<compile_context>
chip_gen: v7x
topology: tpu7x:2x2x1
jax: 0.10.0
libtpu: 0.0.40
codegen_flags: <defaults>
</compile_context>

<pallas_src>
import functools

import jax
import jax.numpy as jnp
from jax import lax
from jax.experimental import pallas as pl
from jax.experimental.pallas import tpu as pltpu


def _make_fused_kernel(H, W, layer_cfgs, halos):
    """Builds the fused (all layers x all timesteps) ConvLSTM kernel body.

    layer_cfgs: list of (Cin_l, CH_l, KH_l, KW_l) per layer.
    halos:      list of (halo_y, halo_x) per layer for the padded hidden buffers
                (big enough for the layer's own recurrent conv AND the next layer's
                 input conv, so the buffer can be shared by both).
    Ref order: x_col, wx_0..wx_{L-1}, wh_0..wh_{L-1}, b_0..b_{L-1},
               y_out, c_last_out,
               padh_0, c_0, ..., padh_{L-1}, c_{L-1}
    """
    L = len(layer_cfgs)

    def tap_accumulate(acc, src, w_ref, halo_yx, KH, KW, C):
        # src: (H+2hy, W+2hx, C) bf16 zero-padded image; w_ref: (KH*KW, C, 4*CH) bf16.
        hy, hx = halo_yx
        oy, ox = hy - KH // 2, hx - KW // 2
        for ky in range(KH):
            for kx in range(KW):
                win = src[oy + ky:oy + ky + H, ox + kx:ox + kx + W, :]
                acc = acc + jnp.dot(win.reshape(H * W, C), w_ref[ky * KW + kx],
                                    preferred_element_type=jnp.float32)
        return acc

    def kernel(*refs):
        xcol_ref = refs[0]
        wx_refs = refs[1:1 + L]
        wh_refs = refs[1 + L:1 + 2 * L]
        b_refs = refs[1 + 2 * L:1 + 3 * L]
        y_ref = refs[1 + 3 * L]
        c_last_ref = refs[2 + 3 * L]
        scratch = refs[3 + 3 * L:]
        padh_refs = scratch[0::2]
        c_refs = scratch[1::2]

        t = pl.program_id(1)
        T = pl.num_programs(1)

        # Fresh zero state (and zero halo rings) at the start of each sequence.
        @pl.when(t == 0)
        def _init():
            for l in range(L):
                padh_refs[l][...] = jnp.zeros_like(padh_refs[l])
                c_refs[l][...] = jnp.zeros_like(c_refs[l])

        for l, (Cin, CH, KH, KW) in enumerate(layer_cfgs):
            hy, hx = halos[l]

            # Gate pre-activations, seeded with the (broadcast) bias.
            acc = jnp.broadcast_to(b_refs[l][...], (H * W, 4 * CH))

            # conv(cat([x, h_{t-1}])) == conv_x(x) + conv_h(h_{t-1})
            if l == 0:
                # Input frame already im2col'ed in the wrapper -> single matmul.
                acc = acc + jnp.dot(xcol_ref[...], wx_refs[0][...],
                                    preferred_element_type=jnp.float32)
            else:
                # Layer input == h_t of layer l-1, already zero-padded in its buffer.
                src = padh_refs[l - 1][...].astype(jnp.bfloat16)
                acc = tap_accumulate(acc, src, wx_refs[l], halos[l - 1], KH, KW, Cin)

            hsrc = padh_refs[l][...].astype(jnp.bfloat16)     # h_{t-1} of this layer
            acc = tap_accumulate(acc, hsrc, wh_refs[l], (hy, hx), KH, KW, CH)

            # Gate order matches torch.split(combined_conv, hidden_dim, dim=1).
            i = jax.nn.sigmoid(acc[:, 0 * CH:1 * CH])
            f = jax.nn.sigmoid(acc[:, 1 * CH:2 * CH])
            o = jax.nn.sigmoid(acc[:, 2 * CH:3 * CH])
            g = jnp.tanh(acc[:, 3 * CH:4 * CH])
            c_next = f * c_refs[l][...] + i * g
            h_next = o * jnp.tanh(c_next)

            c_refs[l][...] = c_next
            # Recurrent h for step t+1 (and input for layer l+1 this step):
            # interior only, the zero halo reproduces padding = kernel // 2.
            padh_refs[l][hy:hy + H, hx:hx + W, :] = h_next.reshape(H, W, CH)

            if l == L - 1:
                y_ref[...] = h_next                           # per-timestep output block

                @pl.when(t == T - 1)
                def _store_c():
                    c_last_ref[...] = c_next                  # resident block, final write

    return kernel


def _const_full_spec(arr):
    """Full-array block, resident in VMEM for the whole grid (constant index map)."""
    if arr.ndim == 2:
        return pl.BlockSpec(arr.shape, lambda b_, t_: (0, 0))
    if arr.ndim == 3:
        return pl.BlockSpec(arr.shape, lambda b_, t_: (0, 0, 0))
    raise ValueError(f"unexpected rank {arr.ndim}")


def conv_lstm_forward(x_btchw, params, kernel_sizes):
    """Fused multi-layer ConvLSTM forward (batch_first, zero init, return_all_layers=False).

    x_btchw : (B, T, Cin, H, W) float32.
    params  : list of (w, b); w: (KH*KW, Cin_l + CH_l, 4*CH_l), b: (1, 4*CH_l).
    Returns (layer_output_list, last_state_list) in NCHW, mirroring the PyTorch module.
    """
    B, T, Cin, H, W = x_btchw.shape
    L = len(params)

    layer_cfgs = []
    cur_in = Cin
    for (w, b), (KH, KW) in zip(params, kernel_sizes):
        CH = b.shape[-1] // 4
        assert KH % 2 == 1 and KW % 2 == 1, \
            "odd kernel sizes required to match PyTorch padding=kernel//2"
        assert w.shape == (KH * KW, cur_in + CH, 4 * CH)
        layer_cfgs.append((cur_in, CH, KH, KW))
        cur_in = CH
    CH_last = layer_cfgs[-1][1]

    # Halo of layer l's hidden buffer must cover both its own recurrent conv and the
    # next layer's input conv (the buffer doubles as layer l+1's padded input image).
    halos = []
    for l in range(L):
        hy, hx = layer_cfgs[l][2] // 2, layer_cfgs[l][3] // 2
        if l + 1 < L:
            hy = max(hy, layer_cfgs[l + 1][2] // 2)
            hx = max(hx, layer_cfgs[l + 1][3] // 2)
        halos.append((hy, hx))

    # ---- Wrapper-side layout plumbing (done once in XLA, outside the kernel) ----
    KH0, KW0 = kernel_sizes[0]
    p0h, p0w = KH0 // 2, KW0 // 2
    x_nhwc = jnp.transpose(x_btchw, (0, 1, 3, 4, 2)).astype(jnp.bfloat16)
    x_pad = jnp.pad(x_nhwc, ((0, 0), (0, 0), (p0h, p0h), (p0w, p0w), (0, 0)))
    cols = [x_pad[:, :, ky:ky + H, kx:kx + W, :]
            for ky in range(KH0) for kx in range(KW0)]
    x_col = jnp.concatenate(cols, axis=-1).reshape(B, T, H * W, KH0 * KW0 * Cin)

    wx_list, wh_list, b_list = [], [], []
    for li, ((w, b), (Cin_l, CH_l, KH, KW)) in enumerate(zip(params, layer_cfgs)):
        wx = w[:, :Cin_l, :].astype(jnp.bfloat16)          # (KH*KW, Cin_l, 4*CH)
        wh = w[:, Cin_l:, :].astype(jnp.bfloat16)          # (KH*KW, CH_l, 4*CH)
        if li == 0:
            # tap-major rows to match x_col's channel ordering -> single matmul
            wx = wx.reshape(KH * KW * Cin_l, 4 * CH_l)
        wx_list.append(wx)
        wh_list.append(wh)
        b_list.append(b.astype(jnp.float32))

    in_specs = [pl.BlockSpec((None, None, H * W, KH0 * KW0 * Cin),
                             lambda b_, t_: (b_, t_, 0, 0))]
    for arr in (*wx_list, *wh_list, *b_list):
        in_specs.append(_const_full_spec(arr))

    out_specs = (
        pl.BlockSpec((None, None, H * W, CH_last), lambda b_, t_: (b_, t_, 0, 0)),
        pl.BlockSpec((None, H * W, CH_last), lambda b_, t_: (b_, 0, 0)),
    )
    out_shape = (
        jax.ShapeDtypeStruct((B, T, H * W, CH_last), jnp.float32),
        jax.ShapeDtypeStruct((B, H * W, CH_last), jnp.float32),
    )

    scratch_shapes = []
    for (Cin_l, CH_l, KH, KW), (hy, hx) in zip(layer_cfgs, halos):
        scratch_shapes.append(pltpu.VMEM((H + 2 * hy, W + 2 * hx, CH_l), jnp.float32))
        scratch_shapes.append(pltpu.VMEM((H * W, CH_l), jnp.float32))

    kernel = _make_fused_kernel(H, W, layer_cfgs, halos)
    y_flat, c_flat = pl.pallas_call(
        kernel,
        out_shape=out_shape,
        grid_spec=pltpu.PrefetchScalarGridSpec(
            num_scalar_prefetch=0,
            grid=(B, T),                          # T innermost: sequential recurrence
            in_specs=in_specs,
            out_specs=out_specs,
            scratch_shapes=scratch_shapes),
        compiler_params=pltpu.CompilerParams(
            dimension_semantics=("parallel", "arbitrary")),
    )(x_col, *wx_list, *wh_list, *b_list)

    # Unfold the kernel outputs back to the module's NCHW convention.
    y_nchw = jnp.transpose(y_flat.reshape(B, T, H, W, CH_last), (0, 1, 4, 2, 3))
    h_last = y_nchw[:, -1]
    c_last = jnp.transpose(c_flat.reshape(B, H, W, CH_last), (0, 3, 1, 2))
    # return_all_layers=False -> only the last layer's outputs/state.
    # TODO(synk): custom (non-zero) initial hidden_state is not plumbed; zeros init only.
    return [y_nchw], [(h_last, c_last)]


def _ref_forward(x_btchw, params, kernel_sizes):
    """Pure-JAX reference (lax.conv) mirroring the kernel's numerical recipe
    (bf16 conv inputs, f32 accumulation / f32 state)."""
    B, T, Cin, H, W = x_btchw.shape
    cur = jnp.transpose(x_btchw, (0, 1, 3, 4, 2))
    for li, (w, b) in enumerate(params):
        KH, KW = kernel_sizes[li]
        CH = b.shape[-1] // 4
        w_hwio = w.reshape(KH, KW, -1, 4 * CH).astype(jnp.bfloat16)
        h = jnp.zeros((B, H, W, CH), jnp.float32)
        c = jnp.zeros((B, H, W, CH), jnp.float32)
        outs = []
        for t in range(T):
            combined = jnp.concatenate([cur[:, t], h], axis=-1).astype(jnp.bfloat16)
            conv = lax.conv_general_dilated(
                combined, w_hwio, (1, 1), 'SAME',
                dimension_numbers=('NHWC', 'HWIO', 'NHWC'),
                preferred_element_type=jnp.float32) + b
            i = jax.nn.sigmoid(conv[..., 0 * CH:1 * CH])
            f = jax.nn.sigmoid(conv[..., 1 * CH:2 * CH])
            o = jax.nn.sigmoid(conv[..., 2 * CH:3 * CH])
            g = jnp.tanh(conv[..., 3 * CH:4 * CH])
            c = f * c + i * g
            h = o * jnp.tanh(c)
            outs.append(h)
        cur = jnp.stack(outs, axis=1)
    last = jnp.transpose(cur, (0, 1, 4, 2, 3))
    return last, (jnp.transpose(h, (0, 3, 1, 2)), jnp.transpose(c, (0, 3, 1, 2)))


def init_params(key, input_dim, hidden_dims, kernel_sizes):
    """Deterministic init; w is the torch Conv2d weight (4*CH, C, KH, KW) transposed to
    (KH, KW, C, 4*CH) and flattened over the kernel taps -> (KH*KW, C, 4*CH)."""
    params = []
    cur_in = input_dim
    for CH, (KH, KW) in zip(hidden_dims, kernel_sizes):
        C = cur_in + CH
        key, kw_, kb_ = jax.random.split(key, 3)
        w = 0.1 * jax.random.normal(kw_, (KH * KW, C, 4 * CH), jnp.float32)
        b = 0.1 * jax.random.normal(kb_, (1, 4 * CH), jnp.float32)
        params.append((w, b))
        cur_in = CH
    return params


if __name__ == "__main__":
    # ConvLSTM(input_size=(16, 16), input_dim=4, hidden_dim=32,
    #          kernel_size=(3, 3), num_layers=2, batch_first=True, bias=True)
    B, T, Cin, H, W = 2, 8, 4, 16, 16
    num_layers = 2
    hidden_dims = [32, 32]         # 4*CH = 128 -> full lane tile for the gate matmuls
    kernel_sizes = [(3, 3), (3, 3)]

    key = jax.random.PRNGKey(0)
    key, kx = jax.random.split(key)
    x = jax.random.normal(kx, (B, T, Cin, H, W), jnp.float32)
    params = init_params(key, Cin, hidden_dims, kernel_sizes)

    fwd = jax.jit(functools.partial(conv_lstm_forward, kernel_sizes=kernel_sizes))
    layer_output_list, last_state_list = fwd(x, params)
    out = jax.block_until_ready(layer_output_list[0])
    h_last = jax.block_until_ready(last_state_list[0][0])
    c_last = jax.block_until_ready(last_state_list[0][1])

    assert out.shape == (B, T, hidden_dims[-1], H, W)
    assert h_last.shape == (B, hidden_dims[-1], H, W)
    assert c_last.shape == (B, hidden_dims[-1], H, W)

    # Check against a pure-JAX (lax.conv) reference using the same bf16-input recipe.
    ref_out, (ref_h, ref_c) = _ref_forward(x, params, kernel_sizes)
    assert jnp.allclose(out, ref_out, atol=2e-3, rtol=2e-3), \
        float(jnp.max(jnp.abs(out - ref_out)))
    assert jnp.allclose(h_last, ref_h, atol=2e-3, rtol=2e-3)
    assert jnp.allclose(c_last, ref_c, atol=2e-3, rtol=2e-3)

    print("KERNEL_OK")
</pallas_src>

<mosaic_0001>
module attributes {stable_mosaic.version = 11 : i64} {
  func.func @kernel(%arg0: i32, %arg1: i32, %arg2: memref<1x1x256x36xbf16, #tpu.memory_space<vmem>>, %arg3: memref<36x128xbf16, #tpu.memory_space<vmem>>, %arg4: memref<9x32x128xbf16, #tpu.memory_space<vmem>>, %arg5: memref<9x32x128xbf16, #tpu.memory_space<vmem>>, %arg6: memref<9x32x128xbf16, #tpu.memory_space<vmem>>, %arg7: memref<1x128xf32, #tpu.memory_space<vmem>>, %arg8: memref<1x128xf32, #tpu.memory_space<vmem>>, %arg9: memref<1x1x256x32xf32, #tpu.memory_space<vmem>>, %arg10: memref<1x256x32xf32, #tpu.memory_space<vmem>>, %arg11: memref<18x18x32xf32, #tpu.memory_space<vmem>>, %arg12: memref<256x32xf32, #tpu.memory_space<vmem>>, %arg13: memref<18x18x32xf32, #tpu.memory_space<vmem>>, %arg14: memref<256x32xf32, #tpu.memory_space<vmem>>) attributes {dimension_semantics = [#tpu.dimension_semantics<parallel>, #tpu.dimension_semantics<arbitrary>], iteration_bounds = array<i64: 2, 8>, scalar_prefetch = 0 : i64, scratch_operands = 4 : i64, tpu.core_type = #tpu.core_type<tc>, window_params = [{transform_indices = @transform_0, window_bounds = array<i64: 1, 1, 256, 36>}, {pipeline_mode = #tpu.pipeline_mode<synchronous>, transform_indices = @transform_1, window_bounds = array<i64: 36, 128>}, {pipeline_mode = #tpu.pipeline_mode<synchronous>, transform_indices = @transform_2, window_bounds = array<i64: 9, 32, 128>}, {pipeline_mode = #tpu.pipeline_mode<synchronous>, transform_indices = @transform_3, window_bounds = array<i64: 9, 32, 128>}, {pipeline_mode = #tpu.pipeline_mode<synchronous>, transform_indices = @transform_4, window_bounds = array<i64: 9, 32, 128>}, {pipeline_mode = #tpu.pipeline_mode<synchronous>, transform_indices = @transform_5, window_bounds = array<i64: 1, 128>}, {pipeline_mode = #tpu.pipeline_mode<synchronous>, transform_indices = @transform_6, window_bounds = array<i64: 1, 128>}, {transform_indices = @transform_7, window_bounds = array<i64: 1, 1, 256, 32>}, {transform_indices = @transform_8, window_bounds = array<i64: 1, 256, 32>}]} {
    %c0_i32 = arith.constant 0 : i32
    %0 = arith.cmpi eq, %arg1, %c0_i32 : i32
    %1 = arith.extui %0 : i1 to i32
    %c0_i32_0 = arith.constant 0 : i32
    %2 = arith.cmpi ne, %1, %c0_i32_0 : i32
    scf.if %2 {
      %cst_144 = arith.constant 0.000000e+00 : f32
      %246 = vector.broadcast %cst_144 : f32 to vector<18x18x32xf32>
      %c0_145 = arith.constant 0 : index
      %c0_146 = arith.constant 0 : index
      %c0_147 = arith.constant 0 : index
      %247 = vector.load %arg11[%c0_145, %c0_146, %c0_147] : memref<18x18x32xf32, #tpu.memory_space<vmem>>, vector<18x18x32xf32>
      tpu.vector_store %arg11[%c0_145, %c0_146, %c0_147], %246 {strides = array<i32>} : memref<18x18x32xf32, #tpu.memory_space<vmem>>, vector<18x18x32xf32>,
      %cst_148 = arith.constant 0.000000e+00 : f32
      %248 = vector.broadcast %cst_148 : f32 to vector<256x32xf32>
      %c0_149 = arith.constant 0 : index
      %c0_150 = arith.constant 0 : index
      %249 = vector.load %arg12[%c0_149, %c0_150] : memref<256x32xf32, #tpu.memory_space<vmem>>, vector<256x32xf32>
      tpu.vector_store %arg12[%c0_149, %c0_150], %248 {strides = array<i32>} : memref<256x32xf32, #tpu.memory_space<vmem>>, vector<256x32xf32>,
      %cst_151 = arith.constant 0.000000e+00 : f32
      %250 = vector.broadcast %cst_151 : f32 to vector<18x18x32xf32>
      %c0_152 = arith.constant 0 : index
      %c0_153 = arith.constant 0 : index
      %c0_154 = arith.constant 0 : index
      %251 = vector.load %arg13[%c0_152, %c0_153, %c0_154] : memref<18x18x32xf32, #tpu.memory_space<vmem>>, vector<18x18x32xf32>
      tpu.vector_store %arg13[%c0_152, %c0_153, %c0_154], %250 {strides = array<i32>} : memref<18x18x32xf32, #tpu.memory_space<vmem>>, vector<18x18x32xf32>,
      %cst_155 = arith.constant 0.000000e+00 : f32
      %252 = vector.broadcast %cst_155 : f32 to vector<256x32xf32>
      %c0_156 = arith.constant 0 : index
      %c0_157 = arith.constant 0 : index
      %253 = vector.load %arg14[%c0_156, %c0_157] : memref<256x32xf32, #tpu.memory_space<vmem>>, vector<256x32xf32>
      tpu.vector_store %arg14[%c0_156, %c0_157], %252 {strides = array<i32>} : memref<256x32xf32, #tpu.memory_space<vmem>>, vector<256x32xf32>,
    } else {
    }
    %c0 = arith.constant 0 : index
    %c0_1 = arith.constant 0 : index
    %3 = vector.load %arg7[%c0, %c0_1] : memref<1x128xf32, #tpu.memory_space<vmem>>, vector<1x128xf32>
    %4 = vector.shape_cast %3 : vector<1x128xf32> to vector<1x128xf32>
    %5 = vector.broadcast %4 : vector<1x128xf32> to vector<256x128xf32>
    %c0_2 = arith.constant 0 : index
    %c0_3 = arith.constant 0 : index
    %c0_4 = arith.constant 0 : index
    %c0_5 = arith.constant 0 : index
    %6 = vector.load %arg2[%c0_2, %c0_3, %c0_4, %c0_5] : memref<1x1x256x36xbf16, #tpu.memory_space<vmem>>, vector<1x1x256x36xbf16>
    %7 = vector.shape_cast %6 : vector<1x1x256x36xbf16> to vector<256x36xbf16>
    %c0_6 = arith.constant 0 : index
    %c0_7 = arith.constant 0 : index
    %8 = vector.load %arg3[%c0_6, %c0_7] : memref<36x128xbf16, #tpu.memory_space<vmem>>, vector<36x128xbf16>
    %cst = arith.constant dense<0.000000e+00> : vector<256x128xf32>
    %9 = tpu.matmul %7, %8, %cst {dimension_numbers = #tpu.dot_dimension_numbers<[1], [0], [0], [1], [0, 0, 1, 1], [], []>} : vector<256x36xbf16>, vector<36x128xbf16>, vector<256x128xf32> -> vector<256x128xf32>
    %10 = arith.addf %5, %9 : vector<256x128xf32>
    %c0_8 = arith.constant 0 : index
    %c0_9 = arith.constant 0 : index
    %c0_10 = arith.constant 0 : index
    %11 = vector.load %arg11[%c0_8, %c0_9, %c0_10] : memref<18x18x32xf32, #tpu.memory_space<vmem>>, vector<18x18x32xf32>
    %12 = arith.truncf %11 : vector<18x18x32xf32> to vector<18x18x32xbf16>
    %13 = vector.extract_strided_slice %12 {offsets = [0, 0, 0], sizes = [16, 16, 32], strides = [1, 1, 1]} : vector<18x18x32xbf16> to vector<16x16x32xbf16>
    %14 = vector.shape_cast %13 : vector<16x16x32xbf16> to vector<256x32xbf16>
    %c0_11 = arith.constant 0 : index
    %c0_12 = arith.constant 0 : index
    %c0_13 = arith.constant 0 : index
    %15 = vector.load %arg5[%c0_11, %c0_12, %c0_13] : memref<9x32x128xbf16, #tpu.memory_space<vmem>>, vector<1x32x128xbf16>
    %16 = vector.shape_cast %15 : vector<1x32x128xbf16> to vector<32x128xbf16>
    %cst_14 = arith.constant dense<0.000000e+00> : vector<256x128xf32>
    %17 = tpu.matmul %14, %16, %cst_14 {dimension_numbers = #tpu.dot_dimension_numbers<[1], [0], [0], [1], [0, 0, 1, 1], [], []>} : vector<256x32xbf16>, vector<32x128xbf16>, vector<256x128xf32> -> vector<256x128xf32>
    %18 = arith.addf %10, %17 : vector<256x128xf32>
    %19 = vector.extract_strided_slice %12 {offsets = [0, 1, 0], sizes = [16, 16, 32], strides = [1, 1, 1]} : vector<18x18x32xbf16> to vector<16x16x32xbf16>
    %20 = vector.shape_cast %19 : vector<16x16x32xbf16> to vector<256x32xbf16>
    %c1 = arith.constant 1 : index
    %c0_15 = arith.constant 0 : index
    %c0_16 = arith.constant 0 : index
    %21 = vector.load %arg5[%c1, %c0_15, %c0_16] : memref<9x32x128xbf16, #tpu.memory_space<vmem>>, vector<1x32x128xbf16>
    %22 = vector.shape_cast %21 : vector<1x32x128xbf16> to vector<32x128xbf16>
    %cst_17 = arith.constant dense<0.000000e+00> : vector<256x128xf32>
    %23 = tpu.matmul %20, %22, %cst_17 {dimension_numbers = #tpu.dot_dimension_numbers<[1], [0], [0], [1], [0, 0, 1, 1], [], []>} : vector<256x32xbf16>, vector<32x128xbf16>, vector<256x128xf32> -> vector<256x128xf32>
    %24 = arith.addf %18, %23 : vector<256x128xf32>
    %25 = vector.extract_strided_slice %12 {offsets = [0, 2, 0], sizes = [16, 16, 32], strides = [1, 1, 1]} : vector<18x18x32xbf16> to vector<16x16x32xbf16>
    %26 = vector.shape_cast %25 : vector<16x16x32xbf16> to vector<256x32xbf16>
    %c2 = arith.constant 2 : index
    %c0_18 = arith.constant 0 : index
    %c0_19 = arith.constant 0 : index
    %27 = vector.load %arg5[%c2, %c0_18, %c0_19] : memref<9x32x128xbf16, #tpu.memory_space<vmem>>, vector<1x32x128xbf16>
    %28 = vector.shape_cast %27 : vector<1x32x128xbf16> to vector<32x128xbf16>
    %cst_20 = arith.constant dense<0.000000e+00> : vector<256x128xf32>
    %29 = tpu.matmul %26, %28, %cst_20 {dimension_numbers = #tpu.dot_dimension_numbers<[1], [0], [0], [1], [0, 0, 1, 1], [], []>} : vector<256x32xbf16>, vector<32x128xbf16>, vector<256x128xf32> -> vector<256x128xf32>
    %30 = arith.addf %24, %29 : vector<256x128xf32>
    %31 = vector.extract_strided_slice %12 {offsets = [1, 0, 0], sizes = [16, 16, 32], strides = [1, 1, 1]} : vector<18x18x32xbf16> to vector<16x16x32xbf16>
    %32 = vector.shape_cast %31 : vector<16x16x32xbf16> to vector<256x32xbf16>
    %c3 = arith.constant 3 : index
    %c0_21 = arith.constant 0 : index
    %c0_22 = arith.constant 0 : index
    %33 = vector.load %arg5[%c3, %c0_21, %c0_22] : memref<9x32x128xbf16, #tpu.memory_space<vmem>>, vector<1x32x128xbf16>
    %34 = vector.shape_cast %33 : vector<1x32x128xbf16> to vector<32x128xbf16>
    %cst_23 = arith.constant dense<0.000000e+00> : vector<256x128xf32>
    %35 = tpu.matmul %32, %34, %cst_23 {dimension_numbers = #tpu.dot_dimension_numbers<[1], [0], [0], [1], [0, 0, 1, 1], [], []>} : vector<256x32xbf16>, vector<32x128xbf16>, vector<256x128xf32> -> vector<256x128xf32>
    %36 = arith.addf %30, %35 : vector<256x128xf32>
    %37 = vector.extract_strided_slice %12 {offsets = [1, 1, 0], sizes = [16, 16, 32], strides = [1, 1, 1]} : vector<18x18x32xbf16> to vector<16x16x32xbf16>
    %38 = vector.shape_cast %37 : vector<16x16x32xbf16> to vector<256x32xbf16>
    %c4 = arith.constant 4 : index
    %c0_24 = arith.constant 0 : index
    %c0_25 = arith.constant 0 : index
    %39 = vector.load %arg5[%c4, %c0_24, %c0_25] : memref<9x32x128xbf16, #tpu.memory_space<vmem>>, vector<1x32x128xbf16>
    %40 = vector.shape_cast %39 : vector<1x32x128xbf16> to vector<32x128xbf16>
    %cst_26 = arith.constant dense<0.000000e+00> : vector<256x128xf32>
    %41 = tpu.matmul %38, %40, %cst_26 {dimension_numbers = #tpu.dot_dimension_numbers<[1], [0], [0], [1], [0, 0, 1, 1], [], []>} : vector<256x32xbf16>, vector<32x128xbf16>, vector<256x128xf32> -> vector<256x128xf32>
    %42 = arith.addf %36, %41 : vector<256x128xf32>
    %43 = vector.extract_strided_slice %12 {offsets = [1, 2, 0], sizes = [16, 16, 32], strides = [1, 1, 1]} : vector<18x18x32xbf16> to vector<16x16x32xbf16>
    %44 = vector.shape_cast %43 : vector<16x16x32xbf16> to vector<256x32xbf16>
    %c5 = arith.constant 5 : index
    %c0_27 = arith.constant 0 : index
    %c0_28 = arith.constant 0 : index
    %45 = vector.load %arg5[%c5, %c0_27, %c0_28] : memref<9x32x128xbf16, #tpu.memory_space<vmem>>, vector<1x32x128xbf16>
    %46 = vector.shape_cast %45 : vector<1x32x128xbf16> to vector<32x128xbf16>
    %cst_29 = arith.constant dense<0.000000e+00> : vector<256x128xf32>
    %47 = tpu.matmul %44, %46, %cst_29 {dimension_numbers = #tpu.dot_dimension_numbers<[1], [0], [0], [1], [0, 0, 1, 1], [], []>} : vector<256x32xbf16>, vector<32x128xbf16>, vector<256x128xf32> -> vector<256x128xf32>
    %48 = arith.addf %42, %47 : vector<256x128xf32>
    %49 = vector.extract_strided_slice %12 {offsets = [2, 0, 0], sizes = [16, 16, 32], strides = [1, 1, 1]} : vector<18x18x32xbf16> to vector<16x16x32xbf16>
    %50 = vector.shape_cast %49 : vector<16x16x32xbf16> to vector<256x32xbf16>
    %c6 = arith.constant 6 : index
    %c0_30 = arith.constant 0 : index
    %c0_31 = arith.constant 0 : index
    %51 = vector.load %arg5[%c6, %c0_30, %c0_31] : memref<9x32x128xbf16, #tpu.memory_space<vmem>>, vector<1x32x128xbf16>
    %52 = vector.shape_cast %51 : vector<1x32x128xbf16> to vector<32x128xbf16>
    %cst_32 = arith.constant dense<0.000000e+00> : vector<256x128xf32>
    %53 = tpu.matmul %50, %52, %cst_32 {dimension_numbers = #tpu.dot_dimension_numbers<[1], [0], [0], [1], [0, 0, 1, 1], [], []>} : vector<256x32xbf16>, vector<32x128xbf16>, vector<256x128xf32> -> vector<256x128xf32>
    %54 = arith.addf %48, %53 : vector<256x128xf32>
    %55 = vector.extract_strided_slice %12 {offsets = [2, 1, 0], sizes = [16, 16, 32], strides = [1, 1, 1]} : vector<18x18x32xbf16> to vector<16x16x32xbf16>
    %56 = vector.shape_cast %55 : vector<16x16x32xbf16> to vector<256x32xbf16>
    %c7 = arith.constant 7 : index
    %c0_33 = arith.constant 0 : index
    %c0_34 = arith.constant 0 : index
    %57 = vector.load %arg5[%c7, %c0_33, %c0_34] : memref<9x32x128xbf16, #tpu.memory_space<vmem>>, vector<1x32x128xbf16>
    %58 = vector.shape_cast %57 : vector<1x32x128xbf16> to vector<32x128xbf16>
    %cst_35 = arith.constant dense<0.000000e+00> : vector<256x128xf32>
    %59 = tpu.matmul %56, %58, %cst_35 {dimension_numbers = #tpu.dot_dimension_numbers<[1], [0], [0], [1], [0, 0, 1, 1], [], []>} : vector<256x32xbf16>, vector<32x128xbf16>, vector<256x128xf32> -> vector<256x128xf32>
    %60 = arith.addf %54, %59 : vector<256x128xf32>
    %61 = vector.extract_strided_slice %12 {offsets = [2, 2, 0], sizes = [16, 16, 32], strides = [1, 1, 1]} : vector<18x18x32xbf16> to vector<16x16x32xbf16>
    %62 = vector.shape_cast %61 : vector<16x16x32xbf16> to vector<256x32xbf16>
    %c8 = arith.constant 8 : index
    %c0_36 = arith.constant 0 : index
    %c0_37 = arith.constant 0 : index
    %63 = vector.load %arg5[%c8, %c0_36, %c0_37] : memref<9x32x128xbf16, #tpu.memory_space<vmem>>, vector<1x32x128xbf16>
    %64 = vector.shape_cast %63 : vector<1x32x128xbf16> to vector<32x128xbf16>
    %cst_38 = arith.constant dense<0.000000e+00> : vector<256x128xf32>
    %65 = tpu.matmul %62, %64, %cst_38 {dimension_numbers = #tpu.dot_dimension_numbers<[1], [0], [0], [1], [0, 0, 1, 1], [], []>} : vector<256x32xbf16>, vector<32x128xbf16>, vector<256x128xf32> -> vector<256x128xf32>
    %66 = arith.addf %60, %65 : vector<256x128xf32>
    %67 = vector.extract_strided_slice %66 {offsets = [0, 0], sizes = [256, 32], strides = [1, 1]} : vector<256x128xf32> to vector<256x32xf32>
    %68 = arith.negf %67 : vector<256x32xf32>
    %69 = math.exp %68 : vector<256x32xf32>
    %cst_39 = arith.constant 1.000000e+00 : f32
    %70 = vector.broadcast %cst_39 : f32 to vector<256x32xf32>
    %71 = arith.addf %70, %69 : vector<256x32xf32>
    %72 = arith.divf %70, %71 : vector<256x32xf32>
    %73 = vector.extract_strided_slice %66 {offsets = [0, 32], sizes = [256, 32], strides = [1, 1]} : vector<256x128xf32> to vector<256x32xf32>
    %74 = arith.negf %73 : vector<256x32xf32>
    %75 = math.exp %74 : vector<256x32xf32>
    %cst_40 = arith.constant 1.000000e+00 : f32
    %76 = vector.broadcast %cst_40 : f32 to vector<256x32xf32>
    %77 = arith.addf %76, %75 : vector<256x32xf32>
    %78 = arith.divf %76, %77 : vector<256x32xf32>
    %79 = vector.extract_strided_slice %66 {offsets = [0, 64], sizes = [256, 32], strides = [1, 1]} : vector<256x128xf32> to vector<256x32xf32>
    %80 = arith.negf %79 : vector<256x32xf32>
    %81 = math.exp %80 : vector<256x32xf32>
    %cst_41 = arith.constant 1.000000e+00 : f32
    %82 = vector.broadcast %cst_41 : f32 to vector<256x32xf32>
    %83 = arith.addf %82, %81 : vector<256x32xf32>
    %84 = arith.divf %82, %83 : vector<256x32xf32>
    %85 = vector.extract_strided_slice %66 {offsets = [0, 96], sizes = [256, 32], strides = [1, 1]} : vector<256x128xf32> to vector<256x32xf32>
    %86 = math.tanh %85 : vector<256x32xf32>
    %c0_42 = arith.constant 0 : index
    %c0_43 = arith.constant 0 : index
    %87 = vector.load %arg12[%c0_42, %c0_43] : memref<256x32xf32, #tpu.memory_space<vmem>>, vector<256x32xf32>
    %88 = arith.mulf %78, %87 : vector<256x32xf32>
    %89 = arith.mulf %72, %86 : vector<256x32xf32>
    %90 = arith.addf %88, %89 : vector<256x32xf32>
    %91 = math.tanh %90 : vector<256x32xf32>
    %92 = arith.mulf %84, %91 : vector<256x32xf32>
    %c0_44 = arith.constant 0 : index
    %c0_45 = arith.constant 0 : index
    %93 = vector.load %arg12[%c0_44, %c0_45] : memref<256x32xf32, #tpu.memory_space<vmem>>, vector<256x32xf32>
    tpu.vector_store %arg12[%c0_44, %c0_45], %90 {strides = array<i32>} : memref<256x32xf32, #tpu.memory_space<vmem>>, vector<256x32xf32>,
    %94 = vector.shape_cast %92 : vector<256x32xf32> to vector<16x16x32xf32>
    %c1_46 = arith.constant 1 : index
    %c1_47 = arith.constant 1 : index
    %c0_48 = arith.constant 0 : index
    %95 = vector.load %arg11[%c1_46, %c1_47, %c0_48] : memref<18x18x32xf32, #tpu.memory_space<vmem>>, vector<16x16x32xf32>
    tpu.vector_store %arg11[%c1_46, %c1_47, %c0_48], %94 {strides = array<i32>} : memref<18x18x32xf32, #tpu.memory_space<vmem>>, vector<16x16x32xf32>,
    %c0_49 = arith.constant 0 : index
    %c0_50 = arith.constant 0 : index
    %96 = vector.load %arg8[%c0_49, %c0_50] : memref<1x128xf32, #tpu.memory_space<vmem>>, vector<1x128xf32>
    %97 = vector.shape_cast %96 : vector<1x128xf32> to vector<1x128xf32>
    %98 = vector.broadcast %97 : vector<1x128xf32> to vector<256x128xf32>
    %c0_51 = arith.constant 0 : index
    %c0_52 = arith.constant 0 : index
    %c0_53 = arith.constant 0 : index
    %99 = vector.load %arg11[%c0_51, %c0_52, %c0_53] : memref<18x18x32xf32, #tpu.memory_space<vmem>>, vector<18x18x32xf32>
    %100 = arith.truncf %99 : vector<18x18x32xf32> to vector<18x18x32xbf16>
    %101 = vector.extract_strided_slice %100 {offsets = [0, 0, 0], sizes = [16, 16, 32], strides = [1, 1, 1]} : vector<18x18x32xbf16> to vector<16x16x32xbf16>
    %102 = vector.shape_cast %101 : vector<16x16x32xbf16> to vector<256x32xbf16>
    %c0_54 = arith.constant 0 : index
    %c0_55 = arith.constant 0 : index
    %c0_56 = arith.constant 0 : index
    %103 = vector.load %arg4[%c0_54, %c0_55, %c0_56] : memref<9x32x128xbf16, #tpu.memory_space<vmem>>, vector<1x32x128xbf16>
    %104 = vector.shape_cast %103 : vector<1x32x128xbf16> to vector<32x128xbf16>
    %cst_57 = arith.constant dense<0.000000e+00> : vector<256x128xf32>
    %105 = tpu.matmul %102, %104, %cst_57 {dimension_numbers = #tpu.dot_dimension_numbers<[1], [0], [0], [1], [0, 0, 1, 1], [], []>} : vector<256x32xbf16>, vector<32x128xbf16>, vector<256x128xf32> -> vector<256x128xf32>
    %106 = arith.addf %98, %105 : vector<256x128xf32>
    %107 = vector.extract_strided_slice %100 {offsets = [0, 1, 0], sizes = [16, 16, 32], strides = [1, 1, 1]} : vector<18x18x32xbf16> to vector<16x16x32xbf16>
    %108 = vector.shape_cast %107 : vector<16x16x32xbf16> to vector<256x32xbf16>
    %c1_58 = arith.constant 1 : index
    %c0_59 = arith.constant 0 : index
    %c0_60 = arith.constant 0 : index
    %109 = vector.load %arg4[%c1_58, %c0_59, %c0_60] : memref<9x32x128xbf16, #tpu.memory_space<vmem>>, vector<1x32x128xbf16>
    %110 = vector.shape_cast %109 : vector<1x32x128xbf16> to vector<32x128xbf16>
    %cst_61 = arith.constant dense<0.000000e+00> : vector<256x128xf32>
    %111 = tpu.matmul %108, %110, %cst_61 {dimension_numbers = #tpu.dot_dimension_numbers<[1], [0], [0], [1], [0, 0, 1, 1], [], []>} : vector<256x32xbf16>, vector<32x128xbf16>, vector<256x128xf32> -> vector<256x128xf32>
    %112 = arith.addf %106, %111 : vector<256x128xf32>
    %113 = vector.extract_strided_slice %100 {offsets = [0, 2, 0], sizes = [16, 16, 32], strides = [1, 1, 1]} : vector<18x18x32xbf16> to vector<16x16x32xbf16>
    %114 = vector.shape_cast %113 : vector<16x16x32xbf16> to vector<256x32xbf16>
    %c2_62 = arith.constant 2 : index
    %c0_63 = arith.constant 0 : index
    %c0_64 = arith.constant 0 : index
    %115 = vector.load %arg4[%c2_62, %c0_63, %c0_64] : memref<9x32x128xbf16, #tpu.memory_space<vmem>>, vector<1x32x128xbf16>
    %116 = vector.shape_cast %115 : vector<1x32x128xbf16> to vector<32x128xbf16>
    %cst_65 = arith.constant dense<0.000000e+00> : vector<256x128xf32>
    %117 = tpu.matmul %114, %116, %cst_65 {dimension_numbers = #tpu.dot_dimension_numbers<[1], [0], [0], [1], [0, 0, 1, 1], [], []>} : vector<256x32xbf16>, vector<32x128xbf16>, vector<256x128xf32> -> vector<256x128xf32>
    %118 = arith.addf %112, %117 : vector<256x128xf32>
    %119 = vector.extract_strided_slice %100 {offsets = [1, 0, 0], sizes = [16, 16, 32], strides = [1, 1, 1]} : vector<18x18x32xbf16> to vector<16x16x32xbf16>
    %120 = vector.shape_cast %119 : vector<16x16x32xbf16> to vector<256x32xbf16>
    %c3_66 = arith.constant 3 : index
    %c0_67 = arith.constant 0 : index
    %c0_68 = arith.constant 0 : index
    %121 = vector.load %arg4[%c3_66, %c0_67, %c0_68] : memref<9x32x128xbf16, #tpu.memory_space<vmem>>, vector<1x32x128xbf16>
    %122 = vector.shape_cast %121 : vector<1x32x128xbf16> to vector<32x128xbf16>
    %cst_69 = arith.constant dense<0.000000e+00> : vector<256x128xf32>
    %123 = tpu.matmul %120, %122, %cst_69 {dimension_numbers = #tpu.dot_dimension_numbers<[1], [0], [0], [1], [0, 0, 1, 1], [], []>} : vector<256x32xbf16>, vector<32x128xbf16>, vector<256x128xf32> -> vector<256x128xf32>
    %124 = arith.addf %118, %123 : vector<256x128xf32>
    %125 = vector.extract_strided_slice %100 {offsets = [1, 1, 0], sizes = [16, 16, 32], strides = [1, 1, 1]} : vector<18x18x32xbf16> to vector<16x16x32xbf16>
    %126 = vector.shape_cast %125 : vector<16x16x32xbf16> to vector<256x32xbf16>
    %c4_70 = arith.constant 4 : index
    %c0_71 = arith.constant 0 : index
    %c0_72 = arith.constant 0 : index
    %127 = vector.load %arg4[%c4_70, %c0_71, %c0_72] : memref<9x32x128xbf16, #tpu.memory_space<vmem>>, vector<1x32x128xbf16>
    %128 = vector.shape_cast %127 : vector<1x32x128xbf16> to vector<32x128xbf16>
    %cst_73 = arith.constant dense<0.000000e+00> : vector<256x128xf32>
    %129 = tpu.matmul %126, %128, %cst_73 {dimension_numbers = #tpu.dot_dimension_numbers<[1], [0], [0], [1], [0, 0, 1, 1], [], []>} : vector<256x32xbf16>, vector<32x128xbf16>, vector<256x128xf32> -> vector<256x128xf32>
    %130 = arith.addf %124, %129 : vector<256x128xf32>
    %131 = vector.extract_strided_slice %100 {offsets = [1, 2, 0], sizes = [16, 16, 32], strides = [1, 1, 1]} : vector<18x18x32xbf16> to vector<16x16x32xbf16>
    %132 = vector.shape_cast %131 : vector<16x16x32xbf16> to vector<256x32xbf16>
    %c5_74 = arith.constant 5 : index
    %c0_75 = arith.constant 0 : index
    %c0_76 = arith.constant 0 : index
    %133 = vector.load %arg4[%c5_74, %c0_75, %c0_76] : memref<9x32x128xbf16, #tpu.memory_space<vmem>>, vector<1x32x128xbf16>
    %134 = vector.shape_cast %133 : vector<1x32x128xbf16> to vector<32x128xbf16>
    %cst_77 = arith.constant dense<0.000000e+00> : vector<256x128xf32>
    %135 = tpu.matmul %132, %134, %cst_77 {dimension_numbers = #tpu.dot_dimension_numbers<[1], [0], [0], [1], [0, 0, 1, 1], [], []>} : vector<256x32xbf16>, vector<32x128xbf16>, vector<256x128xf32> -> vector<256x128xf32>
    %136 = arith.addf %130, %135 : vector<256x128xf32>
    %137 = vector.extract_strided_slice %100 {offsets = [2, 0, 0], sizes = [16, 16, 32], strides = [1, 1, 1]} : vector<18x18x32xbf16> to vector<16x16x32xbf16>
    %138 = vector.shape_cast %137 : vector<16x16x32xbf16> to vector<256x32xbf16>
    %c6_78 = arith.constant 6 : index
    %c0_79 = arith.constant 0 : index
    %c0_80 = arith.constant 0 : index
    %139 = vector.load %arg4[%c6_78, %c0_79, %c0_80] : memref<9x32x128xbf16, #tpu.memory_space<vmem>>, vector<1x32x128xbf16>
    %140 = vector.shape_cast %139 : vector<1x32x128xbf16> to vector<32x128xbf16>
    %cst_81 = arith.constant dense<0.000000e+00> : vector<256x128xf32>
    %141 = tpu.matmul %138, %140, %cst_81 {dimension_numbers = #tpu.dot_dimension_numbers<[1], [0], [0], [1], [0, 0, 1, 1], [], []>} : vector<256x32xbf16>, vector<32x128xbf16>, vector<256x128xf32> -> vector<256x128xf32>
    %142 = arith.addf %136, %141 : vector<256x128xf32>
    %143 = vector.extract_strided_slice %100 {offsets = [2, 1, 0], sizes = [16, 16, 32], strides = [1, 1, 1]} : vector<18x18x32xbf16> to vector<16x16x32xbf16>
    %144 = vector.shape_cast %143 : vector<16x16x32xbf16> to vector<256x32xbf16>
    %c7_82 = arith.constant 7 : index
    %c0_83 = arith.constant 0 : index
    %c0_84 = arith.constant 0 : index
    %145 = vector.load %arg4[%c7_82, %c0_83, %c0_84] : memref<9x32x128xbf16, #tpu.memory_space<vmem>>, vector<1x32x128xbf16>
    %146 = vector.shape_cast %145 : vector<1x32x128xbf16> to vector<32x128xbf16>
    %cst_85 = arith.constant dense<0.000000e+00> : vector<256x128xf32>
    %147 = tpu.matmul %144, %146, %cst_85 {dimension_numbers = #tpu.dot_dimension_numbers<[1], [0], [0], [1], [0, 0, 1, 1], [], []>} : vector<256x32xbf16>, vector<32x128xbf16>, vector<256x128xf32> -> vector<256x128xf32>
    %148 = arith.addf %142, %147 : vector<256x128xf32>
    %149 = vector.extract_strided_slice %100 {offsets = [2, 2, 0], sizes = [16, 16, 32], strides = [1, 1, 1]} : vector<18x18x32xbf16> to vector<16x16x32xbf16>
    %150 = vector.shape_cast %149 : vector<16x16x32xbf16> to vector<256x32xbf16>
    %c8_86 = arith.constant 8 : index
    %c0_87 = arith.constant 0 : index
    %c0_88 = arith.constant 0 : index
    %151 = vector.load %arg4[%c8_86, %c0_87, %c0_88] : memref<9x32x128xbf16, #tpu.memory_space<vmem>>, vector<1x32x128xbf16>
    %152 = vector.shape_cast %151 : vector<1x32x128xbf16> to vector<32x128xbf16>
    %cst_89 = arith.constant dense<0.000000e+00> : vector<256x128xf32>
    %153 = tpu.matmul %150, %152, %cst_89 {dimension_numbers = #tpu.dot_dimension_numbers<[1], [0], [0], [1], [0, 0, 1, 1], [], []>} : vector<256x32xbf16>, vector<32x128xbf16>, vector<256x128xf32> -> vector<256x128xf32>
    %154 = arith.addf %148, %153 : vector<256x128xf32>
    %c0_90 = arith.constant 0 : index
    %c0_91 = arith.constant 0 : index
    %c0_92 = arith.constant 0 : index
    %155 = vector.load %arg13[%c0_90, %c0_91, %c0_92] : memref<18x18x32xf32, #tpu.memory_space<vmem>>, vector<18x18x32xf32>
    %156 = arith.truncf %155 : vector<18x18x32xf32> to vector<18x18x32xbf16>
    %157 = vector.extract_strided_slice %156 {offsets = [0, 0, 0], sizes = [16, 16, 32], strides = [1, 1, 1]} : vector<18x18x32xbf16> to vector<16x16x32xbf16>
    %158 = vector.shape_cast %157 : vector<16x16x32xbf16> to vector<256x32xbf16>
    %c0_93 = arith.constant 0 : index
    %c0_94 = arith.constant 0 : index
    %c0_95 = arith.constant 0 : index
    %159 = vector.load %arg6[%c0_93, %c0_94, %c0_95] : memref<9x32x128xbf16, #tpu.memory_space<vmem>>, vector<1x32x128xbf16>
    %160 = vector.shape_cast %159 : vector<1x32x128xbf16> to vector<32x128xbf16>
    %cst_96 = arith.constant dense<0.000000e+00> : vector<256x128xf32>
    %161 = tpu.matmul %158, %160, %cst_96 {dimension_numbers = #tpu.dot_dimension_numbers<[1], [0], [0], [1], [0, 0, 1, 1], [], []>} : vector<256x32xbf16>, vector<32x128xbf16>, vector<256x128xf32> -> vector<256x128xf32>
    %162 = arith.addf %154, %161 : vector<256x128xf32>
    %163 = vector.extract_strided_slice %156 {offsets = [0, 1, 0], sizes = [16, 16, 32], strides = [1, 1, 1]} : vector<18x18x32xbf16> to vector<16x16x32xbf16>
    %164 = vector.shape_cast %163 : vector<16x16x32xbf16> to vector<256x32xbf16>
    %c1_97 = arith.constant 1 : index
    %c0_98 = arith.constant 0 : index
    %c0_99 = arith.constant 0 : index
    %165 = vector.load %arg6[%c1_97, %c0_98, %c0_99] : memref<9x32x128xbf16, #tpu.memory_space<vmem>>, vector<1x32x128xbf16>
    %166 = vector.shape_cast %165 : vector<1x32x128xbf16> to vector<32x128xbf16>
    %cst_100 = arith.constant dense<0.000000e+00> : vector<256x128xf32>
    %167 = tpu.matmul %164, %166, %cst_100 {dimension_numbers = #tpu.dot_dimension_numbers<[1], [0], [0], [1], [0, 0, 1, 1], [], []>} : vector<256x32xbf16>, vector<32x128xbf16>, vector<256x128xf32> -> vector<256x128xf32>
    %168 = arith.addf %162, %167 : vector<256x128xf32>
    %169 = vector.extract_strided_slice %156 {offsets = [0, 2, 0], sizes = [16, 16, 32], strides = [1, 1, 1]} : vector<18x18x32xbf16> to vector<16x16x32xbf16>
    %170 = vector.shape_cast %169 : vector<16x16x32xbf16> to vector<256x32xbf16>
    %c2_101 = arith.constant 2 : index
    %c0_102 = arith.constant 0 : index
    %c0_103 = arith.constant 0 : index
    %171 = vector.load %arg6[%c2_101, %c0_102, %c0_103] : memref<9x32x128xbf16, #tpu.memory_space<vmem>>, vector<1x32x128xbf16>
    %172 = vector.shape_cast %171 : vector<1x32x128xbf16> to vector<32x128xbf16>
    %cst_104 = arith.constant dense<0.000000e+00> : vector<256x128xf32>
    %173 = tpu.matmul %170, %172, %cst_104 {dimension_numbers = #tpu.dot_dimension_numbers<[1], [0], [0], [1], [0, 0, 1, 1], [], []>} : vector<256x32xbf16>, vector<32x128xbf16>, vector<256x128xf32> -> vector<256x128xf32>
    %174 = arith.addf %168, %173 : vector<256x128xf32>
    %175 = vector.extract_strided_slice %156 {offsets = [1, 0, 0], sizes = [16, 16, 32], strides = [1, 1, 1]} : vector<18x18x32xbf16> to vector<16x16x32xbf16>
    %176 = vector.shape_cast %175 : vector<16x16x32xbf16> to vector<256x32xbf16>
    %c3_105 = arith.constant 3 : index
    %c0_106 = arith.constant 0 : index
    %c0_107 = arith.constant 0 : index
    %177 = vector.load %arg6[%c3_105, %c0_106, %c0_107] : memref<9x32x128xbf16, #tpu.memory_space<vmem>>, vector<1x32x128xbf16>
    %178 = vector.shape_cast %177 : vector<1x32x128xbf16> to vector<32x128xbf16>
    %cst_108 = arith.constant dense<0.000000e+00> : vector<256x128xf32>
    %179 = tpu.matmul %176, %178, %cst_108 {dimension_numbers = #tpu.dot_dimension_numbers<[1], [0], [0], [1], [0, 0, 1, 1], [], []>} : vector<256x32xbf16>, vector<32x128xbf16>, vector<256x128xf32> -> vector<256x128xf32>
    %180 = arith.addf %174, %179 : vector<256x128xf32>
    %181 = vector.extract_strided_slice %156 {offsets = [1, 1, 0], sizes = [16, 16, 32], strides = [1, 1, 1]} : vector<18x18x32xbf16> to vector<16x16x32xbf16>
    %182 = vector.shape_cast %181 : vector<16x16x32xbf16> to vector<256x32xbf16>
    %c4_109 = arith.constant 4 : index
    %c0_110 = arith.constant 0 : index
    %c0_111 = arith.constant 0 : index
    %183 = vector.load %arg6[%c4_109, %c0_110, %c0_111] : memref<9x32x128xbf16, #tpu.memory_space<vmem>>, vector<1x32x128xbf16>
    %184 = vector.shape_cast %183 : vector<1x32x128xbf16> to vector<32x128xbf16>
    %cst_112 = arith.constant dense<0.000000e+00> : vector<256x128xf32>
    %185 = tpu.matmul %182, %184, %cst_112 {dimension_numbers = #tpu.dot_dimension_numbers<[1], [0], [0], [1], [0, 0, 1, 1], [], []>} : vector<256x32xbf16>, vector<32x128xbf16>, vector<256x128xf32> -> vector<256x128xf32>
    %186 = arith.addf %180, %185 : vector<256x128xf32>
    %187 = vector.extract_strided_slice %156 {offsets = [1, 2, 0], sizes = [16, 16, 32], strides = [1, 1, 1]} : vector<18x18x32xbf16> to vector<16x16x32xbf16>
    %188 = vector.shape_cast %187 : vector<16x16x32xbf16> to vector<256x32xbf16>
    %c5_113 = arith.constant 5 : index
    %c0_114 = arith.constant 0 : index
    %c0_115 = arith.constant 0 : index
    %189 = vector.load %arg6[%c5_113, %c0_114, %c0_115] : memref<9x32x128xbf16, #tpu.memory_space<vmem>>, vector<1x32x128xbf16>
    %190 = vector.shape_cast %189 : vector<1x32x128xbf16> to vector<32x128xbf16>
    %cst_116 = arith.constant dense<0.000000e+00> : vector<256x128xf32>
    %191 = tpu.matmul %188, %190, %cst_116 {dimension_numbers = #tpu.dot_dimension_numbers<[1], [0], [0], [1], [0, 0, 1, 1], [], []>} : vector<256x32xbf16>, vector<32x128xbf16>, vector<256x128xf32> -> vector<256x128xf32>
    %192 = arith.addf %186, %191 : vector<256x128xf32>
    %193 = vector.extract_strided_slice %156 {offsets = [2, 0, 0], sizes = [16, 16, 32], strides = [1, 1, 1]} : vector<18x18x32xbf16> to vector<16x16x32xbf16>
    %194 = vector.shape_cast %193 : vector<16x16x32xbf16> to vector<256x32xbf16>
    %c6_117 = arith.constant 6 : index
    %c0_118 = arith.constant 0 : index
    %c0_119 = arith.constant 0 : index
    %195 = vector.load %arg6[%c6_117, %c0_118, %c0_119] : memref<9x32x128xbf16, #tpu.memory_space<vmem>>, vector<1x32x128xbf16>
    %196 = vector.shape_cast %195 : vector<1x32x128xbf16> to vector<32x128xbf16>
    %cst_120 = arith.constant dense<0.000000e+00> : vector<256x128xf32>
    %197 = tpu.matmul %194, %196, %cst_120 {dimension_numbers = #tpu.dot_dimension_numbers<[1], [0], [0], [1], [0, 0, 1, 1], [], []>} : vector<256x32xbf16>, vector<32x128xbf16>, vector<256x128xf32> -> vector<256x128xf32>
    %198 = arith.addf %192, %197 : vector<256x128xf32>
    %199 = vector.extract_strided_slice %156 {offsets = [2, 1, 0], sizes = [16, 16, 32], strides = [1, 1, 1]} : vector<18x18x32xbf16> to vector<16x16x32xbf16>
    %200 = vector.shape_cast %199 : vector<16x16x32xbf16> to vector<256x32xbf16>
    %c7_121 = arith.constant 7 : index
    %c0_122 = arith.constant 0 : index
    %c0_123 = arith.constant 0 : index
    %201 = vector.load %arg6[%c7_121, %c0_122, %c0_123] : memref<9x32x128xbf16, #tpu.memory_space<vmem>>, vector<1x32x128xbf16>
    %202 = vector.shape_cast %201 : vector<1x32x128xbf16> to vector<32x128xbf16>
    %cst_124 = arith.constant dense<0.000000e+00> : vector<256x128xf32>
    %203 = tpu.matmul %200, %202, %cst_124 {dimension_numbers = #tpu.dot_dimension_numbers<[1], [0], [0], [1], [0, 0, 1, 1], [], []>} : vector<256x32xbf16>, vector<32x128xbf16>, vector<256x128xf32> -> vector<256x128xf32>
    %204 = arith.addf %198, %203 : vector<256x128xf32>
    %205 = vector.extract_strided_slice %156 {offsets = [2, 2, 0], sizes = [16, 16, 32], strides = [1, 1, 1]} : vector<18x18x32xbf16> to vector<16x16x32xbf16>
    %206 = vector.shape_cast %205 : vector<16x16x32xbf16> to vector<256x32xbf16>
    %c8_125 = arith.constant 8 : index
    %c0_126 = arith.constant 0 : index
    %c0_127 = arith.constant 0 : index
    %207 = vector.load %arg6[%c8_125, %c0_126, %c0_127] : memref<9x32x128xbf16, #tpu.memory_space<vmem>>, vector<1x32x128xbf16>
    %208 = vector.shape_cast %207 : vector<1x32x128xbf16> to vector<32x128xbf16>
    %cst_128 = arith.constant dense<0.000000e+00> : vector<256x128xf32>
    %209 = tpu.matmul %206, %208, %cst_128 {dimension_numbers = #tpu.dot_dimension_numbers<[1], [0], [0], [1], [0, 0, 1, 1], [], []>} : vector<256x32xbf16>, vector<32x128xbf16>, vector<256x128xf32> -> vector<256x128xf32>
    %210 = arith.addf %204, %209 : vector<256x128xf32>
    %211 = vector.extract_strided_slice %210 {offsets = [0, 0], sizes = [256, 32], strides = [1, 1]} : vector<256x128xf32> to vector<256x32xf32>
    %212 = arith.negf %211 : vector<256x32xf32>
    %213 = math.exp %212 : vector<256x32xf32>
    %cst_129 = arith.constant 1.000000e+00 : f32
    %214 = vector.broadcast %cst_129 : f32 to vector<256x32xf32>
    %215 = arith.addf %214, %213 : vector<256x32xf32>
    %216 = arith.divf %214, %215 : vector<256x32xf32>
    %217 = vector.extract_strided_slice %210 {offsets = [0, 32], sizes = [256, 32], strides = [1, 1]} : vector<256x128xf32> to vector<256x32xf32>
    %218 = arith.negf %217 : vector<256x32xf32>
    %219 = math.exp %218 : vector<256x32xf32>
    %cst_130 = arith.constant 1.000000e+00 : f32
    %220 = vector.broadcast %cst_130 : f32 to vector<256x32xf32>
    %221 = arith.addf %220, %219 : vector<256x32xf32>
    %222 = arith.divf %220, %221 : vector<256x32xf32>
    %223 = vector.extract_strided_slice %210 {offsets = [0, 64], sizes = [256, 32], strides = [1, 1]} : vector<256x128xf32> to vector<256x32xf32>
    %224 = arith.negf %223 : vector<256x32xf32>
    %225 = math.exp %224 : vector<256x32xf32>
    %cst_131 = arith.constant 1.000000e+00 : f32
    %226 = vector.broadcast %cst_131 : f32 to vector<256x32xf32>
    %227 = arith.addf %226, %225 : vector<256x32xf32>
    %228 = arith.divf %226, %227 : vector<256x32xf32>
    %229 = vector.extract_strided_slice %210 {offsets = [0, 96], sizes = [256, 32], strides = [1, 1]} : vector<256x128xf32> to vector<256x32xf32>
    %230 = math.tanh %229 : vector<256x32xf32>
    %c0_132 = arith.constant 0 : index
    %c0_133 = arith.constant 0 : index
    %231 = vector.load %arg14[%c0_132, %c0_133] : memref<256x32xf32, #tpu.memory_space<vmem>>, vector<256x32xf32>
    %232 = arith.mulf %222, %231 : vector<256x32xf32>
    %233 = arith.mulf %216, %230 : vector<256x32xf32>
    %234 = arith.addf %232, %233 : vector<256x32xf32>
    %235 = math.tanh %234 : vector<256x32xf32>
    %236 = arith.mulf %228, %235 : vector<256x32xf32>
    %c0_134 = arith.constant 0 : index
    %c0_135 = arith.constant 0 : index
    %237 = vector.load %arg14[%c0_134, %c0_135] : memref<256x32xf32, #tpu.memory_space<vmem>>, vector<256x32xf32>
    tpu.vector_store %arg14[%c0_134, %c0_135], %234 {strides = array<i32>} : memref<256x32xf32, #tpu.memory_space<vmem>>, vector<256x32xf32>,
    %238 = vector.shape_cast %236 : vector<256x32xf32> to vector<16x16x32xf32>
    %c1_136 = arith.constant 1 : index
    %c1_137 = arith.constant 1 : index
    %c0_138 = arith.constant 0 : index
    %239 = vector.load %arg13[%c1_136, %c1_137, %c0_138] : memref<18x18x32xf32, #tpu.memory_space<vmem>>, vector<16x16x32xf32>
    tpu.vector_store %arg13[%c1_136, %c1_137, %c0_138], %238 {strides = array<i32>} : memref<18x18x32xf32, #tpu.memory_space<vmem>>, vector<16x16x32xf32>,
    %c0_139 = arith.constant 0 : index
    %c0_140 = arith.constant 0 : index
    %c0_141 = arith.constant 0 : index
    %c0_142 = arith.constant 0 : index
    %240 = vector.load %arg9[%c0_139, %c0_140, %c0_141, %c0_142] : memref<1x1x256x32xf32, #tpu.memory_space<vmem>>, vector<1x1x256x32xf32>
    %241 = vector.shape_cast %240 : vector<1x1x256x32xf32> to vector<256x32xf32>
    %242 = vector.shape_cast %236 : vector<256x32xf32> to vector<1x1x256x32xf32>
    tpu.vector_store %arg9[%c0_139, %c0_140, %c0_141, %c0_142], %242 {strides = array<i32>} : memref<1x1x256x32xf32, #tpu.memory_space<vmem>>, vector<1x1x256x32xf32>,
    %c7_i32 = arith.constant 7 : i32
    %243 = arith.cmpi eq, %arg1, %c7_i32 : i32
    %244 = arith.extui %243 : i1 to i32
    %c0_i32_143 = arith.constant 0 : i32
    %245 = arith.cmpi ne, %244, %c0_i32_143 : i32
    scf.if %245 {
      %c0_144 = arith.constant 0 : index
      %c0_145 = arith.constant 0 : index
      %c0_146 = arith.constant 0 : index
      %246 = vector.load %arg10[%c0_144, %c0_145, %c0_146] : memref<1x256x32xf32, #tpu.memory_space<vmem>>, vector<1x256x32xf32>
      %247 = vector.shape_cast %246 : vector<1x256x32xf32> to vector<256x32xf32>
      %248 = vector.shape_cast %234 : vector<256x32xf32> to vector<1x256x32xf32>
      tpu.vector_store %arg10[%c0_144, %c0_145, %c0_146], %248 {strides = array<i32>} : memref<1x256x32xf32, #tpu.memory_space<vmem>>, vector<1x256x32xf32>,
    } else {
    }
    return
  }
  func.func @transform_0(%arg0: i32, %arg1: i32) -> (i32, i32, i32, i32) {
    %c0_i32 = arith.constant 0 : i32
    %c0_i32_0 = arith.constant 0 : i32
    %c0_i32_1 = arith.constant 0 : i32
    return %arg0, %arg1, %c0_i32, %c0_i32_0 : i32, i32, i32, i32
  }
  func.func @transform_1(%arg0: i32, %arg1: i32) -> (i32, i32) {
    %c0_i32 = arith.constant 0 : i32
    %c0_i32_0 = arith.constant 0 : i32
    %c0_i32_1 = arith.constant 0 : i32
    return %c0_i32, %c0_i32_0 : i32, i32
  }
  func.func @transform_2(%arg0: i32, %arg1: i32) -> (i32, i32, i32) {
    %c0_i32 = arith.constant 0 : i32
    %c0_i32_0 = arith.constant 0 : i32
    %c0_i32_1 = arith.constant 0 : i32
    %c0_i32_2 = arith.constant 0 : i32
    return %c0_i32, %c0_i32_0, %c0_i32_1 : i32, i32, i32
  }
  func.func @transform_3(%arg0: i32, %arg1: i32) -> (i32, i32, i32) {
    %c0_i32 = arith.constant 0 : i32
    %c0_i32_0 = arith.constant 0 : i32
    %c0_i32_1 = arith.constant 0 : i32
    %c0_i32_2 = arith.constant 0 : i32
    return %c0_i32, %c0_i32_0, %c0_i32_1 : i32, i32, i32
  }
  func.func @transform_4(%arg0: i32, %arg1: i32) -> (i32, i32, i32) {
    %c0_i32 = arith.constant 0 : i32
    %c0_i32_0 = arith.constant 0 : i32
    %c0_i32_1 = arith.constant 0 : i32
    %c0_i32_2 = arith.constant 0 : i32
    return %c0_i32, %c0_i32_0, %c0_i32_1 : i32, i32, i32
  }
  func.func @transform_5(%arg0: i32, %arg1: i32) -> (i32, i32) {
    %c0_i32 = arith.constant 0 : i32
    %c0_i32_0 = arith.constant 0 : i32
    %c0_i32_1 = arith.constant 0 : i32
    return %c0_i32, %c0_i32_0 : i32, i32
  }
  func.func @transform_6(%arg0: i32, %arg1: i32) -> (i32, i32) {
    %c0_i32 = arith.constant 0 : i32
    %c0_i32_0 = arith.constant 0 : i32
    %c0_i32_1 = arith.constant 0 : i32
    return %c0_i32, %c0_i32_0 : i32, i32
  }
  func.func @transform_7(%arg0: i32, %arg1: i32) -> (i32, i32, i32, i32) {
    %c0_i32 = arith.constant 0 : i32
    %c0_i32_0 = arith.constant 0 : i32
    %c0_i32_1 = arith.constant 0 : i32
    return %arg0, %arg1, %c0_i32, %c0_i32_0 : i32, i32, i32, i32
  }
  func.func @transform_8(%arg0: i32, %arg1: i32) -> (i32, i32, i32) {
    %c0_i32 = arith.constant 0 : i32
    %c0_i32_0 = arith.constant 0 : i32
    %c0_i32_1 = arith.constant 0 : i32
    return %arg0, %c0_i32, %c0_i32_0 : i32, i32, i32
  }
}

</mosaic_0001>

<llo_original>
// kernel: conv_lstm_forward.1
$region0: #{conv_lstm_forward.1}
  #allocation0 [shape = 'u32[]', space=smem, size = 0x4, offset = 0x4, fixed_abs, tag = 'smem constant byte address 0x4 - core index']
  #allocation1 [shape = 'u32[144,128]{1,0:T(1,128)}', space=vmem, size = 0x12000, scoped, tag = 'internal scratch']
  #allocation2 [shape = 'f32[18,18,32]{2,1,0:T(8,128)}', space=vmem, size = 0x36000, scoped, tag = 'scratch operand']
  #allocation3 [shape = 'f32[256,32]{1,0:T(8,128)}', space=vmem, size = 0x20000, scoped, tag = 'scratch operand']
  #allocation4 [shape = 'f32[18,18,32]{2,1,0:T(8,128)}', space=vmem, size = 0x36000, scoped, tag = 'scratch operand']
  #allocation5 [shape = 'f32[256,32]{1,0:T(8,128)}', space=vmem, size = 0x20000, scoped, tag = 'scratch operand']
  %s0 = inlined_call_operand.vmem [shape: bf16[2,8,256,36], index: 0, kind: input, shape index: {}]
  %s1 = inlined_call_operand.vmem [shape: bf16[36,128], index: 1, kind: input, shape index: {}]
  %s2 = inlined_call_operand.vmem [shape: bf16[9,32,128], index: 2, kind: input, shape index: {}]
  %s3 = inlined_call_operand.vmem [shape: bf16[9,32,128], index: 3, kind: input, shape index: {}]
  %s4 = inlined_call_operand.vmem [shape: bf16[9,32,128], index: 4, kind: input, shape index: {}]
  %s5 = inlined_call_operand.vmem [shape: f32[1,128], index: 5, kind: input, shape index: {}]
  %s6 = inlined_call_operand.vmem [shape: f32[1,128], index: 6, kind: input, shape index: {}]
  %s7 = inlined_call_operand.vmem [shape: f32[2,8,256,32], index: 7, kind: output, shape index: {0}]
  %s8 = inlined_call_operand.hbm [shape: f32[2,256,32], index: 8, kind: output, shape index: {1}]
  %9 = xla_tuple %s7, %s8
  %s10 = sld [smem:[#allocation0]]
  $region77: #{conv_lstm_forward.1} parent=0
    _
  %s12 = ssub.s32 1, %s10
  %s13 = scalar_select 0, %s12, %s10
  $region1: #{conv_lstm_forward.1} parent=0
    #allocation6 [shape = 'u8[262144]{0}', space=vmem, size = 0x40000, scoped, tag = 'output window, operand 1']
    #allocation7 [shape = 's32[2]{0}', space=sflag, size = 0x8, scoped, tag = 'scoped memory for conv_lstm_forward.1']
    %14 = vsyncpa [#allocation7], 0
    %s15 = scalar_lea.sflag [#allocation7], 1
    %16 = vsyncpa %s15, 0
    loop: start=0, step=1, limit=18
    $region2: #{conv_lstm_forward.1} parent=1 // loop_pre_header
      _
    $region3: #{conv_lstm_forward.1} parent=1 // loop_header
      %s18 = sphi 0, %s22
      %p19 = scmp.ge.s32.totalorder %s18, 18
      %s25 = sphi 0, %s37
      %s26 = sphi 0, %s33
      %s27 = sphi 0, %s25
      %s28 = sphi 0, %s26
      %s29 = sphi 0, %s27
      %s30 = sphi 0, %s28
      %s42 = sphi 0, %s44
      %s45 = sphi 0, %s42
      %s46 = sphi 0, %s45
      %s62 = sphi 0, %s46
      %s66 = sphi 0, %s66
      %s68 = sphi 0, %s66
      %s69 = sphi 0, %s68
      %s83 = sphi 0, %s69
      %s87 = sphi 0, %s87
      %s89 = sphi 0, %s87
      %s90 = sphi 0, %s89
      %s104 = sphi 0, %s90
      %s108 = sphi 0, %s108
      %s110 = sphi 0, %s108
      %s111 = sphi 0, %s110
      %s125 = sphi 0, %s111
      %s129 = sphi 0, %s129
      %s131 = sphi 0, %s129
      %s132 = sphi 0, %s131
      %s146 = sphi 0, %s132
      %s150 = sphi 0, %s150
      %s152 = sphi 0, %s150
      %s153 = sphi 0, %s152
      %s167 = sphi 0, %s153
      %s171 = sphi 0, %s171
      %s173 = sphi 0, %s171
      %s174 = sphi 0, %s173
      %s188 = sphi 0, %s174
      %s196 = sphi 0, %s198
      %s199 = sphi 0, %s196
      %s200 = sphi 0, %s199
      %s216 = sphi 0, %s200
      %s222 = sphi 0, %s224
      %s225 = sphi 0, %s222
      %s226 = sphi 0, %s225
      %s242 = sphi 0, %s226
    $region4: #{conv_lstm_forward.1} parent=1 // loop_header_branch
      %21 = sbr.rel (%p19) target = $region8
    $region5: #{conv_lstm_forward.1} parent=1 // loop_body
      %s23 = ssub.s32 %s18, 1
      %s24 = ssub.s32 %s18, 2
      %s31 = sadd.s32 1, %s26
      %p32 = scmp.ge.s32.totalorder %s31, 8
      %s33 = scalar_select %p32, 0, %s31
      %s34 = sadd.s32 1, %s25
      %s35 = scalar_select %p32, %s34, %s25
      %p36 = scmp.ge.s32.totalorder %s35, 2
      %s37 = scalar_select %p36, 0, %s35
      %s38 = ssub.s32 %s25, %s37
      %s39 = ssub.s32 %s26, %s33
      %s40 = sor.u32 %s38, %s39
      %p41 = scmp.eq.s32.totalorder %s40, 0
      %s43 = sadd.s32 %s42, 1
      %s44 = scalar_select %p41, %s42, %s43
      %p47 = pneg %p41
      %p48 = scmp.eq.s32.totalorder %s18, 15
      %p49 = por %p47, %p48
      %p50 = scmp.ne.s32.totalorder %s42, %s45
      %p51 = scmp.eq.s32.totalorder %s18, 0
      %p52 = por %p50, %p51
      %p53 = scmp.ne.s32.totalorder %s42, %s45
      %p54 = scmp.eq.s32.totalorder %s23, 15
      %p55 = por %p53, %p54
      %p56 = scmp.ne.s32.totalorder %s45, %s46
      %p57 = scmp.eq.s32.totalorder %s23, 0
      %p58 = por %p56, %p57
      %p59 = scmp.ne.s32.totalorder %s45, %s46
      %p60 = scmp.eq.s32.totalorder %s24, 15
      %p61 = por %p59, %p60
      %p63 = scmp.ne.s32.totalorder %s46, %s62
      %p64 = scmp.eq.s32.totalorder %s24, 0
      %p65 = por %p63, %p64
      %s67 = sadd.s32 %s66, 1
      %p70 = scmp.eq.s32.totalorder %s18, 15
      %p71 = scmp.ne.s32.totalorder %s66, %s68
      %p72 = scmp.eq.s32.totalorder %s18, 0
      %p73 = por %p71, %p72
      %p74 = scmp.ne.s32.totalorder %s66, %s68
      %p75 = scmp.eq.s32.totalorder %s23, 15
      %p76 = por %p74, %p75
      %p77 = scmp.ne.s32.totalorder %s68, %s69
      %p78 = scmp.eq.s32.totalorder %s23, 0
      %p79 = por %p77, %p78
      %p80 = scmp.ne.s32.totalorder %s68, %s69
      %p81 = scmp.eq.s32.totalorder %s24, 15
      %p82 = por %p80, %p81
      %p84 = scmp.ne.s32.totalorder %s69, %s83
      %p85 = scmp.eq.s32.totalorder %s24, 0
      %p86 = por %p84, %p85
      %s88 = sadd.s32 %s87, 1
      %p91 = scmp.eq.s32.totalorder %s18, 15
      %p92 = scmp.ne.s32.totalorder %s87, %s89
      %p93 = scmp.eq.s32.totalorder %s18, 0
      %p94 = por %p92, %p93
      %p95 = scmp.ne.s32.totalorder %s87, %s89
      %p96 = scmp.eq.s32.totalorder %s23, 15
      %p97 = por %p95, %p96
      %p98 = scmp.ne.s32.totalorder %s89, %s90
      %p99 = scmp.eq.s32.totalorder %s23, 0
      %p100 = por %p98, %p99
      %p101 = scmp.ne.s32.totalorder %s89, %s90
      %p102 = scmp.eq.s32.totalorder %s24, 15
      %p103 = por %p101, %p102
      %p105 = scmp.ne.s32.totalorder %s90, %s104
      %p106 = scmp.eq.s32.totalorder %s24, 0
      %p107 = por %p105, %p106
      %s109 = sadd.s32 %s108, 1
      %p112 = scmp.eq.s32.totalorder %s18, 15
      %p113 = scmp.ne.s32.totalorder %s108, %s110
      %p114 = scmp.eq.s32.totalorder %s18, 0
      %p115 = por %p113, %p114
      %p116 = scmp.ne.s32.totalorder %s108, %s110
      %p117 = scmp.eq.s32.totalorder %s23, 15
      %p118 = por %p116, %p117
      %p119 = scmp.ne.s32.totalorder %s110, %s111
      %p120 = scmp.eq.s32.totalorder %s23, 0
      %p121 = por %p119, %p120
      %p122 = scmp.ne.s32.totalorder %s110, %s111
      %p123 = scmp.eq.s32.totalorder %s24, 15
      %p124 = por %p122, %p123
      %p126 = scmp.ne.s32.totalorder %s111, %s125
      %p127 = scmp.eq.s32.totalorder %s24, 0
      %p128 = por %p126, %p127
      %s130 = sadd.s32 %s129, 1
      %p133 = scmp.eq.s32.totalorder %s18, 15
      %p134 = scmp.ne.s32.totalorder %s129, %s131
      %p135 = scmp.eq.s32.totalorder %s18, 0
      %p136 = por %p134, %p135
      %p137 = scmp.ne.s32.totalorder %s129, %s131
      %p138 = scmp.eq.s32.totalorder %s23, 15
      %p139 = por %p137, %p138
      %p140 = scmp.ne.s32.totalorder %s131, %s132
      %p141 = scmp.eq.s32.totalorder %s23, 0
      %p142 = por %p140, %p141
      %p143 = scmp.ne.s32.totalorder %s131, %s132
      %p144 = scmp.eq.s32.totalorder %s24, 15
      %p145 = por %p143, %p144
      %p147 = scmp.ne.s32.totalorder %s132, %s146
      %p148 = scmp.eq.s32.totalorder %s24, 0
      %p149 = por %p147, %p148
      %s151 = sadd.s32 %s150, 1
      %p154 = scmp.eq.s32.totalorder %s18, 15
      %p155 = scmp.ne.s32.totalorder %s150, %s152
      %p156 = scmp.eq.s32.totalorder %s18, 0
      %p157 = por %p155, %p156
      %p158 = scmp.ne.s32.totalorder %s150, %s152
      %p159 = scmp.eq.s32.totalorder %s23, 15
      %p160 = por %p158, %p159
      %p161 = scmp.ne.s32.totalorder %s152, %s153
      %p162 = scmp.eq.s32.totalorder %s23, 0
      %p163 = por %p161, %p162
      %p164 = scmp.ne.s32.totalorder %s152, %s153
      %p165 = scmp.eq.s32.totalorder %s24, 15
      %p166 = por %p164, %p165
      %p168 = scmp.ne.s32.totalorder %s153, %s167
      %p169 = scmp.eq.s32.totalorder %s24, 0
      %p170 = por %p168, %p169
      %s172 = sadd.s32 %s171, 1
      %p175 = scmp.eq.s32.totalorder %s18, 15
      %p176 = scmp.ne.s32.totalorder %s171, %s173
      %p177 = scmp.eq.s32.totalorder %s18, 0
      %p178 = por %p176, %p177
      %p179 = scmp.ne.s32.totalorder %s171, %s173
      %p180 = scmp.eq.s32.totalorder %s23, 15
      %p181 = por %p179, %p180
      %p182 = scmp.ne.s32.totalorder %s173, %s174
      %p183 = scmp.eq.s32.totalorder %s23, 0
      %p184 = por %p182, %p183
      %p185 = scmp.ne.s32.totalorder %s173, %s174
      %p186 = scmp.eq.s32.totalorder %s24, 15
      %p187 = por %p185, %p186
      %p189 = scmp.ne.s32.totalorder %s174, %s188
      %p190 = scmp.eq.s32.totalorder %s24, 0
      %p191 = por %p189, %p190
      %s192 = ssub.s32 %s25, %s37
      %s193 = ssub.s32 %s26, %s33
      %s194 = sor.u32 %s192, %s193
      %p195 = scmp.eq.s32.totalorder %s194, 0
      %s197 = sadd.s32 %s196, 1
      %s198 = scalar_select %p195, %s196, %s197
      %p201 = pneg %p195
      %p202 = scmp.eq.s32.totalorder %s18, 15
      %p203 = por %p201, %p202
      %p204 = scmp.ne.s32.totalorder %s196, %s199
      %p205 = scmp.eq.s32.totalorder %s18, 0
      %p206 = por %p204, %p205
      %p207 = scmp.ne.s32.totalorder %s196, %s199
      %p208 = scmp.eq.s32.totalorder %s23, 15
      %p209 = por %p207, %p208
      %p210 = scmp.ne.s32.totalorder %s199, %s200
      %p211 = scmp.eq.s32.totalorder %s23, 0
      %p212 = por %p210, %p211
      %p213 = scmp.ne.s32.totalorder %s199, %s200
      %p214 = scmp.eq.s32.totalorder %s24, 15
      %p215 = por %p213, %p214
      %p217 = scmp.ne.s32.totalorder %s200, %s216
      %p218 = scmp.eq.s32.totalorder %s24, 0
      %p219 = por %p217, %p218
      %s220 = ssub.s32 %s25, %s37
      %p221 = scmp.eq.s32.totalorder %s220, 0
      %s223 = sadd.s32 %s222, 1
      %s224 = scalar_select %p221, %s222, %s223
      %p227 = pneg %p221
      %p228 = scmp.eq.s32.totalorder %s18, 15
      %p229 = por %p227, %p228
      %p230 = scmp.ne.s32.totalorder %s222, %s225
      %p231 = scmp.eq.s32.totalorder %s18, 0
      %p232 = por %p230, %p231
      %p233 = scmp.ne.s32.totalorder %s222, %s225
      %p234 = scmp.eq.s32.totalorder %s23, 15
      %p235 = por %p233, %p234
      %p236 = scmp.ne.s32.totalorder %s225, %s226
      %p237 = scmp.eq.s32.totalorder %s23, 0
      %p238 = por %p236, %p237
      %p239 = scmp.ne.s32.totalorder %s225, %s226
      %p240 = scmp.eq.s32.totalorder %s24, 15
      %p241 = por %p239, %p240
      %p243 = scmp.ne.s32.totalorder %s226, %s242
      %p244 = scmp.eq.s32.totalorder %s24, 0
      %p245 = por %p243, %p244
      %p246 = scmp.le.s32.totalorder 1, %s18
      %p247 = scmp.lt.s32.totalorder %s18, 17
      %p248 = pnand %p246, %p247
      %p249 = pneg %p248
      // Predicated region
      $region9: #{conv_lstm_forward.1} parent=5 // pred_check
        _
      $region10: #{conv_lstm_forward.1} parent=5 // pred_check_branch
        %251 = sbr.rel (%p248) target = $region12
      $region11: #{conv_lstm_forward.1} parent=5 // pred_region
        %s252 = ssub.s32 %s18, 1
        // Predicated region
        $region13: #{conv_lstm_forward.1} parent=11 // pred_check
          %p253 = pneg %p79
        $region14: #{conv_lstm_forward.1} parent=11 // pred_check_branch
          %255 = sbr.rel (%p253) target = $region16
        $region15: #{conv_lstm_forward.1} parent=11 // pred_region
          _
        $region16: #{conv_lstm_forward.1} parent=11 // pred_fallthru
          _
        // Predicated region
        $region17: #{conv_lstm_forward.1} parent=11 // pred_check
          %p256 = pneg %p100
        $region18: #{conv_lstm_forward.1} parent=11 // pred_check_branch
          %258 = sbr.rel (%p256) target = $region20
        $region19: #{conv_lstm_forward.1} parent=11 // pred_region
          _
        $region20: #{conv_lstm_forward.1} parent=11 // pred_fallthru
          _
        // Predicated region
        $region21: #{conv_lstm_forward.1} parent=11 // pred_check
          %p259 = pneg %p121
        $region22: #{conv_lstm_forward.1} parent=11 // pred_check_branch
          %261 = sbr.rel (%p259) target = $region24
        $region23: #{conv_lstm_forward.1} parent=11 // pred_region
          _
        $region24: #{conv_lstm_forward.1} parent=11 // pred_fallthru
          _
        // Predicated region
        $region25: #{conv_lstm_forward.1} parent=11 // pred_check
          %p262 = pneg %p142
        $region26: #{conv_lstm_forward.1} parent=11 // pred_check_branch
          %264 = sbr.rel (%p262) target = $region28
        $region27: #{conv_lstm_forward.1} parent=11 // pred_region
          _
        $region28: #{conv_lstm_forward.1} parent=11 // pred_fallthru
          _
        // Predicated region
        $region29: #{conv_lstm_forward.1} parent=11 // pred_check
          %p265 = pneg %p163
        $region30: #{conv_lstm_forward.1} parent=11 // pred_check_branch
          %267 = sbr.rel (%p265) target = $region32
        $region31: #{conv_lstm_forward.1} parent=11 // pred_region
          _
        $region32: #{conv_lstm_forward.1} parent=11 // pred_fallthru
          _
        // Predicated region
        $region33: #{conv_lstm_forward.1} parent=11 // pred_check
          %p268 = pneg %p184
        $region34: #{conv_lstm_forward.1} parent=11 // pred_check_branch
          %270 = sbr.rel (%p268) target = $region36
        $region35: #{conv_lstm_forward.1} parent=11 // pred_region
          _
        $region36: #{conv_lstm_forward.1} parent=11 // pred_fallthru
          _
      $region12: #{conv_lstm_forward.1} parent=5 // pred_fallthru
        _
      %p271 = scmp.lt.s32.totalorder %s18, 16
      // Predicated region
      $region37: #{conv_lstm_forward.1} parent=5 // pred_check
        %p272 = pneg %p271
      $region38: #{conv_lstm_forward.1} parent=5 // pred_check_branch
        %274 = sbr.rel (%p272) target = $region40
      $region39: #{conv_lstm_forward.1} parent=5 // pred_region
        // Predicated region
        $region41: #{conv_lstm_forward.1} parent=39 // pred_check
          %p275 = pneg %p52
        $region42: #{conv_lstm_forward.1} parent=39 // pred_check_branch
          %277 = sbr.rel (%p275) target = $region44
        $region43: #{conv_lstm_forward.1} parent=39 // pred_region
          %p278 = scmp.lt.s32.totalorder %s25, 1
          %s279 = scalar_select %p278, %s25, 1
          %p280 = scmp.lt.s32.totalorder %s26, 7
          %s281 = scalar_select %p280, %s26, 7
          %s282 = smul.addr %s281, 32
          %s283 = smul.addr %s279, 256
          %s284 = sadd.s32 %s282, %s283
          %s285 = smul.addr %s284, 4
          %s286 = scalar_lea.vmem %s0, %s285
        $region44: #{conv_lstm_forward.1} parent=39 // pred_fallthru
          _
      $region40: #{conv_lstm_forward.1} parent=5 // pred_fallthru
        _
      %p287 = scmp.le.s32.totalorder 1, %s18
      %p288 = scmp.lt.s32.totalorder %s18, 17
      %p289 = pnand %p287, %p288
      %p290 = pneg %p289
      // Predicated region
      $region45: #{conv_lstm_forward.1} parent=5 // pred_check
        _
      $region46: #{conv_lstm_forward.1} parent=5 // pred_check_branch
        %292 = sbr.rel (%p289) target = $region48
      $region47: #{conv_lstm_forward.1} parent=5 // pred_region
        %s293 = ssub.s32 %s18, 1
        %p294 = scmp.lt.s32.totalorder %s27, 1
        %s295 = scalar_select %p294, %s27, 1
        %p296 = scmp.lt.s32.totalorder %s28, 7
        %s297 = scalar_select %p296, %s28, 7
        %s298 = smul.addr %s297, 32
        %s299 = smul.addr %s295, 256
        %s300 = sadd.s32 %s298, %s299
        %s301 = smul.addr %s300, 4
        %s302 = scalar_lea.vmem %s0, %s301
        %p303 = pneg %p58
        %p304 = pneg %p55
        %p305 = pneg %p79
        %p306 = pneg %p76
        %p307 = pneg %p100
        %p308 = pneg %p97
        %p309 = pneg %p121
        %p310 = pneg %p118
        %p311 = pneg %p142
        %p312 = pneg %p139
        %p313 = pneg %p163
        %p314 = pneg %p160
        %p315 = pneg %p184
        %p316 = pneg %p181
        %p317 = pneg %p212
        %p318 = pneg %p209
        %p319 = scmp.lt.s32.totalorder %s27, 1
        %s320 = scalar_select %p319, %s27, 1
        %p321 = scmp.lt.s32.totalorder %s28, 7
        %s322 = scalar_select %p321, %s28, 7
        %s323 = smul.addr %s322, 32
        %s324 = smul.addr %s320, 256
        %s325 = sadd.s32 %s323, %s324
        %s326 = smul.addr %s325, 8
        %s327 = scalar_lea.vmem %s7, %s326
        %p328 = pneg %p238
        %p329 = pneg %p235
        %s330 = sand.u32 %s225, 1
        %s331 = scalar_lea.sflag [#allocation7], %s330
        %s332 = sand.u32 %s225, 1
        %s333 = smul.addr %s332, 256
        %s334 = scalar_lea.vmem [#allocation6], %s333
        %p335 = scmp.lt.s32.totalorder %s27, 1
        %s336 = scalar_select %p335, %s27, 1
        %p337 = scmp.lt.s32.totalorder %s28, 7
        %s338 = scalar_select %p337, %s28, 7
        %s339 = smul.addr %s338, 32
        %s340 = smul.addr %s336, 256
        %s341 = sadd.s32 %s339, %s340
        %s342 = smul.addr %s341, 4
        %s343 = scalar_lea.vmem %s0, %s342
        %p344 = scmp.lt.s32.totalorder %s27, 1
        %s345 = scalar_select %p344, %s27, 1
        %p346 = scmp.lt.s32.totalorder %s28, 7
        %s347 = scalar_select %p346, %s28, 7
        %s348 = smul.addr %s347, 32
        %s349 = smul.addr %s345, 256
        %s350 = sadd.s32 %s348, %s349
        %s351 = smul.addr %s350, 8
        %s352 = scalar_lea.vmem %s7, %s351
        %p354 = scmp.eq.s32.totalorder %s28, 0
        // Predicated region
        $region49: #{conv_lstm_forward.1} parent=47 // pred_check
          %p355 = pneg %p354
        $region50: #{conv_lstm_forward.1} parent=47 // pred_check_branch
          %357 = sbr.rel (%p355) target = $region52
        $region51: #{conv_lstm_forward.1} parent=47 // pred_region
          %vm358 = vcmask 261120
          %359 = vst.msk [vmem:[#allocation2] sm:$0xff] %vm358, 0.0
          %360 = vst.msk [vmem:[#allocation2 + $0x8] sm:$0xff] %vm358, 0.0
          %vm361 = vcmask 254976
          %362 = vst.msk [vmem:[#allocation2 + $0x10] sm:$0x3] %vm361, 0.0
          %363 = vst.msk [vmem:[#allocation2 + $0x18] sm:$0xff] %vm358, 0.0
          %364 = vst.msk [vmem:[#allocation2 + $0x20] sm:$0xff] %vm358, 0.0
          %365 = vst.msk [vmem:[#allocation2 + $0x28] sm:$0x3] %vm361, 0.0
          %366 = vst.msk [vmem:[#allocation2 + $0x30] sm:$0xff] %vm358, 0.0
          %367 = vst.msk [vmem:[#allocation2 + $0x38] sm:$0xff] %vm358, 0.0
          %368 = vst.msk [vmem:[#allocation2 + $0x40] sm:$0x3] %vm361, 0.0
          %369 = vst.msk [vmem:[#allocation2 + $0x48] sm:$0xff] %vm358, 0.0
          %370 = vst.msk [vmem:[#allocation2 + $0x50] sm:$0xff] %vm358, 0.0
          %371 = vst.msk [vmem:[#allocation2 + $0x58] sm:$0x3] %vm361, 0.0
          %372 = vst.msk [vmem:[#allocation2 + $0x60] sm:$0xff] %vm358, 0.0
          %373 = vst.msk [vmem:[#allocation2 + $0x68] sm:$0xff] %vm358, 0.0
          %374 = vst.msk [vmem:[#allocation2 + $0x70] sm:$0x3] %vm361, 0.0
          %375 = vst.msk [vmem:[#allocation2 + $0x78] sm:$0xff] %vm358, 0.0
          %376 = vst.msk [vmem:[#allocation2 + $0x80] sm:$0xff] %vm358, 0.0
          %377 = vst.msk [vmem:[#allocation2 + $0x88] sm:$0x3] %vm361, 0.0
          %378 = vst.msk [vmem:[#allocation2 + $0x90] sm:$0xff] %vm358, 0.0
          %379 = vst.msk [vmem:[#allocation2 + $0x98] sm:$0xff] %vm358, 0.0
          %380 = vst.msk [vmem:[#allocation2 + $0xa0] sm:$0x3] %vm361, 0.0
          %381 = vst.msk [vmem:[#allocation2 + $0xa8] sm:$0xff] %vm358, 0.0
          %382 = vst.msk [vmem:[#allocation2 + $0xb0] sm:$0xff] %vm358, 0.0
          %383 = vst.msk [vmem:[#allocation2 + $0xb8] sm:$0x3] %vm361, 0.0
          %384 = vst.msk [vmem:[#allocation2 + $0xc0] sm:$0xff] %vm358, 0.0
          %385 = vst.msk [vmem:[#allocation2 + $0xc8] sm:$0xff] %vm358, 0.0
          %386 = vst.msk [vmem:[#allocation2 + $0xd0] sm:$0x3] %vm361, 0.0
          %387 = vst.msk [vmem:[#allocation2 + $0xd8] sm:$0xff] %vm358, 0.0
          %388 = vst.msk [vmem:[#allocation2 + $0xe0] sm:$0xff] %vm358, 0.0
          %389 = vst.msk [vmem:[#allocation2 + $0xe8] sm:$0x3] %vm361, 0.0
          %390 = vst.msk [vmem:[#allocation2 + $0xf0] sm:$0xff] %vm358, 0.0
          %391 = vst.msk [vmem:[#allocation2 + $0xf8] sm:$0xff] %vm358, 0.0
          %392 = vst.msk [vmem:[#allocation2 + $0x100] sm:$0x3] %vm361, 0.0
          %393 = vst.msk [vmem:[#allocation2 + $0x108] sm:$0xff] %vm358, 0.0
          %394 = vst.msk [vmem:[#allocation2 + $0x110] sm:$0xff] %vm358, 0.0
          %395 = vst.msk [vmem:[#allocation2 + $0x118] sm:$0x3] %vm361, 0.0
          %396 = vst.msk [vmem:[#allocation2 + $0x120] sm:$0xff] %vm358, 0.0
          %397 = vst.msk [vmem:[#allocation2 + $0x128] sm:$0xff] %vm358, 0.0
          %398 = vst.msk [vmem:[#allocation2 + $0x130] sm:$0x3] %vm361, 0.0
          %399 = vst.msk [vmem:[#allocation2 + $0x138] sm:$0xff] %vm358, 0.0
          %400 = vst.msk [vmem:[#allocation2 + $0x140] sm:$0xff] %vm358, 0.0
          %401 = vst.msk [vmem:[#allocation2 + $0x148] sm:$0x3] %vm361, 0.0
          %402 = vst.msk [vmem:[#allocation2 + $0x150] sm:$0xff] %vm358, 0.0
          %403 = vst.msk [vmem:[#allocation2 + $0x158] sm:$0xff] %vm358, 0.0
          %404 = vst.msk [vmem:[#allocation2 + $0x160] sm:$0x3] %vm361, 0.0
          %405 = vst.msk [vmem:[#allocation2 + $0x168] sm:$0xff] %vm358, 0.0
          %406 = vst.msk [vmem:[#allocation2 + $0x170] sm:$0xff] %vm358, 0.0
          %407 = vst.msk [vmem:[#allocation2 + $0x178] sm:$0x3] %vm361, 0.0
          %408 = vst.msk [vmem:[#allocation2 + $0x180] sm:$0xff] %vm358, 0.0
          %409 = vst.msk [vmem:[#allocation2 + $0x188] sm:$0xff] %vm358, 0.0
          %410 = vst.msk [vmem:[#allocation2 + $0x190] sm:$0x3] %vm361, 0.0
          %411 = vst.msk [vmem:[#allocation2 + $0x198] sm:$0xff] %vm358, 0.0
          %412 = vst.msk [vmem:[#allocation2 + $0x1a0] sm:$0xff] %vm358, 0.0
          %413 = vst.msk [vmem:[#allocation2 + $0x1a8] sm:$0x3] %vm361, 0.0
          %414 = vst.msk [vmem:[#allocation3] sm:$0xff] %vm358, 0.0
          %415 = vst.msk [vmem:[#allocation3 + $0x8] sm:$0xff] %vm358, 0.0
          %416 = vst.msk [vmem:[#allocation3 + $0x10] sm:$0xff] %vm358, 0.0
          %417 = vst.msk [vmem:[#allocation3 + $0x18] sm:$0xff] %vm358, 0.0
          %418 = vst.msk [vmem:[#allocation3 + $0x20] sm:$0xff] %vm358, 0.0
          %419 = vst.msk [vmem:[#allocation3 + $0x28] sm:$0xff] %vm358, 0.0
          %420 = vst.msk [vmem:[#allocation3 + $0x30] sm:$0xff] %vm358, 0.0
          %421 = vst.msk [vmem:[#allocation3 + $0x38] sm:$0xff] %vm358, 0.0
          %422 = vst.msk [vmem:[#allocation3 + $0x40] sm:$0xff] %vm358, 0.0
          %423 = vst.msk [vmem:[#allocation3 + $0x48] sm:$0xff] %vm358, 0.0
          %424 = vst.msk [vmem:[#allocation3 + $0x50] sm:$0xff] %vm358, 0.0
          %425 = vst.msk [vmem:[#allocation3 + $0x58] sm:$0xff] %vm358, 0.0
          %426 = vst.msk [vmem:[#allocation3 + $0x60] sm:$0xff] %vm358, 0.0
          %427 = vst.msk [vmem:[#allocation3 + $0x68] sm:$0xff] %vm358, 0.0
          %428 = vst.msk [vmem:[#allocation3 + $0x70] sm:$0xff] %vm358, 0.0
          %429 = vst.msk [vmem:[#allocation3 + $0x78] sm:$0xff] %vm358, 0.0
          %430 = vst.msk [vmem:[#allocation3 + $0x80] sm:$0xff] %vm358, 0.0
          %431 = vst.msk [vmem:[#allocation3 + $0x88] sm:$0xff] %vm358, 0.0
          %432 = vst.msk [vmem:[#allocation3 + $0x90] sm:$0xff] %vm358, 0.0
          %433 = vst.msk [vmem:[#allocation3 + $0x98] sm:$0xff] %vm358, 0.0
          %434 = vst.msk [vmem:[#allocation3 + $0xa0] sm:$0xff] %vm358, 0.0
          %435 = vst.msk [vmem:[#allocation3 + $0xa8] sm:$0xff] %vm358, 0.0
          %436 = vst.msk [vmem:[#allocation3 + $0xb0] sm:$0xff] %vm358, 0.0
          %437 = vst.msk [vmem:[#allocation3 + $0xb8] sm:$0xff] %vm358, 0.0
          %438 = vst.msk [vmem:[#allocation3 + $0xc0] sm:$0xff] %vm358, 0.0
          %439 = vst.msk [vmem:[#allocation3 + $0xc8] sm:$0xff] %vm358, 0.0
          %440 = vst.msk [vmem:[#allocation3 + $0xd0] sm:$0xff] %vm358, 0.0
          %441 = vst.msk [vmem:[#allocation3 + $0xd8] sm:$0xff] %vm358, 0.0
          %442 = vst.msk [vmem:[#allocation3 + $0xe0] sm:$0xff] %vm358, 0.0
          %443 = vst.msk [vmem:[#allocation3 + $0xe8] sm:$0xff] %vm358, 0.0
          %444 = vst.msk [vmem:[#allocation3 + $0xf0] sm:$0xff] %vm358, 0.0
          %445 = vst.msk [vmem:[#allocation3 + $0xf8] sm:$0xff] %vm358, 0.0
          %446 = vst.msk [vmem:[#allocation4] sm:$0xff] %vm358, 0.0
          %447 = vst.msk [vmem:[#allocation4 + $0x8] sm:$0xff] %vm358, 0.0
          %448 = vst.msk [vmem:[#allocation4 + $0x10] sm:$0x3] %vm361, 0.0
          %449 = vst.msk [vmem:[#allocation4 + $0x18] sm:$0xff] %vm358, 0.0
          %450 = vst.msk [vmem:[#allocation4 + $0x20] sm:$0xff] %vm358, 0.0
          %451 = vst.msk [vmem:[#allocation4 + $0x28] sm:$0x3] %vm361, 0.0
          %452 = vst.msk [vmem:[#allocation4 + $0x30] sm:$0xff] %vm358, 0.0
          %453 = vst.msk [vmem:[#allocation4 + $0x38] sm:$0xff] %vm358, 0.0
          %454 = vst.msk [vmem:[#allocation4 + $0x40] sm:$0x3] %vm361, 0.0
          %455 = vst.msk [vmem:[#allocation4 + $0x48] sm:$0xff] %vm358, 0.0
          %456 = vst.msk [vmem:[#allocation4 + $0x50] sm:$0xff] %vm358, 0.0
          %457 = vst.msk [vmem:[#allocation4 + $0x58] sm:$0x3] %vm361, 0.0
          %458 = vst.msk [vmem:[#allocation4 + $0x60] sm:$0xff] %vm358, 0.0
          %459 = vst.msk [vmem:[#allocation4 + $0x68] sm:$0xff] %vm358, 0.0
          %460 = vst.msk [vmem:[#allocation4 + $0x70] sm:$0x3] %vm361, 0.0
          %461 = vst.msk [vmem:[#allocation4 + $0x78] sm:$0xff] %vm358, 0.0
          %462 = vst.msk [vmem:[#allocation4 + $0x80] sm:$0xff] %vm358, 0.0
          %463 = vst.msk [vmem:[#allocation4 + $0x88] sm:$0x3] %vm361, 0.0
          %464 = vst.msk [vmem:[#allocation4 + $0x90] sm:$0xff] %vm358, 0.0
          %465 = vst.msk [vmem:[#allocation4 + $0x98] sm:$0xff] %vm358, 0.0
          %466 = vst.msk [vmem:[#allocation4 + $0xa0] sm:$0x3] %vm361, 0.0
          %467 = vst.msk [vmem:[#allocation4 + $0xa8] sm:$0xff] %vm358, 0.0
          %468 = vst.msk [vmem:[#allocation4 + $0xb0] sm:$0xff] %vm358, 0.0
          %469 = vst.msk [vmem:[#allocation4 + $0xb8] sm:$0x3] %vm361, 0.0
          %470 = vst.msk [vmem:[#allocation4 + $0xc0] sm:$0xff] %vm358, 0.0
          %471 = vst.msk [vmem:[#allocation4 + $0xc8] sm:$0xff] %vm358, 0.0
          %472 = vst.msk [vmem:[#allocation4 + $0xd0] sm:$0x3] %vm361, 0.0
          %473 = vst.msk [vmem:[#allocation4 + $0xd8] sm:$0xff] %vm358, 0.0
          %474 = vst.msk [vmem:[#allocation4 + $0xe0] sm:$0xff] %vm358, 0.0
          %475 = vst.msk [vmem:[#allocation4 + $0xe8] sm:$0x3] %vm361, 0.0
          %476 = vst.msk [vmem:[#allocation4 + $0xf0] sm:$0xff] %vm358, 0.0
          %477 = vst.msk [vmem:[#allocation4 + $0xf8] sm:$0xff] %vm358, 0.0
          %478 = vst.msk [vmem:[#allocation4 + $0x100] sm:$0x3] %vm361, 0.0
          %479 = vst.msk [vmem:[#allocation4 + $0x108] sm:$0xff] %vm358, 0.0
          %480 = vst.msk [vmem:[#allocation4 + $0x110] sm:$0xff] %vm358, 0.0
          %481 = vst.msk [vmem:[#allocation4 + $0x118] sm:$0x3] %vm361, 0.0
          %482 = vst.msk [vmem:[#allocation4 + $0x120] sm:$0xff] %vm358, 0.0
          %483 = vst.msk [vmem:[#allocation4 + $0x128] sm:$0xff] %vm358, 0.0
          %484 = vst.msk [vmem:[#allocation4 + $0x130] sm:$0x3] %vm361, 0.0
          %485 = vst.msk [vmem:[#allocation4 + $0x138] sm:$0xff] %vm358, 0.0
          %486 = vst.msk [vmem:[#allocation4 + $0x140] sm:$0xff] %vm358, 0.0
          %487 = vst.msk [vmem:[#allocation4 + $0x148] sm:$0x3] %vm361, 0.0
          %488 = vst.msk [vmem:[#allocation4 + $0x150] sm:$0xff] %vm358, 0.0
          %489 = vst.msk [vmem:[#allocation4 + $0x158] sm:$0xff] %vm358, 0.0
          %490 = vst.msk [vmem:[#allocation4 + $0x160] sm:$0x3] %vm361, 0.0
          %491 = vst.msk [vmem:[#allocation4 + $0x168] sm:$0xff] %vm358, 0.0
          %492 = vst.msk [vmem:[#allocation4 + $0x170] sm:$0xff] %vm358, 0.0
          %493 = vst.msk [vmem:[#allocation4 + $0x178] sm:$0x3] %vm361, 0.0
          %494 = vst.msk [vmem:[#allocation4 + $0x180] sm:$0xff] %vm358, 0.0
          %495 = vst.msk [vmem:[#allocation4 + $0x188] sm:$0xff] %vm358, 0.0
          %496 = vst.msk [vmem:[#allocation4 + $0x190] sm:$0x3] %vm361, 0.0
          %497 = vst.msk [vmem:[#allocation4 + $0x198] sm:$0xff] %vm358, 0.0
          %498 = vst.msk [vmem:[#allocation4 + $0x1a0] sm:$0xff] %vm358, 0.0
          %499 = vst.msk [vmem:[#allocation4 + $0x1a8] sm:$0x3] %vm361, 0.0
          %500 = vst.msk [vmem:[#allocation5] sm:$0xff] %vm358, 0.0
          %501 = vst.msk [vmem:[#allocation5 + $0x8] sm:$0xff] %vm358, 0.0
          %502 = vst.msk [vmem:[#allocation5 + $0x10] sm:$0xff] %vm358, 0.0
          %503 = vst.msk [vmem:[#allocation5 + $0x18] sm:$0xff] %vm358, 0.0
          %504 = vst.msk [vmem:[#allocation5 + $0x20] sm:$0xff] %vm358, 0.0
          %505 = vst.msk [vmem:[#allocation5 + $0x28] sm:$0xff] %vm358, 0.0
          %506 = vst.msk [vmem:[#allocation5 + $0x30] sm:$0xff] %vm358, 0.0
          %507 = vst.msk [vmem:[#allocation5 + $0x38] sm:$0xff] %vm358, 0.0
          %508 = vst.msk [vmem:[#allocation5 + $0x40] sm:$0xff] %vm358, 0.0
          %509 = vst.msk [vmem:[#allocation5 + $0x48] sm:$0xff] %vm358, 0.0
          %510 = vst.msk [vmem:[#allocation5 + $0x50] sm:$0xff] %vm358, 0.0
          %511 = vst.msk [vmem:[#allocation5 + $0x58] sm:$0xff] %vm358, 0.0
          %512 = vst.msk [vmem:[#allocation5 + $0x60] sm:$0xff] %vm358, 0.0
          %513 = vst.msk [vmem:[#allocation5 + $0x68] sm:$0xff] %vm358, 0.0
          %514 = vst.msk [vmem:[#allocation5 + $0x70] sm:$0xff] %vm358, 0.0
          %515 = vst.msk [vmem:[#allocation5 + $0x78] sm:$0xff] %vm358, 0.0
          %516 = vst.msk [vmem:[#allocation5 + $0x80] sm:$0xff] %vm358, 0.0
          %517 = vst.msk [vmem:[#allocation5 + $0x88] sm:$0xff] %vm358, 0.0
          %518 = vst.msk [vmem:[#allocation5 + $0x90] sm:$0xff] %vm358, 0.0
          %519 = vst.msk [vmem:[#allocation5 + $0x98] sm:$0xff] %vm358, 0.0
          %520 = vst.msk [vmem:[#allocation5 + $0xa0] sm:$0xff] %vm358, 0.0
          %521 = vst.msk [vmem:[#allocation5 + $0xa8] sm:$0xff] %vm358, 0.0
          %522 = vst.msk [vmem:[#allocation5 + $0xb0] sm:$0xff] %vm358, 0.0
          %523 = vst.msk [vmem:[#allocation5 + $0xb8] sm:$0xff] %vm358, 0.0
          %524 = vst.msk [vmem:[#allocation5 + $0xc0] sm:$0xff] %vm358, 0.0
          %525 = vst.msk [vmem:[#allocation5 + $0xc8] sm:$0xff] %vm358, 0.0
          %526 = vst.msk [vmem:[#allocation5 + $0xd0] sm:$0xff] %vm358, 0.0
          %527 = vst.msk [vmem:[#allocation5 + $0xd8] sm:$0xff] %vm358, 0.0
          %528 = vst.msk [vmem:[#allocation5 + $0xe0] sm:$0xff] %vm358, 0.0
          %529 = vst.msk [vmem:[#allocation5 + $0xe8] sm:$0xff] %vm358, 0.0
          %530 = vst.msk [vmem:[#allocation5 + $0xf0] sm:$0xff] %vm358, 0.0
          %531 = vst.msk [vmem:[#allocation5 + $0xf8] sm:$0xff] %vm358, 0.0
        $region52: #{conv_lstm_forward.1} parent=47 // pred_fallthru
          _
        %v532 = vld [vmem:[%s5] sm:$0x1]
        %v534 = vlaneseq
        %v535 = vshrl.u32 %v534, 7
        %v536 = vsub.s32 0, %v535
        %v537 = vrot.slane %v532, %v536
        %v539 = vld [vmem:[%s343] sm:$0xf]
        %v540 = vld [vmem:[%s343 + $0x4] sm:$0xf]
        %v541 = vld [vmem:[%s343 + $0x8] sm:$0xf]
        %v542 = vld [vmem:[%s343 + $0xc] sm:$0xf]
        %v543 = vld [vmem:[%s343 + $0x10] sm:$0xf]
        %v544 = vld [vmem:[%s343 + $0x14] sm:$0xf]
        %v545 = vld [vmem:[%s343 + $0x18] sm:$0xf]
        %v546 = vld [vmem:[%s343 + $0x1c] sm:$0xf]
        %v547 = vld [vmem:[%s343 + $0x20] sm:$0xf]
        %v548 = vld [vmem:[%s343 + $0x24] sm:$0xf]
        %v549 = vld [vmem:[%s343 + $0x28] sm:$0xf]
        %v550 = vld [vmem:[%s343 + $0x2c] sm:$0xf]
        %v551 = vld [vmem:[%s343 + $0x30] sm:$0xf]
        %v552 = vld [vmem:[%s343 + $0x34] sm:$0xf]
        %v553 = vld [vmem:[%s343 + $0x38] sm:$0xf]
        %v554 = vld [vmem:[%s343 + $0x3c] sm:$0xf]
        %v555 = vld [vmem:[%s343 + $0x40] sm:$0xf]
        %v556 = vld [vmem:[%s343 + $0x44] sm:$0xf]
        %v557 = vld [vmem:[%s343 + $0x48] sm:$0xf]
        %v558 = vld [vmem:[%s343 + $0x4c] sm:$0xf]
        %v559 = vld [vmem:[%s343 + $0x50] sm:$0xf]
        %v560 = vld [vmem:[%s343 + $0x54] sm:$0xf]
        %v561 = vld [vmem:[%s343 + $0x58] sm:$0xf]
        %v562 = vld [vmem:[%s343 + $0x5c] sm:$0xf]
        %v563 = vld [vmem:[%s343 + $0x60] sm:$0xf]
        %v564 = vld [vmem:[%s343 + $0x64] sm:$0xf]
        %v565 = vld [vmem:[%s343 + $0x68] sm:$0xf]
        %v566 = vld [vmem:[%s343 + $0x6c] sm:$0xf]
        %v567 = vld [vmem:[%s343 + $0x70] sm:$0xf]
        %v568 = vld [vmem:[%s343 + $0x74] sm:$0xf]
        %v569 = vld [vmem:[%s343 + $0x78] sm:$0xf]
        %v570 = vld [vmem:[%s343 + $0x7c] sm:$0xf]
        %v571 = vld [vmem:[%s1] sm:$0xf]
        %v572 = vld [vmem:[%s1 + $0x4] sm:$0xf]
        %v573 = vld [vmem:[%s1 + $0x8] sm:$0xf]
        %v574 = vld [vmem:[%s1 + $0xc] sm:$0xf]
        %v575 = vld [vmem:[%s1 + $0x10] sm:$0x3]
        %v608 = vunpack.c.l.b16 %v539
        %v609 = vunpack.c.l.b16 %v540
        %v610 = vunpack.c.l.b16 %v541
        %v611 = vunpack.c.l.b16 %v542
        %v612 = vunpack.c.l.b16 %v543
        %v613 = vunpack.c.l.b16 %v544
        %v614 = vunpack.c.l.b16 %v545
        %v615 = vunpack.c.l.b16 %v546
        %v616 = vunpack.c.l.b16 %v547
        %v617 = vunpack.c.l.b16 %v548
        %v618 = vunpack.c.l.b16 %v549
        %v619 = vunpack.c.l.b16 %v550
        %v620 = vunpack.c.l.b16 %v551
        %v621 = vunpack.c.l.b16 %v552
        %v622 = vunpack.c.l.b16 %v553
        %v623 = vunpack.c.l.b16 %v554
        %v624 = vunpack.c.l.b16 %v555
        %v625 = vunpack.c.l.b16 %v556
        %v626 = vunpack.c.l.b16 %v557
        %v627 = vunpack.c.l.b16 %v558
        %v628 = vunpack.c.l.b16 %v559
        %v629 = vunpack.c.l.b16 %v560
        %v630 = vunpack.c.l.b16 %v561
        %v631 = vunpack.c.l.b16 %v562
        %v632 = vunpack.c.l.b16 %v563
        %v633 = vunpack.c.l.b16 %v564
        %v634 = vunpack.c.l.b16 %v565
        %v635 = vunpack.c.l.b16 %v566
        %v636 = vunpack.c.l.b16 %v567
        %v637 = vunpack.c.l.b16 %v568
        %v638 = vunpack.c.l.b16 %v569
        %v639 = vunpack.c.l.b16 %v570
        %v640 = vpack.c.b16 %v609, %v608
        %v641 = vpack.c.b16 %v611, %v610
        %v642 = vpack.c.b16 %v613, %v612
        %v643 = vpack.c.b16 %v615, %v614
        %v644 = vpack.c.b16 %v617, %v616
        %v645 = vpack.c.b16 %v619, %v618
        %v646 = vpack.c.b16 %v621, %v620
        %v647 = vpack.c.b16 %v623, %v622
        %v648 = vpack.c.b16 %v625, %v624
        %v649 = vpack.c.b16 %v627, %v626
        %v650 = vpack.c.b16 %v629, %v628
        %v651 = vpack.c.b16 %v631, %v630
        %v652 = vpack.c.b16 %v633, %v632
        %v653 = vpack.c.b16 %v635, %v634
        %v654 = vpack.c.b16 %v637, %v636
        %v655 = vpack.c.b16 %v639, %v638
        %v661 = vunpack.c.l.b16 %v571
        %v662 = vunpack.c.l.b16 %v572
        %v663 = vunpack.c.l.b16 %v573
        %v664 = vunpack.c.l.b16 %v574
        %v665 = vunpack.c.l.b16 %v575
        %v666 = vpack.c.b16 %v662, %v661
        %v667 = vpack.c.b16 %v664, %v663
        %v668 = vpack.c.b16 %v665, %v665
        %vm671 = vcmask 293888
        %v673 = vsel %vm671, %v640, 0
        %v676 = vsel %vm671, %v641, 0
        %v679 = vsel %vm671, %v642, 0
        %v682 = vsel %vm671, %v643, 0
        %v685 = vsel %vm671, %v644, 0
        %v688 = vsel %vm671, %v645, 0
        %v691 = vsel %vm671, %v646, 0
        %v694 = vsel %vm671, %v647, 0
        %v697 = vsel %vm671, %v648, 0
        %v700 = vsel %vm671, %v649, 0
        %v703 = vsel %vm671, %v650, 0
        %v706 = vsel %vm671, %v651, 0
        %v709 = vsel %vm671, %v652, 0
        %v712 = vsel %vm671, %v653, 0
        %v715 = vsel %vm671, %v654, 0
        %v718 = vsel %vm671, %v655, 0
        %vm720 = vcmask 1041408
        %v722 = vsel %vm720, %v668, 0
        %724 = vmatprep.subr.bf16.mxu0 0
        %725 = vmatpush1.bf16.msra.mxu0 %v666
        %726 = vmatprep.subr.bf16.mxu0 0
        %727 = vmatpush1.bf16.msra.mxu0 %v667
        %728 = vmatprep.subr.bf16.mxu0 0
        %729 = vmatpush1.bf16.msra.mxu0 %v722
        %730 = vmatprep.subr.bf16.mxu0 0
        %731 = vmatpush1.bf16.msra.mxu0 0
        %732 = vmatprep.subr.bf16.mxu0 0
        %733 = vmatpush1.bf16.msra.mxu0 0
        %734 = vmatprep.subr.bf16.mxu0 0
        %735 = vmatpush1.bf16.msra.mxu0 0
        %736 = vmatprep.subr.bf16.mxu0 0
        %737 = vmatpush1.bf16.msra.mxu0 0
        %738 = vmatprep.subr.bf16.mxu0 0
        %739 = vmatpush1.bf16.msra.mxu0 0
        %740 = vmatprep.subr.bf16.mxu0 0
        %741 = vmatpush1.bf16.msra.mxu0 0
        %742 = vmatprep.subr.bf16.mxu0 0
        %743 = vmatpush1.bf16.msra.mxu0 0
        %744 = vmatprep.subr.bf16.mxu0 0
        %745 = vmatpush1.bf16.msra.mxu0 0
        %746 = vmatprep.subr.bf16.mxu0 0
        %747 = vmatpush1.bf16.msra.mxu0 0
        %748 = vmatprep.subr.bf16.mxu0 0
        %749 = vmatpush1.bf16.msra.mxu0 0
        %750 = vmatprep.subr.bf16.mxu0 0
        %751 = vmatpush1.bf16.msra.mxu0 0
        %752 = vmatprep.subr.bf16.mxu0 0
        %753 = vmatpush1.bf16.msra.mxu0 0
        %754 = vmatprep.subr.bf16.mxu0 0
        %755 = vmatpush1.bf16.msra.mxu0 0
        %756 = vmatprep.mubr.bf16.mxu0 0
        %757 = vmatmul.mubr.bf16.gmra.mrb[0].mxu0 %v673
        %v758 = vpop.f32.mrb[0].mxu0
        %v759 = vadd.f32 0.0, %v758
        %v760 = vpop.f32.mrb[0].mxu0
        %v761 = vpop.f32.mrb[0].mxu0
        %v762 = vadd.f32 0.0, %v761
        %v763 = vpop.f32.mrb[0].mxu0
        %764 = vmatprep.mubr.bf16.mxu0 0
        %765 = vmatmul.mubr.bf16.gmra.mrb[0].mxu0 %v676
        %v766 = vpop.f32.mrb[0].mxu0
        %v767 = vadd.f32 0.0, %v766
        %v768 = vpop.f32.mrb[0].mxu0
        %v769 = vpop.f32.mrb[0].mxu0
        %v770 = vadd.f32 0.0, %v769
        %v771 = vpop.f32.mrb[0].mxu0
        %772 = vmatprep.mubr.bf16.mxu0 0
        %773 = vmatmul.mubr.bf16.gmra.mrb[0].mxu0 %v679
        %v774 = vpop.f32.mrb[0].mxu0
        %v775 = vadd.f32 0.0, %v774
        %v776 = vpop.f32.mrb[0].mxu0
        %v777 = vpop.f32.mrb[0].mxu0
        %v778 = vadd.f32 0.0, %v777
        %v779 = vpop.f32.mrb[0].mxu0
        %780 = vmatprep.mubr.bf16.mxu0 0
        %781 = vmatmul.mubr.bf16.gmra.mrb[0].mxu0 %v682
        %v782 = vpop.f32.mrb[0].mxu0
        %v783 = vadd.f32 0.0, %v782
        %v784 = vpop.f32.mrb[0].mxu0
        %v785 = vpop.f32.mrb[0].mxu0
        %v786 = vadd.f32 0.0, %v785
        %v787 = vpop.f32.mrb[0].mxu0
        %788 = vmatprep.mubr.bf16.mxu0 0
        %789 = vmatmul.mubr.bf16.gmra.mrb[0].mxu0 %v685
        %v790 = vpop.f32.mrb[0].mxu0
        %v791 = vadd.f32 0.0, %v790
        %v792 = vpop.f32.mrb[0].mxu0
        %v793 = vpop.f32.mrb[0].mxu0
        %v794 = vadd.f32 0.0, %v793
        %v795 = vpop.f32.mrb[0].mxu0
        %796 = vmatprep.mubr.bf16.mxu0 0
        %797 = vmatmul.mubr.bf16.gmra.mrb[0].mxu0 %v688
        %v798 = vpop.f32.mrb[0].mxu0
        %v799 = vadd.f32 0.0, %v798
        %v800 = vpop.f32.mrb[0].mxu0
        %v801 = vpop.f32.mrb[0].mxu0
        %v802 = vadd.f32 0.0, %v801
        %v803 = vpop.f32.mrb[0].mxu0
        %804 = vmatprep.mubr.bf16.mxu0 0
        %805 = vmatmul.mubr.bf16.gmra.mrb[0].mxu0 %v691
        %v806 = vpop.f32.mrb[0].mxu0
        %v807 = vadd.f32 0.0, %v806
        %v808 = vpop.f32.mrb[0].mxu0
        %v809 = vpop.f32.mrb[0].mxu0
        %v810 = vadd.f32 0.0, %v809
        %v811 = vpop.f32.mrb[0].mxu0
        %812 = vmatprep.mubr.bf16.mxu0 0
        %813 = vmatmul.mubr.bf16.gmra.mrb[0].mxu0 %v694
        %v814 = vpop.f32.mrb[0].mxu0
        %v815 = vadd.f32 0.0, %v814
        %v816 = vpop.f32.mrb[0].mxu0
        %v817 = vpop.f32.mrb[0].mxu0
        %v818 = vadd.f32 0.0, %v817
        %v819 = vpop.f32.mrb[0].mxu0
        %820 = vmatprep.mubr.bf16.mxu0 0
        %821 = vmatmul.mubr.bf16.gmra.mrb[0].mxu0 %v697
        %v822 = vpop.f32.mrb[0].mxu0
        %v823 = vadd.f32 0.0, %v822
        %v824 = vpop.f32.mrb[0].mxu0
        %v825 = vpop.f32.mrb[0].mxu0
        %v826 = vadd.f32 0.0, %v825
        %v827 = vpop.f32.mrb[0].mxu0
        %828 = vmatprep.mubr.bf16.mxu0 0
        %829 = vmatmul.mubr.bf16.gmra.mrb[0].mxu0 %v700
        %v830 = vpop.f32.mrb[0].mxu0
        %v831 = vadd.f32 0.0, %v830
        %v832 = vpop.f32.mrb[0].mxu0
        %v833 = vpop.f32.mrb[0].mxu0
        %v834 = vadd.f32 0.0, %v833
        %v835 = vpop.f32.mrb[0].mxu0
        %836 = vmatprep.mubr.bf16.mxu0 0
        %837 = vmatmul.mubr.bf16.gmra.mrb[0].mxu0 %v703
        %v838 = vpop.f32.mrb[0].mxu0
        %v839 = vadd.f32 0.0, %v838
        %v840 = vpop.f32.mrb[0].mxu0
        %v841 = vpop.f32.mrb[0].mxu0
        %v842 = vadd.f32 0.0, %v841
        %v843 = vpop.f32.mrb[0].mxu0
        %844 = vmatprep.mubr.bf16.mxu0 0
        %845 = vmatmul.mubr.bf16.gmra.mrb[0].mxu0 %v706
        %v846 = vpop.f32.mrb[0].mxu0
        %v847 = vadd.f32 0.0, %v846
        %v848 = vpop.f32.mrb[0].mxu0
        %v849 = vpop.f32.mrb[0].mxu0
        %v850 = vadd.f32 0.0, %v849
        %v851 = vpop.f32.mrb[0].mxu0
        %852 = vmatprep.mubr.bf16.mxu0 0
        %853 = vmatmul.mubr.bf16.gmra.mrb[0].mxu0 %v709
        %v854 = vpop.f32.mrb[0].mxu0
        %v855 = vadd.f32 0.0, %v854
        %v856 = vpop.f32.mrb[0].mxu0
        %v857 = vpop.f32.mrb[0].mxu0
        %v858 = vadd.f32 0.0, %v857
        %v859 = vpop.f32.mrb[0].mxu0
        %860 = vmatprep.mubr.bf16.mxu0 0
        %861 = vmatmul.mubr.bf16.gmra.mrb[0].mxu0 %v712
        %v862 = vpop.f32.mrb[0].mxu0
        %v863 = vadd.f32 0.0, %v862
        %v864 = vpop.f32.mrb[0].mxu0
        %v865 = vpop.f32.mrb[0].mxu0
        %v866 = vadd.f32 0.0, %v865
        %v867 = vpop.f32.mrb[0].mxu0
        %868 = vmatprep.mubr.bf16.mxu0 0
        %869 = vmatmul.mubr.bf16.gmra.mrb[0].mxu0 %v715
        %v870 = vpop.f32.mrb[0].mxu0
        %v871 = vadd.f32 0.0, %v870
        %v872 = vpop.f32.mrb[0].mxu0
        %v873 = vpop.f32.mrb[0].mxu0
        %v874 = vadd.f32 0.0, %v873
        %v875 = vpop.f32.mrb[0].mxu0
        %876 = vmatprep.mubr.bf16.mxu0 0
        %877 = vmatmul.mubr.bf16.gmra.mrb[0].mxu0 %v718
        %v878 = vpop.f32.mrb[0].mxu0
        %v879 = vadd.f32 0.0, %v878
        %v880 = vpop.f32.mrb[0].mxu0
        %v881 = vpop.f32.mrb[0].mxu0
        %v882 = vadd.f32 0.0, %v881
        %v883 = vpop.f32.mrb[0].mxu0
        %884 = vdwg.mxu0
        %v885 = vadd.f32 %v537, %v759
        %v886 = vadd.f32 %v537, %v762
        %v887 = vadd.f32 %v537, %v767
        %v888 = vadd.f32 %v537, %v770
        %v889 = vadd.f32 %v537, %v775
        %v890 = vadd.f32 %v537, %v778
        %v891 = vadd.f32 %v537, %v783
        %v892 = vadd.f32 %v537, %v786
        %v893 = vadd.f32 %v537, %v791
        %v894 = vadd.f32 %v537, %v794
        %v895 = vadd.f32 %v537, %v799
        %v896 = vadd.f32 %v537, %v802
        %v897 = vadd.f32 %v537, %v807
        %v898 = vadd.f32 %v537, %v810
        %v899 = vadd.f32 %v537, %v815
        %v900 = vadd.f32 %v537, %v818
        %v901 = vadd.f32 %v537, %v823
        %v902 = vadd.f32 %v537, %v826
        %v903 = vadd.f32 %v537, %v831
        %v904 = vadd.f32 %v537, %v834
        %v905 = vadd.f32 %v537, %v839
        %v906 = vadd.f32 %v537, %v842
        %v907 = vadd.f32 %v537, %v847
        %v908 = vadd.f32 %v537, %v850
        %v909 = vadd.f32 %v537, %v855
        %v910 = vadd.f32 %v537, %v858
        %v911 = vadd.f32 %v537, %v863
        %v912 = vadd.f32 %v537, %v866
        %v913 = vadd.f32 %v537, %v871
        %v914 = vadd.f32 %v537, %v874
        %v915 = vadd.f32 %v537, %v879
        %v916 = vadd.f32 %v537, %v882
        %v917 = vld [vmem:[#allocation2] sm:$0xff]
        %v918 = vld [vmem:[#allocation2 + $0x8] sm:$0xff]
        %v919 = vld [vmem:[#allocation2 + $0x10] sm:$0x3]
        %v920 = vld [vmem:[#allocation2 + $0x18] sm:$0xff]
        %v921 = vld [vmem:[#allocation2 + $0x20] sm:$0xff]
        %v922 = vld [vmem:[#allocation2 + $0x28] sm:$0x3]
        %v923 = vld [vmem:[#allocation2 + $0x30] sm:$0xff]
        %v924 = vld [vmem:[#allocation2 + $0x38] sm:$0xff]
        %v925 = vld [vmem:[#allocation2 + $0x40] sm:$0x3]
        %v926 = vld [vmem:[#allocation2 + $0x48] sm:$0xff]
        %v927 = vld [vmem:[#allocation2 + $0x50] sm:$0xff]
        %v928 = vld [vmem:[#allocation2 + $0x58] sm:$0x3]
        %v929 = vld [vmem:[#allocation2 + $0x60] sm:$0xff]
        %v930 = vld [vmem:[#allocation2 + $0x68] sm:$0xff]
        %v931 = vld [vmem:[#allocation2 + $0x70] sm:$0x3]
        %v932 = vld [vmem:[#allocation2 + $0x78] sm:$0xff]
        %v933 = vld [vmem:[#allocation2 + $0x80] sm:$0xff]
        %v934 = vld [vmem:[#allocation2 + $0x88] sm:$0x3]
        %v935 = vld [vmem:[#allocation2 + $0x90] sm:$0xff]
        %v936 = vld [vmem:[#allocation2 + $0x98] sm:$0xff]
        %v937 = vld [vmem:[#allocation2 + $0xa0] sm:$0x3]
        %v938 = vld [vmem:[#allocation2 + $0xa8] sm:$0xff]
        %v939 = vld [vmem:[#allocation2 + $0xb0] sm:$0xff]
        %v940 = vld [vmem:[#allocation2 + $0xb8] sm:$0x3]
        %v941 = vld [vmem:[#allocation2 + $0xc0] sm:$0xff]
        %v942 = vld [vmem:[#allocation2 + $0xc8] sm:$0xff]
        %v943 = vld [vmem:[#allocation2 + $0xd0] sm:$0x3]
        %v944 = vld [vmem:[#allocation2 + $0xd8] sm:$0xff]
        %v945 = vld [vmem:[#allocation2 + $0xe0] sm:$0xff]
        %v946 = vld [vmem:[#allocation2 + $0xe8] sm:$0x3]
        %v947 = vld [vmem:[#allocation2 + $0xf0] sm:$0xff]
        %v948 = vld [vmem:[#allocation2 + $0xf8] sm:$0xff]
        %v949 = vld [vmem:[#allocation2 + $0x100] sm:$0x3]
        %v950 = vld [vmem:[#allocation2 + $0x108] sm:$0xff]
        %v951 = vld [vmem:[#allocation2 + $0x110] sm:$0xff]
        %v952 = vld [vmem:[#allocation2 + $0x118] sm:$0x3]
        %v953 = vld [vmem:[#allocation2 + $0x120] sm:$0xff]
        %v954 = vld [vmem:[#allocation2 + $0x128] sm:$0xff]
        %v955 = vld [vmem:[#allocation2 + $0x130] sm:$0x3]
        %v956 = vld [vmem:[#allocation2 + $0x138] sm:$0xff]
        %v957 = vld [vmem:[#allocation2 + $0x140] sm:$0xff]
        %v958 = vld [vmem:[#allocation2 + $0x148] sm:$0x3]
        %v959 = vld [vmem:[#allocation2 + $0x150] sm:$0xff]
        %v960 = vld [vmem:[#allocation2 + $0x158] sm:$0xff]
        %v961 = vld [vmem:[#allocation2 + $0x160] sm:$0x3]
        %v962 = vld [vmem:[#allocation2 + $0x168] sm:$0xff]
        %v963 = vld [vmem:[#allocation2 + $0x170] sm:$0xff]
        %v964 = vld [vmem:[#allocation2 + $0x178] sm:$0x3]
        %v965 = vld [vmem:[#allocation2 + $0x180] sm:$0xff]
        %v966 = vld [vmem:[#allocation2 + $0x188] sm:$0xff]
        %v967 = vld [vmem:[#allocation2 + $0x190] sm:$0x3]
        %v968 = vld [vmem:[#allocation2 + $0x198] sm:$0xff]
        %v969 = vld [vmem:[#allocation2 + $0x1a0] sm:$0xff]
        %v970 = vld [vmem:[#allocation2 + $0x1a8] sm:$0x3]
        %v971 = vpack.c.bf16 %v918, %v917
        %v972 = vpack.c.bf16 %v919, %v919
        %v973 = vpack.c.bf16 %v921, %v920
        %v974 = vpack.c.bf16 %v922, %v922
        %v975 = vpack.c.bf16 %v924, %v923
        %v976 = vpack.c.bf16 %v925, %v925
        %v977 = vpack.c.bf16 %v927, %v926
        %v978 = vpack.c.bf16 %v928, %v928
        %v979 = vpack.c.bf16 %v930, %v929
        %v980 = vpack.c.bf16 %v931, %v931
        %v981 = vpack.c.bf16 %v933, %v932
        %v982 = vpack.c.bf16 %v934, %v934
        %v983 = vpack.c.bf16 %v936, %v935
        %v984 = vpack.c.bf16 %v937, %v937
        %v985 = vpack.c.bf16 %v939, %v938
        %v986 = vpack.c.bf16 %v940, %v940
        %v987 = vpack.c.bf16 %v942, %v941
        %v988 = vpack.c.bf16 %v943, %v943
        %v989 = vpack.c.bf16 %v945, %v944
        %v990 = vpack.c.bf16 %v946, %v946
        %v991 = vpack.c.bf16 %v948, %v947
        %v992 = vpack.c.bf16 %v949, %v949
        %v993 = vpack.c.bf16 %v951, %v950
        %v994 = vpack.c.bf16 %v952, %v952
        %v995 = vpack.c.bf16 %v954, %v953
        %v996 = vpack.c.bf16 %v955, %v955
        %v997 = vpack.c.bf16 %v957, %v956
        %v998 = vpack.c.bf16 %v958, %v958
        %v999 = vpack.c.bf16 %v960, %v959
        %v1000 = vpack.c.bf16 %v961, %v961
        %v1001 = vpack.c.bf16 %v963, %v962
        %v1002 = vpack.c.bf16 %v964, %v964
        %v1003 = vpack.c.bf16 %v966, %v965
        %v1004 = vpack.c.bf16 %v967, %v967
        %v1005 = vpack.c.bf16 %v969, %v968
        %v1006 = vpack.c.bf16 %v970, %v970
        %v1007 = vld [vmem:[%s3] sm:$0xf]
        %v1008 = vld [vmem:[%s3 + $0x4] sm:$0xf]
        %v1009 = vld [vmem:[%s3 + $0x8] sm:$0xf]
        %v1010 = vld [vmem:[%s3 + $0xc] sm:$0xf]
        %v1015 = vunpack.c.l.b16 %v1007
        %v1016 = vunpack.c.l.b16 %v1008
        %v1017 = vunpack.c.l.b16 %v1009
        %v1018 = vunpack.c.l.b16 %v1010
        %v1019 = vpack.c.b16 %v1016, %v1015
        %v1020 = vpack.c.b16 %v1018, %v1017
        %vm1023 = vcmask 261120
        %v1025 = vsel %vm1023, %v971, 0
        %v1028 = vsel %vm1023, %v973, 0
        %v1031 = vsel %vm1023, %v975, 0
        %v1034 = vsel %vm1023, %v977, 0
        %v1037 = vsel %vm1023, %v979, 0
        %v1040 = vsel %vm1023, %v981, 0
        %v1043 = vsel %vm1023, %v983, 0
        %v1046 = vsel %vm1023, %v985, 0
        %v1049 = vsel %vm1023, %v987, 0
        %v1052 = vsel %vm1023, %v989, 0
        %v1055 = vsel %vm1023, %v991, 0
        %v1058 = vsel %vm1023, %v993, 0
        %v1061 = vsel %vm1023, %v995, 0
        %v1064 = vsel %vm1023, %v997, 0
        %v1067 = vsel %vm1023, %v999, 0
        %v1070 = vsel %vm1023, %v1001, 0
        %1072 = vmatprep.subr.bf16.mxu0 0
        %1073 = vmatpush1.bf16.msra.mxu0 %v1019
        %1074 = vmatprep.subr.bf16.mxu0 0
        %1075 = vmatpush1.bf16.msra.mxu0 %v1020
        %1076 = vmatprep.subr.bf16.mxu0 0
        %1077 = vmatpush1.bf16.msra.mxu0 0
        %1078 = vmatprep.subr.bf16.mxu0 0
        %1079 = vmatpush1.bf16.msra.mxu0 0
        %1080 = vmatprep.subr.bf16.mxu0 0
        %1081 = vmatpush1.bf16.msra.mxu0 0
        %1082 = vmatprep.subr.bf16.mxu0 0
        %1083 = vmatpush1.bf16.msra.mxu0 0
        %1084 = vmatprep.subr.bf16.mxu0 0
        %1085 = vmatpush1.bf16.msra.mxu0 0
        %1086 = vmatprep.subr.bf16.mxu0 0
        %1087 = vmatpush1.bf16.msra.mxu0 0
        %1088 = vmatprep.subr.bf16.mxu0 0
        %1089 = vmatpush1.bf16.msra.mxu0 0
        %1090 = vmatprep.subr.bf16.mxu0 0
        %1091 = vmatpush1.bf16.msra.mxu0 0
        %1092 = vmatprep.subr.bf16.mxu0 0
        %1093 = vmatpush1.bf16.msra.mxu0 0
        %1094 = vmatprep.subr.bf16.mxu0 0
        %1095 = vmatpush1.bf16.msra.mxu0 0
        %1096 = vmatprep.subr.bf16.mxu0 0
        %1097 = vmatpush1.bf16.msra.mxu0 0
        %1098 = vmatprep.subr.bf16.mxu0 0
        %1099 = vmatpush1.bf16.msra.mxu0 0
        %1100 = vmatprep.subr.bf16.mxu0 0
        %1101 = vmatpush1.bf16.msra.mxu0 0
        %1102 = vmatprep.subr.bf16.mxu0 0
        %1103 = vmatpush1.bf16.msra.mxu0 0
        %1104 = vmatprep.mubr.bf16.mxu0 0
        %1105 = vmatmul.mubr.bf16.gmra.mrb[0].mxu0 %v1025
        %v1106 = vpop.f32.mrb[0].mxu0
        %v1107 = vadd.f32 0.0, %v1106
        %v1108 = vpop.f32.mrb[0].mxu0
        %v1109 = vpop.f32.mrb[0].mxu0
        %v1110 = vadd.f32 0.0, %v1109
        %v1111 = vpop.f32.mrb[0].mxu0
        %1112 = vmatprep.mubr.bf16.mxu0 0
        %1113 = vmatmul.mubr.bf16.gmra.mrb[0].mxu0 %v1028
        %v1114 = vpop.f32.mrb[0].mxu0
        %v1115 = vadd.f32 0.0, %v1114
        %v1116 = vpop.f32.mrb[0].mxu0
        %v1117 = vpop.f32.mrb[0].mxu0
        %v1118 = vadd.f32 0.0, %v1117
        %v1119 = vpop.f32.mrb[0].mxu0
        %1120 = vmatprep.mubr.bf16.mxu0 0
        %1121 = vmatmul.mubr.bf16.gmra.mrb[0].mxu0 %v1031
        %v1122 = vpop.f32.mrb[0].mxu0
        %v1123 = vadd.f32 0.0, %v1122
        %v1124 = vpop.f32.mrb[0].mxu0
        %v1125 = vpop.f32.mrb[0].mxu0
        %v1126 = vadd.f32 0.0, %v1125
        %v1127 = vpop.f32.mrb[0].mxu0
        %1128 = vmatprep.mubr.bf16.mxu0 0
        %1129 = vmatmul.mubr.bf16.gmra.mrb[0].mxu0 %v1034
        %v1130 = vpop.f32.mrb[0].mxu0
        %v1131 = vadd.f32 0.0, %v1130
        %v1132 = vpop.f32.mrb[0].mxu0
        %v1133 = vpop.f32.mrb[0].mxu0
        %v1134 = vadd.f32 0.0, %v1133
        %v1135 = vpop.f32.mrb[0].mxu0
        %1136 = vmatprep.mubr.bf16.mxu0 0
        %1137 = vmatmul.mubr.bf16.gmra.mrb[0].mxu0 %v1037
        %v1138 = vpop.f32.mrb[0].mxu0
        %v1139 = vadd.f32 0.0, %v1138
        %v1140 = vpop.f32.mrb[0].mxu0
        %v1141 = vpop.f32.mrb[0].mxu0
        %v1142 = vadd.f32 0.0, %v1141
        %v1143 = vpop.f32.mrb[0].mxu0
        %1144 = vmatprep.mubr.bf16.mxu0 0
        %1145 = vmatmul.mubr.bf16.gmra.mrb[0].mxu0 %v1040
        %v1146 = vpop.f32.mrb[0].mxu0
        %v1147 = vadd.f32 0.0, %v1146
        %v1148 = vpop.f32.mrb[0].mxu0
        %v1149 = vpop.f32.mrb[0].mxu0
        %v1150 = vadd.f32 0.0, %v1149
        %v1151 = vpop.f32.mrb[0].mxu0
        %1152 = vmatprep.mubr.bf16.mxu0 0
        %1153 = vmatmul.mubr.bf16.gmra.mrb[0].mxu0 %v1043
        %v1154 = vpop.f32.mrb[0].mxu0
        %v1155 = vadd.f32 0.0, %v1154
        %v1156 = vpop.f32.mrb[0].mxu0
        %v1157 = vpop.f32.mrb[0].mxu0
        %v1158 = vadd.f32 0.0, %v1157
        %v1159 = vpop.f32.mrb[0].mxu0
        %1160 = vmatprep.mubr.bf16.mxu0 0
        %1161 = vmatmul.mubr.bf16.gmra.mrb[0].mxu0 %v1046
        %v1162 = vpop.f32.mrb[0].mxu0
        %v1163 = vadd.f32 0.0, %v1162
        %v1164 = vpop.f32.mrb[0].mxu0
        %v1165 = vpop.f32.mrb[0].mxu0
        %v1166 = vadd.f32 0.0, %v1165
        %v1167 = vpop.f32.mrb[0].mxu0
        %1168 = vmatprep.mubr.bf16.mxu0 0
        %1169 = vmatmul.mubr.bf16.gmra.mrb[0].mxu0 %v1049
        %v1170 = vpop.f32.mrb[0].mxu0
        %v1171 = vadd.f32 0.0, %v1170
        %v1172 = vpop.f32.mrb[0].mxu0
        %v1173 = vpop.f32.mrb[0].mxu0
        %v1174 = vadd.f32 0.0, %v1173
        %v1175 = vpop.f32.mrb[0].mxu0
        %1176 = vmatprep.mubr.bf16.mxu0 0
        %1177 = vmatmul.mubr.bf16.gmra.mrb[0].mxu0 %v1052
        %v1178 = vpop.f32.mrb[0].mxu0
        %v1179 = vadd.f32 0.0, %v1178
        %v1180 = vpop.f32.mrb[0].mxu0
        %v1181 = vpop.f32.mrb[0].mxu0
        %v1182 = vadd.f32 0.0, %v1181
        %v1183 = vpop.f32.mrb[0].mxu0
        %1184 = vmatprep.mubr.bf16.mxu0 0
        %1185 = vmatmul.mubr.bf16.gmra.mrb[0].mxu0 %v1055
        %v1186 = vpop.f32.mrb[0].mxu0
        %v1187 = vadd.f32 0.0, %v1186
        %v1188 = vpop.f32.mrb[0].mxu0
        %v1189 = vpop.f32.mrb[0].mxu0
        %v1190 = vadd.f32 0.0, %v1189
        %v1191 = vpop.f32.mrb[0].mxu0
        %1192 = vmatprep.mubr.bf16.mxu0 0
        %1193 = vmatmul.mubr.bf16.gmra.mrb[0].mxu0 %v1058
        %v1194 = vpop.f32.mrb[0].mxu0
        %v1195 = vadd.f32 0.0, %v1194
        %v1196 = vpop.f32.mrb[0].mxu0
        %v1197 = vpop.f32.mrb[0].mxu0
        %v1198 = vadd.f32 0.0, %v1197
        %v1199 = vpop.f32.mrb[0].mxu0
        %1200 = vmatprep.mubr.bf16.mxu0 0
        %1201 = vmatmul.mubr.bf16.gmra.mrb[0].mxu0 %v1061
        %v1202 = vpop.f32.mrb[0].mxu0
        %v1203 = vadd.f32 0.0, %v1202
        %v1204 = vpop.f32.mrb[0].mxu0
        %v1205 = vpop.f32.mrb[0].mxu0
        %v1206 = vadd.f32 0.0, %v1205
        %v1207 = vpop.f32.mrb[0].mxu0
        %1208 = vmatprep.mubr.bf16.mxu0 0
        %1209 = vmatmul.mubr.bf16.gmra.mrb[0].mxu0 %v1064
        %v1210 = vpop.f32.mrb[0].mxu0
        %v1211 = vadd.f32 0.0, %v1210
        %v1212 = vpop.f32.mrb[0].mxu0
        %v1213 = vpop.f32.mrb[0].mxu0
        %v1214 = vadd.f32 0.0, %v1213
        %v1215 = vpop.f32.mrb[0].mxu0
        %1216 = vmatprep.mubr.bf16.mxu0 0
        %1217 = vmatmul.mubr.bf16.gmra.mrb[0].mxu0 %v1067
        %v1218 = vpop.f32.mrb[0].mxu0
        %v1219 = vadd.f32 0.0, %v1218
        %v1220 = vpop.f32.mrb[0].mxu0
        %v1221 = vpop.f32.mrb[0].mxu0
        %v1222 = vadd.f32 0.0, %v1221
        %v1223 = vpop.f32.mrb[0].mxu0
        %1224 = vmatprep.mubr.bf16.mxu0 0
        %1225 = vmatmul.mubr.bf16.gmra.mrb[0].mxu0 %v1070
        %v1226 = vpop.f32.mrb[0].mxu0
        %v1227 = vadd.f32 0.0, %v1226
        %v1228 = vpop.f32.mrb[0].mxu0
        %v1229 = vpop.f32.mrb[0].mxu0
        %v1230 = vadd.f32 0.0, %v1229
        %v1231 = vpop.f32.mrb[0].mxu0
        %1232 = vdwg.mxu0
        %v1233 = vadd.f32 %v885, %v1107
        %v1234 = vadd.f32 %v886, %v1110
        %v1235 = vadd.f32 %v887, %v1115
        %v1236 = vadd.f32 %v888, %v1118
        %v1237 = vadd.f32 %v889, %v1123
        %v1238 = vadd.f32 %v890, %v1126
        %v1239 = vadd.f32 %v891, %v1131
        %v1240 = vadd.f32 %v892, %v1134
        %v1241 = vadd.f32 %v893, %v1139
        %v1242 = vadd.f32 %v894, %v1142
        %v1243 = vadd.f32 %v895, %v1147
        %v1244 = vadd.f32 %v896, %v1150
        %v1245 = vadd.f32 %v897, %v1155
        %v1246 = vadd.f32 %v898, %v1158
        %v1247 = vadd.f32 %v899, %v1163
        %v1248 = vadd.f32 %v900, %v1166
        %v1249 = vadd.f32 %v901, %v1171
        %v1250 = vadd.f32 %v902, %v1174
        %v1251 = vadd.f32 %v903, %v1179
        %v1252 = vadd.f32 %v904, %v1182
        %v1253 = vadd.f32 %v905, %v1187
        %v1254 = vadd.f32 %v906, %v1190
        %v1255 = vadd.f32 %v907, %v1195
        %v1256 = vadd.f32 %v908, %v1198
        %v1257 = vadd.f32 %v909, %v1203
        %v1258 = vadd.f32 %v910, %v1206
        %v1259 = vadd.f32 %v911, %v1211
        %v1260 = vadd.f32 %v912, %v1214
        %v1261 = vadd.f32 %v913, %v1219
        %v1262 = vadd.f32 %v914, %v1222
        %v1263 = vadd.f32 %v915, %v1227
        %v1264 = vadd.f32 %v916, %v1230
        %vm1265 = vsmask.f32 7424
        %v1266 = vshrl.u32 %v971, 16
        %v1268 = vshll.u32 %v971, 16
        %v1270 = vrot.slane %v1268, 1
        %v1271 = vor.u32 %v1266, %v1270
        %v1273 = vshll.u32 %v972, 16
        %v1275 = vrot.slane %v1273, 1
        %v1276 = vsel %vm1265, %v1271, %v1275
        %v1277 = vshrl.u32 %v973, 16
        %v1279 = vshll.u32 %v973, 16
        %v1281 = vrot.slane %v1279, 1
        %v1282 = vor.u32 %v1277, %v1281
        %v1284 = vshll.u32 %v974, 16
        %v1286 = vrot.slane %v1284, 1
        %v1287 = vsel %vm1265, %v1282, %v1286
        %v1288 = vshrl.u32 %v975, 16
        %v1290 = vshll.u32 %v975, 16
        %v1292 = vrot.slane %v1290, 1
        %v1293 = vor.u32 %v1288, %v1292
        %v1295 = vshll.u32 %v976, 16
        %v1297 = vrot.slane %v1295, 1
        %v1298 = vsel %vm1265, %v1293, %v1297
        %v1299 = vshrl.u32 %v977, 16
        %v1301 = vshll.u32 %v977, 16
        %v1303 = vrot.slane %v1301, 1
        %v1304 = vor.u32 %v1299, %v1303
        %v1306 = vshll.u32 %v978, 16
        %v1308 = vrot.slane %v1306, 1
        %v1309 = vsel %vm1265, %v1304, %v1308
        %v1310 = vshrl.u32 %v979, 16
        %v1312 = vshll.u32 %v979, 16
        %v1314 = vrot.slane %v1312, 1
        %v1315 = vor.u32 %v1310, %v1314
        %v1317 = vshll.u32 %v980, 16
        %v1319 = vrot.slane %v1317, 1
        %v1320 = vsel %vm1265, %v1315, %v1319
        %v1321 = vshrl.u32 %v981, 16
        %v1323 = vshll.u32 %v981, 16
        %v1325 = vrot.slane %v1323, 1
        %v1326 = vor.u32 %v1321, %v1325
        %v1328 = vshll.u32 %v982, 16
        %v1330 = vrot.slane %v1328, 1
        %v1331 = vsel %vm1265, %v1326, %v1330
        %v1332 = vshrl.u32 %v983, 16
        %v1334 = vshll.u32 %v983, 16
        %v1336 = vrot.slane %v1334, 1
        %v1337 = vor.u32 %v1332, %v1336
        %v1339 = vshll.u32 %v984, 16
        %v1341 = vrot.slane %v1339, 1
        %v1342 = vsel %vm1265, %v1337, %v1341
        %v1343 = vshrl.u32 %v985, 16
        %v1345 = vshll.u32 %v985, 16
        %v1347 = vrot.slane %v1345, 1
        %v1348 = vor.u32 %v1343, %v1347
        %v1350 = vshll.u32 %v986, 16
        %v1352 = vrot.slane %v1350, 1
        %v1353 = vsel %vm1265, %v1348, %v1352
        %v1354 = vshrl.u32 %v987, 16
        %v1356 = vshll.u32 %v987, 16
        %v1358 = vrot.slane %v1356, 1
        %v1359 = vor.u32 %v1354, %v1358
        %v1361 = vshll.u32 %v988, 16
        %v1363 = vrot.slane %v1361, 1
        %v1364 = vsel %vm1265, %v1359, %v1363
        %v1365 = vshrl.u32 %v989, 16
        %v1367 = vshll.u32 %v989, 16
        %v1369 = vrot.slane %v1367, 1
        %v1370 = vor.u32 %v1365, %v1369
        %v1372 = vshll.u32 %v990, 16
        %v1374 = vrot.slane %v1372, 1
        %v1375 = vsel %vm1265, %v1370, %v1374
        %v1376 = vshrl.u32 %v991, 16
        %v1378 = vshll.u32 %v991, 16
        %v1380 = vrot.slane %v1378, 1
        %v1381 = vor.u32 %v1376, %v1380
        %v1383 = vshll.u32 %v992, 16
        %v1385 = vrot.slane %v1383, 1
        %v1386 = vsel %vm1265, %v1381, %v1385
        %v1387 = vshrl.u32 %v993, 16
        %v1389 = vshll.u32 %v993, 16
        %v1391 = vrot.slane %v1389, 1
        %v1392 = vor.u32 %v1387, %v1391
        %v1394 = vshll.u32 %v994, 16
        %v1396 = vrot.slane %v1394, 1
        %v1397 = vsel %vm1265, %v1392, %v1396
        %v1398 = vshrl.u32 %v995, 16
        %v1400 = vshll.u32 %v995, 16
        %v1402 = vrot.slane %v1400, 1
        %v1403 = vor.u32 %v1398, %v1402
        %v1405 = vshll.u32 %v996, 16
        %v1407 = vrot.slane %v1405, 1
        %v1408 = vsel %vm1265, %v1403, %v1407
        %v1409 = vshrl.u32 %v997, 16
        %v1411 = vshll.u32 %v997, 16
        %v1413 = vrot.slane %v1411, 1
        %v1414 = vor.u32 %v1409, %v1413
        %v1416 = vshll.u32 %v998, 16
        %v1418 = vrot.slane %v1416, 1
        %v1419 = vsel %vm1265, %v1414, %v1418
        %v1420 = vshrl.u32 %v999, 16
        %v1422 = vshll.u32 %v999, 16
        %v1424 = vrot.slane %v1422, 1
        %v1425 = vor.u32 %v1420, %v1424
        %v1427 = vshll.u32 %v1000, 16
        %v1429 = vrot.slane %v1427, 1
        %v1430 = vsel %vm1265, %v1425, %v1429
        %v1431 = vshrl.u32 %v1001, 16
        %v1433 = vshll.u32 %v1001, 16
        %v1435 = vrot.slane %v1433, 1
        %v1436 = vor.u32 %v1431, %v1435
        %v1438 = vshll.u32 %v1002, 16
        %v1440 = vrot.slane %v1438, 1
        %v1441 = vsel %vm1265, %v1436, %v1440
        %s1442 = scalar_lea.vmem %s3, 16
        %v1443 = vld [vmem:[%s1442] sm:$0xf]
        %v1444 = vld [vmem:[%s1442 + $0x4] sm:$0xf]
        %v1445 = vld [vmem:[%s1442 + $0x8] sm:$0xf]
        %v1446 = vld [vmem:[%s1442 + $0xc] sm:$0xf]
        %v1451 = vunpack.c.l.b16 %v1443
        %v1452 = vunpack.c.l.b16 %v1444
        %v1453 = vunpack.c.l.b16 %v1445
        %v1454 = vunpack.c.l.b16 %v1446
        %v1455 = vpack.c.b16 %v1452, %v1451
        %v1456 = vpack.c.b16 %v1454, %v1453
        %v1460 = vsel %vm1023, %v1276, 0
        %v1463 = vsel %vm1023, %v1287, 0
        %v1466 = vsel %vm1023, %v1298, 0
        %v1469 = vsel %vm1023, %v1309, 0
        %v1472 = vsel %vm1023, %v1320, 0
        %v1475 = vsel %vm1023, %v1331, 0
        %v1478 = vsel %vm1023, %v1342, 0
        %v1481 = vsel %vm1023, %v1353, 0
        %v1484 = vsel %vm1023, %v1364, 0
        %v1487 = vsel %vm1023, %v1375, 0
        %v1490 = vsel %vm1023, %v1386, 0
        %v1493 = vsel %vm1023, %v1397, 0
        %v1496 = vsel %vm1023, %v1408, 0
        %v1499 = vsel %vm1023, %v1419, 0
        %v1502 = vsel %vm1023, %v1430, 0
        %v1505 = vsel %vm1023, %v1441, 0
        %1507 = vmatprep.subr.bf16.mxu0 0
        %1508 = vmatpush1.bf16.msra.mxu0 %v1455
        %1509 = vmatprep.subr.bf16.mxu0 0
        %1510 = vmatpush1.bf16.msra.mxu0 %v1456
        %1511 = vmatprep.subr.bf16.mxu0 0
        %1512 = vmatpush1.bf16.msra.mxu0 0
        %1513 = vmatprep.subr.bf16.mxu0 0
        %1514 = vmatpush1.bf16.msra.mxu0 0
        %1515 = vmatprep.subr.bf16.mxu0 0
        %1516 = vmatpush1.bf16.msra.mxu0 0
        %1517 = vmatprep.subr.bf16.mxu0 0
        %1518 = vmatpush1.bf16.msra.mxu0 0
        %1519 = vmatprep.subr.bf16.mxu0 0
        %1520 = vmatpush1.bf16.msra.mxu0 0
        %1521 = vmatprep.subr.bf16.mxu0 0
        %1522 = vmatpush1.bf16.msra.mxu0 0
        %1523 = vmatprep.subr.bf16.mxu0 0
        %1524 = vmatpush1.bf16.msra.mxu0 0
        %1525 = vmatprep.subr.bf16.mxu0 0
        %1526 = vmatpush1.bf16.msra.mxu0 0
        %1527 = vmatprep.subr.bf16.mxu0 0
        %1528 = vmatpush1.bf16.msra.mxu0 0
        %1529 = vmatprep.subr.bf16.mxu0 0
        %1530 = vmatpush1.bf16.msra.mxu0 0
        %1531 = vmatprep.subr.bf16.mxu0 0
        %1532 = vmatpush1.bf16.msra.mxu0 0
        %1533 = vmatprep.subr.bf16.mxu0 0
        %1534 = vmatpush1.bf16.msra.mxu0 0
        %1535 = vmatprep.subr.bf16.mxu0 0
        %1536 = vmatpush1.bf16.msra.mxu0 0
        %1537 = vmatprep.subr.bf16.mxu0 0
        %1538 = vmatpush1.bf16.msra.mxu0 0
        %1539 = vmatprep.mubr.bf16.mxu0 0
        %1540 = vmatmul.mubr.bf16.gmra.mrb[0].mxu0 %v1460
        %v1541 = vpop.f32.mrb[0].mxu0
        %v1542 = vadd.f32 0.0, %v1541
        %v1543 = vpop.f32.mrb[0].mxu0
        %v1544 = vpop.f32.mrb[0].mxu0
        %v1545 = vadd.f32 0.0, %v1544
        %v1546 = vpop.f32.mrb[0].mxu0
        %1547 = vmatprep.mubr.bf16.mxu0 0
        %1548 = vmatmul.mubr.bf16.gmra.mrb[0].mxu0 %v1463
        %v1549 = vpop.f32.mrb[0].mxu0
        %v1550 = vadd.f32 0.0, %v1549
        %v1551 = vpop.f32.mrb[0].mxu0
        %v1552 = vpop.f32.mrb[0].mxu0
        %v1553 = vadd.f32 0.0, %v1552
        %v1554 = vpop.f32.mrb[0].mxu0
        %1555 = vmatprep.mubr.bf16.mxu0 0
        %1556 = vmatmul.mubr.bf16.gmra.mrb[0].mxu0 %v1466
        %v1557 = vpop.f32.mrb[0].mxu0
        %v1558 = vadd.f32 0.0, %v1557
        %v1559 = vpop.f32.mrb[0].mxu0
        %v1560 = vpop.f32.mrb[0].mxu0
        %v1561 = vadd.f32 0.0, %v1560
        %v1562 = vpop.f32.mrb[0].mxu0
        %1563 = vmatprep.mubr.bf16.mxu0 0
        %1564 = vmatmul.mubr.bf16.gmra.mrb[0].mxu0 %v1469
        %v1565 = vpop.f32.mrb[0].mxu0
        %v1566 = vadd.f32 0.0, %v1565
        %v1567 = vpop.f32.mrb[0].mxu0
        %v1568 = vpop.f32.mrb[0].mxu0
        %v1569 = vadd.f32 0.0, %v1568
        %v1570 = vpop.f32.mrb[0].mxu0
        %1571 = vmatprep.mubr.bf16.mxu0 0
        %1572 = vmatmul.mubr.bf16.gmra.mrb[0].mxu0 %v1472
        %v1573 = vpop.f32.mrb[0].mxu0
        %v1574 = vadd.f32 0.0, %v1573
        %v1575 = vpop.f32.mrb[0].mxu0
        %v1576 = vpop.f32.mrb[0].mxu0
        %v1577 = vadd.f32 0.0, %v1576
        %v1578 = vpop.f32.mrb[0].mxu0
        %1579 = vmatprep.mubr.bf16.mxu0 0
        %1580 = vmatmul.mubr.bf16.gmra.mrb[0].mxu0 %v1475
        %v1581 = vpop.f32.mrb[0].mxu0
        %v1582 = vadd.f32 0.0, %v1581
        %v1583 = vpop.f32.mrb[0].mxu0
        %v1584 = vpop.f32.mrb[0].mxu0
        %v1585 = vadd.f32 0.0, %v1584
        %v1586 = vpop.f32.mrb[0].mxu0
        %1587 = vmatprep.mubr.bf16.mxu0 0
        %1588 = vmatmul.mubr.bf16.gmra.mrb[0].mxu0 %v1478
        %v1589 = vpop.f32.mrb[0].mxu0
        %v1590 = vadd.f32 0.0, %v1589
        %v1591 = vpop.f32.mrb[0].mxu0
        %v1592 = vpop.f32.mrb[0].mxu0
        %v1593 = vadd.f32 0.0, %v1592
        %v1594 = vpop.f32.mrb[0].mxu0
        %1595 = vmatprep.mubr.bf16.mxu0 0
        %1596 = vmatmul.mubr.bf16.gmra.mrb[0].mxu0 %v1481
        %v1597 = vpop.f32.mrb[0].mxu0
        %v1598 = vadd.f32 0.0, %v1597
        %v1599 = vpop.f32.mrb[0].mxu0
        %v1600 = vpop.f32.mrb[0].mxu0
        %v1601 = vadd.f32 0.0, %v1600
        %v1602 = vpop.f32.mrb[0].mxu0
        %1603 = vmatprep.mubr.bf16.mxu0 0
        %1604 = vmatmul.mubr.bf16.gmra.mrb[0].mxu0 %v1484
        %v1605 = vpop.f32.mrb[0].mxu0
        %v1606 = vadd.f32 0.0, %v1605
        %v1607 = vpop.f32.mrb[0].mxu0
        %v1608 = vpop.f32.mrb[0].mxu0
        %v1609 = vadd.f32 0.0, %v1608
        %v1610 = vpop.f32.mrb[0].mxu0
        %1611 = vmatprep.mubr.bf16.mxu0 0
        %1612 = vmatmul.mubr.bf16.gmra.mrb[0].mxu0 %v1487
        %v1613 = vpop.f32.mrb[0].mxu0
        %v1614 = vadd.f32 0.0, %v1613
        %v1615 = vpop.f32.mrb[0].mxu0
        %v1616 = vpop.f32.mrb[0].mxu0
        %v1617 = vadd.f32 0.0, %v1616
        %v1618 = vpop.f32.mrb[0].mxu0
        %1619 = vmatprep.mubr.bf16.mxu0 0
        %1620 = vmatmul.mubr.bf16.gmra.mrb[0].mxu0 %v1490
        %v1621 = vpop.f32.mrb[0].mxu0
        %v1622 = vadd.f32 0.0, %v1621
        %v1623 = vpop.f32.mrb[0].mxu0
        %v1624 = vpop.f32.mrb[0].mxu0
        %v1625 = vadd.f32 0.0, %v1624
        %v1626 = vpop.f32.mrb[0].mxu0
        %1627 = vmatprep.mubr.bf16.mxu0 0
        %1628 = vmatmul.mubr.bf16.gmra.mrb[0].mxu0 %v1493
        %v1629 = vpop.f32.mrb[0].mxu0
        %v1630 = vadd.f32 0.0, %v1629
        %v1631 = vpop.f32.mrb[0].mxu0
        %v1632 = vpop.f32.mrb[0].mxu0
        %v1633 = vadd.f32 0.0, %v1632
        %v1634 = vpop.f32.mrb[0].mxu0
        %1635 = vmatprep.mubr.bf16.mxu0 0
        %1636 = vmatmul.mubr.bf16.gmra.mrb[0].mxu0 %v1496
        %v1637 = vpop.f32.mrb[0].mxu0
        %v1638 = vadd.f32 0.0, %v1637
        %v1639 = vpop.f32.mrb[0].mxu0
        %v1640 = vpop.f32.mrb[0].mxu0
        %v1641 = vadd.f32 0.0, %v1640
        %v1642 = vpop.f32.mrb[0].mxu0
        %1643 = vmatprep.mubr.bf16.mxu0 0
        %1644 = vmatmul.mubr.bf16.gmra.mrb[0].mxu0 %v1499
        %v1645 = vpop.f32.mrb[0].mxu0
        %v1646 = vadd.f32 0.0, %v1645
        %v1647 = vpop.f32.mrb[0].mxu0
        %v1648 = vpop.f32.mrb[0].mxu0
        %v1649 = vadd.f32 0.0, %v1648
        %v1650 = vpop.f32.mrb[0].mxu0
        %1651 = vmatprep.mubr.bf16.mxu0 0
        %1652 = vmatmul.mubr.bf16.gmra.mrb[0].mxu0 %v1502
        %v1653 = vpop.f32.mrb[0].mxu0
        %v1654 = vadd.f32 0.0, %v1653
        %v1655 = vpop.f32.mrb[0].mxu0
        %v1656 = vpop.f32.mrb[0].mxu0
        %v1657 = vadd.f32 0.0, %v1656
        %v1658 = vpop.f32.mrb[0].mxu0
        %1659 = vmatprep.mubr.bf16.mxu0 0
        %1660 = vmatmul.mubr.bf16.gmra.mrb[0].mxu0 %v1505
        %v1661 = vpop.f32.mrb[0].mxu0
        %v1662 = vadd.f32 0.0, %v1661
        %v1663 = vpop.f32.mrb[0].mxu0
        %v1664 = vpop.f32.mrb[0].mxu0
        %v1665 = vadd.f32 0.0, %v1664
        %v1666 = vpop.f32.mrb[0].mxu0
        %1667 = vdwg.mxu0
        %v1668 = vadd.f32 %v1233, %v1542
        %v1669 = vadd.f32 %v1234, %v1545
        %v1670 = vadd.f32 %v1235, %v1550
        %v1671 = vadd.f32 %v1236, %v1553
        %v1672 = vadd.f32 %v1237, %v1558
        %v1673 = vadd.f32 %v1238, %v1561
        %v1674 = vadd.f32 %v1239, %v1566
        %v1675 = vadd.f32 %v1240, %v1569
        %v1676 = vadd.f32 %v1241, %v1574
        %v1677 = vadd.f32 %v1242, %v1577
        %v1678 = vadd.f32 %v1243, %v1582
        %v1679 = vadd.f32 %v1244, %v1585
        %v1680 = vadd.f32 %v1245, %v1590
        %v1681 = vadd.f32 %v1246, %v1593
        %v1682 = vadd.f32 %v1247, %v1598
        %v1683 = vadd.f32 %v1248, %v1601
        %v1684 = vadd.f32 %v1249, %v1606
        %v1685 = vadd.f32 %v1250, %v1609
        %v1686 = vadd.f32 %v1251, %v1614
        %v1687 = vadd.f32 %v1252, %v1617
        %v1688 = vadd.f32 %v1253, %v1622
        %v1689 = vadd.f32 %v1254, %v1625
        %v1690 = vadd.f32 %v1255, %v1630
        %v1691 = vadd.f32 %v1256, %v1633
        %v1692 = vadd.f32 %v1257, %v1638
        %v1693 = vadd.f32 %v1258, %v1641
        %v1694 = vadd.f32 %v1259, %v1646
        %v1695 = vadd.f32 %v1260, %v1649
        %v1696 = vadd.f32 %v1261, %v1654
        %v1697 = vadd.f32 %v1262, %v1657
        %v1698 = vadd.f32 %v1263, %v1662
        %v1699 = vadd.f32 %v1264, %v1665
        %vm1732 = vcmask 1046528
        %v1733 = vrot.slane %v971, 1
        %v1734 = vrot.slane %v972, 1
        %v1735 = vsel %vm1732, %v1733, %v1734
        %v1736 = vrot.slane %v973, 1
        %v1737 = vrot.slane %v974, 1
        %v1738 = vsel %vm1732, %v1736, %v1737
        %v1739 = vrot.slane %v975, 1
        %v1740 = vrot.slane %v976, 1
        %v1741 = vsel %vm1732, %v1739, %v1740
        %v1742 = vrot.slane %v977, 1
        %v1743 = vrot.slane %v978, 1
        %v1744 = vsel %vm1732, %v1742, %v1743
        %v1745 = vrot.slane %v979, 1
        %v1746 = vrot.slane %v980, 1
        %v1747 = vsel %vm1732, %v1745, %v1746
        %v1748 = vrot.slane %v981, 1
        %v1749 = vrot.slane %v982, 1
        %v1750 = vsel %vm1732, %v1748, %v1749
        %v1751 = vrot.slane %v983, 1
        %v1752 = vrot.slane %v984, 1
        %v1753 = vsel %vm1732, %v1751, %v1752
        %v1754 = vrot.slane %v985, 1
        %v1755 = vrot.slane %v986, 1
        %v1756 = vsel %vm1732, %v1754, %v1755
        %v1757 = vrot.slane %v987, 1
        %v1758 = vrot.slane %v988, 1
        %v1759 = vsel %vm1732, %v1757, %v1758
        %v1760 = vrot.slane %v989, 1
        %v1761 = vrot.slane %v990, 1
        %v1762 = vsel %vm1732, %v1760, %v1761
        %v1763 = vrot.slane %v991, 1
        %v1764 = vrot.slane %v992, 1
        %v1765 = vsel %vm1732, %v1763, %v1764
        %v1766 = vrot.slane %v993, 1
        %v1767 = vrot.slane %v994, 1
        %v1768 = vsel %vm1732, %v1766, %v1767
        %v1769 = vrot.slane %v995, 1
        %v1770 = vrot.slane %v996, 1
        %v1771 = vsel %vm1732, %v1769, %v1770
        %v1772 = vrot.slane %v997, 1
        %v1773 = vrot.slane %v998, 1
        %v1774 = vsel %vm1732, %v1772, %v1773
        %v1775 = vrot.slane %v999, 1
        %v1776 = vrot.slane %v1000, 1
        %v1777 = vsel %vm1732, %v1775, %v1776
        %v1778 = vrot.slane %v1001, 1
        %v1779 = vrot.slane %v1002, 1
        %v1780 = vsel %vm1732, %v1778, %v1779
        %s1781 = scalar_lea.vmem %s3, 32
        %v1782 = vld [vmem:[%s1781] sm:$0xf]
        %v1783 = vld [vmem:[%s1781 + $0x4] sm:$0xf]
        %v1784 = vld [vmem:[%s1781 + $0x8] sm:$0xf]
        %v1785 = vld [vmem:[%s1781 + $0xc] sm:$0xf]
        %v1790 = vunpack.c.l.b16 %v1782
        %v1791 = vunpack.c.l.b16 %v1783
        %v1792 = vunpack.c.l.b16 %v1784
        %v1793 = vunpack.c.l.b16 %v1785
        %v1794 = vpack.c.b16 %v1791, %v1790
        %v1795 = vpack.c.b16 %v1793, %v1792
        %v1799 = vsel %vm1023, %v1735, 0
        %v1802 = vsel %vm1023, %v1738, 0
        %v1805 = vsel %vm1023, %v1741, 0
        %v1808 = vsel %vm1023, %v1744, 0
        %v1811 = vsel %vm1023, %v1747, 0
        %v1814 = vsel %vm1023, %v1750, 0
        %v1817 = vsel %vm1023, %v1753, 0
        %v1820 = vsel %vm1023, %v1756, 0
        %v1823 = vsel %vm1023, %v1759, 0
        %v1826 = vsel %vm1023, %v1762, 0
        %v1829 = vsel %vm1023, %v1765, 0
        %v1832 = vsel %vm1023, %v1768, 0
        %v1835 = vsel %vm1023, %v1771, 0
        %v1838 = vsel %vm1023, %v1774, 0
        %v1841 = vsel %vm1023, %v1777, 0
        %v1844 = vsel %vm1023, %v1780, 0
        %1846 = vmatprep.subr.bf16.mxu0 0
        %1847 = vmatpush1.bf16.msra.mxu0 %v1794
        %1848 = vmatprep.subr.bf16.mxu0 0
        %1849 = vmatpush1.bf16.msra.mxu0 %v1795
        %1850 = vmatprep.subr.bf16.mxu0 0
        %1851 = vmatpush1.bf16.msra.mxu0 0
        %1852 = vmatprep.subr.bf16.mxu0 0
        %1853 = vmatpush1.bf16.msra.mxu0 0
        %1854 = vmatprep.subr.bf16.mxu0 0
        %1855 = vmatpush1.bf16.msra.mxu0 0
        %1856 = vmatprep.subr.bf16.mxu0 0
        %1857 = vmatpush1.bf16.msra.mxu0 0
        %1858 = vmatprep.subr.bf16.mxu0 0
        %1859 = vmatpush1.bf16.msra.mxu0 0
        %1860 = vmatprep.subr.bf16.mxu0 0
        %1861 = vmatpush1.bf16.msra.mxu0 0
        %1862 = vmatprep.subr.bf16.mxu0 0
        %1863 = vmatpush1.bf16.msra.mxu0 0
        %1864 = vmatprep.subr.bf16.mxu0 0
        %1865 = vmatpush1.bf16.msra.mxu0 0
        %1866 = vmatprep.subr.bf16.mxu0 0
        %1867 = vmatpush1.bf16.msra.mxu0 0
        %1868 = vmatprep.subr.bf16.mxu0 0
        %1869 = vmatpush1.bf16.msra.mxu0 0
        %1870 = vmatprep.subr.bf16.mxu0 0
        %1871 = vmatpush1.bf16.msra.mxu0 0
        %1872 = vmatprep.subr.bf16.mxu0 0
        %1873 = vmatpush1.bf16.msra.mxu0 0
        %1874 = vmatprep.subr.bf16.mxu0 0
        %1875 = vmatpush1.bf16.msra.mxu0 0
        %1876 = vmatprep.subr.bf16.mxu0 0
        %1877 = vmatpush1.bf16.msra.mxu0 0
        %1878 = vmatprep.mubr.bf16.mxu0 0
        %1879 = vmatmul.mubr.bf16.gmra.mrb[0].mxu0 %v1799
        %v1880 = vpop.f32.mrb[0].mxu0
        %v1881 = vadd.f32 0.0, %v1880
        %v1882 = vpop.f32.mrb[0].mxu0
        %v1883 = vpop.f32.mrb[0].mxu0
        %v1884 = vadd.f32 0.0, %v1883
        %v1885 = vpop.f32.mrb[0].mxu0
        %1886 = vmatprep.mubr.bf16.mxu0 0
        %1887 = vmatmul.mubr.bf16.gmra.mrb[0].mxu0 %v1802
        %v1888 = vpop.f32.mrb[0].mxu0
        %v1889 = vadd.f32 0.0, %v1888
        %v1890 = vpop.f32.mrb[0].mxu0
        %v1891 = vpop.f32.mrb[0].mxu0
        %v1892 = vadd.f32 0.0, %v1891
        %v1893 = vpop.f32.mrb[0].mxu0
        %1894 = vmatprep.mubr.bf16.mxu0 0
        %1895 = vmatmul.mubr.bf16.gmra.mrb[0].mxu0 %v1805
        %v1896 = vpop.f32.mrb[0].mxu0
        %v1897 = vadd.f32 0.0, %v1896
        %v1898 = vpop.f32.mrb[0].mxu0
        %v1899 = vpop.f32.mrb[0].mxu0
        %v1900 = vadd.f32 0.0, %v1899
        %v1901 = vpop.f32.mrb[0].mxu0
        %1902 = vmatprep.mubr.bf16.mxu0 0
        %1903 = vmatmul.mubr.bf16.gmra.mrb[0].mxu0 %v1808
        %v1904 = vpop.f32.mrb[0].mxu0
        %v1905 = vadd.f32 0.0, %v1904
        %v1906 = vpop.f32.mrb[0].mxu0
        %v1907 = vpop.f32.mrb[0].mxu0
        %v1908 = vadd.f32 0.0, %v1907
        %v1909 = vpop.f32.mrb[0].mxu0
        %1910 = vmatprep.mubr.bf16.mxu0 0
        %1911 = vmatmul.mubr.bf16.gmra.mrb[0].mxu0 %v1811
        %v1912 = vpop.f32.mrb[0].mxu0
        %v1913 = vadd.f32 0.0, %v1912
        %v1914 = vpop.f32.mrb[0].mxu0
        %v1915 = vpop.f32.mrb[0].mxu0
        %v1916 = vadd.f32 0.0, %v1915
        %v1917 = vpop.f32.mrb[0].mxu0
        %1918 = vmatprep.mubr.bf16.mxu0 0
        %1919 = vmatmul.mubr.bf16.gmra.mrb[0].mxu0 %v1814
        %v1920 = vpop.f32.mrb[0].mxu0
        %v1921 = vadd.f32 0.0, %v1920
        %v1922 = vpop.f32.mrb[0].mxu0
        %v1923 = vpop.f32.mrb[0].mxu0
        %v1924 = vadd.f32 0.0, %v1923
        %v1925 = vpop.f32.mrb[0].mxu0
        %1926 = vmatprep.mubr.bf16.mxu0 0
        %1927 = vmatmul.mubr.bf16.gmra.mrb[0].mxu0 %v1817
        %v1928 = vpop.f32.mrb[0].mxu0
        %v1929 = vadd.f32 0.0, %v1928
        %v1930 = vpop.f32.mrb[0].mxu0
        %v1931 = vpop.f32.mrb[0].mxu0
        %v1932 = vadd.f32 0.0, %v1931
        %v1933 = vpop.f32.mrb[0].mxu0
        %1934 = vmatprep.mubr.bf16.mxu0 0
        %1935 = vmatmul.mubr.bf16.gmra.mrb[0].mxu0 %v1820
        %v1936 = vpop.f32.mrb[0].mxu0
        %v1937 = vadd.f32 0.0, %v1936
        %v1938 = vpop.f32.mrb[0].mxu0
        %v1939 = vpop.f32.mrb[0].mxu0
        %v1940 = vadd.f32 0.0, %v1939
        %v1941 = vpop.f32.mrb[0].mxu0
        %1942 = vmatprep.mubr.bf16.mxu0 0
        %1943 = vmatmul.mubr.bf16.gmra.mrb[0].mxu0 %v1823
        %v1944 = vpop.f32.mrb[0].mxu0
        %v1945 = vadd.f32 0.0, %v1944
        %v1946 = vpop.f32.mrb[0].mxu0
        %v1947 = vpop.f32.mrb[0].mxu0
        %v1948 = vadd.f32 0.0, %v1947
        %v1949 = vpop.f32.mrb[0].mxu0
        %1950 = vmatprep.mubr.bf16.mxu0 0
        %1951 = vmatmul.mubr.bf16.gmra.mrb[0].mxu0 %v1826
        %v1952 = vpop.f32.mrb[0].mxu0
        %v1953 = vadd.f32 0.0, %v1952
        %v1954 = vpop.f32.mrb[0].mxu0
        %v1955 = vpop.f32.mrb[0].mxu0
        %v1956 = vadd.f32 0.0, %v1955
        %v1957 = vpop.f32.mrb[0].mxu0
        %1958 = vmatprep.mubr.bf16.mxu0 0
        %1959 = vmatmul.mubr.bf16.gmra.mrb[0].mxu0 %v1829
        %v1960 = vpop.f32.mrb[0].mxu0
        %v1961 = vadd.f32 0.0, %v1960
        %v1962 = vpop.f32.mrb[0].mxu0
        %v1963 = vpop.f32.mrb[0].mxu0
        %v1964 = vadd.f32 0.0, %v1963
        %v1965 = vpop.f32.mrb[0].mxu0
        %1966 = vmatprep.mubr.bf16.mxu0 0
        %1967 = vmatmul.mubr.bf16.gmra.mrb[0].mxu0 %v1832
        %v1968 = vpop.f32.mrb[0].mxu0
        %v1969 = vadd.f32 0.0, %v1968
        %v1970 = vpop.f32.mrb[0].mxu0
        %v1971 = vpop.f32.mrb[0].mxu0
        %v1972 = vadd.f32 0.0, %v1971
        %v1973 = vpop.f32.mrb[0].mxu0
        %1974 = vmatprep.mubr.bf16.mxu0 0
        %1975 = vmatmul.mubr.bf16.gmra.mrb[0].mxu0 %v1835
        %v1976 = vpop.f32.mrb[0].mxu0
        %v1977 = vadd.f32 0.0, %v1976
        %v1978 = vpop.f32.mrb[0].mxu0
        %v1979 = vpop.f32.mrb[0].mxu0
        %v1980 = vadd.f32 0.0, %v1979
        %v1981 = vpop.f32.mrb[0].mxu0
        %1982 = vmatprep.mubr.bf16.mxu0 0
        %1983 = vmatmul.mubr.bf16.gmra.mrb[0].mxu0 %v1838
        %v1984 = vpop.f32.mrb[0].mxu0
        %v1985 = vadd.f32 0.0, %v1984
        %v1986 = vpop.f32.mrb[0].mxu0
        %v1987 = vpop.f32.mrb[0].mxu0
        %v1988 = vadd.f32 0.0, %v1987
        %v1989 = vpop.f32.mrb[0].mxu0
        %1990 = vmatprep.mubr.bf16.mxu0 0
        %1991 = vmatmul.mubr.bf16.gmra.mrb[0].mxu0 %v1841
        %v1992 = vpop.f32.mrb[0].mxu0
        %v1993 = vadd.f32 0.0, %v1992
        %v1994 = vpop.f32.mrb[0].mxu0
        %v1995 = vpop.f32.mrb[0].mxu0
        %v1996 = vadd.f32 0.0, %v1995
        %v1997 = vpop.f32.mrb[0].mxu0
        %1998 = vmatprep.mubr.bf16.mxu0 0
        %1999 = vmatmul.mubr.bf16.gmra.mrb[0].mxu0 %v1844
        %v2000 = vpop.f32.mrb[0].mxu0
        %v2001 = vadd.f32 0.0, %v2000
        %v2002 = vpop.f32.mrb[0].mxu0
        %v2003 = vpop.f32.mrb[0].mxu0
        %v2004 = vadd.f32 0.0, %v2003
        %v2005 = vpop.f32.mrb[0].mxu0
        %2006 = vdwg.mxu0
        %v2007 = vadd.f32 %v1668, %v1881
        %v2008 = vadd.f32 %v1669, %v1884
        %v2009 = vadd.f32 %v1670, %v1889
        %v2010 = vadd.f32 %v1671, %v1892
        %v2011 = vadd.f32 %v1672, %v1897
        %v2012 = vadd.f32 %v1673, %v1900
        %v2013 = vadd.f32 %v1674, %v1905
        %v2014 = vadd.f32 %v1675, %v1908
        %v2015 = vadd.f32 %v1676, %v1913
        %v2016 = vadd.f32 %v1677, %v1916
        %v2017 = vadd.f32 %v1678, %v1921
        %v2018 = vadd.f32 %v1679, %v1924
        %v2019 = vadd.f32 %v1680, %v1929
        %v2020 = vadd.f32 %v1681, %v1932
        %v2021 = vadd.f32 %v1682, %v1937
        %v2022 = vadd.f32 %v1683, %v1940
        %v2023 = vadd.f32 %v1684, %v1945
        %v2024 = vadd.f32 %v1685, %v1948
        %v2025 = vadd.f32 %v1686, %v1953
        %v2026 = vadd.f32 %v1687, %v1956
        %v2027 = vadd.f32 %v1688, %v1961
        %v2028 = vadd.f32 %v1689, %v1964
        %v2029 = vadd.f32 %v1690, %v1969
        %v2030 = vadd.f32 %v1691, %v1972
        %v2031 = vadd.f32 %v1692, %v1977
        %v2032 = vadd.f32 %v1693, %v1980
        %v2033 = vadd.f32 %v1694, %v1985
        %v2034 = vadd.f32 %v1695, %v1988
        %v2035 = vadd.f32 %v1696, %v1993
        %v2036 = vadd.f32 %v1697, %v1996
        %v2037 = vadd.f32 %v1698, %v2001
        %v2038 = vadd.f32 %v1699, %v2004
        %s2039 = scalar_lea.vmem %s3, 48
        %v2040 = vld [vmem:[%s2039] sm:$0xf]
        %v2041 = vld [vmem:[%s2039 + $0x4] sm:$0xf]
        %v2042 = vld [vmem:[%s2039 + $0x8] sm:$0xf]
        %v2043 = vld [vmem:[%s2039 + $0xc] sm:$0xf]
        %v2048 = vunpack.c.l.b16 %v2040
        %v2049 = vunpack.c.l.b16 %v2041
        %v2050 = vunpack.c.l.b16 %v2042
        %v2051 = vunpack.c.l.b16 %v2043
        %v2052 = vpack.c.b16 %v2049, %v2048
        %v2053 = vpack.c.b16 %v2051, %v2050
        %v2057 = vsel %vm1023, %v1003, 0
        %2059 = vmatprep.subr.bf16.mxu0 0
        %2060 = vmatpush1.bf16.msra.mxu0 %v2052
        %2061 = vmatprep.subr.bf16.mxu0 0
        %2062 = vmatpush1.bf16.msra.mxu0 %v2053
        %2063 = vmatprep.subr.bf16.mxu0 0
        %2064 = vmatpush1.bf16.msra.mxu0 0
        %2065 = vmatprep.subr.bf16.mxu0 0
        %2066 = vmatpush1.bf16.msra.mxu0 0
        %2067 = vmatprep.subr.bf16.mxu0 0
        %2068 = vmatpush1.bf16.msra.mxu0 0
        %2069 = vmatprep.subr.bf16.mxu0 0
        %2070 = vmatpush1.bf16.msra.mxu0 0
        %2071 = vmatprep.subr.bf16.mxu0 0
        %2072 = vmatpush1.bf16.msra.mxu0 0
        %2073 = vmatprep.subr.bf16.mxu0 0
        %2074 = vmatpush1.bf16.msra.mxu0 0
        %2075 = vmatprep.subr.bf16.mxu0 0
        %2076 = vmatpush1.bf16.msra.mxu0 0
        %2077 = vmatprep.subr.bf16.mxu0 0
        %2078 = vmatpush1.bf16.msra.mxu0 0
        %2079 = vmatprep.subr.bf16.mxu0 0
        %2080 = vmatpush1.bf16.msra.mxu0 0
        %2081 = vmatprep.subr.bf16.mxu0 0
        %2082 = vmatpush1.bf16.msra.mxu0 0
        %2083 = vmatprep.subr.bf16.mxu0 0
        %2084 = vmatpush1.bf16.msra.mxu0 0
        %2085 = vmatprep.subr.bf16.mxu0 0
        %2086 = vmatpush1.bf16.msra.mxu0 0
        %2087 = vmatprep.subr.bf16.mxu0 0
        %2088 = vmatpush1.bf16.msra.mxu0 0
        %2089 = vmatprep.subr.bf16.mxu0 0
        %2090 = vmatpush1.bf16.msra.mxu0 0
        %2091 = vmatprep.mubr.bf16.mxu0 0
        %2092 = vmatmul.mubr.bf16.gmra.mrb[0].mxu0 %v1028
        %v2093 = vpop.f32.mrb[0].mxu0
        %v2094 = vadd.f32 0.0, %v2093
        %v2095 = vpop.f32.mrb[0].mxu0
        %v2096 = vpop.f32.mrb[0].mxu0
        %v2097 = vadd.f32 0.0, %v2096
        %v2098 = vpop.f32.mrb[0].mxu0
        %2099 = vmatprep.mubr.bf16.mxu0 0
        %2100 = vmatmul.mubr.bf16.gmra.mrb[0].mxu0 %v1031
        %v2101 = vpop.f32.mrb[0].mxu0
        %v2102 = vadd.f32 0.0, %v2101
        %v2103 = vpop.f32.mrb[0].mxu0
        %v2104 = vpop.f32.mrb[0].mxu0
        %v2105 = vadd.f32 0.0, %v2104
        %v2106 = vpop.f32.mrb[0].mxu0
        %2107 = vmatprep.mubr.bf16.mxu0 0
        %2108 = vmatmul.mubr.bf16.gmra.mrb[0].mxu0 %v1034
        %v2109 = vpop.f32.mrb[0].mxu0
        %v2110 = vadd.f32 0.0, %v2109
        %v2111 = vpop.f32.mrb[0].mxu0
        %v2112 = vpop.f32.mrb[0].mxu0
        %v2113 = vadd.f32 0.0, %v2112
        %v2114 = vpop.f32.mrb[0].mxu0
        %2115 = vmatprep.mubr.bf16.mxu0 0
        %2116 = vmatmul.mubr.bf16.gmra.mrb[0].mxu0 %v1037
        %v2117 = vpop.f32.mrb[0].mxu0
        %v2118 = vadd.f32 0.0, %v2117
        %v2119 = vpop.f32.mrb[0].mxu0
        %v2120 = vpop.f32.mrb[0].mxu0
        %v2121 = vadd.f32 0.0, %v2120
        %v2122 = vpop.f32.mrb[0].mxu0
        %2123 = vmatprep.mubr.bf16.mxu0 0
        %2124 = vmatmul.mubr.bf16.gmra.mrb[0].mxu0 %v1040
        %v2125 = vpop.f32.mrb[0].mxu0
        %v2126 = vadd.f32 0.0, %v2125
        %v2127 = vpop.f32.mrb[0].mxu0
        %v2128 = vpop.f32.mrb[0].mxu0
        %v2129 = vadd.f32 0.0, %v2128
        %v2130 = vpop.f32.mrb[0].mxu0
        %2131 = vmatprep.mubr.bf16.mxu0 0
        %2132 = vmatmul.mubr.bf16.gmra.mrb[0].mxu0 %v1043
        %v2133 = vpop.f32.mrb[0].mxu0
        %v2134 = vadd.f32 0.0, %v2133
        %v2135 = vpop.f32.mrb[0].mxu0
        %v2136 = vpop.f32.mrb[0].mxu0
        %v2137 = vadd.f32 0.0, %v2136
        %v2138 = vpop.f32.mrb[0].mxu0
        %2139 = vmatprep.mubr.bf16.mxu0 0
        %2140 = vmatmul.mubr.bf16.gmra.mrb[0].mxu0 %v1046
        %v2141 = vpop.f32.mrb[0].mxu0
        %v2142 = vadd.f32 0.0, %v2141
        %v2143 = vpop.f32.mrb[0].mxu0
        %v2144 = vpop.f32.mrb[0].mxu0
        %v2145 = vadd.f32 0.0, %v2144
        %v2146 = vpop.f32.mrb[0].mxu0
        %2147 = vmatprep.mubr.bf16.mxu0 0
        %2148 = vmatmul.mubr.bf16.gmra.mrb[0].mxu0 %v1049
        %v2149 = vpop.f32.mrb[0].mxu0
        %v2150 = vadd.f32 0.0, %v2149
        %v2151 = vpop.f32.mrb[0].mxu0
        %v2152 = vpop.f32.mrb[0].mxu0
        %v2153 = vadd.f32 0.0, %v2152
        %v2154 = vpop.f32.mrb[0].mxu0
        %2155 = vmatprep.mubr.bf16.mxu0 0
        %2156 = vmatmul.mubr.bf16.gmra.mrb[0].mxu0 %v1052
        %v2157 = vpop.f32.mrb[0].mxu0
        %v2158 = vadd.f32 0.0, %v2157
        %v2159 = vpop.f32.mrb[0].mxu0
        %v2160 = vpop.f32.mrb[0].mxu0
        %v2161 = vadd.f32 0.0, %v2160
        %v2162 = vpop.f32.mrb[0].mxu0
        %2163 = vmatprep.mubr.bf16.mxu0 0
        %2164 = vmatmul.mubr.bf16.gmra.mrb[0].mxu0 %v1055
        %v2165 = vpop.f32.mrb[0].mxu0
        %v2166 = vadd.f32 0.0, %v2165
        %v2167 = vpop.f32.mrb[0].mxu0
        %v2168 = vpop.f32.mrb[0].mxu0
        %v2169 = vadd.f32 0.0, %v2168
        %v2170 = vpop.f32.mrb[0].mxu0
        %2171 = vmatprep.mubr.bf16.mxu0 0
        %2172 = vmatmul.mubr.bf16.gmra.mrb[0].mxu0 %v1058
        %v2173 = vpop.f32.mrb[0].mxu0
        %v2174 = vadd.f32 0.0, %v2173
        %v2175 = vpop.f32.mrb[0].mxu0
        %v2176 = vpop.f32.mrb[0].mxu0
        %v2177 = vadd.f32 0.0, %v2176
        %v2178 = vpop.f32.mrb[0].mxu0
        %2179 = vmatprep.mubr.bf16.mxu0 0
        %2180 = vmatmul.mubr.bf16.gmra.mrb[0].mxu0 %v1061
        %v2181 = vpop.f32.mrb[0].mxu0
        %v2182 = vadd.f32 0.0, %v2181
        %v2183 = vpop.f32.mrb[0].mxu0
        %v2184 = vpop.f32.mrb[0].mxu0
        %v2185 = vadd.f32 0.0, %v2184
        %v2186 = vpop.f32.mrb[0].mxu0
        %2187 = vmatprep.mubr.bf16.mxu0 0
        %2188 = vmatmul.mubr.bf16.gmra.mrb[0].mxu0 %v1064
        %v2189 = vpop.f32.mrb[0].mxu0
        %v2190 = vadd.f32 0.0, %v2189
        %v2191 = vpop.f32.mrb[0].mxu0
        %v2192 = vpop.f32.mrb[0].mxu0
        %v2193 = vadd.f32 0.0, %v2192
        %v2194 = vpop.f32.mrb[0].mxu0
        %2195 = vmatprep.mubr.bf16.mxu0 0
        %2196 = vmatmul.mubr.bf16.gmra.mrb[0].mxu0 %v1067
        %v2197 = vpop.f32.mrb[0].mxu0
        %v2198 = vadd.f32 0.0, %v2197
        %v2199 = vpop.f32.mrb[0].mxu0
        %v2200 = vpop.f32.mrb[0].mxu0
        %v2201 = vadd.f32 0.0, %v2200
        %v2202 = vpop.f32.mrb[0].mxu0
        %2203 = vmatprep.mubr.bf16.mxu0 0
        %2204 = vmatmul.mubr.bf16.gmra.mrb[0].mxu0 %v1070
        %v2205 = vpop.f32.mrb[0].mxu0
        %v2206 = vadd.f32 0.0, %v2205
        %v2207 = vpop.f32.mrb[0].mxu0
        %v2208 = vpop.f32.mrb[0].mxu0
        %v2209 = vadd.f32 0.0, %v2208
        %v2210 = vpop.f32.mrb[0].mxu0
        %2211 = vmatprep.mubr.bf16.mxu0 0
        %2212 = vmatmul.mubr.bf16.gmra.mrb[0].mxu0 %v2057
        %v2213 = vpop.f32.mrb[0].mxu0
        %v2214 = vadd.f32 0.0, %v2213
        %v2215 = vpop.f32.mrb[0].mxu0
        %v2216 = vpop.f32.mrb[0].mxu0
        %v2217 = vadd.f32 0.0, %v2216
        %v2218 = vpop.f32.mrb[0].mxu0
        %2219 = vdwg.mxu0
        %v2220 = vadd.f32 %v2007, %v2094
        %v2221 = vadd.f32 %v2008, %v2097
        %v2222 = vadd.f32 %v2009, %v2102
        %v2223 = vadd.f32 %v2010, %v2105
        %v2224 = vadd.f32 %v2011, %v2110
        %v2225 = vadd.f32 %v2012, %v2113
        %v2226 = vadd.f32 %v2013, %v2118
        %v2227 = vadd.f32 %v2014, %v2121
        %v2228 = vadd.f32 %v2015, %v2126
        %v2229 = vadd.f32 %v2016, %v2129
        %v2230 = vadd.f32 %v2017, %v2134
        %v2231 = vadd.f32 %v2018, %v2137
        %v2232 = vadd.f32 %v2019, %v2142
        %v2233 = vadd.f32 %v2020, %v2145
        %v2234 = vadd.f32 %v2021, %v2150
        %v2235 = vadd.f32 %v2022, %v2153
        %v2236 = vadd.f32 %v2023, %v2158
        %v2237 = vadd.f32 %v2024, %v2161
        %v2238 = vadd.f32 %v2025, %v2166
        %v2239 = vadd.f32 %v2026, %v2169
        %v2240 = vadd.f32 %v2027, %v2174
        %v2241 = vadd.f32 %v2028, %v2177
        %v2242 = vadd.f32 %v2029, %v2182
        %v2243 = vadd.f32 %v2030, %v2185
        %v2244 = vadd.f32 %v2031, %v2190
        %v2245 = vadd.f32 %v2032, %v2193
        %v2246 = vadd.f32 %v2033, %v2198
        %v2247 = vadd.f32 %v2034, %v2201
        %v2248 = vadd.f32 %v2035, %v2206
        %v2249 = vadd.f32 %v2036, %v2209
        %v2250 = vadd.f32 %v2037, %v2214
        %v2251 = vadd.f32 %v2038, %v2217
        %v2252 = vshrl.u32 %v1003, 16
        %v2254 = vshll.u32 %v1003, 16
        %v2256 = vrot.slane %v2254, 1
        %v2257 = vor.u32 %v2252, %v2256
        %v2259 = vshll.u32 %v1004, 16
        %v2261 = vrot.slane %v2259, 1
        %v2262 = vsel %vm1265, %v2257, %v2261
        %s2263 = scalar_lea.vmem %s3, 64
        %v2264 = vld [vmem:[%s2263] sm:$0xf]
        %v2265 = vld [vmem:[%s2263 + $0x4] sm:$0xf]
        %v2266 = vld [vmem:[%s2263 + $0x8] sm:$0xf]
        %v2267 = vld [vmem:[%s2263 + $0xc] sm:$0xf]
        %v2272 = vunpack.c.l.b16 %v2264
        %v2273 = vunpack.c.l.b16 %v2265
        %v2274 = vunpack.c.l.b16 %v2266
        %v2275 = vunpack.c.l.b16 %v2267
        %v2276 = vpack.c.b16 %v2273, %v2272
        %v2277 = vpack.c.b16 %v2275, %v2274
        %v2281 = vsel %vm1023, %v2262, 0
        %2283 = vmatprep.subr.bf16.mxu0 0
        %2284 = vmatpush1.bf16.msra.mxu0 %v2276
        %2285 = vmatprep.subr.bf16.mxu0 0
        %2286 = vmatpush1.bf16.msra.mxu0 %v2277
        %2287 = vmatprep.subr.bf16.mxu0 0
        %2288 = vmatpush1.bf16.msra.mxu0 0
        %2289 = vmatprep.subr.bf16.mxu0 0
        %2290 = vmatpush1.bf16.msra.mxu0 0
        %2291 = vmatprep.subr.bf16.mxu0 0
        %2292 = vmatpush1.bf16.msra.mxu0 0
        %2293 = vmatprep.subr.bf16.mxu0 0
        %2294 = vmatpush1.bf16.msra.mxu0 0
        %2295 = vmatprep.subr.bf16.mxu0 0
        %2296 = vmatpush1.bf16.msra.mxu0 0
        %2297 = vmatprep.subr.bf16.mxu0 0
        %2298 = vmatpush1.bf16.msra.mxu0 0
        %2299 = vmatprep.subr.bf16.mxu0 0
        %2300 = vmatpush1.bf16.msra.mxu0 0
        %2301 = vmatprep.subr.bf16.mxu0 0
        %2302 = vmatpush1.bf16.msra.mxu0 0
        %2303 = vmatprep.subr.bf16.mxu0 0
        %2304 = vmatpush1.bf16.msra.mxu0 0
        %2305 = vmatprep.subr.bf16.mxu0 0
        %2306 = vmatpush1.bf16.msra.mxu0 0
        %2307 = vmatprep.subr.bf16.mxu0 0
        %2308 = vmatpush1.bf16.msra.mxu0 0
        %2309 = vmatprep.subr.bf16.mxu0 0
        %2310 = vmatpush1.bf16.msra.mxu0 0
        %2311 = vmatprep.subr.bf16.mxu0 0
        %2312 = vmatpush1.bf16.msra.mxu0 0
        %2313 = vmatprep.subr.bf16.mxu0 0
        %2314 = vmatpush1.bf16.msra.mxu0 0
        %2315 = vmatprep.mubr.bf16.mxu0 0
        %2316 = vmatmul.mubr.bf16.gmra.mrb[0].mxu0 %v1463
        %v2317 = vpop.f32.mrb[0].mxu0
        %v2318 = vadd.f32 0.0, %v2317
        %v2319 = vpop.f32.mrb[0].mxu0
        %v2320 = vpop.f32.mrb[0].mxu0
        %v2321 = vadd.f32 0.0, %v2320
        %v2322 = vpop.f32.mrb[0].mxu0
        %2323 = vmatprep.mubr.bf16.mxu0 0
        %2324 = vmatmul.mubr.bf16.gmra.mrb[0].mxu0 %v1466
        %v2325 = vpop.f32.mrb[0].mxu0
        %v2326 = vadd.f32 0.0, %v2325
        %v2327 = vpop.f32.mrb[0].mxu0
        %v2328 = vpop.f32.mrb[0].mxu0
        %v2329 = vadd.f32 0.0, %v2328
        %v2330 = vpop.f32.mrb[0].mxu0
        %2331 = vmatprep.mubr.bf16.mxu0 0
        %2332 = vmatmul.mubr.bf16.gmra.mrb[0].mxu0 %v1469
        %v2333 = vpop.f32.mrb[0].mxu0
        %v2334 = vadd.f32 0.0, %v2333
        %v2335 = vpop.f32.mrb[0].mxu0
        %v2336 = vpop.f32.mrb[0].mxu0
        %v2337 = vadd.f32 0.0, %v2336
        %v2338 = vpop.f32.mrb[0].mxu0
        %2339 = vmatprep.mubr.bf16.mxu0 0
        %2340 = vmatmul.mubr.bf16.gmra.mrb[0].mxu0 %v1472
        %v2341 = vpop.f32.mrb[0].mxu0
        %v2342 = vadd.f32 0.0, %v2341
        %v2343 = vpop.f32.mrb[0].mxu0
        %v2344 = vpop.f32.mrb[0].mxu0
        %v2345 = vadd.f32 0.0, %v2344
        %v2346 = vpop.f32.mrb[0].mxu0
        %2347 = vmatprep.mubr.bf16.mxu0 0
        %2348 = vmatmul.mubr.bf16.gmra.mrb[0].mxu0 %v1475
        %v2349 = vpop.f32.mrb[0].mxu0
        %v2350 = vadd.f32 0.0, %v2349
        %v2351 = vpop.f32.mrb[0].mxu0
        %v2352 = vpop.f32.mrb[0].mxu0
        %v2353 = vadd.f32 0.0, %v2352
        %v2354 = vpop.f32.mrb[0].mxu0
        %2355 = vmatprep.mubr.bf16.mxu0 0
        %2356 = vmatmul.mubr.bf16.gmra.mrb[0].mxu0 %v1478
        %v2357 = vpop.f32.mrb[0].mxu0
        %v2358 = vadd.f32 0.0, %v2357
        %v2359 = vpop.f32.mrb[0].mxu0
        %v2360 = vpop.f32.mrb[0].mxu0
        %v2361 = vadd.f32 0.0, %v2360
        %v2362 = vpop.f32.mrb[0].mxu0
        %2363 = vmatprep.mubr.bf16.mxu0 0
        %2364 = vmatmul.mubr.bf16.gmra.mrb[0].mxu0 %v1481
        %v2365 = vpop.f32.mrb[0].mxu0
        %v2366 = vadd.f32 0.0, %v2365
        %v2367 = vpop.f32.mrb[0].mxu0
        %v2368 = vpop.f32.mrb[0].mxu0
        %v2369 = vadd.f32 0.0, %v2368
        %v2370 = vpop.f32.mrb[0].mxu0
        %2371 = vmatprep.mubr.bf16.mxu0 0
        %2372 = vmatmul.mubr.bf16.gmra.mrb[0].mxu0 %v1484
        %v2373 = vpop.f32.mrb[0].mxu0
        %v2374 = vadd.f32 0.0, %v2373
        %v2375 = vpop.f32.mrb[0].mxu0
        %v2376 = vpop.f32.mrb[0].mxu0
        %v2377 = vadd.f32 0.0, %v2376
        %v2378 = vpop.f32.mrb[0].mxu0
        %2379 = vmatprep.mubr.bf16.mxu0 0
        %2380 = vmatmul.mubr.bf16.gmra.mrb[0].mxu0 %v1487
        %v2381 = vpop.f32.mrb[0].mxu0
        %v2382 = vadd.f32 0.0, %v2381
        %v2383 = vpop.f32.mrb[0].mxu0
        %v2384 = vpop.f32.mrb[0].mxu0
        %v2385 = vadd.f32 0.0, %v2384
        %v2386 = vpop.f32.mrb[0].mxu0
        %2387 = vmatprep.mubr.bf16.mxu0 0
        %2388 = vmatmul.mubr.bf16.gmra.mrb[0].mxu0 %v1490
        %v2389 = vpop.f32.mrb[0].mxu0
        %v2390 = vadd.f32 0.0, %v2389
        %v2391 = vpop.f32.mrb[0].mxu0
        %v2392 = vpop.f32.mrb[0].mxu0
        %v2393 = vadd.f32 0.0, %v2392
        %v2394 = vpop.f32.mrb[0].mxu0
        %2395 = vmatprep.mubr.bf16.mxu0 0
        %2396 = vmatmul.mubr.bf16.gmra.mrb[0].mxu0 %v1493
        %v2397 = vpop.f32.mrb[0].mxu0
        %v2398 = vadd.f32 0.0, %v2397
        %v2399 = vpop.f32.mrb[0].mxu0
        %v2400 = vpop.f32.mrb[0].mxu0
        %v2401 = vadd.f32 0.0, %v2400
        %v2402 = vpop.f32.mrb[0].mxu0
        %2403 = vmatprep.mubr.bf16.mxu0 0
        %2404 = vmatmul.mubr.bf16.gmra.mrb[0].mxu0 %v1496
        %v2405 = vpop.f32.mrb[0].mxu0
        %v2406 = vadd.f32 0.0, %v2405
        %v2407 = vpop.f32.mrb[0].mxu0
        %v2408 = vpop.f32.mrb[0].mxu0
        %v2409 = vadd.f32 0.0, %v2408
        %v2410 = vpop.f32.mrb[0].mxu0
        %2411 = vmatprep.mubr.bf16.mxu0 0
        %2412 = vmatmul.mubr.bf16.gmra.mrb[0].mxu0 %v1499
        %v2413 = vpop.f32.mrb[0].mxu0
        %v2414 = vadd.f32 0.0, %v2413
        %v2415 = vpop.f32.mrb[0].mxu0
        %v2416 = vpop.f32.mrb[0].mxu0
        %v2417 = vadd.f32 0.0, %v2416
        %v2418 = vpop.f32.mrb[0].mxu0
        %2419 = vmatprep.mubr.bf16.mxu0 0
        %2420 = vmatmul.mubr.bf16.gmra.mrb[0].mxu0 %v1502
        %v2421 = vpop.f32.mrb[0].mxu0
        %v2422 = vadd.f32 0.0, %v2421
        %v2423 = vpop.f32.mrb[0].mxu0
        %v2424 = vpop.f32.mrb[0].mxu0
        %v2425 = vadd.f32 0.0, %v2424
        %v2426 = vpop.f32.mrb[0].mxu0
        %2427 = vmatprep.mubr.bf16.mxu0 0
        %2428 = vmatmul.mubr.bf16.gmra.mrb[0].mxu0 %v1505
        %v2429 = vpop.f32.mrb[0].mxu0
        %v2430 = vadd.f32 0.0, %v2429
        %v2431 = vpop.f32.mrb[0].mxu0
        %v2432 = vpop.f32.mrb[0].mxu0
        %v2433 = vadd.f32 0.0, %v2432
        %v2434 = vpop.f32.mrb[0].mxu0
        %2435 = vmatprep.mubr.bf16.mxu0 0
        %2436 = vmatmul.mubr.bf16.gmra.mrb[0].mxu0 %v2281
        %v2437 = vpop.f32.mrb[0].mxu0
        %v2438 = vadd.f32 0.0, %v2437
        %v2439 = vpop.f32.mrb[0].mxu0
        %v2440 = vpop.f32.mrb[0].mxu0
        %v2441 = vadd.f32 0.0, %v2440
        %v2442 = vpop.f32.mrb[0].mxu0
        %2443 = vdwg.mxu0
        %v2444 = vadd.f32 %v2220, %v2318
        %v2445 = vadd.f32 %v2221, %v2321
        %v2446 = vadd.f32 %v2222, %v2326
        %v2447 = vadd.f32 %v2223, %v2329
        %v2448 = vadd.f32 %v2224, %v2334
        %v2449 = vadd.f32 %v2225, %v2337
        %v2450 = vadd.f32 %v2226, %v2342
        %v2451 = vadd.f32 %v2227, %v2345
        %v2452 = vadd.f32 %v2228, %v2350
        %v2453 = vadd.f32 %v2229, %v2353
        %v2454 = vadd.f32 %v2230, %v2358
        %v2455 = vadd.f32 %v2231, %v2361
        %v2456 = vadd.f32 %v2232, %v2366
        %v2457 = vadd.f32 %v2233, %v2369
        %v2458 = vadd.f32 %v2234, %v2374
        %v2459 = vadd.f32 %v2235, %v2377
        %v2460 = vadd.f32 %v2236, %v2382
        %v2461 = vadd.f32 %v2237, %v2385
        %v2462 = vadd.f32 %v2238, %v2390
        %v2463 = vadd.f32 %v2239, %v2393
        %v2464 = vadd.f32 %v2240, %v2398
        %v2465 = vadd.f32 %v2241, %v2401
        %v2466 = vadd.f32 %v2242, %v2406
        %v2467 = vadd.f32 %v2243, %v2409
        %v2468 = vadd.f32 %v2244, %v2414
        %v2469 = vadd.f32 %v2245, %v2417
        %v2470 = vadd.f32 %v2246, %v2422
        %v2471 = vadd.f32 %v2247, %v2425
        %v2472 = vadd.f32 %v2248, %v2430
        %v2473 = vadd.f32 %v2249, %v2433
        %v2474 = vadd.f32 %v2250, %v2438
        %v2475 = vadd.f32 %v2251, %v2441
        %v2478 = vrot.slane %v1003, 1
        %v2479 = vrot.slane %v1004, 1
        %v2480 = vsel %vm1732, %v2478, %v2479
        %s2481 = scalar_lea.vmem %s3, 80
        %v2482 = vld [vmem:[%s2481] sm:$0xf]
        %v2483 = vld [vmem:[%s2481 + $0x4] sm:$0xf]
        %v2484 = vld [vmem:[%s2481 + $0x8] sm:$0xf]
        %v2485 = vld [vmem:[%s2481 + $0xc] sm:$0xf]
        %v2490 = vunpack.c.l.b16 %v2482
        %v2491 = vunpack.c.l.b16 %v2483
        %v2492 = vunpack.c.l.b16 %v2484
        %v2493 = vunpack.c.l.b16 %v2485
        %v2494 = vpack.c.b16 %v2491, %v2490
        %v2495 = vpack.c.b16 %v2493, %v2492
        %v2499 = vsel %vm1023, %v2480, 0
        %2501 = vmatprep.subr.bf16.mxu0 0
        %2502 = vmatpush1.bf16.msra.mxu0 %v2494
        %2503 = vmatprep.subr.bf16.mxu0 0
        %2504 = vmatpush1.bf16.msra.mxu0 %v2495
        %2505 = vmatprep.subr.bf16.mxu0 0
        %2506 = vmatpush1.bf16.msra.mxu0 0
        %2507 = vmatprep.subr.bf16.mxu0 0
        %2508 = vmatpush1.bf16.msra.mxu0 0
        %2509 = vmatprep.subr.bf16.mxu0 0
        %2510 = vmatpush1.bf16.msra.mxu0 0
        %2511 = vmatprep.subr.bf16.mxu0 0
        %2512 = vmatpush1.bf16.msra.mxu0 0
        %2513 = vmatprep.subr.bf16.mxu0 0
        %2514 = vmatpush1.bf16.msra.mxu0 0
        %2515 = vmatprep.subr.bf16.mxu0 0
        %2516 = vmatpush1.bf16.msra.mxu0 0
        %2517 = vmatprep.subr.bf16.mxu0 0
        %2518 = vmatpush1.bf16.msra.mxu0 0
        %2519 = vmatprep.subr.bf16.mxu0 0
        %2520 = vmatpush1.bf16.msra.mxu0 0
        %2521 = vmatprep.subr.bf16.mxu0 0
        %2522 = vmatpush1.bf16.msra.mxu0 0
        %2523 = vmatprep.subr.bf16.mxu0 0
        %2524 = vmatpush1.bf16.msra.mxu0 0
        %2525 = vmatprep.subr.bf16.mxu0 0
        %2526 = vmatpush1.bf16.msra.mxu0 0
        %2527 = vmatprep.subr.bf16.mxu0 0
        %2528 = vmatpush1.bf16.msra.mxu0 0
        %2529 = vmatprep.subr.bf16.mxu0 0
        %2530 = vmatpush1.bf16.msra.mxu0 0
        %2531 = vmatprep.subr.bf16.mxu0 0
        %2532 = vmatpush1.bf16.msra.mxu0 0
        %2533 = vmatprep.mubr.bf16.mxu0 0
        %2534 = vmatmul.mubr.bf16.gmra.mrb[0].mxu0 %v1802
        %v2535 = vpop.f32.mrb[0].mxu0
        %v2536 = vadd.f32 0.0, %v2535
        %v2537 = vpop.f32.mrb[0].mxu0
        %v2538 = vpop.f32.mrb[0].mxu0
        %v2539 = vadd.f32 0.0, %v2538
        %v2540 = vpop.f32.mrb[0].mxu0
        %2541 = vmatprep.mubr.bf16.mxu0 0
        %2542 = vmatmul.mubr.bf16.gmra.mrb[0].mxu0 %v1805
        %v2543 = vpop.f32.mrb[0].mxu0
        %v2544 = vadd.f32 0.0, %v2543
        %v2545 = vpop.f32.mrb[0].mxu0
        %v2546 = vpop.f32.mrb[0].mxu0
        %v2547 = vadd.f32 0.0, %v2546
        %v2548 = vpop.f32.mrb[0].mxu0
        %2549 = vmatprep.mubr.bf16.mxu0 0
        %2550 = vmatmul.mubr.bf16.gmra.mrb[0].mxu0 %v1808
        %v2551 = vpop.f32.mrb[0].mxu0
        %v2552 = vadd.f32 0.0, %v2551
        %v2553 = vpop.f32.mrb[0].mxu0
        %v2554 = vpop.f32.mrb[0].mxu0
        %v2555 = vadd.f32 0.0, %v2554
        %v2556 = vpop.f32.mrb[0].mxu0
        %2557 = vmatprep.mubr.bf16.mxu0 0
        %2558 = vmatmul.mubr.bf16.gmra.mrb[0].mxu0 %v1811
        %v2559 = vpop.f32.mrb[0].mxu0
        %v2560 = vadd.f32 0.0, %v2559
        %v2561 = vpop.f32.mrb[0].mxu0
        %v2562 = vpop.f32.mrb[0].mxu0
        %v2563 = vadd.f32 0.0, %v2562
        %v2564 = vpop.f32.mrb[0].mxu0
        %2565 = vmatprep.mubr.bf16.mxu0 0
        %2566 = vmatmul.mubr.bf16.gmra.mrb[0].mxu0 %v1814
        %v2567 = vpop.f32.mrb[0].mxu0
        %v2568 = vadd.f32 0.0, %v2567
        %v2569 = vpop.f32.mrb[0].mxu0
        %v2570 = vpop.f32.mrb[0].mxu0
        %v2571 = vadd.f32 0.0, %v2570
        %v2572 = vpop.f32.mrb[0].mxu0
        %2573 = vmatprep.mubr.bf16.mxu0 0
        %2574 = vmatmul.mubr.bf16.gmra.mrb[0].mxu0 %v1817
        %v2575 = vpop.f32.mrb[0].mxu0
        %v2576 = vadd.f32 0.0, %v2575
        %v2577 = vpop.f32.mrb[0].mxu0
        %v2578 = vpop.f32.mrb[0].mxu0
        %v2579 = vadd.f32 0.0, %v2578
        %v2580 = vpop.f32.mrb[0].mxu0
        %2581 = vmatprep.mubr.bf16.mxu0 0
        %2582 = vmatmul.mubr.bf16.gmra.mrb[0].mxu0 %v1820
        %v2583 = vpop.f32.mrb[0].mxu0
        %v2584 = vadd.f32 0.0, %v2583
        %v2585 = vpop.f32.mrb[0].mxu0
        %v2586 = vpop.f32.mrb[0].mxu0
        %v2587 = vadd.f32 0.0, %v2586
        %v2588 = vpop.f32.mrb[0].mxu0
        %2589 = vmatprep.mubr.bf16.mxu0 0
        %2590 = vmatmul.mubr.bf16.gmra.mrb[0].mxu0 %v1823
        %v2591 = vpop.f32.mrb[0].mxu0
        %v2592 = vadd.f32 0.0, %v2591
        %v2593 = vpop.f32.mrb[0].mxu0
        %v2594 = vpop.f32.mrb[0].mxu0
        %v2595 = vadd.f32 0.0, %v2594
        %v2596 = vpop.f32.mrb[0].mxu0
        %2597 = vmatprep.mubr.bf16.mxu0 0
        %2598 = vmatmul.mubr.bf16.gmra.mrb[0].mxu0 %v1826
        %v2599 = vpop.f32.mrb[0].mxu0
        %v2600 = vadd.f32 0.0, %v2599
        %v2601 = vpop.f32.mrb[0].mxu0
        %v2602 = vpop.f32.mrb[0].mxu0
        %v2603 = vadd.f32 0.0, %v2602
        %v2604 = vpop.f32.mrb[0].mxu0
        %2605 = vmatprep.mubr.bf16.mxu0 0
        %2606 = vmatmul.mubr.bf16.gmra.mrb[0].mxu0 %v1829
        %v2607 = vpop.f32.mrb[0].mxu0
        %v2608 = vadd.f32 0.0, %v2607
        %v2609 = vpop.f32.mrb[0].mxu0
        %v2610 = vpop.f32.mrb[0].mxu0
        %v2611 = vadd.f32 0.0, %v2610
        %v2612 = vpop.f32.mrb[0].mxu0
        %2613 = vmatprep.mubr.bf16.mxu0 0
        %2614 = vmatmul.mubr.bf16.gmra.mrb[0].mxu0 %v1832
        %v2615 = vpop.f32.mrb[0].mxu0
        %v2616 = vadd.f32 0.0, %v2615
        %v2617 = vpop.f32.mrb[0].mxu0
        %v2618 = vpop.f32.mrb[0].mxu0
        %v2619 = vadd.f32 0.0, %v2618
        %v2620 = vpop.f32.mrb[0].mxu0
        %2621 = vmatprep.mubr.bf16.mxu0 0
        %2622 = vmatmul.mubr.bf16.gmra.mrb[0].mxu0 %v1835
        %v2623 = vpop.f32.mrb[0].mxu0
        %v2624 = vadd.f32 0.0, %v2623
        %v2625 = vpop.f32.mrb[0].mxu0
        %v2626 = vpop.f32.mrb[0].mxu0
        %v2627 = vadd.f32 0.0, %v2626
        %v2628 = vpop.f32.mrb[0].mxu0
        %2629 = vmatprep.mubr.bf16.mxu0 0
        %2630 = vmatmul.mubr.bf16.gmra.mrb[0].mxu0 %v1838
        %v2631 = vpop.f32.mrb[0].mxu0
        %v2632 = vadd.f32 0.0, %v2631
        %v2633 = vpop.f32.mrb[0].mxu0
        %v2634 = vpop.f32.mrb[0].mxu0
        %v2635 = vadd.f32 0.0, %v2634
        %v2636 = vpop.f32.mrb[0].mxu0
        %2637 = vmatprep.mubr.bf16.mxu0 0
        %2638 = vmatmul.mubr.bf16.gmra.mrb[0].mxu0 %v1841
        %v2639 = vpop.f32.mrb[0].mxu0
        %v2640 = vadd.f32 0.0, %v2639
        %v2641 = vpop.f32.mrb[0].mxu0
        %v2642 = vpop.f32.mrb[0].mxu0
        %v2643 = vadd.f32 0.0, %v2642
        %v2644 = vpop.f32.mrb[0].mxu0
        %2645 = vmatprep.mubr.bf16.mxu0 0
        %2646 = vmatmul.mubr.bf16.gmra.mrb[0].mxu0 %v1844
        %v2647 = vpop.f32.mrb[0].mxu0
        %v2648 = vadd.f32 0.0, %v2647
        %v2649 = vpop.f32.mrb[0].mxu0
        %v2650 = vpop.f32.mrb[0].mxu0
        %v2651 = vadd.f32 0.0, %v2650
        %v2652 = vpop.f32.mrb[0].mxu0
        %2653 = vmatprep.mubr.bf16.mxu0 0
        %2654 = vmatmul.mubr.bf16.gmra.mrb[0].mxu0 %v2499
        %v2655 = vpop.f32.mrb[0].mxu0
        %v2656 = vadd.f32 0.0, %v2655
        %v2657 = vpop.f32.mrb[0].mxu0
        %v2658 = vpop.f32.mrb[0].mxu0
        %v2659 = vadd.f32 0.0, %v2658
        %v2660 = vpop.f32.mrb[0].mxu0
        %2661 = vdwg.mxu0
        %v2662 = vadd.f32 %v2444, %v2536
        %v2663 = vadd.f32 %v2445, %v2539
        %v2664 = vadd.f32 %v2446, %v2544
        %v2665 = vadd.f32 %v2447, %v2547
        %v2666 = vadd.f32 %v2448, %v2552
        %v2667 = vadd.f32 %v2449, %v2555
        %v2668 = vadd.f32 %v2450, %v2560
        %v2669 = vadd.f32 %v2451, %v2563
        %v2670 = vadd.f32 %v2452, %v2568
        %v2671 = vadd.f32 %v2453, %v2571
        %v2672 = vadd.f32 %v2454, %v2576
        %v2673 = vadd.f32 %v2455, %v2579
        %v2674 = vadd.f32 %v2456, %v2584
        %v2675 = vadd.f32 %v2457, %v2587
        %v2676 = vadd.f32 %v2458, %v2592
        %v2677 = vadd.f32 %v2459, %v2595
        %v2678 = vadd.f32 %v2460, %v2600
        %v2679 = vadd.f32 %v2461, %v2603
        %v2680 = vadd.f32 %v2462, %v2608
        %v2681 = vadd.f32 %v2463, %v2611
        %v2682 = vadd.f32 %v2464, %v2616
        %v2683 = vadd.f32 %v2465, %v2619
        %v2684 = vadd.f32 %v2466, %v2624
        %v2685 = vadd.f32 %v2467, %v2627
        %v2686 = vadd.f32 %v2468, %v2632
        %v2687 = vadd.f32 %v2469, %v2635
        %v2688 = vadd.f32 %v2470, %v2640
        %v2689 = vadd.f32 %v2471, %v2643
        %v2690 = vadd.f32 %v2472, %v2648
        %v2691 = vadd.f32 %v2473, %v2651
        %v2692 = vadd.f32 %v2474, %v2656
        %v2693 = vadd.f32 %v2475, %v2659
        %s2694 = scalar_lea.vmem %s3, 96
        %v2695 = vld [vmem:[%s2694] sm:$0xf]
        %v2696 = vld [vmem:[%s2694 + $0x4] sm:$0xf]
        %v2697 = vld [vmem:[%s2694 + $0x8] sm:$0xf]
        %v2698 = vld [vmem:[%s2694 + $0xc] sm:$0xf]
        %v2703 = vunpack.c.l.b16 %v2695
        %v2704 = vunpack.c.l.b16 %v2696
        %v2705 = vunpack.c.l.b16 %v2697
        %v2706 = vunpack.c.l.b16 %v2698
        %v2707 = vpack.c.b16 %v2704, %v2703
        %v2708 = vpack.c.b16 %v2706, %v2705
        %v2712 = vsel %vm1023, %v1005, 0
        %2714 = vmatprep.subr.bf16.mxu0 0
        %2715 = vmatpush1.bf16.msra.mxu0 %v2707
        %2716 = vmatprep.subr.bf16.mxu0 0
        %2717 = vmatpush1.bf16.msra.mxu0 %v2708
        %2718 = vmatprep.subr.bf16.mxu0 0
        %2719 = vmatpush1.bf16.msra.mxu0 0
        %2720 = vmatprep.subr.bf16.mxu0 0
        %2721 = vmatpush1.bf16.msra.mxu0 0
        %2722 = vmatprep.subr.bf16.mxu0 0
        %2723 = vmatpush1.bf16.msra.mxu0 0
        %2724 = vmatprep.subr.bf16.mxu0 0
        %2725 = vmatpush1.bf16.msra.mxu0 0
        %2726 = vmatprep.subr.bf16.mxu0 0
        %2727 = vmatpush1.bf16.msra.mxu0 0
        %2728 = vmatprep.subr.bf16.mxu0 0
        %2729 = vmatpush1.bf16.msra.mxu0 0
        %2730 = vmatprep.subr.bf16.mxu0 0
        %2731 = vmatpush1.bf16.msra.mxu0 0
        %2732 = vmatprep.subr.bf16.mxu0 0
        %2733 = vmatpush1.bf16.msra.mxu0 0
        %2734 = vmatprep.subr.bf16.mxu0 0
        %2735 = vmatpush1.bf16.msra.mxu0 0
        %2736 = vmatprep.subr.bf16.mxu0 0
        %2737 = vmatpush1.bf16.msra.mxu0 0
        %2738 = vmatprep.subr.bf16.mxu0 0
        %2739 = vmatpush1.bf16.msra.mxu0 0
        %2740 = vmatprep.subr.bf16.mxu0 0
        %2741 = vmatpush1.bf16.msra.mxu0 0
        %2742 = vmatprep.subr.bf16.mxu0 0
        %2743 = vmatpush1.bf16.msra.mxu0 0
        %2744 = vmatprep.subr.bf16.mxu0 0
        %2745 = vmatpush1.bf16.msra.mxu0 0
        %2746 = vmatprep.mubr.bf16.mxu0 0
        %2747 = vmatmul.mubr.bf16.gmra.mrb[0].mxu0 %v1031
        %v2748 = vpop.f32.mrb[0].mxu0
        %v2749 = vadd.f32 0.0, %v2748
        %v2750 = vpop.f32.mrb[0].mxu0
        %v2751 = vpop.f32.mrb[0].mxu0
        %v2752 = vadd.f32 0.0, %v2751
        %v2753 = vpop.f32.mrb[0].mxu0
        %2754 = vmatprep.mubr.bf16.mxu0 0
        %2755 = vmatmul.mubr.bf16.gmra.mrb[0].mxu0 %v1034
        %v2756 = vpop.f32.mrb[0].mxu0
        %v2757 = vadd.f32 0.0, %v2756
        %v2758 = vpop.f32.mrb[0].mxu0
        %v2759 = vpop.f32.mrb[0].mxu0
        %v2760 = vadd.f32 0.0, %v2759
        %v2761 = vpop.f32.mrb[0].mxu0
        %2762 = vmatprep.mubr.bf16.mxu0 0
        %2763 = vmatmul.mubr.bf16.gmra.mrb[0].mxu0 %v1037
        %v2764 = vpop.f32.mrb[0].mxu0
        %v2765 = vadd.f32 0.0, %v2764
        %v2766 = vpop.f32.mrb[0].mxu0
        %v2767 = vpop.f32.mrb[0].mxu0
        %v2768 = vadd.f32 0.0, %v2767
        %v2769 = vpop.f32.mrb[0].mxu0
        %2770 = vmatprep.mubr.bf16.mxu0 0
        %2771 = vmatmul.mubr.bf16.gmra.mrb[0].mxu0 %v1040
        %v2772 = vpop.f32.mrb[0].mxu0
        %v2773 = vadd.f32 0.0, %v2772
        %v2774 = vpop.f32.mrb[0].mxu0
        %v2775 = vpop.f32.mrb[0].mxu0
        %v2776 = vadd.f32 0.0, %v2775
        %v2777 = vpop.f32.mrb[0].mxu0
        %2778 = vmatprep.mubr.bf16.mxu0 0
        %2779 = vmatmul.mubr.bf16.gmra.mrb[0].mxu0 %v1043
        %v2780 = vpop.f32.mrb[0].mxu0
        %v2781 = vadd.f32 0.0, %v2780
        %v2782 = vpop.f32.mrb[0].mxu0
        %v2783 = vpop.f32.mrb[0].mxu0
        %v2784 = vadd.f32 0.0, %v2783
        %v2785 = vpop.f32.mrb[0].mxu0
        %2786 = vmatprep.mubr.bf16.mxu0 0
        %2787 = vmatmul.mubr.bf16.gmra.mrb[0].mxu0 %v1046
        %v2788 = vpop.f32.mrb[0].mxu0
        %v2789 = vadd.f32 0.0, %v2788
        %v2790 = vpop.f32.mrb[0].mxu0
        %v2791 = vpop.f32.mrb[0].mxu0
        %v2792 = vadd.f32 0.0, %v2791
        %v2793 = vpop.f32.mrb[0].mxu0
        %2794 = vmatprep.mubr.bf16.mxu0 0
        %2795 = vmatmul.mubr.bf16.gmra.mrb[0].mxu0 %v1049
        %v2796 = vpop.f32.mrb[0].mxu0
        %v2797 = vadd.f32 0.0, %v2796
        %v2798 = vpop.f32.mrb[0].mxu0
        %v2799 = vpop.f32.mrb[0].mxu0
        %v2800 = vadd.f32 0.0, %v2799
        %v2801 = vpop.f32.mrb[0].mxu0
        %2802 = vmatprep.mubr.bf16.mxu0 0
        %2803 = vmatmul.mubr.bf16.gmra.mrb[0].mxu0 %v1052
        %v2804 = vpop.f32.mrb[0].mxu0
        %v2805 = vadd.f32 0.0, %v2804
        %v2806 = vpop.f32.mrb[0].mxu0
        %v2807 = vpop.f32.mrb[0].mxu0
        %v2808 = vadd.f32 0.0, %v2807
        %v2809 = vpop.f32.mrb[0].mxu0
        %2810 = vmatprep.mubr.bf16.mxu0 0
        %2811 = vmatmul.mubr.bf16.gmra.mrb[0].mxu0 %v1055
        %v2812 = vpop.f32.mrb[0].mxu0
        %v2813 = vadd.f32 0.0, %v2812
        %v2814 = vpop.f32.mrb[0].mxu0
        %v2815 = vpop.f32.mrb[0].mxu0
        %v2816 = vadd.f32 0.0, %v2815
        %v2817 = vpop.f32.mrb[0].mxu0
        %2818 = vmatprep.mubr.bf16.mxu0 0
        %2819 = vmatmul.mubr.bf16.gmra.mrb[0].mxu0 %v1058
        %v2820 = vpop.f32.mrb[0].mxu0
        %v2821 = vadd.f32 0.0, %v2820
        %v2822 = vpop.f32.mrb[0].mxu0
        %v2823 = vpop.f32.mrb[0].mxu0
        %v2824 = vadd.f32 0.0, %v2823
        %v2825 = vpop.f32.mrb[0].mxu0
        %2826 = vmatprep.mubr.bf16.mxu0 0
        %2827 = vmatmul.mubr.bf16.gmra.mrb[0].mxu0 %v1061
        %v2828 = vpop.f32.mrb[0].mxu0
        %v2829 = vadd.f32 0.0, %v2828
        %v2830 = vpop.f32.mrb[0].mxu0
        %v2831 = vpop.f32.mrb[0].mxu0
        %v2832 = vadd.f32 0.0, %v2831
        %v2833 = vpop.f32.mrb[0].mxu0
        %2834 = vmatprep.mubr.bf16.mxu0 0
        %2835 = vmatmul.mubr.bf16.gmra.mrb[0].mxu0 %v1064
        %v2836 = vpop.f32.mrb[0].mxu0
        %v2837 = vadd.f32 0.0, %v2836
        %v2838 = vpop.f32.mrb[0].mxu0
        %v2839 = vpop.f32.mrb[0].mxu0
        %v2840 = vadd.f32 0.0, %v2839
        %v2841 = vpop.f32.mrb[0].mxu0
        %2842 = vmatprep.mubr.bf16.mxu0 0
        %2843 = vmatmul.mubr.bf16.gmra.mrb[0].mxu0 %v1067
        %v2844 = vpop.f32.mrb[0].mxu0
        %v2845 = vadd.f32 0.0, %v2844
        %v2846 = vpop.f32.mrb[0].mxu0
        %v2847 = vpop.f32.mrb[0].mxu0
        %v2848 = vadd.f32 0.0, %v2847
        %v2849 = vpop.f32.mrb[0].mxu0
        %2850 = vmatprep.mubr.bf16.mxu0 0
        %2851 = vmatmul.mubr.bf16.gmra.mrb[0].mxu0 %v1070
        %v2852 = vpop.f32.mrb[0].mxu0
        %v2853 = vadd.f32 0.0, %v2852
        %v2854 = vpop.f32.mrb[0].mxu0
        %v2855 = vpop.f32.mrb[0].mxu0
        %v2856 = vadd.f32 0.0, %v2855
        %v2857 = vpop.f32.mrb[0].mxu0
        %2858 = vmatprep.mubr.bf16.mxu0 0
        %2859 = vmatmul.mubr.bf16.gmra.mrb[0].mxu0 %v2057
        %v2860 = vpop.f32.mrb[0].mxu0
        %v2861 = vadd.f32 0.0, %v2860
        %v2862 = vpop.f32.mrb[0].mxu0
        %v2863 = vpop.f32.mrb[0].mxu0
        %v2864 = vadd.f32 0.0, %v2863
        %v2865 = vpop.f32.mrb[0].mxu0
        %2866 = vmatprep.mubr.bf16.mxu0 0
        %2867 = vmatmul.mubr.bf16.gmra.mrb[0].mxu0 %v2712
        %v2868 = vpop.f32.mrb[0].mxu0
        %v2869 = vadd.f32 0.0, %v2868
        %v2870 = vpop.f32.mrb[0].mxu0
        %v2871 = vpop.f32.mrb[0].mxu0
        %v2872 = vadd.f32 0.0, %v2871
        %v2873 = vpop.f32.mrb[0].mxu0
        %2874 = vdwg.mxu0
        %v2875 = vadd.f32 %v2662, %v2749
        %v2876 = vadd.f32 %v2663, %v2752
        %v2877 = vadd.f32 %v2664, %v2757
        %v2878 = vadd.f32 %v2665, %v2760
        %v2879 = vadd.f32 %v2666, %v2765
        %v2880 = vadd.f32 %v2667, %v2768
        %v2881 = vadd.f32 %v2668, %v2773
        %v2882 = vadd.f32 %v2669, %v2776
        %v2883 = vadd.f32 %v2670, %v2781
        %v2884 = vadd.f32 %v2671, %v2784
        %v2885 = vadd.f32 %v2672, %v2789
        %v2886 = vadd.f32 %v2673, %v2792
        %v2887 = vadd.f32 %v2674, %v2797
        %v2888 = vadd.f32 %v2675, %v2800
        %v2889 = vadd.f32 %v2676, %v2805
        %v2890 = vadd.f32 %v2677, %v2808
        %v2891 = vadd.f32 %v2678, %v2813
        %v2892 = vadd.f32 %v2679, %v2816
        %v2893 = vadd.f32 %v2680, %v2821
        %v2894 = vadd.f32 %v2681, %v2824
        %v2895 = vadd.f32 %v2682, %v2829
        %v2896 = vadd.f32 %v2683, %v2832
        %v2897 = vadd.f32 %v2684, %v2837
        %v2898 = vadd.f32 %v2685, %v2840
        %v2899 = vadd.f32 %v2686, %v2845
        %v2900 = vadd.f32 %v2687, %v2848
        %v2901 = vadd.f32 %v2688, %v2853
        %v2902 = vadd.f32 %v2689, %v2856
        %v2903 = vadd.f32 %v2690, %v2861
        %v2904 = vadd.f32 %v2691, %v2864
        %v2905 = vadd.f32 %v2692, %v2869
        %v2906 = vadd.f32 %v2693, %v2872
        %v2907 = vshrl.u32 %v1005, 16
        %v2909 = vshll.u32 %v1005, 16
        %v2911 = vrot.slane %v2909, 1
        %v2912 = vor.u32 %v2907, %v2911
        %v2914 = vshll.u32 %v1006, 16
        %v2916 = vrot.slane %v2914, 1
        %v2917 = vsel %vm1265, %v2912, %v2916
        %s2918 = scalar_lea.vmem %s3, 112
        %v2919 = vld [vmem:[%s2918] sm:$0xf]
        %v2920 = vld [vmem:[%s2918 + $0x4] sm:$0xf]
        %v2921 = vld [vmem:[%s2918 + $0x8] sm:$0xf]
        %v2922 = vld [vmem:[%s2918 + $0xc] sm:$0xf]
        %v2927 = vunpack.c.l.b16 %v2919
        %v2928 = vunpack.c.l.b16 %v2920
        %v2929 = vunpack.c.l.b16 %v2921
        %v2930 = vunpack.c.l.b16 %v2922
        %v2931 = vpack.c.b16 %v2928, %v2927
        %v2932 = vpack.c.b16 %v2930, %v2929
        %v2936 = vsel %vm1023, %v2917, 0
        %2938 = vmatprep.subr.bf16.mxu0 0
        %2939 = vmatpush1.bf16.msra.mxu0 %v2931
        %2940 = vmatprep.subr.bf16.mxu0 0
        %2941 = vmatpush1.bf16.msra.mxu0 %v2932
        %2942 = vmatprep.subr.bf16.mxu0 0
        %2943 = vmatpush1.bf16.msra.mxu0 0
        %2944 = vmatprep.subr.bf16.mxu0 0
        %2945 = vmatpush1.bf16.msra.mxu0 0
        %2946 = vmatprep.subr.bf16.mxu0 0
        %2947 = vmatpush1.bf16.msra.mxu0 0
        %2948 = vmatprep.subr.bf16.mxu0 0
        %2949 = vmatpush1.bf16.msra.mxu0 0
        %2950 = vmatprep.subr.bf16.mxu0 0
        %2951 = vmatpush1.bf16.msra.mxu0 0
        %2952 = vmatprep.subr.bf16.mxu0 0
        %2953 = vmatpush1.bf16.msra.mxu0 0
        %2954 = vmatprep.subr.bf16.mxu0 0
        %2955 = vmatpush1.bf16.msra.mxu0 0
        %2956 = vmatprep.subr.bf16.mxu0 0
        %2957 = vmatpush1.bf16.msra.mxu0 0
        %2958 = vmatprep.subr.bf16.mxu0 0
        %2959 = vmatpush1.bf16.msra.mxu0 0
        %2960 = vmatprep.subr.bf16.mxu0 0
        %2961 = vmatpush1.bf16.msra.mxu0 0
        %2962 = vmatprep.subr.bf16.mxu0 0
        %2963 = vmatpush1.bf16.msra.mxu0 0
        %2964 = vmatprep.subr.bf16.mxu0 0
        %2965 = vmatpush1.bf16.msra.mxu0 0
        %2966 = vmatprep.subr.bf16.mxu0 0
        %2967 = vmatpush1.bf16.msra.mxu0 0
        %2968 = vmatprep.subr.bf16.mxu0 0
        %2969 = vmatpush1.bf16.msra.mxu0 0
        %2970 = vmatprep.mubr.bf16.mxu0 0
        %2971 = vmatmul.mubr.bf16.gmra.mrb[0].mxu0 %v1466
        %v2972 = vpop.f32.mrb[0].mxu0
        %v2973 = vadd.f32 0.0, %v2972
        %v2974 = vpop.f32.mrb[0].mxu0
        %v2975 = vpop.f32.mrb[0].mxu0
        %v2976 = vadd.f32 0.0, %v2975
        %v2977 = vpop.f32.mrb[0].mxu0
        %2978 = vmatprep.mubr.bf16.mxu0 0
        %2979 = vmatmul.mubr.bf16.gmra.mrb[0].mxu0 %v1469
        %v2980 = vpop.f32.mrb[0].mxu0
        %v2981 = vadd.f32 0.0, %v2980
        %v2982 = vpop.f32.mrb[0].mxu0
        %v2983 = vpop.f32.mrb[0].mxu0
        %v2984 = vadd.f32 0.0, %v2983
        %v2985 = vpop.f32.mrb[0].mxu0
        %2986 = vmatprep.mubr.bf16.mxu0 0
        %2987 = vmatmul.mubr.bf16.gmra.mrb[0].mxu0 %v1472
        %v2988 = vpop.f32.mrb[0].mxu0
        %v2989 = vadd.f32 0.0, %v2988
        %v2990 = vpop.f32.mrb[0].mxu0
        %v2991 = vpop.f32.mrb[0].mxu0
        %v2992 = vadd.f32 0.0, %v2991
        %v2993 = vpop.f32.mrb[0].mxu0
        %2994 = vmatprep.mubr.bf16.mxu0 0
        %2995 = vmatmul.mubr.bf16.gmra.mrb[0].mxu0 %v1475
        %v2996 = vpop.f32.mrb[0].mxu0
        %v2997 = vadd.f32 0.0, %v2996
        %v2998 = vpop.f32.mrb[0].mxu0
        %v2999 = vpop.f32.mrb[0].mxu0
        %v3000 = vadd.f32 0.0, %v2999
        %v3001 = vpop.f32.mrb[0].mxu0
        %3002 = vmatprep.mubr.bf16.mxu0 0
        %3003 = vmatmul.mubr.bf16.gmra.mrb[0].mxu0 %v1478
        %v3004 = vpop.f32.mrb[0].mxu0
        %v3005 = vadd.f32 0.0, %v3004
        %v3006 = vpop.f32.mrb[0].mxu0
        %v3007 = vpop.f32.mrb[0].mxu0
        %v3008 = vadd.f32 0.0, %v3007
        %v3009 = vpop.f32.mrb[0].mxu0
        %3010 = vmatprep.mubr.bf16.mxu0 0
        %3011 = vmatmul.mubr.bf16.gmra.mrb[0].mxu0 %v1481
        %v3012 = vpop.f32.mrb[0].mxu0
        %v3013 = vadd.f32 0.0, %v3012
        %v3014 = vpop.f32.mrb[0].mxu0
        %v3015 = vpop.f32.mrb[0].mxu0
        %v3016 = vadd.f32 0.0, %v3015
        %v3017 = vpop.f32.mrb[0].mxu0
        %3018 = vmatprep.mubr.bf16.mxu0 0
        %3019 = vmatmul.mubr.bf16.gmra.mrb[0].mxu0 %v1484
        %v3020 = vpop.f32.mrb[0].mxu0
        %v3021 = vadd.f32 0.0, %v3020
        %v3022 = vpop.f32.mrb[0].mxu0
        %v3023 = vpop.f32.mrb[0].mxu0
        %v3024 = vadd.f32 0.0, %v3023
        %v3025 = vpop.f32.mrb[0].mxu0
        %3026 = vmatprep.mubr.bf16.mxu0 0
        %3027 = vmatmul.mubr.bf16.gmra.mrb[0].mxu0 %v1487
        %v3028 = vpop.f32.mrb[0].mxu0
        %v3029 = vadd.f32 0.0, %v3028
        %v3030 = vpop.f32.mrb[0].mxu0
        %v3031 = vpop.f32.mrb[0].mxu0
        %v3032 = vadd.f32 0.0, %v3031
        %v3033 = vpop.f32.mrb[0].mxu0
        %3034 = vmatprep.mubr.bf16.mxu0 0
        %3035 = vmatmul.mubr.bf16.gmra.mrb[0].mxu0 %v1490
        %v3036 = vpop.f32.mrb[0].mxu0
        %v3037 = vadd.f32 0.0, %v3036
        %v3038 = vpop.f32.mrb[0].mxu0
        %v3039 = vpop.f32.mrb[0].mxu0
        %v3040 = vadd.f32 0.0, %v3039
        %v3041 = vpop.f32.mrb[0].mxu0
        %3042 = vmatprep.mubr.bf16.mxu0 0
        %3043 = vmatmul.mubr.bf16.gmra.mrb[0].mxu0 %v1493
        %v3044 = vpop.f32.mrb[0].mxu0
        %v3045 = vadd.f32 0.0, %v3044
        %v3046 = vpop.f32.mrb[0].mxu0
        %v3047 = vpop.f32.mrb[0].mxu0
        %v3048 = vadd.f32 0.0, %v3047
        %v3049 = vpop.f32.mrb[0].mxu0
        %3050 = vmatprep.mubr.bf16.mxu0 0
        %3051 = vmatmul.mubr.bf16.gmra.mrb[0].mxu0 %v1496
        %v3052 = vpop.f32.mrb[0].mxu0
        %v3053 = vadd.f32 0.0, %v3052
        %v3054 = vpop.f32.mrb[0].mxu0
        %v3055 = vpop.f32.mrb[0].mxu0
        %v3056 = vadd.f32 0.0, %v3055
        %v3057 = vpop.f32.mrb[0].mxu0
        %3058 = vmatprep.mubr.bf16.mxu0 0
        %3059 = vmatmul.mubr.bf16.gmra.mrb[0].mxu0 %v1499
        %v3060 = vpop.f32.mrb[0].mxu0
        %v3061 = vadd.f32 0.0, %v3060
        %v3062 = vpop.f32.mrb[0].mxu0
        %v3063 = vpop.f32.mrb[0].mxu0
        %v3064 = vadd.f32 0.0, %v3063
        %v3065 = vpop.f32.mrb[0].mxu0
        %3066 = vmatprep.mubr.bf16.mxu0 0
        %3067 = vmatmul.mubr.bf16.gmra.mrb[0].mxu0 %v1502
        %v3068 = vpop.f32.mrb[0].mxu0
        %v3069 = vadd.f32 0.0, %v3068
        %v3070 = vpop.f32.mrb[0].mxu0
        %v3071 = vpop.f32.mrb[0].mxu0
        %v3072 = vadd.f32 0.0, %v3071
        %v3073 = vpop.f32.mrb[0].mxu0
        %3074 = vmatprep.mubr.bf16.mxu0 0
        %3075 = vmatmul.mubr.bf16.gmra.mrb[0].mxu0 %v1505
        %v3076 = vpop.f32.mrb[0].mxu0
        %v3077 = vadd.f32 0.0, %v3076
        %v3078 = vpop.f32.mrb[0].mxu0
        %v3079 = vpop.f32.mrb[0].mxu0
        %v3080 = vadd.f32 0.0, %v3079
        %v3081 = vpop.f32.mrb[0].mxu0
        %3082 = vmatprep.mubr.bf16.mxu0 0
        %3083 = vmatmul.mubr.bf16.gmra.mrb[0].mxu0 %v2281
        %v3084 = vpop.f32.mrb[0].mxu0
        %v3085 = vadd.f32 0.0, %v3084
        %v3086 = vpop.f32.mrb[0].mxu0
        %v3087 = vpop.f32.mrb[0].mxu0
        %v3088 = vadd.f32 0.0, %v3087
        %v3089 = vpop.f32.mrb[0].mxu0
        %3090 = vmatprep.mubr.bf16.mxu0 0
        %3091 = vmatmul.mubr.bf16.gmra.mrb[0].mxu0 %v2936
        %v3092 = vpop.f32.mrb[0].mxu0
        %v3093 = vadd.f32 0.0, %v3092
        %v3094 = vpop.f32.mrb[0].mxu0
        %v3095 = vpop.f32.mrb[0].mxu0
        %v3096 = vadd.f32 0.0, %v3095
        %v3097 = vpop.f32.mrb[0].mxu0
        %3098 = vdwg.mxu0
        %v3099 = vadd.f32 %v2875, %v2973
        %v3100 = vadd.f32 %v2876, %v2976
        %v3101 = vadd.f32 %v2877, %v2981
        %v3102 = vadd.f32 %v2878, %v2984
        %v3103 = vadd.f32 %v2879, %v2989
        %v3104 = vadd.f32 %v2880, %v2992
        %v3105 = vadd.f32 %v2881, %v2997
        %v3106 = vadd.f32 %v2882, %v3000
        %v3107 = vadd.f32 %v2883, %v3005
        %v3108 = vadd.f32 %v2884, %v3008
        %v3109 = vadd.f32 %v2885, %v3013
        %v3110 = vadd.f32 %v2886, %v3016
        %v3111 = vadd.f32 %v2887, %v3021
        %v3112 = vadd.f32 %v2888, %v3024
        %v3113 = vadd.f32 %v2889, %v3029
        %v3114 = vadd.f32 %v2890, %v3032
        %v3115 = vadd.f32 %v2891, %v3037
        %v3116 = vadd.f32 %v2892, %v3040
        %v3117 = vadd.f32 %v2893, %v3045
        %v3118 = vadd.f32 %v2894, %v3048
        %v3119 = vadd.f32 %v2895, %v3053
        %v3120 = vadd.f32 %v2896, %v3056
        %v3121 = vadd.f32 %v2897, %v3061
        %v3122 = vadd.f32 %v2898, %v3064
        %v3123 = vadd.f32 %v2899, %v3069
        %v3124 = vadd.f32 %v2900, %v3072
        %v3125 = vadd.f32 %v2901, %v3077
        %v3126 = vadd.f32 %v2902, %v3080
        %v3127 = vadd.f32 %v2903, %v3085
        %v3128 = vadd.f32 %v2904, %v3088
        %v3129 = vadd.f32 %v2905, %v3093
        %v3130 = vadd.f32 %v2906, %v3096
        %v3133 = vrot.slane %v1005, 1
        %v3134 = vrot.slane %v1006, 1
        %v3135 = vsel %vm1732, %v3133, %v3134
        %s3136 = scalar_lea.vmem %s3, 128
        %v3137 = vld [vmem:[%s3136] sm:$0xf]
        %v3138 = vld [vmem:[%s3136 + $0x4] sm:$0xf]
        %v3139 = vld [vmem:[%s3136 + $0x8] sm:$0xf]
        %v3140 = vld [vmem:[%s3136 + $0xc] sm:$0xf]
        %v3145 = vunpack.c.l.b16 %v3137
        %v3146 = vunpack.c.l.b16 %v3138
        %v3147 = vunpack.c.l.b16 %v3139
        %v3148 = vunpack.c.l.b16 %v3140
        %v3149 = vpack.c.b16 %v3146, %v3145
        %v3150 = vpack.c.b16 %v3148, %v3147
        %v3154 = vsel %vm1023, %v3135, 0
        %3156 = vmatprep.subr.bf16.mxu0 0
        %3157 = vmatpush1.bf16.msra.mxu0 %v3149
        %3158 = vmatprep.subr.bf16.mxu0 0
        %3159 = vmatpush1.bf16.msra.mxu0 %v3150
        %3160 = vmatprep.subr.bf16.mxu0 0
        %3161 = vmatpush1.bf16.msra.mxu0 0
        %3162 = vmatprep.subr.bf16.mxu0 0
        %3163 = vmatpush1.bf16.msra.mxu0 0
        %3164 = vmatprep.subr.bf16.mxu0 0
        %3165 = vmatpush1.bf16.msra.mxu0 0
        %3166 = vmatprep.subr.bf16.mxu0 0
        %3167 = vmatpush1.bf16.msra.mxu0 0
        %3168 = vmatprep.subr.bf16.mxu0 0
        %3169 = vmatpush1.bf16.msra.mxu0 0
        %3170 = vmatprep.subr.bf16.mxu0 0
        %3171 = vmatpush1.bf16.msra.mxu0 0
        %3172 = vmatprep.subr.bf16.mxu0 0
        %3173 = vmatpush1.bf16.msra.mxu0 0
        %3174 = vmatprep.subr.bf16.mxu0 0
        %3175 = vmatpush1.bf16.msra.mxu0 0
        %3176 = vmatprep.subr.bf16.mxu0 0
        %3177 = vmatpush1.bf16.msra.mxu0 0
        %3178 = vmatprep.subr.bf16.mxu0 0
        %3179 = vmatpush1.bf16.msra.mxu0 0
        %3180 = vmatprep.subr.bf16.mxu0 0
        %3181 = vmatpush1.bf16.msra.mxu0 0
        %3182 = vmatprep.subr.bf16.mxu0 0
        %3183 = vmatpush1.bf16.msra.mxu0 0
        %3184 = vmatprep.subr.bf16.mxu0 0
        %3185 = vmatpush1.bf16.msra.mxu0 0
        %3186 = vmatprep.subr.bf16.mxu0 0
        %3187 = vmatpush1.bf16.msra.mxu0 0
        %3188 = vmatprep.mubr.bf16.mxu0 0
        %3189 = vmatmul.mubr.bf16.gmra.mrb[0].mxu0 %v1805
        %v3190 = vpop.f32.mrb[0].mxu0
        %v3191 = vadd.f32 0.0, %v3190
        %v3192 = vpop.f32.mrb[0].mxu0
        %v3193 = vpop.f32.mrb[0].mxu0
        %v3194 = vadd.f32 0.0, %v3193
        %v3195 = vpop.f32.mrb[0].mxu0
        %3196 = vmatprep.mubr.bf16.mxu0 0
        %3197 = vmatmul.mubr.bf16.gmra.mrb[0].mxu0 %v1808
        %v3198 = vpop.f32.mrb[0].mxu0
        %v3199 = vadd.f32 0.0, %v3198
        %v3200 = vpop.f32.mrb[0].mxu0
        %v3201 = vpop.f32.mrb[0].mxu0
        %v3202 = vadd.f32 0.0, %v3201
        %v3203 = vpop.f32.mrb[0].mxu0
        %3204 = vmatprep.mubr.bf16.mxu0 0
        %3205 = vmatmul.mubr.bf16.gmra.mrb[0].mxu0 %v1811
        %v3206 = vpop.f32.mrb[0].mxu0
        %v3207 = vadd.f32 0.0, %v3206
        %v3208 = vpop.f32.mrb[0].mxu0
        %v3209 = vpop.f32.mrb[0].mxu0
        %v3210 = vadd.f32 0.0, %v3209
        %v3211 = vpop.f32.mrb[0].mxu0
        %3212 = vmatprep.mubr.bf16.mxu0 0
        %3213 = vmatmul.mubr.bf16.gmra.mrb[0].mxu0 %v1814
        %v3214 = vpop.f32.mrb[0].mxu0
        %v3215 = vadd.f32 0.0, %v3214
        %v3216 = vpop.f32.mrb[0].mxu0
        %v3217 = vpop.f32.mrb[0].mxu0
        %v3218 = vadd.f32 0.0, %v3217
        %v3219 = vpop.f32.mrb[0].mxu0
        %3220 = vmatprep.mubr.bf16.mxu0 0
        %3221 = vmatmul.mubr.bf16.gmra.mrb[0].mxu0 %v1817
        %v3222 = vpop.f32.mrb[0].mxu0
        %v3223 = vadd.f32 0.0, %v3222
        %v3224 = vpop.f32.mrb[0].mxu0
        %v3225 = vpop.f32.mrb[0].mxu0
        %v3226 = vadd.f32 0.0, %v3225
        %v3227 = vpop.f32.mrb[0].mxu0
        %3228 = vmatprep.mubr.bf16.mxu0 0
        %3229 = vmatmul.mubr.bf16.gmra.mrb[0].mxu0 %v1820
        %v3230 = vpop.f32.mrb[0].mxu0
        %v3231 = vadd.f32 0.0, %v3230
        %v3232 = vpop.f32.mrb[0].mxu0
        %v3233 = vpop.f32.mrb[0].mxu0
        %v3234 = vadd.f32 0.0, %v3233
        %v3235 = vpop.f32.mrb[0].mxu0
        %3236 = vmatprep.mubr.bf16.mxu0 0
        %3237 = vmatmul.mubr.bf16.gmra.mrb[0].mxu0 %v1823
        %v3238 = vpop.f32.mrb[0].mxu0
        %v3239 = vadd.f32 0.0, %v3238
        %v3240 = vpop.f32.mrb[0].mxu0
        %v3241 = vpop.f32.mrb[0].mxu0
        %v3242 = vadd.f32 0.0, %v3241
        %v3243 = vpop.f32.mrb[0].mxu0
        %3244 = vmatprep.mubr.bf16.mxu0 0
        %3245 = vmatmul.mubr.bf16.gmra.mrb[0].mxu0 %v1826
        %v3246 = vpop.f32.mrb[0].mxu0
        %v3247 = vadd.f32 0.0, %v3246
        %v3248 = vpop.f32.mrb[0].mxu0
        %v3249 = vpop.f32.mrb[0].mxu0
        %v3250 = vadd.f32 0.0, %v3249
        %v3251 = vpop.f32.mrb[0].mxu0
        %3252 = vmatprep.mubr.bf16.mxu0 0
        %3253 = vmatmul.mubr.bf16.gmra.mrb[0].mxu0 %v1829
        %v3254 = vpop.f32.mrb[0].mxu0
        %v3255 = vadd.f32 0.0, %v3254
        %v3256 = vpop.f32.mrb[0].mxu0
        %v3257 = vpop.f32.mrb[0].mxu0
        %v3258 = vadd.f32 0.0, %v3257
        %v3259 = vpop.f32.mrb[0].mxu0
        %3260 = vmatprep.mubr.bf16.mxu0 0
        %3261 = vmatmul.mubr.bf16.gmra.mrb[0].mxu0 %v1832
        %v3262 = vpop.f32.mrb[0].mxu0
        %v3263 = vadd.f32 0.0, %v3262
        %v3264 = vpop.f32.mrb[0].mxu0
        %v3265 = vpop.f32.mrb[0].mxu0
        %v3266 = vadd.f32 0.0, %v3265
        %v3267 = vpop.f32.mrb[0].mxu0
        %3268 = vmatprep.mubr.bf16.mxu0 0
        %3269 = vmatmul.mubr.bf16.gmra.mrb[0].mxu0 %v1835
        %v3270 = vpop.f32.mrb[0].mxu0
        %v3271 = vadd.f32 0.0, %v3270
        %v3272 = vpop.f32.mrb[0].mxu0
        %v3273 = vpop.f32.mrb[0].mxu0
        %v3274 = vadd.f32 0.0, %v3273
        %v3275 = vpop.f32.mrb[0].mxu0
        %3276 = vmatprep.mubr.bf16.mxu0 0
        %3277 = vmatmul.mubr.bf16.gmra.mrb[0].mxu0 %v1838
        %v3278 = vpop.f32.mrb[0].mxu0
        %v3279 = vadd.f32 0.0, %v3278
        %v3280 = vpop.f32.mrb[0].mxu0
        %v3281 = vpop.f32.mrb[0].mxu0
        %v3282 = vadd.f32 0.0, %v3281
        %v3283 = vpop.f32.mrb[0].mxu0
        %3284 = vmatprep.mubr.bf16.mxu0 0
        %3285 = vmatmul.mubr.bf16.gmra.mrb[0].mxu0 %v1841
        %v3286 = vpop.f32.mrb[0].mxu0
        %v3287 = vadd.f32 0.0, %v3286
        %v3288 = vpop.f32.mrb[0].mxu0
        %v3289 = vpop.f32.mrb[0].mxu0
        %v3290 = vadd.f32 0.0, %v3289
        %v3291 = vpop.f32.mrb[0].mxu0
        %3292 = vmatprep.mubr.bf16.mxu0 0
        %3293 = vmatmul.mubr.bf16.gmra.mrb[0].mxu0 %v1844
        %v3294 = vpop.f32.mrb[0].mxu0
        %v3295 = vadd.f32 0.0, %v3294
        %v3296 = vpop.f32.mrb[0].mxu0
        %v3297 = vpop.f32.mrb[0].mxu0
        %v3298 = vadd.f32 0.0, %v3297
        %v3299 = vpop.f32.mrb[0].mxu0
        %3300 = vmatprep.mubr.bf16.mxu0 0
        %3301 = vmatmul.mubr.bf16.gmra.mrb[0].mxu0 %v2499
        %v3302 = vpop.f32.mrb[0].mxu0
        %v3303 = vadd.f32 0.0, %v3302
        %v3304 = vpop.f32.mrb[0].mxu0
        %v3305 = vpop.f32.mrb[0].mxu0
        %v3306 = vadd.f32 0.0, %v3305
        %v3307 = vpop.f32.mrb[0].mxu0
        %3308 = vmatprep.mubr.bf16.mxu0 0
        %3309 = vmatmul.mubr.bf16.gmra.mrb[0].mxu0 %v3154
        %v3310 = vpop.f32.mrb[0].mxu0
        %v3311 = vadd.f32 0.0, %v3310
        %v3312 = vpop.f32.mrb[0].mxu0
        %v3313 = vpop.f32.mrb[0].mxu0
        %v3314 = vadd.f32 0.0, %v3313
        %v3315 = vpop.f32.mrb[0].mxu0
        %3316 = vdwg.mxu0
        %v3317 = vadd.f32 %v3099, %v3191
        %v3318 = vadd.f32 %v3100, %v3194
        %v3319 = vadd.f32 %v3101, %v3199
        %v3320 = vadd.f32 %v3102, %v3202
        %v3321 = vadd.f32 %v3103, %v3207
        %v3322 = vadd.f32 %v3104, %v3210
        %v3323 = vadd.f32 %v3105, %v3215
        %v3324 = vadd.f32 %v3106, %v3218
        %v3325 = vadd.f32 %v3107, %v3223
        %v3326 = vadd.f32 %v3108, %v3226
        %v3327 = vadd.f32 %v3109, %v3231
        %v3328 = vadd.f32 %v3110, %v3234
        %v3329 = vadd.f32 %v3111, %v3239
        %v3330 = vadd.f32 %v3112, %v3242
        %v3331 = vadd.f32 %v3113, %v3247
        %v3332 = vadd.f32 %v3114, %v3250
        %v3333 = vadd.f32 %v3115, %v3255
        %v3334 = vadd.f32 %v3116, %v3258
        %v3335 = vadd.f32 %v3117, %v3263
        %v3336 = vadd.f32 %v3118, %v3266
        %v3337 = vadd.f32 %v3119, %v3271
        %v3338 = vadd.f32 %v3120, %v3274
        %v3339 = vadd.f32 %v3121, %v3279
        %v3340 = vadd.f32 %v3122, %v3282
        %v3341 = vadd.f32 %v3123, %v3287
        %v3342 = vadd.f32 %v3124, %v3290
        %v3343 = vadd.f32 %v3125, %v3295
        %v3344 = vadd.f32 %v3126, %v3298
        %v3345 = vadd.f32 %v3127, %v3303
        %v3346 = vadd.f32 %v3128, %v3306
        %v3347 = vadd.f32 %v3129, %v3311
        %v3348 = vadd.f32 %v3130, %v3314
        %v3349 = vxor.u32 %v3317, 2147483648
        %v3350 = vxor.u32 %v3318, 2147483648
        %v3351 = vxor.u32 %v3319, 2147483648
        %v3352 = vxor.u32 %v3320, 2147483648
        %v3353 = vxor.u32 %v3321, 2147483648
        %v3354 = vxor.u32 %v3322, 2147483648
        %v3355 = vxor.u32 %v3323, 2147483648
        %v3356 = vxor.u32 %v3324, 2147483648
        %v3357 = vxor.u32 %v3325, 2147483648
        %v3358 = vxor.u32 %v3326, 2147483648
        %v3359 = vxor.u32 %v3327, 2147483648
        %v3360 = vxor.u32 %v3328, 2147483648
        %v3361 = vxor.u32 %v3329, 2147483648
        %v3362 = vxor.u32 %v3330, 2147483648
        %v3363 = vxor.u32 %v3331, 2147483648
        %v3364 = vxor.u32 %v3332, 2147483648
        %v3365 = vxor.u32 %v3333, 2147483648
        %v3366 = vxor.u32 %v3334, 2147483648
        %v3367 = vxor.u32 %v3335, 2147483648
        %v3368 = vxor.u32 %v3336, 2147483648
        %v3369 = vxor.u32 %v3337, 2147483648
        %v3370 = vxor.u32 %v3338, 2147483648
        %v3371 = vxor.u32 %v3339, 2147483648
        %v3372 = vxor.u32 %v3340, 2147483648
        %v3373 = vxor.u32 %v3341, 2147483648
        %v3374 = vxor.u32 %v3342, 2147483648
        %v3375 = vxor.u32 %v3343, 2147483648
        %v3376 = vxor.u32 %v3344, 2147483648
        %v3377 = vxor.u32 %v3345, 2147483648
        %v3378 = vxor.u32 %v3346, 2147483648
        %v3379 = vxor.u32 %v3347, 2147483648
        %v3380 = vxor.u32 %v3348, 2147483648
        %v3381 = vmul.f32 %v3349, 1.442695
        %v3382 = vpow.pop %v3381
        %v3383 = vmul.f32 %v3350, 1.442695
        %v3384 = vpow.pop %v3383
        %v3385 = vmul.f32 %v3351, 1.442695
        %v3386 = vpow.pop %v3385
        %v3387 = vmul.f32 %v3352, 1.442695
        %v3388 = vpow.pop %v3387
        %v3389 = vmul.f32 %v3353, 1.442695
        %v3390 = vpow.pop %v3389
        %v3391 = vmul.f32 %v3354, 1.442695
        %v3392 = vpow.pop %v3391
        %v3393 = vmul.f32 %v3355, 1.442695
        %v3394 = vpow.pop %v3393
        %v3395 = vmul.f32 %v3356, 1.442695
        %v3396 = vpow.pop %v3395
        %v3397 = vmul.f32 %v3357, 1.442695
        %v3398 = vpow.pop %v3397
        %v3399 = vmul.f32 %v3358, 1.442695
        %v3400 = vpow.pop %v3399
        %v3401 = vmul.f32 %v3359, 1.442695
        %v3402 = vpow.pop %v3401
        %v3403 = vmul.f32 %v3360, 1.442695
        %v3404 = vpow.pop %v3403
        %v3405 = vmul.f32 %v3361, 1.442695
        %v3406 = vpow.pop %v3405
        %v3407 = vmul.f32 %v3362, 1.442695
        %v3408 = vpow.pop %v3407
        %v3409 = vmul.f32 %v3363, 1.442695
        %v3410 = vpow.pop %v3409
        %v3411 = vmul.f32 %v3364, 1.442695
        %v3412 = vpow.pop %v3411
        %v3413 = vmul.f32 %v3365, 1.442695
        %v3414 = vpow.pop %v3413
        %v3415 = vmul.f32 %v3366, 1.442695
        %v3416 = vpow.pop %v3415
        %v3417 = vmul.f32 %v3367, 1.442695
        %v3418 = vpow.pop %v3417
        %v3419 = vmul.f32 %v3368, 1.442695
        %v3420 = vpow.pop %v3419
        %v3421 = vmul.f32 %v3369, 1.442695
        %v3422 = vpow.pop %v3421
        %v3423 = vmul.f32 %v3370, 1.442695
        %v3424 = vpow.pop %v3423
        %v3425 = vmul.f32 %v3371, 1.442695
        %v3426 = vpow.pop %v3425
        %v3427 = vmul.f32 %v3372, 1.442695
        %v3428 = vpow.pop %v3427
        %v3429 = vmul.f32 %v3373, 1.442695
        %v3430 = vpow.pop %v3429
        %v3431 = vmul.f32 %v3374, 1.442695
        %v3432 = vpow.pop %v3431
        %v3433 = vmul.f32 %v3375, 1.442695
        %v3434 = vpow.pop %v3433
        %v3435 = vmul.f32 %v3376, 1.442695
        %v3436 = vpow.pop %v3435
        %v3437 = vmul.f32 %v3377, 1.442695
        %v3438 = vpow.pop %v3437
        %v3439 = vmul.f32 %v3378, 1.442695
        %v3440 = vpow.pop %v3439
        %v3441 = vmul.f32 %v3379, 1.442695
        %v3442 = vpow.pop %v3441
        %v3443 = vmul.f32 %v3380, 1.442695
        %v3444 = vpow.pop %v3443
        %v3445 = vadd.f32 %v3382, 1.0
        %v3446 = vadd.f32 %v3384, 1.0
        %v3447 = vadd.f32 %v3386, 1.0
        %v3448 = vadd.f32 %v3388, 1.0
        %v3449 = vadd.f32 %v3390, 1.0
        %v3450 = vadd.f32 %v3392, 1.0
        %v3451 = vadd.f32 %v3394, 1.0
        %v3452 = vadd.f32 %v3396, 1.0
        %v3453 = vadd.f32 %v3398, 1.0
        %v3454 = vadd.f32 %v3400, 1.0
        %v3455 = vadd.f32 %v3402, 1.0
        %v3456 = vadd.f32 %v3404, 1.0
        %v3457 = vadd.f32 %v3406, 1.0
        %v3458 = vadd.f32 %v3408, 1.0
        %v3459 = vadd.f32 %v3410, 1.0
        %v3460 = vadd.f32 %v3412, 1.0
        %v3461 = vadd.f32 %v3414, 1.0
        %v3462 = vadd.f32 %v3416, 1.0
        %v3463 = vadd.f32 %v3418, 1.0
        %v3464 = vadd.f32 %v3420, 1.0
        %v3465 = vadd.f32 %v3422, 1.0
        %v3466 = vadd.f32 %v3424, 1.0
        %v3467 = vadd.f32 %v3426, 1.0
        %v3468 = vadd.f32 %v3428, 1.0
        %v3469 = vadd.f32 %v3430, 1.0
        %v3470 = vadd.f32 %v3432, 1.0
        %v3471 = vadd.f32 %v3434, 1.0
        %v3472 = vadd.f32 %v3436, 1.0
        %v3473 = vadd.f32 %v3438, 1.0
        %v3474 = vadd.f32 %v3440, 1.0
        %v3475 = vadd.f32 %v3442, 1.0
        %v3476 = vadd.f32 %v3444, 1.0
        %v3477 = vrcp.pop %v3445
        %v3478 = vmul.f32 1.0, %v3477
        %v3479 = vrcp.pop %v3446
        %v3480 = vmul.f32 1.0, %v3479
        %v3481 = vrcp.pop %v3447
        %v3482 = vmul.f32 1.0, %v3481
        %v3483 = vrcp.pop %v3448
        %v3484 = vmul.f32 1.0, %v3483
        %v3485 = vrcp.pop %v3449
        %v3486 = vmul.f32 1.0, %v3485
        %v3487 = vrcp.pop %v3450
        %v3488 = vmul.f32 1.0, %v3487
        %v3489 = vrcp.pop %v3451
        %v3490 = vmul.f32 1.0, %v3489
        %v3491 = vrcp.pop %v3452
        %v3492 = vmul.f32 1.0, %v3491
        %v3493 = vrcp.pop %v3453
        %v3494 = vmul.f32 1.0, %v3493
        %v3495 = vrcp.pop %v3454
        %v3496 = vmul.f32 1.0, %v3495
        %v3497 = vrcp.pop %v3455
        %v3498 = vmul.f32 1.0, %v3497
        %v3499 = vrcp.pop %v3456
        %v3500 = vmul.f32 1.0, %v3499
        %v3501 = vrcp.pop %v3457
        %v3502 = vmul.f32 1.0, %v3501
        %v3503 = vrcp.pop %v3458
        %v3504 = vmul.f32 1.0, %v3503
        %v3505 = vrcp.pop %v3459
        %v3506 = vmul.f32 1.0, %v3505
        %v3507 = vrcp.pop %v3460
        %v3508 = vmul.f32 1.0, %v3507
        %v3509 = vrcp.pop %v3461
        %v3510 = vmul.f32 1.0, %v3509
        %v3511 = vrcp.pop %v3462
        %v3512 = vmul.f32 1.0, %v3511
        %v3513 = vrcp.pop %v3463
        %v3514 = vmul.f32 1.0, %v3513
        %v3515 = vrcp.pop %v3464
        %v3516 = vmul.f32 1.0, %v3515
        %v3517 = vrcp.pop %v3465
        %v3518 = vmul.f32 1.0, %v3517
        %v3519 = vrcp.pop %v3466
        %v3520 = vmul.f32 1.0, %v3519
        %v3521 = vrcp.pop %v3467
        %v3522 = vmul.f32 1.0, %v3521
        %v3523 = vrcp.pop %v3468
        %v3524 = vmul.f32 1.0, %v3523
        %v3525 = vrcp.pop %v3469
        %v3526 = vmul.f32 1.0, %v3525
        %v3527 = vrcp.pop %v3470
        %v3528 = vmul.f32 1.0, %v3527
        %v3529 = vrcp.pop %v3471
        %v3530 = vmul.f32 1.0, %v3529
        %v3531 = vrcp.pop %v3472
        %v3532 = vmul.f32 1.0, %v3531
        %v3533 = vrcp.pop %v3473
        %v3534 = vmul.f32 1.0, %v3533
        %v3535 = vrcp.pop %v3474
        %v3536 = vmul.f32 1.0, %v3535
        %v3537 = vrcp.pop %v3475
        %v3538 = vmul.f32 1.0, %v3537
        %v3539 = vrcp.pop %v3476
        %v3540 = vmul.f32 1.0, %v3539
        %v3541 = vtanh.pop %v3317
        %v3542 = vtanh.pop %v3318
        %v3543 = vtanh.pop %v3319
        %v3544 = vtanh.pop %v3320
        %v3545 = vtanh.pop %v3321
        %v3546 = vtanh.pop %v3322
        %v3547 = vtanh.pop %v3323
        %v3548 = vtanh.pop %v3324
        %v3549 = vtanh.pop %v3325
        %v3550 = vtanh.pop %v3326
        %v3551 = vtanh.pop %v3327
        %v3552 = vtanh.pop %v3328
        %v3553 = vtanh.pop %v3329
        %v3554 = vtanh.pop %v3330
        %v3555 = vtanh.pop %v3331
        %v3556 = vtanh.pop %v3332
        %v3557 = vtanh.pop %v3333
        %v3558 = vtanh.pop %v3334
        %v3559 = vtanh.pop %v3335
        %v3560 = vtanh.pop %v3336
        %v3561 = vtanh.pop %v3337
        %v3562 = vtanh.pop %v3338
        %v3563 = vtanh.pop %v3339
        %v3564 = vtanh.pop %v3340
        %v3565 = vtanh.pop %v3341
        %v3566 = vtanh.pop %v3342
        %v3567 = vtanh.pop %v3343
        %v3568 = vtanh.pop %v3344
        %v3569 = vtanh.pop %v3345
        %v3570 = vtanh.pop %v3346
        %v3571 = vtanh.pop %v3347
        %v3572 = vtanh.pop %v3348
        %v3573 = vld [vmem:[#allocation3] sm:$0xff]
        %v3574 = vld [vmem:[#allocation3 + $0x8] sm:$0xff]
        %v3575 = vld [vmem:[#allocation3 + $0x10] sm:$0xff]
        %v3576 = vld [vmem:[#allocation3 + $0x18] sm:$0xff]
        %v3577 = vld [vmem:[#allocation3 + $0x20] sm:$0xff]
        %v3578 = vld [vmem:[#allocation3 + $0x28] sm:$0xff]
        %v3579 = vld [vmem:[#allocation3 + $0x30] sm:$0xff]
        %v3580 = vld [vmem:[#allocation3 + $0x38] sm:$0xff]
        %v3581 = vld [vmem:[#allocation3 + $0x40] sm:$0xff]
        %v3582 = vld [vmem:[#allocation3 + $0x48] sm:$0xff]
        %v3583 = vld [vmem:[#allocation3 + $0x50] sm:$0xff]
        %v3584 = vld [vmem:[#allocation3 + $0x58] sm:$0xff]
        %v3585 = vld [vmem:[#allocation3 + $0x60] sm:$0xff]
        %v3586 = vld [vmem:[#allocation3 + $0x68] sm:$0xff]
        %v3587 = vld [vmem:[#allocation3 + $0x70] sm:$0xff]
        %v3588 = vld [vmem:[#allocation3 + $0x78] sm:$0xff]
        %v3589 = vld [vmem:[#allocation3 + $0x80] sm:$0xff]
        %v3590 = vld [vmem:[#allocation3 + $0x88] sm:$0xff]
        %v3591 = vld [vmem:[#allocation3 + $0x90] sm:$0xff]
        %v3592 = vld [vmem:[#allocation3 + $0x98] sm:$0xff]
        %v3593 = vld [vmem:[#allocation3 + $0xa0] sm:$0xff]
        %v3594 = vld [vmem:[#allocation3 + $0xa8] sm:$0xff]
        %v3595 = vld [vmem:[#allocation3 + $0xb0] sm:$0xff]
        %v3596 = vld [vmem:[#allocation3 + $0xb8] sm:$0xff]
        %v3597 = vld [vmem:[#allocation3 + $0xc0] sm:$0xff]
        %v3598 = vld [vmem:[#allocation3 + $0xc8] sm:$0xff]
        %v3599 = vld [vmem:[#allocation3 + $0xd0] sm:$0xff]
        %v3600 = vld [vmem:[#allocation3 + $0xd8] sm:$0xff]
        %v3601 = vld [vmem:[#allocation3 + $0xe0] sm:$0xff]
        %v3602 = vld [vmem:[#allocation3 + $0xe8] sm:$0xff]
        %v3603 = vld [vmem:[#allocation3 + $0xf0] sm:$0xff]
        %v3604 = vld [vmem:[#allocation3 + $0xf8] sm:$0xff]
        %3637 = vrot.lane.b32.xlu0 %v3573, 32
        %v3638 = vpop.permute.xlu0 %3637
        %3639 = vrot.lane.b32.xlu0 %v3574, 32
        %v3640 = vpop.permute.xlu0 %3639
        %3641 = vrot.lane.b32.xlu0 %v3575, 32
        %v3642 = vpop.permute.xlu0 %3641
        %3643 = vrot.lane.b32.xlu0 %v3576, 32
        %v3644 = vpop.permute.xlu0 %3643
        %3645 = vrot.lane.b32.xlu0 %v3577, 32
        %v3646 = vpop.permute.xlu0 %3645
        %3647 = vrot.lane.b32.xlu0 %v3578, 32
        %v3648 = vpop.permute.xlu0 %3647
        %3649 = vrot.lane.b32.xlu0 %v3579, 32
        %v3650 = vpop.permute.xlu0 %3649
        %3651 = vrot.lane.b32.xlu0 %v3580, 32
        %v3652 = vpop.permute.xlu0 %3651
        %3653 = vrot.lane.b32.xlu0 %v3581, 32
        %v3654 = vpop.permute.xlu0 %3653
        %3655 = vrot.lane.b32.xlu0 %v3582, 32
        %v3656 = vpop.permute.xlu0 %3655
        %3657 = vrot.lane.b32.xlu0 %v3583, 32
        %v3658 = vpop.permute.xlu0 %3657
        %3659 = vrot.lane.b32.xlu0 %v3584, 32
        %v3660 = vpop.permute.xlu0 %3659
        %3661 = vrot.lane.b32.xlu0 %v3585, 32
        %v3662 = vpop.permute.xlu0 %3661
        %3663 = vrot.lane.b32.xlu0 %v3586, 32
        %v3664 = vpop.permute.xlu0 %3663
        %3665 = vrot.lane.b32.xlu0 %v3587, 32
        %v3666 = vpop.permute.xlu0 %3665
        %3667 = vrot.lane.b32.xlu0 %v3588, 32
        %v3668 = vpop.permute.xlu0 %3667
        %3669 = vrot.lane.b32.xlu0 %v3589, 32
        %v3670 = vpop.permute.xlu0 %3669
        %3671 = vrot.lane.b32.xlu0 %v3590, 32
        %v3672 = vpop.permute.xlu0 %3671
        %3673 = vrot.lane.b32.xlu0 %v3591, 32
        %v3674 = vpop.permute.xlu0 %3673
        %3675 = vrot.lane.b32.xlu0 %v3592, 32
        %v3676 = vpop.permute.xlu0 %3675
        %3677 = vrot.lane.b32.xlu0 %v3593, 32
        %v3678 = vpop.permute.xlu0 %3677
        %3679 = vrot.lane.b32.xlu0 %v3594, 32
        %v3680 = vpop.permute.xlu0 %3679
        %3681 = vrot.lane.b32.xlu0 %v3595, 32
        %v3682 = vpop.permute.xlu0 %3681
        %3683 = vrot.lane.b32.xlu0 %v3596, 32
        %v3684 = vpop.permute.xlu0 %3683
        %3685 = vrot.lane.b32.xlu0 %v3597, 32
        %v3686 = vpop.permute.xlu0 %3685
        %3687 = vrot.lane.b32.xlu0 %v3598, 32
        %v3688 = vpop.permute.xlu0 %3687
        %3689 = vrot.lane.b32.xlu0 %v3599, 32
        %v3690 = vpop.permute.xlu0 %3689
        %3691 = vrot.lane.b32.xlu0 %v3600, 32
        %v3692 = vpop.permute.xlu0 %3691
        %3693 = vrot.lane.b32.xlu0 %v3601, 32
        %v3694 = vpop.permute.xlu0 %3693
        %3695 = vrot.lane.b32.xlu0 %v3602, 32
        %v3696 = vpop.permute.xlu0 %3695
        %3697 = vrot.lane.b32.xlu0 %v3603, 32
        %v3698 = vpop.permute.xlu0 %3697
        %3699 = vrot.lane.b32.xlu0 %v3604, 32
        %v3700 = vpop.permute.xlu0 %3699
        %v3733 = vmul.f32 %v3478, %v3638
        %v3734 = vmul.f32 %v3480, %v3640
        %v3735 = vmul.f32 %v3482, %v3642
        %v3736 = vmul.f32 %v3484, %v3644
        %v3737 = vmul.f32 %v3486, %v3646
        %v3738 = vmul.f32 %v3488, %v3648
        %v3739 = vmul.f32 %v3490, %v3650
        %v3740 = vmul.f32 %v3492, %v3652
        %v3741 = vmul.f32 %v3494, %v3654
        %v3742 = vmul.f32 %v3496, %v3656
        %v3743 = vmul.f32 %v3498, %v3658
        %v3744 = vmul.f32 %v3500, %v3660
        %v3745 = vmul.f32 %v3502, %v3662
        %v3746 = vmul.f32 %v3504, %v3664
        %v3747 = vmul.f32 %v3506, %v3666
        %v3748 = vmul.f32 %v3508, %v3668
        %v3749 = vmul.f32 %v3510, %v3670
        %v3750 = vmul.f32 %v3512, %v3672
        %v3751 = vmul.f32 %v3514, %v3674
        %v3752 = vmul.f32 %v3516, %v3676
        %v3753 = vmul.f32 %v3518, %v3678
        %v3754 = vmul.f32 %v3520, %v3680
        %v3755 = vmul.f32 %v3522, %v3682
        %v3756 = vmul.f32 %v3524, %v3684
        %v3757 = vmul.f32 %v3526, %v3686
        %v3758 = vmul.f32 %v3528, %v3688
        %v3759 = vmul.f32 %v3530, %v3690
        %v3760 = vmul.f32 %v3532, %v3692
        %v3761 = vmul.f32 %v3534, %v3694
        %v3762 = vmul.f32 %v3536, %v3696
        %v3763 = vmul.f32 %v3538, %v3698
        %v3764 = vmul.f32 %v3540, %v3700
        %3797 = vrot.lane.b32.xlu0 %v3541, 32
        %v3798 = vpop.permute.xlu0 %3797
        %3799 = vrot.lane.b32.xlu0 %v3542, 32
        %v3800 = vpop.permute.xlu0 %3799
        %3801 = vrot.lane.b32.xlu0 %v3543, 32
        %v3802 = vpop.permute.xlu0 %3801
        %3803 = vrot.lane.b32.xlu0 %v3544, 32
        %v3804 = vpop.permute.xlu0 %3803
        %3805 = vrot.lane.b32.xlu0 %v3545, 32
        %v3806 = vpop.permute.xlu0 %3805
        %3807 = vrot.lane.b32.xlu0 %v3546, 32
        %v3808 = vpop.permute.xlu0 %3807
        %3809 = vrot.lane.b32.xlu0 %v3547, 32
        %v3810 = vpop.permute.xlu0 %3809
        %3811 = vrot.lane.b32.xlu0 %v3548, 32
        %v3812 = vpop.permute.xlu0 %3811
        %3813 = vrot.lane.b32.xlu0 %v3549, 32
        %v3814 = vpop.permute.xlu0 %3813
        %3815 = vrot.lane.b32.xlu0 %v3550, 32
        %v3816 = vpop.permute.xlu0 %3815
        %3817 = vrot.lane.b32.xlu0 %v3551, 32
        %v3818 = vpop.permute.xlu0 %3817
        %3819 = vrot.lane.b32.xlu0 %v3552, 32
        %v3820 = vpop.permute.xlu0 %3819
        %3821 = vrot.lane.b32.xlu0 %v3553, 32
        %v3822 = vpop.permute.xlu0 %3821
        %3823 = vrot.lane.b32.xlu0 %v3554, 32
        %v3824 = vpop.permute.xlu0 %3823
        %3825 = vrot.lane.b32.xlu0 %v3555, 32
        %v3826 = vpop.permute.xlu0 %3825
        %3827 = vrot.lane.b32.xlu0 %v3556, 32
        %v3828 = vpop.permute.xlu0 %3827
        %3829 = vrot.lane.b32.xlu0 %v3557, 32
        %v3830 = vpop.permute.xlu0 %3829
        %3831 = vrot.lane.b32.xlu0 %v3558, 32
        %v3832 = vpop.permute.xlu0 %3831
        %3833 = vrot.lane.b32.xlu0 %v3559, 32
        %v3834 = vpop.permute.xlu0 %3833
        %3835 = vrot.lane.b32.xlu0 %v3560, 32
        %v3836 = vpop.permute.xlu0 %3835
        %3837 = vrot.lane.b32.xlu0 %v3561, 32
        %v3838 = vpop.permute.xlu0 %3837
        %3839 = vrot.lane.b32.xlu0 %v3562, 32
        %v3840 = vpop.permute.xlu0 %3839
        %3841 = vrot.lane.b32.xlu0 %v3563, 32
        %v3842 = vpop.permute.xlu0 %3841
        %3843 = vrot.lane.b32.xlu0 %v3564, 32
        %v3844 = vpop.permute.xlu0 %3843
        %3845 = vrot.lane.b32.xlu0 %v3565, 32
        %v3846 = vpop.permute.xlu0 %3845
        %3847 = vrot.lane.b32.xlu0 %v3566, 32
        %v3848 = vpop.permute.xlu0 %3847
        %3849 = vrot.lane.b32.xlu0 %v3567, 32
        %v3850 = vpop.permute.xlu0 %3849
        %3851 = vrot.lane.b32.xlu0 %v3568, 32
        %v3852 = vpop.permute.xlu0 %3851
        %3853 = vrot.lane.b32.xlu0 %v3569, 32
        %v3854 = vpop.permute.xlu0 %3853
        %3855 = vrot.lane.b32.xlu0 %v3570, 32
        %v3856 = vpop.permute.xlu0 %3855
        %3857 = vrot.lane.b32.xlu0 %v3571, 32
        %v3858 = vpop.permute.xlu0 %3857
        %3859 = vrot.lane.b32.xlu0 %v3572, 32
        %v3860 = vpop.permute.xlu0 %3859
        %v3893 = vmul.f32 %v3478, %v3798
        %v3894 = vmul.f32 %v3480, %v3800
        %v3895 = vmul.f32 %v3482, %v3802
        %v3896 = vmul.f32 %v3484, %v3804
        %v3897 = vmul.f32 %v3486, %v3806
        %v3898 = vmul.f32 %v3488, %v3808
        %v3899 = vmul.f32 %v3490, %v3810
        %v3900 = vmul.f32 %v3492, %v3812
        %v3901 = vmul.f32 %v3494, %v3814
        %v3902 = vmul.f32 %v3496, %v3816
        %v3903 = vmul.f32 %v3498, %v3818
        %v3904 = vmul.f32 %v3500, %v3820
        %v3905 = vmul.f32 %v3502, %v3822
        %v3906 = vmul.f32 %v3504, %v3824
        %v3907 = vmul.f32 %v3506, %v3826
        %v3908 = vmul.f32 %v3508, %v3828
        %v3909 = vmul.f32 %v3510, %v3830
        %v3910 = vmul.f32 %v3512, %v3832
        %v3911 = vmul.f32 %v3514, %v3834
        %v3912 = vmul.f32 %v3516, %v3836
        %v3913 = vmul.f32 %v3518, %v3838
        %v3914 = vmul.f32 %v3520, %v3840
        %v3915 = vmul.f32 %v3522, %v3842
        %v3916 = vmul.f32 %v3524, %v3844
        %v3917 = vmul.f32 %v3526, %v3846
        %v3918 = vmul.f32 %v3528, %v3848
        %v3919 = vmul.f32 %v3530, %v3850
        %v3920 = vmul.f32 %v3532, %v3852
        %v3921 = vmul.f32 %v3534, %v3854
        %v3922 = vmul.f32 %v3536, %v3856
        %v3923 = vmul.f32 %v3538, %v3858
        %v3924 = vmul.f32 %v3540, %v3860
        %3957 = vrot.lane.b32.xlu0 %v3893, 32
        %v3958 = vpop.permute.xlu0 %3957
        %3959 = vrot.lane.b32.xlu0 %v3894, 32
        %v3960 = vpop.permute.xlu0 %3959
        %3961 = vrot.lane.b32.xlu0 %v3895, 32
        %v3962 = vpop.permute.xlu0 %3961
        %3963 = vrot.lane.b32.xlu0 %v3896, 32
        %v3964 = vpop.permute.xlu0 %3963
        %3965 = vrot.lane.b32.xlu0 %v3897, 32
        %v3966 = vpop.permute.xlu0 %3965
        %3967 = vrot.lane.b32.xlu0 %v3898, 32
        %v3968 = vpop.permute.xlu0 %3967
        %3969 = vrot.lane.b32.xlu0 %v3899, 32
        %v3970 = vpop.permute.xlu0 %3969
        %3971 = vrot.lane.b32.xlu0 %v3900, 32
        %v3972 = vpop.permute.xlu0 %3971
        %3973 = vrot.lane.b32.xlu0 %v3901, 32
        %v3974 = vpop.permute.xlu0 %3973
        %3975 = vrot.lane.b32.xlu0 %v3902, 32
        %v3976 = vpop.permute.xlu0 %3975
        %3977 = vrot.lane.b32.xlu0 %v3903, 32
        %v3978 = vpop.permute.xlu0 %3977
        %3979 = vrot.lane.b32.xlu0 %v3904, 32
        %v3980 = vpop.permute.xlu0 %3979
        %3981 = vrot.lane.b32.xlu0 %v3905, 32
        %v3982 = vpop.permute.xlu0 %3981
        %3983 = vrot.lane.b32.xlu0 %v3906, 32
        %v3984 = vpop.permute.xlu0 %3983
        %3985 = vrot.lane.b32.xlu0 %v3907, 32
        %v3986 = vpop.permute.xlu0 %3985
        %3987 = vrot.lane.b32.xlu0 %v3908, 32
        %v3988 = vpop.permute.xlu0 %3987
        %3989 = vrot.lane.b32.xlu0 %v3909, 32
        %v3990 = vpop.permute.xlu0 %3989
        %3991 = vrot.lane.b32.xlu0 %v3910, 32
        %v3992 = vpop.permute.xlu0 %3991
        %3993 = vrot.lane.b32.xlu0 %v3911, 32
        %v3994 = vpop.permute.xlu0 %3993
        %3995 = vrot.lane.b32.xlu0 %v3912, 32
        %v3996 = vpop.permute.xlu0 %3995
        %3997 = vrot.lane.b32.xlu0 %v3913, 32
        %v3998 = vpop.permute.xlu0 %3997
        %3999 = vrot.lane.b32.xlu0 %v3914, 32
        %v4000 = vpop.permute.xlu0 %3999
        %4001 = vrot.lane.b32.xlu0 %v3915, 32
        %v4002 = vpop.permute.xlu0 %4001
        %4003 = vrot.lane.b32.xlu0 %v3916, 32
        %v4004 = vpop.permute.xlu0 %4003
        %4005 = vrot.lane.b32.xlu0 %v3917, 32
        %v4006 = vpop.permute.xlu0 %4005
        %4007 = vrot.lane.b32.xlu0 %v3918, 32
        %v4008 = vpop.permute.xlu0 %4007
        %4009 = vrot.lane.b32.xlu0 %v3919, 32
        %v4010 = vpop.permute.xlu0 %4009
        %4011 = vrot.lane.b32.xlu0 %v3920, 32
        %v4012 = vpop.permute.xlu0 %4011
        %4013 = vrot.lane.b32.xlu0 %v3921, 32
        %v4014 = vpop.permute.xlu0 %4013
        %4015 = vrot.lane.b32.xlu0 %v3922, 32
        %v4016 = vpop.permute.xlu0 %4015
        %4017 = vrot.lane.b32.xlu0 %v3923, 32
        %v4018 = vpop.permute.xlu0 %4017
        %4019 = vrot.lane.b32.xlu0 %v3924, 32
        %v4020 = vpop.permute.xlu0 %4019
        %v4053 = vadd.f32 %v3733, %v3958
        %v4054 = vadd.f32 %v3734, %v3960
        %v4055 = vadd.f32 %v3735, %v3962
        %v4056 = vadd.f32 %v3736, %v3964
        %v4057 = vadd.f32 %v3737, %v3966
        %v4058 = vadd.f32 %v3738, %v3968
        %v4059 = vadd.f32 %v3739, %v3970
        %v4060 = vadd.f32 %v3740, %v3972
        %v4061 = vadd.f32 %v3741, %v3974
        %v4062 = vadd.f32 %v3742, %v3976
        %v4063 = vadd.f32 %v3743, %v3978
        %v4064 = vadd.f32 %v3744, %v3980
        %v4065 = vadd.f32 %v3745, %v3982
        %v4066 = vadd.f32 %v3746, %v3984
        %v4067 = vadd.f32 %v3747, %v3986
        %v4068 = vadd.f32 %v3748, %v3988
        %v4069 = vadd.f32 %v3749, %v3990
        %v4070 = vadd.f32 %v3750, %v3992
        %v4071 = vadd.f32 %v3751, %v3994
        %v4072 = vadd.f32 %v3752, %v3996
        %v4073 = vadd.f32 %v3753, %v3998
        %v4074 = vadd.f32 %v3754, %v4000
        %v4075 = vadd.f32 %v3755, %v4002
        %v4076 = vadd.f32 %v3756, %v4004
        %v4077 = vadd.f32 %v3757, %v4006
        %v4078 = vadd.f32 %v3758, %v4008
        %v4079 = vadd.f32 %v3759, %v4010
        %v4080 = vadd.f32 %v3760, %v4012
        %v4081 = vadd.f32 %v3761, %v4014
        %v4082 = vadd.f32 %v3762, %v4016
        %v4083 = vadd.f32 %v3763, %v4018
        %v4084 = vadd.f32 %v3764, %v4020
        %v4085 = vtanh.pop %v4053
        %v4086 = vtanh.pop %v4054
        %v4087 = vtanh.pop %v4055
        %v4088 = vtanh.pop %v4056
        %v4089 = vtanh.pop %v4057
        %v4090 = vtanh.pop %v4058
        %v4091 = vtanh.pop %v4059
        %v4092 = vtanh.pop %v4060
        %v4093 = vtanh.pop %v4061
        %v4094 = vtanh.pop %v4062
        %v4095 = vtanh.pop %v4063
        %v4096 = vtanh.pop %v4064
        %v4097 = vtanh.pop %v4065
        %v4098 = vtanh.pop %v4066
        %v4099 = vtanh.pop %v4067
        %v4100 = vtanh.pop %v4068
        %v4101 = vtanh.pop %v4069
        %v4102 = vtanh.pop %v4070
        %v4103 = vtanh.pop %v4071
        %v4104 = vtanh.pop %v4072
        %v4105 = vtanh.pop %v4073
        %v4106 = vtanh.pop %v4074
        %v4107 = vtanh.pop %v4075
        %v4108 = vtanh.pop %v4076
        %v4109 = vtanh.pop %v4077
        %v4110 = vtanh.pop %v4078
        %v4111 = vtanh.pop %v4079
        %v4112 = vtanh.pop %v4080
        %v4113 = vtanh.pop %v4081
        %v4114 = vtanh.pop %v4082
        %v4115 = vtanh.pop %v4083
        %v4116 = vtanh.pop %v4084
        %4149 = vrot.lane.b32.xlu0 %v4085, 32
        %v4150 = vpop.permute.xlu0 %4149
        %4151 = vrot.lane.b32.xlu0 %v4086, 32
        %v4152 = vpop.permute.xlu0 %4151
        %4153 = vrot.lane.b32.xlu0 %v4087, 32
        %v4154 = vpop.permute.xlu0 %4153
        %4155 = vrot.lane.b32.xlu0 %v4088, 32
        %v4156 = vpop.permute.xlu0 %4155
        %4157 = vrot.lane.b32.xlu0 %v4089, 32
        %v4158 = vpop.permute.xlu0 %4157
        %4159 = vrot.lane.b32.xlu0 %v4090, 32
        %v4160 = vpop.permute.xlu0 %4159
        %4161 = vrot.lane.b32.xlu0 %v4091, 32
        %v4162 = vpop.permute.xlu0 %4161
        %4163 = vrot.lane.b32.xlu0 %v4092, 32
        %v4164 = vpop.permute.xlu0 %4163
        %4165 = vrot.lane.b32.xlu0 %v4093, 32
        %v4166 = vpop.permute.xlu0 %4165
        %4167 = vrot.lane.b32.xlu0 %v4094, 32
        %v4168 = vpop.permute.xlu0 %4167
        %4169 = vrot.lane.b32.xlu0 %v4095, 32
        %v4170 = vpop.permute.xlu0 %4169
        %4171 = vrot.lane.b32.xlu0 %v4096, 32
        %v4172 = vpop.permute.xlu0 %4171
        %4173 = vrot.lane.b32.xlu0 %v4097, 32
        %v4174 = vpop.permute.xlu0 %4173
        %4175 = vrot.lane.b32.xlu0 %v4098, 32
        %v4176 = vpop.permute.xlu0 %4175
        %4177 = vrot.lane.b32.xlu0 %v4099, 32
        %v4178 = vpop.permute.xlu0 %4177
        %4179 = vrot.lane.b32.xlu0 %v4100, 32
        %v4180 = vpop.permute.xlu0 %4179
        %4181 = vrot.lane.b32.xlu0 %v4101, 32
        %v4182 = vpop.permute.xlu0 %4181
        %4183 = vrot.lane.b32.xlu0 %v4102, 32
        %v4184 = vpop.permute.xlu0 %4183
        %4185 = vrot.lane.b32.xlu0 %v4103, 32
        %v4186 = vpop.permute.xlu0 %4185
        %4187 = vrot.lane.b32.xlu0 %v4104, 32
        %v4188 = vpop.permute.xlu0 %4187
        %4189 = vrot.lane.b32.xlu0 %v4105, 32
        %v4190 = vpop.permute.xlu0 %4189
        %4191 = vrot.lane.b32.xlu0 %v4106, 32
        %v4192 = vpop.permute.xlu0 %4191
        %4193 = vrot.lane.b32.xlu0 %v4107, 32
        %v4194 = vpop.permute.xlu0 %4193
        %4195 = vrot.lane.b32.xlu0 %v4108, 32
        %v4196 = vpop.permute.xlu0 %4195
        %4197 = vrot.lane.b32.xlu0 %v4109, 32
        %v4198 = vpop.permute.xlu0 %4197
        %4199 = vrot.lane.b32.xlu0 %v4110, 32
        %v4200 = vpop.permute.xlu0 %4199
        %4201 = vrot.lane.b32.xlu0 %v4111, 32
        %v4202 = vpop.permute.xlu0 %4201
        %4203 = vrot.lane.b32.xlu0 %v4112, 32
        %v4204 = vpop.permute.xlu0 %4203
        %4205 = vrot.lane.b32.xlu0 %v4113, 32
        %v4206 = vpop.permute.xlu0 %4205
        %4207 = vrot.lane.b32.xlu0 %v4114, 32
        %v4208 = vpop.permute.xlu0 %4207
        %4209 = vrot.lane.b32.xlu0 %v4115, 32
        %v4210 = vpop.permute.xlu0 %4209
        %4211 = vrot.lane.b32.xlu0 %v4116, 32
        %v4212 = vpop.permute.xlu0 %4211
        %v4245 = vmul.f32 %v3478, %v4150
        %v4246 = vmul.f32 %v3480, %v4152
        %v4247 = vmul.f32 %v3482, %v4154
        %v4248 = vmul.f32 %v3484, %v4156
        %v4249 = vmul.f32 %v3486, %v4158
        %v4250 = vmul.f32 %v3488, %v4160
        %v4251 = vmul.f32 %v3490, %v4162
        %v4252 = vmul.f32 %v3492, %v4164
        %v4253 = vmul.f32 %v3494, %v4166
        %v4254 = vmul.f32 %v3496, %v4168
        %v4255 = vmul.f32 %v3498, %v4170
        %v4256 = vmul.f32 %v3500, %v4172
        %v4257 = vmul.f32 %v3502, %v4174
        %v4258 = vmul.f32 %v3504, %v4176
        %v4259 = vmul.f32 %v3506, %v4178
        %v4260 = vmul.f32 %v3508, %v4180
        %v4261 = vmul.f32 %v3510, %v4182
        %v4262 = vmul.f32 %v3512, %v4184
        %v4263 = vmul.f32 %v3514, %v4186
        %v4264 = vmul.f32 %v3516, %v4188
        %v4265 = vmul.f32 %v3518, %v4190
        %v4266 = vmul.f32 %v3520, %v4192
        %v4267 = vmul.f32 %v3522, %v4194
        %v4268 = vmul.f32 %v3524, %v4196
        %v4269 = vmul.f32 %v3526, %v4198
        %v4270 = vmul.f32 %v3528, %v4200
        %v4271 = vmul.f32 %v3530, %v4202
        %v4272 = vmul.f32 %v3532, %v4204
        %v4273 = vmul.f32 %v3534, %v4206
        %v4274 = vmul.f32 %v3536, %v4208
        %v4275 = vmul.f32 %v3538, %v4210
        %v4276 = vmul.f32 %v3540, %v4212
        %4309 = vrot.lane.b32.xlu0 %v4053, 96
        %v4310 = vpop.permute.xlu0 %4309
        %4311 = vrot.lane.b32.xlu0 %v4054, 96
        %v4312 = vpop.permute.xlu0 %4311
        %4313 = vrot.lane.b32.xlu0 %v4055, 96
        %v4314 = vpop.permute.xlu0 %4313
        %4315 = vrot.lane.b32.xlu0 %v4056, 96
        %v4316 = vpop.permute.xlu0 %4315
        %4317 = vrot.lane.b32.xlu0 %v4057, 96
        %v4318 = vpop.permute.xlu0 %4317
        %4319 = vrot.lane.b32.xlu0 %v4058, 96
        %v4320 = vpop.permute.xlu0 %4319
        %4321 = vrot.lane.b32.xlu0 %v4059, 96
        %v4322 = vpop.permute.xlu0 %4321
        %4323 = vrot.lane.b32.xlu0 %v4060, 96
        %v4324 = vpop.permute.xlu0 %4323
        %4325 = vrot.lane.b32.xlu0 %v4061, 96
        %v4326 = vpop.permute.xlu0 %4325
        %4327 = vrot.lane.b32.xlu0 %v4062, 96
        %v4328 = vpop.permute.xlu0 %4327
        %4329 = vrot.lane.b32.xlu0 %v4063, 96
        %v4330 = vpop.permute.xlu0 %4329
        %4331 = vrot.lane.b32.xlu0 %v4064, 96
        %v4332 = vpop.permute.xlu0 %4331
        %4333 = vrot.lane.b32.xlu0 %v4065, 96
        %v4334 = vpop.permute.xlu0 %4333
        %4335 = vrot.lane.b32.xlu0 %v4066, 96
        %v4336 = vpop.permute.xlu0 %4335
        %4337 = vrot.lane.b32.xlu0 %v4067, 96
        %v4338 = vpop.permute.xlu0 %4337
        %4339 = vrot.lane.b32.xlu0 %v4068, 96
        %v4340 = vpop.permute.xlu0 %4339
        %4341 = vrot.lane.b32.xlu0 %v4069, 96
        %v4342 = vpop.permute.xlu0 %4341
        %4343 = vrot.lane.b32.xlu0 %v4070, 96
        %v4344 = vpop.permute.xlu0 %4343
        %4345 = vrot.lane.b32.xlu0 %v4071, 96
        %v4346 = vpop.permute.xlu0 %4345
        %4347 = vrot.lane.b32.xlu0 %v4072, 96
        %v4348 = vpop.permute.xlu0 %4347
        %4349 = vrot.lane.b32.xlu0 %v4073, 96
        %v4350 = vpop.permute.xlu0 %4349
        %4351 = vrot.lane.b32.xlu0 %v4074, 96
        %v4352 = vpop.permute.xlu0 %4351
        %4353 = vrot.lane.b32.xlu0 %v4075, 96
        %v4354 = vpop.permute.xlu0 %4353
        %4355 = vrot.lane.b32.xlu0 %v4076, 96
        %v4356 = vpop.permute.xlu0 %4355
        %4357 = vrot.lane.b32.xlu0 %v4077, 96
        %v4358 = vpop.permute.xlu0 %4357
        %4359 = vrot.lane.b32.xlu0 %v4078, 96
        %v4360 = vpop.permute.xlu0 %4359
        %4361 = vrot.lane.b32.xlu0 %v4079, 96
        %v4362 = vpop.permute.xlu0 %4361
        %4363 = vrot.lane.b32.xlu0 %v4080, 96
        %v4364 = vpop.permute.xlu0 %4363
        %4365 = vrot.lane.b32.xlu0 %v4081, 96
        %v4366 = vpop.permute.xlu0 %4365
        %4367 = vrot.lane.b32.xlu0 %v4082, 96
        %v4368 = vpop.permute.xlu0 %4367
        %4369 = vrot.lane.b32.xlu0 %v4083, 96
        %v4370 = vpop.permute.xlu0 %4369
        %4371 = vrot.lane.b32.xlu0 %v4084, 96
        %v4372 = vpop.permute.xlu0 %4371
        %4405 = vst.msk [vmem:[#allocation3] sm:$0xff] %vm1023, %v4310
        %4406 = vst.msk [vmem:[#allocation3 + $0x8] sm:$0xff] %vm1023, %v4312
        %4407 = vst.msk [vmem:[#allocation3 + $0x10] sm:$0xff] %vm1023, %v4314
        %4408 = vst.msk [vmem:[#allocation3 + $0x18] sm:$0xff] %vm1023, %v4316
        %4409 = vst.msk [vmem:[#allocation3 + $0x20] sm:$0xff] %vm1023, %v4318
        %4410 = vst.msk [vmem:[#allocation3 + $0x28] sm:$0xff] %vm1023, %v4320
        %4411 = vst.msk [vmem:[#allocation3 + $0x30] sm:$0xff] %vm1023, %v4322
        %4412 = vst.msk [vmem:[#allocation3 + $0x38] sm:$0xff] %vm1023, %v4324
        %4413 = vst.msk [vmem:[#allocation3 + $0x40] sm:$0xff] %vm1023, %v4326
        %4414 = vst.msk [vmem:[#allocation3 + $0x48] sm:$0xff] %vm1023, %v4328
        %4415 = vst.msk [vmem:[#allocation3 + $0x50] sm:$0xff] %vm1023, %v4330
        %4416 = vst.msk [vmem:[#allocation3 + $0x58] sm:$0xff] %vm1023, %v4332
        %4417 = vst.msk [vmem:[#allocation3 + $0x60] sm:$0xff] %vm1023, %v4334
        %4418 = vst.msk [vmem:[#allocation3 + $0x68] sm:$0xff] %vm1023, %v4336
        %4419 = vst.msk [vmem:[#allocation3 + $0x70] sm:$0xff] %vm1023, %v4338
        %4420 = vst.msk [vmem:[#allocation3 + $0x78] sm:$0xff] %vm1023, %v4340
        %4421 = vst.msk [vmem:[#allocation3 + $0x80] sm:$0xff] %vm1023, %v4342
        %4422 = vst.msk [vmem:[#allocation3 + $0x88] sm:$0xff] %vm1023, %v4344
        %4423 = vst.msk [vmem:[#allocation3 + $0x90] sm:$0xff] %vm1023, %v4346
        %4424 = vst.msk [vmem:[#allocation3 + $0x98] sm:$0xff] %vm1023, %v4348
        %4425 = vst.msk [vmem:[#allocation3 + $0xa0] sm:$0xff] %vm1023, %v4350
        %4426 = vst.msk [vmem:[#allocation3 + $0xa8] sm:$0xff] %vm1023, %v4352
        %4427 = vst.msk [vmem:[#allocation3 + $0xb0] sm:$0xff] %vm1023, %v4354
        %4428 = vst.msk [vmem:[#allocation3 + $0xb8] sm:$0xff] %vm1023, %v4356
        %4429 = vst.msk [vmem:[#allocation3 + $0xc0] sm:$0xff] %vm1023, %v4358
        %4430 = vst.msk [vmem:[#allocation3 + $0xc8] sm:$0xff] %vm1023, %v4360
        %4431 = vst.msk [vmem:[#allocation3 + $0xd0] sm:$0xff] %vm1023, %v4362
        %4432 = vst.msk [vmem:[#allocation3 + $0xd8] sm:$0xff] %vm1023, %v4364
        %4433 = vst.msk [vmem:[#allocation3 + $0xe0] sm:$0xff] %vm1023, %v4366
        %4434 = vst.msk [vmem:[#allocation3 + $0xe8] sm:$0xff] %vm1023, %v4368
        %4435 = vst.msk [vmem:[#allocation3 + $0xf0] sm:$0xff] %vm1023, %v4370
        %4436 = vst.msk [vmem:[#allocation3 + $0xf8] sm:$0xff] %vm1023, %v4372
        %4469 = vrot.lane.b32.xlu0 %v4245, 64
        %v4470 = vpop.permute.xlu0 %4469
        %4471 = vrot.lane.b32.xlu0 %v4246, 64
        %v4472 = vpop.permute.xlu0 %4471
        %4473 = vrot.lane.b32.xlu0 %v4247, 64
        %v4474 = vpop.permute.xlu0 %4473
        %4475 = vrot.lane.b32.xlu0 %v4248, 64
        %v4476 = vpop.permute.xlu0 %4475
        %4477 = vrot.lane.b32.xlu0 %v4249, 64
        %v4478 = vpop.permute.xlu0 %4477
        %4479 = vrot.lane.b32.xlu0 %v4250, 64
        %v4480 = vpop.permute.xlu0 %4479
        %4481 = vrot.lane.b32.xlu0 %v4251, 64
        %v4482 = vpop.permute.xlu0 %4481
        %4483 = vrot.lane.b32.xlu0 %v4252, 64
        %v4484 = vpop.permute.xlu0 %4483
        %4485 = vrot.lane.b32.xlu0 %v4253, 64
        %v4486 = vpop.permute.xlu0 %4485
        %4487 = vrot.lane.b32.xlu0 %v4254, 64
        %v4488 = vpop.permute.xlu0 %4487
        %4489 = vrot.lane.b32.xlu0 %v4255, 64
        %v4490 = vpop.permute.xlu0 %4489
        %4491 = vrot.lane.b32.xlu0 %v4256, 64
        %v4492 = vpop.permute.xlu0 %4491
        %4493 = vrot.lane.b32.xlu0 %v4257, 64
        %v4494 = vpop.permute.xlu0 %4493
        %4495 = vrot.lane.b32.xlu0 %v4258, 64
        %v4496 = vpop.permute.xlu0 %4495
        %4497 = vrot.lane.b32.xlu0 %v4259, 64
        %v4498 = vpop.permute.xlu0 %4497
        %4499 = vrot.lane.b32.xlu0 %v4260, 64
        %v4500 = vpop.permute.xlu0 %4499
        %4501 = vrot.lane.b32.xlu0 %v4261, 64
        %v4502 = vpop.permute.xlu0 %4501
        %4503 = vrot.lane.b32.xlu0 %v4262, 64
        %v4504 = vpop.permute.xlu0 %4503
        %4505 = vrot.lane.b32.xlu0 %v4263, 64
        %v4506 = vpop.permute.xlu0 %4505
        %4507 = vrot.lane.b32.xlu0 %v4264, 64
        %v4508 = vpop.permute.xlu0 %4507
        %4509 = vrot.lane.b32.xlu0 %v4265, 64
        %v4510 = vpop.permute.xlu0 %4509
        %4511 = vrot.lane.b32.xlu0 %v4266, 64
        %v4512 = vpop.permute.xlu0 %4511
        %4513 = vrot.lane.b32.xlu0 %v4267, 64
        %v4514 = vpop.permute.xlu0 %4513
        %4515 = vrot.lane.b32.xlu0 %v4268, 64
        %v4516 = vpop.permute.xlu0 %4515
        %4517 = vrot.lane.b32.xlu0 %v4269, 64
        %v4518 = vpop.permute.xlu0 %4517
        %4519 = vrot.lane.b32.xlu0 %v4270, 64
        %v4520 = vpop.permute.xlu0 %4519
        %4521 = vrot.lane.b32.xlu0 %v4271, 64
        %v4522 = vpop.permute.xlu0 %4521
        %4523 = vrot.lane.b32.xlu0 %v4272, 64
        %v4524 = vpop.permute.xlu0 %4523
        %4525 = vrot.lane.b32.xlu0 %v4273, 64
        %v4526 = vpop.permute.xlu0 %4525
        %4527 = vrot.lane.b32.xlu0 %v4274, 64
        %v4528 = vpop.permute.xlu0 %4527
        %4529 = vrot.lane.b32.xlu0 %v4275, 64
        %v4530 = vpop.permute.xlu0 %4529
        %4531 = vrot.lane.b32.xlu0 %v4276, 64
        %v4532 = vpop.permute.xlu0 %4531
        %s4565 = scalar_lea.vmem [#allocation2], 24
        %4566 = vst.msk [vmem:[%s4565 + $0x1] sm:$0xff] %vm1023, %v4470
        %4567 = vst.msk [vmem:[%s4565 + $0x9] sm:$0xff] %vm1023, %v4472
        %4568 = vst.msk [vmem:[%s4565 + $0x19] sm:$0xff] %vm1023, %v4474
        %4569 = vst.msk [vmem:[%s4565 + $0x21] sm:$0xff] %vm1023, %v4476
        %4570 = vst.msk [vmem:[%s4565 + $0x31] sm:$0xff] %vm1023, %v4478
        %4571 = vst.msk [vmem:[%s4565 + $0x39] sm:$0xff] %vm1023, %v4480
        %4572 = vst.msk [vmem:[%s4565 + $0x49] sm:$0xff] %vm1023, %v4482
        %4573 = vst.msk [vmem:[%s4565 + $0x51] sm:$0xff] %vm1023, %v4484
        %4574 = vst.msk [vmem:[%s4565 + $0x61] sm:$0xff] %vm1023, %v4486
        %4575 = vst.msk [vmem:[%s4565 + $0x69] sm:$0xff] %vm1023, %v4488
        %4576 = vst.msk [vmem:[%s4565 + $0x79] sm:$0xff] %vm1023, %v4490
        %4577 = vst.msk [vmem:[%s4565 + $0x81] sm:$0xff] %vm1023, %v4492
        %4578 = vst.msk [vmem:[%s4565 + $0x91] sm:$0xff] %vm1023, %v4494
        %4579 = vst.msk [vmem:[%s4565 + $0x99] sm:$0xff] %vm1023, %v4496
        %4580 = vst.msk [vmem:[%s4565 + $0xa9] sm:$0xff] %vm1023, %v4498
        %4581 = vst.msk [vmem:[%s4565 + $0xb1] sm:$0xff] %vm1023, %v4500
        %4582 = vst.msk [vmem:[%s4565 + $0xc1] sm:$0xff] %vm1023, %v4502
        %4583 = vst.msk [vmem:[%s4565 + $0xc9] sm:$0xff] %vm1023, %v4504
        %4584 = vst.msk [vmem:[%s4565 + $0xd9] sm:$0xff] %vm1023, %v4506
        %4585 = vst.msk [vmem:[%s4565 + $0xe1] sm:$0xff] %vm1023, %v4508
        %4586 = vst.msk [vmem:[%s4565 + $0xf1] sm:$0xff] %vm1023, %v4510
        %4587 = vst.msk [vmem:[%s4565 + $0xf9] sm:$0xff] %vm1023, %v4512
        %4588 = vst.msk [vmem:[%s4565 + $0x109] sm:$0xff] %vm1023, %v4514
        %4589 = vst.msk [vmem:[%s4565 + $0x111] sm:$0xff] %vm1023, %v4516
        %4590 = vst.msk [vmem:[%s4565 + $0x121] sm:$0xff] %vm1023, %v4518
        %4591 = vst.msk [vmem:[%s4565 + $0x129] sm:$0xff] %vm1023, %v4520
        %4592 = vst.msk [vmem:[%s4565 + $0x139] sm:$0xff] %vm1023, %v4522
        %4593 = vst.msk [vmem:[%s4565 + $0x141] sm:$0xff] %vm1023, %v4524
        %4594 = vst.msk [vmem:[%s4565 + $0x151] sm:$0xff] %vm1023, %v4526
        %4595 = vst.msk [vmem:[%s4565 + $0x159] sm:$0xff] %vm1023, %v4528
        %4596 = vst.msk [vmem:[%s4565 + $0x169] sm:$0xff] %vm1023, %v4530
        %4597 = vst.msk [vmem:[%s4565 + $0x171] sm:$0xff] %vm1023, %v4532
        %v4598 = vld [vmem:[%s6] sm:$0x1]
        %v4600 = vlaneseq
        %v4601 = vshrl.u32 %v4600, 7
        %v4602 = vsub.s32 0, %v4601
        %v4603 = vrot.slane %v4598, %v4602
        %v4605 = vld [vmem:[#allocation2] sm:$0xff]
        %v4606 = vld [vmem:[#allocation2 + $0x8] sm:$0xff]
        %v4607 = vld [vmem:[#allocation2 + $0x10] sm:$0x3]
        %v4608 = vld [vmem:[#allocation2 + $0x18] sm:$0xff]
        %v4609 = vld [vmem:[#allocation2 + $0x20] sm:$0xff]
        %v4610 = vld [vmem:[#allocation2 + $0x28] sm:$0x3]
        %v4611 = vld [vmem:[#allocation2 + $0x30] sm:$0xff]
        %v4612 = vld [vmem:[#allocation2 + $0x38] sm:$0xff]
        %v4613 = vld [vmem:[#allocation2 + $0x40] sm:$0x3]
        %v4614 = vld [vmem:[#allocation2 + $0x48] sm:$0xff]
        %v4615 = vld [vmem:[#allocation2 + $0x50] sm:$0xff]
        %v4616 = vld [vmem:[#allocation2 + $0x58] sm:$0x3]
        %v4617 = vld [vmem:[#allocation2 + $0x60] sm:$0xff]
        %v4618 = vld [vmem:[#allocation2 + $0x68] sm:$0xff]
        %v4619 = vld [vmem:[#allocation2 + $0x70] sm:$0x3]
        %v4620 = vld [vmem:[#allocation2 + $0x78] sm:$0xff]
        %v4621 = vld [vmem:[#allocation2 + $0x80] sm:$0xff]
        %v4622 = vld [vmem:[#allocation2 + $0x88] sm:$0x3]
        %v4623 = vld [vmem:[#allocation2 + $0x90] sm:$0xff]
        %v4624 = vld [vmem:[#allocation2 + $0x98] sm:$0xff]
        %v4625 = vld [vmem:[#allocation2 + $0xa0] sm:$0x3]
        %v4626 = vld [vmem:[#allocation2 + $0xa8] sm:$0xff]
        %v4627 = vld [vmem:[#allocation2 + $0xb0] sm:$0xff]
        %v4628 = vld [vmem:[#allocation2 + $0xb8] sm:$0x3]
        %v4629 = vld [vmem:[#allocation2 + $0xc0] sm:$0xff]
        %v4630 = vld [vmem:[#allocation2 + $0xc8] sm:$0xff]
        %v4631 = vld [vmem:[#allocation2 + $0xd0] sm:$0x3]
        %v4632 = vld [vmem:[#allocation2 + $0xd8] sm:$0xff]
        %v4633 = vld [vmem:[#allocation2 + $0xe0] sm:$0xff]
        %v4634 = vld [vmem:[#allocation2 + $0xe8] sm:$0x3]
        %v4635 = vld [vmem:[#allocation2 + $0xf0] sm:$0xff]
        %v4636 = vld [vmem:[#allocation2 + $0xf8] sm:$0xff]
        %v4637 = vld [vmem:[#allocation2 + $0x100] sm:$0x3]
        %v4638 = vld [vmem:[#allocation2 + $0x108] sm:$0xff]
        %v4639 = vld [vmem:[#allocation2 + $0x110] sm:$0xff]
        %v4640 = vld [vmem:[#allocation2 + $0x118] sm:$0x3]
        %v4641 = vld [vmem:[#allocation2 + $0x120] sm:$0xff]
        %v4642 = vld [vmem:[#allocation2 + $0x128] sm:$0xff]
        %v4643 = vld [vmem:[#allocation2 + $0x130] sm:$0x3]
        %v4644 = vld [vmem:[#allocation2 + $0x138] sm:$0xff]
        %v4645 = vld [vmem:[#allocation2 + $0x140] sm:$0xff]
        %v4646 = vld [vmem:[#allocation2 + $0x148] sm:$0x3]
        %v4647 = vld [vmem:[#allocation2 + $0x150] sm:$0xff]
        %v4648 = vld [vmem:[#allocation2 + $0x158] sm:$0xff]
        %v4649 = vld [vmem:[#allocation2 + $0x160] sm:$0x3]
        %v4650 = vld [vmem:[#allocation2 + $0x168] sm:$0xff]
        %v4651 = vld [vmem:[#allocation2 + $0x170] sm:$0xff]
        %v4652 = vld [vmem:[#allocation2 + $0x178] sm:$0x3]
        %v4653 = vld [vmem:[#allocation2 + $0x180] sm:$0xff]
        %v4654 = vld [vmem:[#allocation2 + $0x188] sm:$0xff]
        %v4655 = vld [vmem:[#allocation2 + $0x190] sm:$0x3]
        %v4656 = vld [vmem:[#allocation2 + $0x198] sm:$0xff]
        %v4657 = vld [vmem:[#allocation2 + $0x1a0] sm:$0xff]
        %v4658 = vld [vmem:[#allocation2 + $0x1a8] sm:$0x3]
        %v4659 = vpack.c.bf16 %v4606, %v4605
        %v4660 = vpack.c.bf16 %v4607, %v4607
        %v4661 = vpack.c.bf16 %v4609, %v4608
        %v4662 = vpack.c.bf16 %v4610, %v4610
        %v4663 = vpack.c.bf16 %v4612, %v4611
        %v4664 = vpack.c.bf16 %v4613, %v4613
        %v4665 = vpack.c.bf16 %v4615, %v4614
        %v4666 = vpack.c.bf16 %v4616, %v4616
        %v4667 = vpack.c.bf16 %v4618, %v4617
        %v4668 = vpack.c.bf16 %v4619, %v4619
        %v4669 = vpack.c.bf16 %v4621, %v4620
        %v4670 = vpack.c.bf16 %v4622, %v4622
        %v4671 = vpack.c.bf16 %v4624, %v4623
        %v4672 = vpack.c.bf16 %v4625, %v4625
        %v4673 = vpack.c.bf16 %v4627, %v4626
        %v4674 = vpack.c.bf16 %v4628, %v4628
        %v4675 = vpack.c.bf16 %v4630, %v4629
        %v4676 = vpack.c.bf16 %v4631, %v4631
        %v4677 = vpack.c.bf16 %v4633, %v4632
        %v4678 = vpack.c.bf16 %v4634, %v4634
        %v4679 = vpack.c.bf16 %v4636, %v4635
        %v4680 = vpack.c.bf16 %v4637, %v4637
        %v4681 = vpack.c.bf16 %v4639, %v4638
        %v4682 = vpack.c.bf16 %v4640, %v4640
        %v4683 = vpack.c.bf16 %v4642, %v4641
        %v4684 = vpack.c.bf16 %v4643, %v4643
        %v4685 = vpack.c.bf16 %v4645, %v4644
        %v4686 = vpack.c.bf16 %v4646, %v4646
        %v4687 = vpack.c.bf16 %v4648, %v4647
        %v4688 = vpack.c.bf16 %v4649, %v4649
        %v4689 = vpack.c.bf16 %v4651, %v4650
        %v4690 = vpack.c.bf16 %v4652, %v4652
        %v4691 = vpack.c.bf16 %v4654, %v4653
        %v4692 = vpack.c.bf16 %v4655, %v4655
        %v4693 = vpack.c.bf16 %v4657, %v4656
        %v4694 = vpack.c.bf16 %v4658, %v4658
        %v4695 = vld [vmem:[%s2] sm:$0xf]
        %v4696 = vld [vmem:[%s2 + $0x4] sm:$0xf]
        %v4697 = vld [vmem:[%s2 + $0x8] sm:$0xf]
        %v4698 = vld [vmem:[%s2 + $0xc] sm:$0xf]
        %v4703 = vunpack.c.l.b16 %v4695
        %v4704 = vunpack.c.l.b16 %v4696
        %v4705 = vunpack.c.l.b16 %v4697
        %v4706 = vunpack.c.l.b16 %v4698
        %v4707 = vpack.c.b16 %v4704, %v4703
        %v4708 = vpack.c.b16 %v4706, %v4705
        %v4712 = vsel %vm1023, %v4659, 0
        %v4715 = vsel %vm1023, %v4661, 0
        %v4718 = vsel %vm1023, %v4663, 0
        %v4721 = vsel %vm1023, %v4665, 0
        %v4724 = vsel %vm1023, %v4667, 0
        %v4727 = vsel %vm1023, %v4669, 0
        %v4730 = vsel %vm1023, %v4671, 0
        %v4733 = vsel %vm1023, %v4673, 0
        %v4736 = vsel %vm1023, %v4675, 0
        %v4739 = vsel %vm1023, %v4677, 0
        %v4742 = vsel %vm1023, %v4679, 0
        %v4745 = vsel %vm1023, %v4681, 0
        %v4748 = vsel %vm1023, %v4683, 0
        %v4751 = vsel %vm1023, %v4685, 0
        %v4754 = vsel %vm1023, %v4687, 0
        %v4757 = vsel %vm1023, %v4689, 0
        %4759 = vmatprep.subr.bf16.mxu0 0
        %4760 = vmatpush1.bf16.msra.mxu0 %v4707
        %4761 = vmatprep.subr.bf16.mxu0 0
        %4762 = vmatpush1.bf16.msra.mxu0 %v4708
        %4763 = vmatprep.subr.bf16.mxu0 0
        %4764 = vmatpush1.bf16.msra.mxu0 0
        %4765 = vmatprep.subr.bf16.mxu0 0
        %4766 = vmatpush1.bf16.msra.mxu0 0
        %4767 = vmatprep.subr.bf16.mxu0 0
        %4768 = vmatpush1.bf16.msra.mxu0 0
        %4769 = vmatprep.subr.bf16.mxu0 0
        %4770 = vmatpush1.bf16.msra.mxu0 0
        %4771 = vmatprep.subr.bf16.mxu0 0
        %4772 = vmatpush1.bf16.msra.mxu0 0
        %4773 = vmatprep.subr.bf16.mxu0 0
        %4774 = vmatpush1.bf16.msra.mxu0 0
        %4775 = vmatprep.subr.bf16.mxu0 0
        %4776 = vmatpush1.bf16.msra.mxu0 0
        %4777 = vmatprep.subr.bf16.mxu0 0
        %4778 = vmatpush1.bf16.msra.mxu0 0
        %4779 = vmatprep.subr.bf16.mxu0 0
        %4780 = vmatpush1.bf16.msra.mxu0 0
        %4781 = vmatprep.subr.bf16.mxu0 0
        %4782 = vmatpush1.bf16.msra.mxu0 0
        %4783 = vmatprep.subr.bf16.mxu0 0
        %4784 = vmatpush1.bf16.msra.mxu0 0
        %4785 = vmatprep.subr.bf16.mxu0 0
        %4786 = vmatpush1.bf16.msra.mxu0 0
        %4787 = vmatprep.subr.bf16.mxu0 0
        %4788 = vmatpush1.bf16.msra.mxu0 0
        %4789 = vmatprep.subr.bf16.mxu0 0
        %4790 = vmatpush1.bf16.msra.mxu0 0
        %4791 = vmatprep.mubr.bf16.mxu0 0
        %4792 = vmatmul.mubr.bf16.gmra.mrb[0].mxu0 %v4712
        %v4793 = vpop.f32.mrb[0].mxu0
        %v4794 = vadd.f32 0.0, %v4793
        %v4795 = vpop.f32.mrb[0].mxu0
        %v4796 = vpop.f32.mrb[0].mxu0
        %v4797 = vadd.f32 0.0, %v4796
        %v4798 = vpop.f32.mrb[0].mxu0
        %4799 = vmatprep.mubr.bf16.mxu0 0
        %4800 = vmatmul.mubr.bf16.gmra.mrb[0].mxu0 %v4715
        %v4801 = vpop.f32.mrb[0].mxu0
        %v4802 = vadd.f32 0.0, %v4801
        %v4803 = vpop.f32.mrb[0].mxu0
        %v4804 = vpop.f32.mrb[0].mxu0
        %v4805 = vadd.f32 0.0, %v4804
        %v4806 = vpop.f32.mrb[0].mxu0
        %4807 = vmatprep.mubr.bf16.mxu0 0
        %4808 = vmatmul.mubr.bf16.gmra.mrb[0].mxu0 %v4718
        %v4809 = vpop.f32.mrb[0].mxu0
        %v4810 = vadd.f32 0.0, %v4809
        %v4811 = vpop.f32.mrb[0].mxu0
        %v4812 = vpop.f32.mrb[0].mxu0
        %v4813 = vadd.f32 0.0, %v4812
        %v4814 = vpop.f32.mrb[0].mxu0
        %4815 = vmatprep.mubr.bf16.mxu0 0
        %4816 = vmatmul.mubr.bf16.gmra.mrb[0].mxu0 %v4721
        %v4817 = vpop.f32.mrb[0].mxu0
        %v4818 = vadd.f32 0.0, %v4817
        %v4819 = vpop.f32.mrb[0].mxu0
        %v4820 = vpop.f32.mrb[0].mxu0
        %v4821 = vadd.f32 0.0, %v4820
        %v4822 = vpop.f32.mrb[0].mxu0
        %4823 = vmatprep.mubr.bf16.mxu0 0
        %4824 = vmatmul.mubr.bf16.gmra.mrb[0].mxu0 %v4724
        %v4825 = vpop.f32.mrb[0].mxu0
        %v4826 = vadd.f32 0.0, %v4825
        %v4827 = vpop.f32.mrb[0].mxu0
        %v4828 = vpop.f32.mrb[0].mxu0
        %v4829 = vadd.f32 0.0, %v4828
        %v4830 = vpop.f32.mrb[0].mxu0
        %4831 = vmatprep.mubr.bf16.mxu0 0
        %4832 = vmatmul.mubr.bf16.gmra.mrb[0].mxu0 %v4727
        %v4833 = vpop.f32.mrb[0].mxu0
        %v4834 = vadd.f32 0.0, %v4833
        %v4835 = vpop.f32.mrb[0].mxu0
        %v4836 = vpop.f32.mrb[0].mxu0
        %v4837 = vadd.f32 0.0, %v4836
        %v4838 = vpop.f32.mrb[0].mxu0
        %4839 = vmatprep.mubr.bf16.mxu0 0
        %4840 = vmatmul.mubr.bf16.gmra.mrb[0].mxu0 %v4730
        %v4841 = vpop.f32.mrb[0].mxu0
        %v4842 = vadd.f32 0.0, %v4841
        %v4843 = vpop.f32.mrb[0].mxu0
        %v4844 = vpop.f32.mrb[0].mxu0
        %v4845 = vadd.f32 0.0, %v4844
        %v4846 = vpop.f32.mrb[0].mxu0
        %4847 = vmatprep.mubr.bf16.mxu0 0
        %4848 = vmatmul.mubr.bf16.gmra.mrb[0].mxu0 %v4733
        %v4849 = vpop.f32.mrb[0].mxu0
        %v4850 = vadd.f32 0.0, %v4849
        %v4851 = vpop.f32.mrb[0].mxu0
        %v4852 = vpop.f32.mrb[0].mxu0
        %v4853 = vadd.f32 0.0, %v4852
        %v4854 = vpop.f32.mrb[0].mxu0
        %4855 = vmatprep.mubr.bf16.mxu0 0
        %4856 = vmatmul.mubr.bf16.gmra.mrb[0].mxu0 %v4736
        %v4857 = vpop.f32.mrb[0].mxu0
        %v4858 = vadd.f32 0.0, %v4857
        %v4859 = vpop.f32.mrb[0].mxu0
        %v4860 = vpop.f32.mrb[0].mxu0
        %v4861 = vadd.f32 0.0, %v4860
        %v4862 = vpop.f32.mrb[0].mxu0
        %4863 = vmatprep.mubr.bf16.mxu0 0
        %4864 = vmatmul.mubr.bf16.gmra.mrb[0].mxu0 %v4739
        %v4865 = vpop.f32.mrb[0].mxu0
        %v4866 = vadd.f32 0.0, %v4865
        %v4867 = vpop.f32.mrb[0].mxu0
        %v4868 = vpop.f32.mrb[0].mxu0
        %v4869 = vadd.f32 0.0, %v4868
        %v4870 = vpop.f32.mrb[0].mxu0
        %4871 = vmatprep.mubr.bf16.mxu0 0
        %4872 = vmatmul.mubr.bf16.gmra.mrb[0].mxu0 %v4742
        %v4873 = vpop.f32.mrb[0].mxu0
        %v4874 = vadd.f32 0.0, %v4873
        %v4875 = vpop.f32.mrb[0].mxu0
        %v4876 = vpop.f32.mrb[0].mxu0
        %v4877 = vadd.f32 0.0, %v4876
        %v4878 = vpop.f32.mrb[0].mxu0
        %4879 = vmatprep.mubr.bf16.mxu0 0
        %4880 = vmatmul.mubr.bf16.gmra.mrb[0].mxu0 %v4745
        %v4881 = vpop.f32.mrb[0].mxu0
        %v4882 = vadd.f32 0.0, %v4881
        %v4883 = vpop.f32.mrb[0].mxu0
        %v4884 = vpop.f32.mrb[0].mxu0
        %v4885 = vadd.f32 0.0, %v4884
        %v4886 = vpop.f32.mrb[0].mxu0
        %4887 = vmatprep.mubr.bf16.mxu0 0
        %4888 = vmatmul.mubr.bf16.gmra.mrb[0].mxu0 %v4748
        %v4889 = vpop.f32.mrb[0].mxu0
        %v4890 = vadd.f32 0.0, %v4889
        %v4891 = vpop.f32.mrb[0].mxu0
        %v4892 = vpop.f32.mrb[0].mxu0
        %v4893 = vadd.f32 0.0, %v4892
        %v4894 = vpop.f32.mrb[0].mxu0
        %4895 = vmatprep.mubr.bf16.mxu0 0
        %4896 = vmatmul.mubr.bf16.gmra.mrb[0].mxu0 %v4751
        %v4897 = vpop.f32.mrb[0].mxu0
        %v4898 = vadd.f32 0.0, %v4897
        %v4899 = vpop.f32.mrb[0].mxu0
        %v4900 = vpop.f32.mrb[0].mxu0
        %v4901 = vadd.f32 0.0, %v4900
        %v4902 = vpop.f32.mrb[0].mxu0
        %4903 = vmatprep.mubr.bf16.mxu0 0
        %4904 = vmatmul.mubr.bf16.gmra.mrb[0].mxu0 %v4754
        %v4905 = vpop.f32.mrb[0].mxu0
        %v4906 = vadd.f32 0.0, %v4905
        %v4907 = vpop.f32.mrb[0].mxu0
        %v4908 = vpop.f32.mrb[0].mxu0
        %v4909 = vadd.f32 0.0, %v4908
        %v4910 = vpop.f32.mrb[0].mxu0
        %4911 = vmatprep.mubr.bf16.mxu0 0
        %4912 = vmatmul.mubr.bf16.gmra.mrb[0].mxu0 %v4757
        %v4913 = vpop.f32.mrb[0].mxu0
        %v4914 = vadd.f32 0.0, %v4913
        %v4915 = vpop.f32.mrb[0].mxu0
        %v4916 = vpop.f32.mrb[0].mxu0
        %v4917 = vadd.f32 0.0, %v4916
        %v4918 = vpop.f32.mrb[0].mxu0
        %4919 = vdwg.mxu0
        %v4920 = vadd.f32 %v4603, %v4794
        %v4921 = vadd.f32 %v4603, %v4797
        %v4922 = vadd.f32 %v4603, %v4802
        %v4923 = vadd.f32 %v4603, %v4805
        %v4924 = vadd.f32 %v4603, %v4810
        %v4925 = vadd.f32 %v4603, %v4813
        %v4926 = vadd.f32 %v4603, %v4818
        %v4927 = vadd.f32 %v4603, %v4821
        %v4928 = vadd.f32 %v4603, %v4826
        %v4929 = vadd.f32 %v4603, %v4829
        %v4930 = vadd.f32 %v4603, %v4834
        %v4931 = vadd.f32 %v4603, %v4837
        %v4932 = vadd.f32 %v4603, %v4842
        %v4933 = vadd.f32 %v4603, %v4845
        %v4934 = vadd.f32 %v4603, %v4850
        %v4935 = vadd.f32 %v4603, %v4853
        %v4936 = vadd.f32 %v4603, %v4858
        %v4937 = vadd.f32 %v4603, %v4861
        %v4938 = vadd.f32 %v4603, %v4866
        %v4939 = vadd.f32 %v4603, %v4869
        %v4940 = vadd.f32 %v4603, %v4874
        %v4941 = vadd.f32 %v4603, %v4877
        %v4942 = vadd.f32 %v4603, %v4882
        %v4943 = vadd.f32 %v4603, %v4885
        %v4944 = vadd.f32 %v4603, %v4890
        %v4945 = vadd.f32 %v4603, %v4893
        %v4946 = vadd.f32 %v4603, %v4898
        %v4947 = vadd.f32 %v4603, %v4901
        %v4948 = vadd.f32 %v4603, %v4906
        %v4949 = vadd.f32 %v4603, %v4909
        %v4950 = vadd.f32 %v4603, %v4914
        %v4951 = vadd.f32 %v4603, %v4917
        %v4952 = vshrl.u32 %v4659, 16
        %v4954 = vshll.u32 %v4659, 16
        %v4956 = vrot.slane %v4954, 1
        %v4957 = vor.u32 %v4952, %v4956
        %v4959 = vshll.u32 %v4660, 16
        %v4961 = vrot.slane %v4959, 1
        %v4962 = vsel %vm1265, %v4957, %v4961
        %v4963 = vshrl.u32 %v4661, 16
        %v4965 = vshll.u32 %v4661, 16
        %v4967 = vrot.slane %v4965, 1
        %v4968 = vor.u32 %v4963, %v4967
        %v4970 = vshll.u32 %v4662, 16
        %v4972 = vrot.slane %v4970, 1
        %v4973 = vsel %vm1265, %v4968, %v4972
        %v4974 = vshrl.u32 %v4663, 16
        %v4976 = vshll.u32 %v4663, 16
        %v4978 = vrot.slane %v4976, 1
        %v4979 = vor.u32 %v4974, %v4978
        %v4981 = vshll.u32 %v4664, 16
        %v4983 = vrot.slane %v4981, 1
        %v4984 = vsel %vm1265, %v4979, %v4983
        %v4985 = vshrl.u32 %v4665, 16
        %v4987 = vshll.u32 %v4665, 16
        %v4989 = vrot.slane %v4987, 1
        %v4990 = vor.u32 %v4985, %v4989
        %v4992 = vshll.u32 %v4666, 16
        %v4994 = vrot.slane %v4992, 1
        %v4995 = vsel %vm1265, %v4990, %v4994
        %v4996 = vshrl.u32 %v4667, 16
        %v4998 = vshll.u32 %v4667, 16
        %v5000 = vrot.slane %v4998, 1
        %v5001 = vor.u32 %v4996, %v5000
        %v5003 = vshll.u32 %v4668, 16
        %v5005 = vrot.slane %v5003, 1
        %v5006 = vsel %vm1265, %v5001, %v5005
        %v5007 = vshrl.u32 %v4669, 16
        %v5009 = vshll.u32 %v4669, 16
        %v5011 = vrot.slane %v5009, 1
        %v5012 = vor.u32 %v5007, %v5011
        %v5014 = vshll.u32 %v4670, 16
        %v5016 = vrot.slane %v5014, 1
        %v5017 = vsel %vm1265, %v5012, %v5016
        %v5018 = vshrl.u32 %v4671, 16
        %v5020 = vshll.u32 %v4671, 16
        %v5022 = vrot.slane %v5020, 1
        %v5023 = vor.u32 %v5018, %v5022
        %v5025 = vshll.u32 %v4672, 16
        %v5027 = vrot.slane %v5025, 1
        %v5028 = vsel %vm1265, %v5023, %v5027
        %v5029 = vshrl.u32 %v4673, 16
        %v5031 = vshll.u32 %v4673, 16
        %v5033 = vrot.slane %v5031, 1
        %v5034 = vor.u32 %v5029, %v5033
        %v5036 = vshll.u32 %v4674, 16
        %v5038 = vrot.slane %v5036, 1
        %v5039 = vsel %vm1265, %v5034, %v5038
        %v5040 = vshrl.u32 %v4675, 16
        %v5042 = vshll.u32 %v4675, 16
        %v5044 = vrot.slane %v5042, 1
        %v5045 = vor.u32 %v5040, %v5044
        %v5047 = vshll.u32 %v4676, 16
        %v5049 = vrot.slane %v5047, 1
        %v5050 = vsel %vm1265, %v5045, %v5049
        %v5051 = vshrl.u32 %v4677, 16
        %v5053 = vshll.u32 %v4677, 16
        %v5055 = vrot.slane %v5053, 1
        %v5056 = vor.u32 %v5051, %v5055
        %v5058 = vshll.u32 %v4678, 16
        %v5060 = vrot.slane %v5058, 1
        %v5061 = vsel %vm1265, %v5056, %v5060
        %v5062 = vshrl.u32 %v4679, 16
        %v5064 = vshll.u32 %v4679, 16
        %v5066 = vrot.slane %v5064, 1
        %v5067 = vor.u32 %v5062, %v5066
        %v5069 = vshll.u32 %v4680, 16
        %v5071 = vrot.slane %v5069, 1
        %v5072 = vsel %vm1265, %v5067, %v5071
        %v5073 = vshrl.u32 %v4681, 16
        %v5075 = vshll.u32 %v4681, 16
        %v5077 = vrot.slane %v5075, 1
        %v5078 = vor.u32 %v5073, %v5077
        %v5080 = vshll.u32 %v4682, 16
        %v5082 = vrot.slane %v5080, 1
        %v5083 = vsel %vm1265, %v5078, %v5082
        %v5084 = vshrl.u32 %v4683, 16
        %v5086 = vshll.u32 %v4683, 16
        %v5088 = vrot.slane %v5086, 1
        %v5089 = vor.u32 %v5084, %v5088
        %v5091 = vshll.u32 %v4684, 16
        %v5093 = vrot.slane %v5091, 1
        %v5094 = vsel %vm1265, %v5089, %v5093
        %v5095 = vshrl.u32 %v4685, 16
        %v5097 = vshll.u32 %v4685, 16
        %v5099 = vrot.slane %v5097, 1
        %v5100 = vor.u32 %v5095, %v5099
        %v5102 = vshll.u32 %v4686, 16
        %v5104 = vrot.slane %v5102, 1
        %v5105 = vsel %vm1265, %v5100, %v5104
        %v5106 = vshrl.u32 %v4687, 16
        %v5108 = vshll.u32 %v4687, 16
        %v5110 = vrot.slane %v5108, 1
        %v5111 = vor.u32 %v5106, %v5110
        %v5113 = vshll.u32 %v4688, 16
        %v5115 = vrot.slane %v5113, 1
        %v5116 = vsel %vm1265, %v5111, %v5115
        %v5117 = vshrl.u32 %v4689, 16
        %v5119 = vshll.u32 %v4689, 16
        %v5121 = vrot.slane %v5119, 1
        %v5122 = vor.u32 %v5117, %v5121
        %v5124 = vshll.u32 %v4690, 16
        %v5126 = vrot.slane %v5124, 1
        %v5127 = vsel %vm1265, %v5122, %v5126
        %s5128 = scalar_lea.vmem %s2, 16
        %v5129 = vld [vmem:[%s5128] sm:$0xf]
        %v5130 = vld [vmem:[%s5128 + $0x4] sm:$0xf]
        %v5131 = vld [vmem:[%s5128 + $0x8] sm:$0xf]
        %v5132 = vld [vmem:[%s5128 + $0xc] sm:$0xf]
        %v5137 = vunpack.c.l.b16 %v5129
        %v5138 = vunpack.c.l.b16 %v5130
        %v5139 = vunpack.c.l.b16 %v5131
        %v5140 = vunpack.c.l.b16 %v5132
        %v5141 = vpack.c.b16 %v5138, %v5137
        %v5142 = vpack.c.b16 %v5140, %v5139
        %v5146 = vsel %vm1023, %v4962, 0
        %v5149 = vsel %vm1023, %v4973, 0
        %v5152 = vsel %vm1023, %v4984, 0
        %v5155 = vsel %vm1023, %v4995, 0
        %v5158 = vsel %vm1023, %v5006, 0
        %v5161 = vsel %vm1023, %v5017, 0
        %v5164 = vsel %vm1023, %v5028, 0
        %v5167 = vsel %vm1023, %v5039, 0
        %v5170 = vsel %vm1023, %v5050, 0
        %v5173 = vsel %vm1023, %v5061, 0
        %v5176 = vsel %vm1023, %v5072, 0
        %v5179 = vsel %vm1023, %v5083, 0
        %v5182 = vsel %vm1023, %v5094, 0
        %v5185 = vsel %vm1023, %v5105, 0
        %v5188 = vsel %vm1023, %v5116, 0
        %v5191 = vsel %vm1023, %v5127, 0
        %5193 = vmatprep.subr.bf16.mxu0 0
        %5194 = vmatpush1.bf16.msra.mxu0 %v5141
        %5195 = vmatprep.subr.bf16.mxu0 0
        %5196 = vmatpush1.bf16.msra.mxu0 %v5142
        %5197 = vmatprep.subr.bf16.mxu0 0
        %5198 = vmatpush1.bf16.msra.mxu0 0
        %5199 = vmatprep.subr.bf16.mxu0 0
        %5200 = vmatpush1.bf16.msra.mxu0 0
        %5201 = vmatprep.subr.bf16.mxu0 0
        %5202 = vmatpush1.bf16.msra.mxu0 0
        %5203 = vmatprep.subr.bf16.mxu0 0
        %5204 = vmatpush1.bf16.msra.mxu0 0
        %5205 = vmatprep.subr.bf16.mxu0 0
        %5206 = vmatpush1.bf16.msra.mxu0 0
        %5207 = vmatprep.subr.bf16.mxu0 0
        %5208 = vmatpush1.bf16.msra.mxu0 0
        %5209 = vmatprep.subr.bf16.mxu0 0
        %5210 = vmatpush1.bf16.msra.mxu0 0
        %5211 = vmatprep.subr.bf16.mxu0 0
        %5212 = vmatpush1.bf16.msra.mxu0 0
        %5213 = vmatprep.subr.bf16.mxu0 0
        %5214 = vmatpush1.bf16.msra.mxu0 0
        %5215 = vmatprep.subr.bf16.mxu0 0
        %5216 = vmatpush1.bf16.msra.mxu0 0
        %5217 = vmatprep.subr.bf16.mxu0 0
        %5218 = vmatpush1.bf16.msra.mxu0 0
        %5219 = vmatprep.subr.bf16.mxu0 0
        %5220 = vmatpush1.bf16.msra.mxu0 0
        %5221 = vmatprep.subr.bf16.mxu0 0
        %5222 = vmatpush1.bf16.msra.mxu0 0
        %5223 = vmatprep.subr.bf16.mxu0 0
        %5224 = vmatpush1.bf16.msra.mxu0 0
        %5225 = vmatprep.mubr.bf16.mxu0 0
        %5226 = vmatmul.mubr.bf16.gmra.mrb[0].mxu0 %v5146
        %v5227 = vpop.f32.mrb[0].mxu0
        %v5228 = vadd.f32 0.0, %v5227
        %v5229 = vpop.f32.mrb[0].mxu0
        %v5230 = vpop.f32.mrb[0].mxu0
        %v5231 = vadd.f32 0.0, %v5230
        %v5232 = vpop.f32.mrb[0].mxu0
        %5233 = vmatprep.mubr.bf16.mxu0 0
        %5234 = vmatmul.mubr.bf16.gmra.mrb[0].mxu0 %v5149
        %v5235 = vpop.f32.mrb[0].mxu0
        %v5236 = vadd.f32 0.0, %v5235
        %v5237 = vpop.f32.mrb[0].mxu0
        %v5238 = vpop.f32.mrb[0].mxu0
        %v5239 = vadd.f32 0.0, %v5238
        %v5240 = vpop.f32.mrb[0].mxu0
        %5241 = vmatprep.mubr.bf16.mxu0 0
        %5242 = vmatmul.mubr.bf16.gmra.mrb[0].mxu0 %v5152
        %v5243 = vpop.f32.mrb[0].mxu0
        %v5244 = vadd.f32 0.0, %v5243
        %v5245 = vpop.f32.mrb[0].mxu0
        %v5246 = vpop.f32.mrb[0].mxu0
        %v5247 = vadd.f32 0.0, %v5246
        %v5248 = vpop.f32.mrb[0].mxu0
        %5249 = vmatprep.mubr.bf16.mxu0 0
        %5250 = vmatmul.mubr.bf16.gmra.mrb[0].mxu0 %v5155
        %v5251 = vpop.f32.mrb[0].mxu0
        %v5252 = vadd.f32 0.0, %v5251
        %v5253 = vpop.f32.mrb[0].mxu0
        %v5254 = vpop.f32.mrb[0].mxu0
        %v5255 = vadd.f32 0.0, %v5254
        %v5256 = vpop.f32.mrb[0].mxu0
        %5257 = vmatprep.mubr.bf16.mxu0 0
        %5258 = vmatmul.mubr.bf16.gmra.mrb[0].mxu0 %v5158
        %v5259 = vpop.f32.mrb[0].mxu0
        %v5260 = vadd.f32 0.0, %v5259
        %v5261 = vpop.f32.mrb[0].mxu0
        %v5262 = vpop.f32.mrb[0].mxu0
        %v5263 = vadd.f32 0.0, %v5262
        %v5264 = vpop.f32.mrb[0].mxu0
        %5265 = vmatprep.mubr.bf16.mxu0 0
        %5266 = vmatmul.mubr.bf16.gmra.mrb[0].mxu0 %v5161
        %v5267 = vpop.f32.mrb[0].mxu0
        %v5268 = vadd.f32 0.0, %v5267
        %v5269 = vpop.f32.mrb[0].mxu0
        %v5270 = vpop.f32.mrb[0].mxu0
        %v5271 = vadd.f32 0.0, %v5270
        %v5272 = vpop.f32.mrb[0].mxu0
        %5273 = vmatprep.mubr.bf16.mxu0 0
        %5274 = vmatmul.mubr.bf16.gmra.mrb[0].mxu0 %v5164
        %v5275 = vpop.f32.mrb[0].mxu0
        %v5276 = vadd.f32 0.0, %v5275
        %v5277 = vpop.f32.mrb[0].mxu0
        %v5278 = vpop.f32.mrb[0].mxu0
        %v5279 = vadd.f32 0.0, %v5278
        %v5280 = vpop.f32.mrb[0].mxu0
        %5281 = vmatprep.mubr.bf16.mxu0 0
        %5282 = vmatmul.mubr.bf16.gmra.mrb[0].mxu0 %v5167
        %v5283 = vpop.f32.mrb[0].mxu0
        %v5284 = vadd.f32 0.0, %v5283
        %v5285 = vpop.f32.mrb[0].mxu0
        %v5286 = vpop.f32.mrb[0].mxu0
        %v5287 = vadd.f32 0.0, %v5286
        %v5288 = vpop.f32.mrb[0].mxu0
        %5289 = vmatprep.mubr.bf16.mxu0 0
        %5290 = vmatmul.mubr.bf16.gmra.mrb[0].mxu0 %v5170
        %v5291 = vpop.f32.mrb[0].mxu0
        %v5292 = vadd.f32 0.0, %v5291
        %v5293 = vpop.f32.mrb[0].mxu0
        %v5294 = vpop.f32.mrb[0].mxu0
        %v5295 = vadd.f32 0.0, %v5294
        %v5296 = vpop.f32.mrb[0].mxu0
        %5297 = vmatprep.mubr.bf16.mxu0 0
        %5298 = vmatmul.mubr.bf16.gmra.mrb[0].mxu0 %v5173
        %v5299 = vpop.f32.mrb[0].mxu0
        %v5300 = vadd.f32 0.0, %v5299
        %v5301 = vpop.f32.mrb[0].mxu0
        %v5302 = vpop.f32.mrb[0].mxu0
        %v5303 = vadd.f32 0.0, %v5302
        %v5304 = vpop.f32.mrb[0].mxu0
        %5305 = vmatprep.mubr.bf16.mxu0 0
        %5306 = vmatmul.mubr.bf16.gmra.mrb[0].mxu0 %v5176
        %v5307 = vpop.f32.mrb[0].mxu0
        %v5308 = vadd.f32 0.0, %v5307
        %v5309 = vpop.f32.mrb[0].mxu0
        %v5310 = vpop.f32.mrb[0].mxu0
        %v5311 = vadd.f32 0.0, %v5310
        %v5312 = vpop.f32.mrb[0].mxu0
        %5313 = vmatprep.mubr.bf16.mxu0 0
        %5314 = vmatmul.mubr.bf16.gmra.mrb[0].mxu0 %v5179
        %v5315 = vpop.f32.mrb[0].mxu0
        %v5316 = vadd.f32 0.0, %v5315
        %v5317 = vpop.f32.mrb[0].mxu0
        %v5318 = vpop.f32.mrb[0].mxu0
        %v5319 = vadd.f32 0.0, %v5318
        %v5320 = vpop.f32.mrb[0].mxu0
        %5321 = vmatprep.mubr.bf16.mxu0 0
        %5322 = vmatmul.mubr.bf16.gmra.mrb[0].mxu0 %v5182
        %v5323 = vpop.f32.mrb[0].mxu0
        %v5324 = vadd.f32 0.0, %v5323
        %v5325 = vpop.f32.mrb[0].mxu0
        %v5326 = vpop.f32.mrb[0].mxu0
        %v5327 = vadd.f32 0.0, %v5326
        %v5328 = vpop.f32.mrb[0].mxu0
        %5329 = vmatprep.mubr.bf16.mxu0 0
        %5330 = vmatmul.mubr.bf16.gmra.mrb[0].mxu0 %v5185
        %v5331 = vpop.f32.mrb[0].mxu0
        %v5332 = vadd.f32 0.0, %v5331
        %v5333 = vpop.f32.mrb[0].mxu0
        %v5334 = vpop.f32.mrb[0].mxu0
        %v5335 = vadd.f32 0.0, %v5334
        %v5336 = vpop.f32.mrb[0].mxu0
        %5337 = vmatprep.mubr.bf16.mxu0 0
        %5338 = vmatmul.mubr.bf16.gmra.mrb[0].mxu0 %v5188
        %v5339 = vpop.f32.mrb[0].mxu0
        %v5340 = vadd.f32 0.0, %v5339
        %v5341 = vpop.f32.mrb[0].mxu0
        %v5342 = vpop.f32.mrb[0].mxu0
        %v5343 = vadd.f32 0.0, %v5342
        %v5344 = vpop.f32.mrb[0].mxu0
        %5345 = vmatprep.mubr.bf16.mxu0 0
        %5346 = vmatmul.mubr.bf16.gmra.mrb[0].mxu0 %v5191
        %v5347 = vpop.f32.mrb[0].mxu0
        %v5348 = vadd.f32 0.0, %v5347
        %v5349 = vpop.f32.mrb[0].mxu0
        %v5350 = vpop.f32.mrb[0].mxu0
        %v5351 = vadd.f32 0.0, %v5350
        %v5352 = vpop.f32.mrb[0].mxu0
        %5353 = vdwg.mxu0
        %v5354 = vadd.f32 %v4920, %v5228
        %v5355 = vadd.f32 %v4921, %v5231
        %v5356 = vadd.f32 %v4922, %v5236
        %v5357 = vadd.f32 %v4923, %v5239
        %v5358 = vadd.f32 %v4924, %v5244
        %v5359 = vadd.f32 %v4925, %v5247
        %v5360 = vadd.f32 %v4926, %v5252
        %v5361 = vadd.f32 %v4927, %v5255
        %v5362 = vadd.f32 %v4928, %v5260
        %v5363 = vadd.f32 %v4929, %v5263
        %v5364 = vadd.f32 %v4930, %v5268
        %v5365 = vadd.f32 %v4931, %v5271
        %v5366 = vadd.f32 %v4932, %v5276
        %v5367 = vadd.f32 %v4933, %v5279
        %v5368 = vadd.f32 %v4934, %v5284
        %v5369 = vadd.f32 %v4935, %v5287
        %v5370 = vadd.f32 %v4936, %v5292
        %v5371 = vadd.f32 %v4937, %v5295
        %v5372 = vadd.f32 %v4938, %v5300
        %v5373 = vadd.f32 %v4939, %v5303
        %v5374 = vadd.f32 %v4940, %v5308
        %v5375 = vadd.f32 %v4941, %v5311
        %v5376 = vadd.f32 %v4942, %v5316
        %v5377 = vadd.f32 %v4943, %v5319
        %v5378 = vadd.f32 %v4944, %v5324
        %v5379 = vadd.f32 %v4945, %v5327
        %v5380 = vadd.f32 %v4946, %v5332
        %v5381 = vadd.f32 %v4947, %v5335
        %v5382 = vadd.f32 %v4948, %v5340
        %v5383 = vadd.f32 %v4949, %v5343
        %v5384 = vadd.f32 %v4950, %v5348
        %v5385 = vadd.f32 %v4951, %v5351
        %v5418 = vrot.slane %v4659, 1
        %v5419 = vrot.slane %v4660, 1
        %v5420 = vsel %vm1732, %v5418, %v5419
        %v5421 = vrot.slane %v4661, 1
        %v5422 = vrot.slane %v4662, 1
        %v5423 = vsel %vm1732, %v5421, %v5422
        %v5424 = vrot.slane %v4663, 1
        %v5425 = vrot.slane %v4664, 1
        %v5426 = vsel %vm1732, %v5424, %v5425
        %v5427 = vrot.slane %v4665, 1
        %v5428 = vrot.slane %v4666, 1
        %v5429 = vsel %vm1732, %v5427, %v5428
        %v5430 = vrot.slane %v4667, 1
        %v5431 = vrot.slane %v4668, 1
        %v5432 = vsel %vm1732, %v5430, %v5431
        %v5433 = vrot.slane %v4669, 1
        %v5434 = vrot.slane %v4670, 1
        %v5435 = vsel %vm1732, %v5433, %v5434
        %v5436 = vrot.slane %v4671, 1
        %v5437 = vrot.slane %v4672, 1
        %v5438 = vsel %vm1732, %v5436, %v5437
        %v5439 = vrot.slane %v4673, 1
        %v5440 = vrot.slane %v4674, 1
        %v5441 = vsel %vm1732, %v5439, %v5440
        %v5442 = vrot.slane %v4675, 1
        %v5443 = vrot.slane %v4676, 1
        %v5444 = vsel %vm1732, %v5442, %v5443
        %v5445 = vrot.slane %v4677, 1
        %v5446 = vrot.slane %v4678, 1
        %v5447 = vsel %vm1732, %v5445, %v5446
        %v5448 = vrot.slane %v4679, 1
        %v5449 = vrot.slane %v4680, 1
        %v5450 = vsel %vm1732, %v5448, %v5449
        %v5451 = vrot.slane %v4681, 1
        %v5452 = vrot.slane %v4682, 1
        %v5453 = vsel %vm1732, %v5451, %v5452
        %v5454 = vrot.slane %v4683, 1
        %v5455 = vrot.slane %v4684, 1
        %v5456 = vsel %vm1732, %v5454, %v5455
        %v5457 = vrot.slane %v4685, 1
        %v5458 = vrot.slane %v4686, 1
        %v5459 = vsel %vm1732, %v5457, %v5458
        %v5460 = vrot.slane %v4687, 1
        %v5461 = vrot.slane %v4688, 1
        %v5462 = vsel %vm1732, %v5460, %v5461
        %v5463 = vrot.slane %v4689, 1
        %v5464 = vrot.slane %v4690, 1
        %v5465 = vsel %vm1732, %v5463, %v5464
        %s5466 = scalar_lea.vmem %s2, 32
        %v5467 = vld [vmem:[%s5466] sm:$0xf]
        %v5468 = vld [vmem:[%s5466 + $0x4] sm:$0xf]
        %v5469 = vld [vmem:[%s5466 + $0x8] sm:$0xf]
        %v5470 = vld [vmem:[%s5466 + $0xc] sm:$0xf]
        %v5475 = vunpack.c.l.b16 %v5467
        %v5476 = vunpack.c.l.b16 %v5468
        %v5477 = vunpack.c.l.b16 %v5469
        %v5478 = vunpack.c.l.b16 %v5470
        %v5479 = vpack.c.b16 %v5476, %v5475
        %v5480 = vpack.c.b16 %v5478, %v5477
        %v5484 = vsel %vm1023, %v5420, 0
        %v5487 = vsel %vm1023, %v5423, 0
        %v5490 = vsel %vm1023, %v5426, 0
        %v5493 = vsel %vm1023, %v5429, 0
        %v5496 = vsel %vm1023, %v5432, 0
        %v5499 = vsel %vm1023, %v5435, 0
        %v5502 = vsel %vm1023, %v5438, 0
        %v5505 = vsel %vm1023, %v5441, 0
        %v5508 = vsel %vm1023, %v5444, 0
        %v5511 = vsel %vm1023, %v5447, 0
        %v5514 = vsel %vm1023, %v5450, 0
        %v5517 = vsel %vm1023, %v5453, 0
        %v5520 = vsel %vm1023, %v5456, 0
        %v5523 = vsel %vm1023, %v5459, 0
        %v5526 = vsel %vm1023, %v5462, 0
        %v5529 = vsel %vm1023, %v5465, 0
        %5531 = vmatprep.subr.bf16.mxu0 0
        %5532 = vmatpush1.bf16.msra.mxu0 %v5479
        %5533 = vmatprep.subr.bf16.mxu0 0
        %5534 = vmatpush1.bf16.msra.mxu0 %v5480
        %5535 = vmatprep.subr.bf16.mxu0 0
        %5536 = vmatpush1.bf16.msra.mxu0 0
        %5537 = vmatprep.subr.bf16.mxu0 0
        %5538 = vmatpush1.bf16.msra.mxu0 0
        %5539 = vmatprep.subr.bf16.mxu0 0
        %5540 = vmatpush1.bf16.msra.mxu0 0
        %5541 = vmatprep.subr.bf16.mxu0 0
        %5542 = vmatpush1.bf16.msra.mxu0 0
        %5543 = vmatprep.subr.bf16.mxu0 0
        %5544 = vmatpush1.bf16.msra.mxu0 0
        %5545 = vmatprep.subr.bf16.mxu0 0
        %5546 = vmatpush1.bf16.msra.mxu0 0
        %5547 = vmatprep.subr.bf16.mxu0 0
        %5548 = vmatpush1.bf16.msra.mxu0 0
        %5549 = vmatprep.subr.bf16.mxu0 0
        %5550 = vmatpush1.bf16.msra.mxu0 0
        %5551 = vmatprep.subr.bf16.mxu0 0
        %5552 = vmatpush1.bf16.msra.mxu0 0
        %5553 = vmatprep.subr.bf16.mxu0 0
        %5554 = vmatpush1.bf16.msra.mxu0 0
        %5555 = vmatprep.subr.bf16.mxu0 0
        %5556 = vmatpush1.bf16.msra.mxu0 0
        %5557 = vmatprep.subr.bf16.mxu0 0
        %5558 = vmatpush1.bf16.msra.mxu0 0
        %5559 = vmatprep.subr.bf16.mxu0 0
        %5560 = vmatpush1.bf16.msra.mxu0 0
        %5561 = vmatprep.subr.bf16.mxu0 0
        %5562 = vmatpush1.bf16.msra.mxu0 0
        %5563 = vmatprep.mubr.bf16.mxu0 0
        %5564 = vmatmul.mubr.bf16.gmra.mrb[0].mxu0 %v5484
        %v5565 = vpop.f32.mrb[0].mxu0
        %v5566 = vadd.f32 0.0, %v5565
        %v5567 = vpop.f32.mrb[0].mxu0
        %v5568 = vpop.f32.mrb[0].mxu0
        %v5569 = vadd.f32 0.0, %v5568
        %v5570 = vpop.f32.mrb[0].mxu0
        %5571 = vmatprep.mubr.bf16.mxu0 0
        %5572 = vmatmul.mubr.bf16.gmra.mrb[0].mxu0 %v5487
        %v5573 = vpop.f32.mrb[0].mxu0
        %v5574 = vadd.f32 0.0, %v5573
        %v5575 = vpop.f32.mrb[0].mxu0
        %v5576 = vpop.f32.mrb[0].mxu0
        %v5577 = vadd.f32 0.0, %v5576
        %v5578 = vpop.f32.mrb[0].mxu0
        %5579 = vmatprep.mubr.bf16.mxu0 0
        %5580 = vmatmul.mubr.bf16.gmra.mrb[0].mxu0 %v5490
        %v5581 = vpop.f32.mrb[0].mxu0
        %v5582 = vadd.f32 0.0, %v5581
        %v5583 = vpop.f32.mrb[0].mxu0
        %v5584 = vpop.f32.mrb[0].mxu0
        %v5585 = vadd.f32 0.0, %v5584
        %v5586 = vpop.f32.mrb[0].mxu0
        %5587 = vmatprep.mubr.bf16.mxu0 0
        %5588 = vmatmul.mubr.bf16.gmra.mrb[0].mxu0 %v5493
        %v5589 = vpop.f32.mrb[0].mxu0
        %v5590 = vadd.f32 0.0, %v5589
        %v5591 = vpop.f32.mrb[0].mxu0
        %v5592 = vpop.f32.mrb[0].mxu0
        %v5593 = vadd.f32 0.0, %v5592
        %v5594 = vpop.f32.mrb[0].mxu0
        %5595 = vmatprep.mubr.bf16.mxu0 0
        %5596 = vmatmul.mubr.bf16.gmra.mrb[0].mxu0 %v5496
        %v5597 = vpop.f32.mrb[0].mxu0
        %v5598 = vadd.f32 0.0, %v5597
        %v5599 = vpop.f32.mrb[0].mxu0
        %v5600 = vpop.f32.mrb[0].mxu0
        %v5601 = vadd.f32 0.0, %v5600
        %v5602 = vpop.f32.mrb[0].mxu0
        %5603 = vmatprep.mubr.bf16.mxu0 0
        %5604 = vmatmul.mubr.bf16.gmra.mrb[0].mxu0 %v5499
        %v5605 = vpop.f32.mrb[0].mxu0
        %v5606 = vadd.f32 0.0, %v5605
        %v5607 = vpop.f32.mrb[0].mxu0
        %v5608 = vpop.f32.mrb[0].mxu0
        %v5609 = vadd.f32 0.0, %v5608
        %v5610 = vpop.f32.mrb[0].mxu0
        %5611 = vmatprep.mubr.bf16.mxu0 0
        %5612 = vmatmul.mubr.bf16.gmra.mrb[0].mxu0 %v5502
        %v5613 = vpop.f32.mrb[0].mxu0
        %v5614 = vadd.f32 0.0, %v5613
        %v5615 = vpop.f32.mrb[0].mxu0
        %v5616 = vpop.f32.mrb[0].mxu0
        %v5617 = vadd.f32 0.0, %v5616
        %v5618 = vpop.f32.mrb[0].mxu0
        %5619 = vmatprep.mubr.bf16.mxu0 0
        %5620 = vmatmul.mubr.bf16.gmra.mrb[0].mxu0 %v5505
        %v5621 = vpop.f32.mrb[0].mxu0
        %v5622 = vadd.f32 0.0, %v5621
        %v5623 = vpop.f32.mrb[0].mxu0
        %v5624 = vpop.f32.mrb[0].mxu0
        %v5625 = vadd.f32 0.0, %v5624
        %v5626 = vpop.f32.mrb[0].mxu0
        %5627 = vmatprep.mubr.bf16.mxu0 0
        %5628 = vmatmul.mubr.bf16.gmra.mrb[0].mxu0 %v5508
        %v5629 = vpop.f32.mrb[0].mxu0
        %v5630 = vadd.f32 0.0, %v5629
        %v5631 = vpop.f32.mrb[0].mxu0
        %v5632 = vpop.f32.mrb[0].mxu0
        %v5633 = vadd.f32 0.0, %v5632
        %v5634 = vpop.f32.mrb[0].mxu0
        %5635 = vmatprep.mubr.bf16.mxu0 0
        %5636 = vmatmul.mubr.bf16.gmra.mrb[0].mxu0 %v5511
        %v5637 = vpop.f32.mrb[0].mxu0
        %v5638 = vadd.f32 0.0, %v5637
        %v5639 = vpop.f32.mrb[0].mxu0
        %v5640 = vpop.f32.mrb[0].mxu0
        %v5641 = vadd.f32 0.0, %v5640
        %v5642 = vpop.f32.mrb[0].mxu0
        %5643 = vmatprep.mubr.bf16.mxu0 0
        %5644 = vmatmul.mubr.bf16.gmra.mrb[0].mxu0 %v5514
        %v5645 = vpop.f32.mrb[0].mxu0
        %v5646 = vadd.f32 0.0, %v5645
        %v5647 = vpop.f32.mrb[0].mxu0
        %v5648 = vpop.f32.mrb[0].mxu0
        %v5649 = vadd.f32 0.0, %v5648
        %v5650 = vpop.f32.mrb[0].mxu0
        %5651 = vmatprep.mubr.bf16.mxu0 0
        %5652 = vmatmul.mubr.bf16.gmra.mrb[0].mxu0 %v5517
        %v5653 = vpop.f32.mrb[0].mxu0
        %v5654 = vadd.f32 0.0, %v5653
        %v5655 = vpop.f32.mrb[0].mxu0
        %v5656 = vpop.f32.mrb[0].mxu0
        %v5657 = vadd.f32 0.0, %v5656
        %v5658 = vpop.f32.mrb[0].mxu0
        %5659 = vmatprep.mubr.bf16.mxu0 0
        %5660 = vmatmul.mubr.bf16.gmra.mrb[0].mxu0 %v5520
        %v5661 = vpop.f32.mrb[0].mxu0
        %v5662 = vadd.f32 0.0, %v5661
        %v5663 = vpop.f32.mrb[0].mxu0
        %v5664 = vpop.f32.mrb[0].mxu0
        %v5665 = vadd.f32 0.0, %v5664
        %v5666 = vpop.f32.mrb[0].mxu0
        %5667 = vmatprep.mubr.bf16.mxu0 0
        %5668 = vmatmul.mubr.bf16.gmra.mrb[0].mxu0 %v5523
        %v5669 = vpop.f32.mrb[0].mxu0
        %v5670 = vadd.f32 0.0, %v5669
        %v5671 = vpop.f32.mrb[0].mxu0
        %v5672 = vpop.f32.mrb[0].mxu0
        %v5673 = vadd.f32 0.0, %v5672
        %v5674 = vpop.f32.mrb[0].mxu0
        %5675 = vmatprep.mubr.bf16.mxu0 0
        %5676 = vmatmul.mubr.bf16.gmra.mrb[0].mxu0 %v5526
        %v5677 = vpop.f32.mrb[0].mxu0
        %v5678 = vadd.f32 0.0, %v5677
        %v5679 = vpop.f32.mrb[0].mxu0
        %v5680 = vpop.f32.mrb[0].mxu0
        %v5681 = vadd.f32 0.0, %v5680
        %v5682 = vpop.f32.mrb[0].mxu0
        %5683 = vmatprep.mubr.bf16.mxu0 0
        %5684 = vmatmul.mubr.bf16.gmra.mrb[0].mxu0 %v5529
        %v5685 = vpop.f32.mrb[0].mxu0
        %v5686 = vadd.f32 0.0, %v5685
        %v5687 = vpop.f32.mrb[0].mxu0
        %v5688 = vpop.f32.mrb[0].mxu0
        %v5689 = vadd.f32 0.0, %v5688
        %v5690 = vpop.f32.mrb[0].mxu0
        %5691 = vdwg.mxu0
        %v5692 = vadd.f32 %v5354, %v5566
        %v5693 = vadd.f32 %v5355, %v5569
        %v5694 = vadd.f32 %v5356, %v5574
        %v5695 = vadd.f32 %v5357, %v5577
        %v5696 = vadd.f32 %v5358, %v5582
        %v5697 = vadd.f32 %v5359, %v5585
        %v5698 = vadd.f32 %v5360, %v5590
        %v5699 = vadd.f32 %v5361, %v5593
        %v5700 = vadd.f32 %v5362, %v5598
        %v5701 = vadd.f32 %v5363, %v5601
        %v5702 = vadd.f32 %v5364, %v5606
        %v5703 = vadd.f32 %v5365, %v5609
        %v5704 = vadd.f32 %v5366, %v5614
        %v5705 = vadd.f32 %v5367, %v5617
        %v5706 = vadd.f32 %v5368, %v5622
        %v5707 = vadd.f32 %v5369, %v5625
        %v5708 = vadd.f32 %v5370, %v5630
        %v5709 = vadd.f32 %v5371, %v5633
        %v5710 = vadd.f32 %v5372, %v5638
        %v5711 = vadd.f32 %v5373, %v5641
        %v5712 = vadd.f32 %v5374, %v5646
        %v5713 = vadd.f32 %v5375, %v5649
        %v5714 = vadd.f32 %v5376, %v5654
        %v5715 = vadd.f32 %v5377, %v5657
        %v5716 = vadd.f32 %v5378, %v5662
        %v5717 = vadd.f32 %v5379, %v5665
        %v5718 = vadd.f32 %v5380, %v5670
        %v5719 = vadd.f32 %v5381, %v5673
        %v5720 = vadd.f32 %v5382, %v5678
        %v5721 = vadd.f32 %v5383, %v5681
        %v5722 = vadd.f32 %v5384, %v5686
        %v5723 = vadd.f32 %v5385, %v5689
        %s5724 = scalar_lea.vmem %s2, 48
        %v5725 = vld [vmem:[%s5724] sm:$0xf]
        %v5726 = vld [vmem:[%s5724 + $0x4] sm:$0xf]
        %v5727 = vld [vmem:[%s5724 + $0x8] sm:$0xf]
        %v5728 = vld [vmem:[%s5724 + $0xc] sm:$0xf]
        %v5733 = vunpack.c.l.b16 %v5725
        %v5734 = vunpack.c.l.b16 %v5726
        %v5735 = vunpack.c.l.b16 %v5727
        %v5736 = vunpack.c.l.b16 %v5728
        %v5737 = vpack.c.b16 %v5734, %v5733
        %v5738 = vpack.c.b16 %v5736, %v5735
        %v5742 = vsel %vm1023, %v4691, 0
        %5744 = vmatprep.subr.bf16.mxu0 0
        %5745 = vmatpush1.bf16.msra.mxu0 %v5737
        %5746 = vmatprep.subr.bf16.mxu0 0
        %5747 = vmatpush1.bf16.msra.mxu0 %v5738
        %5748 = vmatprep.subr.bf16.mxu0 0
        %5749 = vmatpush1.bf16.msra.mxu0 0
        %5750 = vmatprep.subr.bf16.mxu0 0
        %5751 = vmatpush1.bf16.msra.mxu0 0
        %5752 = vmatprep.subr.bf16.mxu0 0
        %5753 = vmatpush1.bf16.msra.mxu0 0
        %5754 = vmatprep.subr.bf16.mxu0 0
        %5755 = vmatpush1.bf16.msra.mxu0 0
        %5756 = vmatprep.subr.bf16.mxu0 0
        %5757 = vmatpush1.bf16.msra.mxu0 0
        %5758 = vmatprep.subr.bf16.mxu0 0
        %5759 = vmatpush1.bf16.msra.mxu0 0
        %5760 = vmatprep.subr.bf16.mxu0 0
        %5761 = vmatpush1.bf16.msra.mxu0 0
        %5762 = vmatprep.subr.bf16.mxu0 0
        %5763 = vmatpush1.bf16.msra.mxu0 0
        %5764 = vmatprep.subr.bf16.mxu0 0
        %5765 = vmatpush1.bf16.msra.mxu0 0
        %5766 = vmatprep.subr.bf16.mxu0 0
        %5767 = vmatpush1.bf16.msra.mxu0 0
        %5768 = vmatprep.subr.bf16.mxu0 0
        %5769 = vmatpush1.bf16.msra.mxu0 0
        %5770 = vmatprep.subr.bf16.mxu0 0
        %5771 = vmatpush1.bf16.msra.mxu0 0
        %5772 = vmatprep.subr.bf16.mxu0 0
        %5773 = vmatpush1.bf16.msra.mxu0 0
        %5774 = vmatprep.subr.bf16.mxu0 0
        %5775 = vmatpush1.bf16.msra.mxu0 0
        %5776 = vmatprep.mubr.bf16.mxu0 0
        %5777 = vmatmul.mubr.bf16.gmra.mrb[0].mxu0 %v4715
        %v5778 = vpop.f32.mrb[0].mxu0
        %v5779 = vadd.f32 0.0, %v5778
        %v5780 = vpop.f32.mrb[0].mxu0
        %v5781 = vpop.f32.mrb[0].mxu0
        %v5782 = vadd.f32 0.0, %v5781
        %v5783 = vpop.f32.mrb[0].mxu0
        %5784 = vmatprep.mubr.bf16.mxu0 0
        %5785 = vmatmul.mubr.bf16.gmra.mrb[0].mxu0 %v4718
        %v5786 = vpop.f32.mrb[0].mxu0
        %v5787 = vadd.f32 0.0, %v5786
        %v5788 = vpop.f32.mrb[0].mxu0
        %v5789 = vpop.f32.mrb[0].mxu0
        %v5790 = vadd.f32 0.0, %v5789
        %v5791 = vpop.f32.mrb[0].mxu0
        %5792 = vmatprep.mubr.bf16.mxu0 0
        %5793 = vmatmul.mubr.bf16.gmra.mrb[0].mxu0 %v4721
        %v5794 = vpop.f32.mrb[0].mxu0
        %v5795 = vadd.f32 0.0, %v5794
        %v5796 = vpop.f32.mrb[0].mxu0
        %v5797 = vpop.f32.mrb[0].mxu0
        %v5798 = vadd.f32 0.0, %v5797
        %v5799 = vpop.f32.mrb[0].mxu0
        %5800 = vmatprep.mubr.bf16.mxu0 0
        %5801 = vmatmul.mubr.bf16.gmra.mrb[0].mxu0 %v4724
        %v5802 = vpop.f32.mrb[0].mxu0
        %v5803 = vadd.f32 0.0, %v5802
        %v5804 = vpop.f32.mrb[0].mxu0
        %v5805 = vpop.f32.mrb[0].mxu0
        %v5806 = vadd.f32 0.0, %v5805
        %v5807 = vpop.f32.mrb[0].mxu0
        %5808 = vmatprep.mubr.bf16.mxu0 0
        %5809 = vmatmul.mubr.bf16.gmra.mrb[0].mxu0 %v4727
        %v5810 = vpop.f32.mrb[0].mxu0
        %v5811 = vadd.f32 0.0, %v5810
        %v5812 = vpop.f32.mrb[0].mxu0
        %v5813 = vpop.f32.mrb[0].mxu0
        %v5814 = vadd.f32 0.0, %v5813
        %v5815 = vpop.f32.mrb[0].mxu0
        %5816 = vmatprep.mubr.bf16.mxu0 0
        %5817 = vmatmul.mubr.bf16.gmra.mrb[0].mxu0 %v4730
        %v5818 = vpop.f32.mrb[0].mxu0
        %v5819 = vadd.f32 0.0, %v5818
        %v5820 = vpop.f32.mrb[0].mxu0
        %v5821 = vpop.f32.mrb[0].mxu0
        %v5822 = vadd.f32 0.0, %v5821
        %v5823 = vpop.f32.mrb[0].mxu0
        %5824 = vmatprep.mubr.bf16.mxu0 0
        %5825 = vmatmul.mubr.bf16.gmra.mrb[0].mxu0 %v4733
        %v5826 = vpop.f32.mrb[0].mxu0
        %v5827 = vadd.f32 0.0, %v5826
        %v5828 = vpop.f32.mrb[0].mxu0
        %v5829 = vpop.f32.mrb[0].mxu0
        %v5830 = vadd.f32 0.0, %v5829
        %v5831 = vpop.f32.mrb[0].mxu0
        %5832 = vmatprep.mubr.bf16.mxu0 0
        %5833 = vmatmul.mubr.bf16.gmra.mrb[0].mxu0 %v4736
        %v5834 = vpop.f32.mrb[0].mxu0
        %v5835 = vadd.f32 0.0, %v5834
        %v5836 = vpop.f32.mrb[0].mxu0
        %v5837 = vpop.f32.mrb[0].mxu0
        %v5838 = vadd.f32 0.0, %v5837
        %v5839 = vpop.f32.mrb[0].mxu0
        %5840 = vmatprep.mubr.bf16.mxu0 0
        %5841 = vmatmul.mubr.bf16.gmra.mrb[0].mxu0 %v4739
        %v5842 = vpop.f32.mrb[0].mxu0
        %v5843 = vadd.f32 0.0, %v5842
        %v5844 = vpop.f32.mrb[0].mxu0
        %v5845 = vpop.f32.mrb[0].mxu0
        %v5846 = vadd.f32 0.0, %v5845
        %v5847 = vpop.f32.mrb[0].mxu0
        %5848 = vmatprep.mubr.bf16.mxu0 0
        %5849 = vmatmul.mubr.bf16.gmra.mrb[0].mxu0 %v4742
        %v5850 = vpop.f32.mrb[0].mxu0
        %v5851 = vadd.f32 0.0, %v5850
        %v5852 = vpop.f32.mrb[0].mxu0
        %v5853 = vpop.f32.mrb[0].mxu0
        %v5854 = vadd.f32 0.0, %v5853
        %v5855 = vpop.f32.mrb[0].mxu0
        %5856 = vmatprep.mubr.bf16.mxu0 0
        %5857 = vmatmul.mubr.bf16.gmra.mrb[0].mxu0 %v4745
        %v5858 = vpop.f32.mrb[0].mxu0
        %v5859 = vadd.f32 0.0, %v5858
        %v5860 = vpop.f32.mrb[0].mxu0
        %v5861 = vpop.f32.mrb[0].mxu0
        %v5862 = vadd.f32 0.0, %v5861
        %v5863 = vpop.f32.mrb[0].mxu0
        %5864 = vmatprep.mubr.bf16.mxu0 0
        %5865 = vmatmul.mubr.bf16.gmra.mrb[0].mxu0 %v4748
        %v5866 = vpop.f32.mrb[0].mxu0
        %v5867 = vadd.f32 0.0, %v5866
        %v5868 = vpop.f32.mrb[0].mxu0
        %v5869 = vpop.f32.mrb[0].mxu0
        %v5870 = vadd.f32 0.0, %v5869
        %v5871 = vpop.f32.mrb[0].mxu0
        %5872 = vmatprep.mubr.bf16.mxu0 0
        %5873 = vmatmul.mubr.bf16.gmra.mrb[0].mxu0 %v4751
        %v5874 = vpop.f32.mrb[0].mxu0
        %v5875 = vadd.f32 0.0, %v5874
        %v5876 = vpop.f32.mrb[0].mxu0
        %v5877 = vpop.f32.mrb[0].mxu0
        %v5878 = vadd.f32 0.0, %v5877
        %v5879 = vpop.f32.mrb[0].mxu0
        %5880 = vmatprep.mubr.bf16.mxu0 0
        %5881 = vmatmul.mubr.bf16.gmra.mrb[0].mxu0 %v4754
        %v5882 = vpop.f32.mrb[0].mxu0
        %v5883 = vadd.f32 0.0, %v5882
        %v5884 = vpop.f32.mrb[0].mxu0
        %v5885 = vpop.f32.mrb[0].mxu0
        %v5886 = vadd.f32 0.0, %v5885
        %v5887 = vpop.f32.mrb[0].mxu0
        %5888 = vmatprep.mubr.bf16.mxu0 0
        %5889 = vmatmul.mubr.bf16.gmra.mrb[0].mxu0 %v4757
        %v5890 = vpop.f32.mrb[0].mxu0
        %v5891 = vadd.f32 0.0, %v5890
        %v5892 = vpop.f32.mrb[0].mxu0
        %v5893 = vpop.f32.mrb[0].mxu0
        %v5894 = vadd.f32 0.0, %v5893
        %v5895 = vpop.f32.mrb[0].mxu0
        %5896 = vmatprep.mubr.bf16.mxu0 0
        %5897 = vmatmul.mubr.bf16.gmra.mrb[0].mxu0 %v5742
        %v5898 = vpop.f32.mrb[0].mxu0
        %v5899 = vadd.f32 0.0, %v5898
        %v5900 = vpop.f32.mrb[0].mxu0
        %v5901 = vpop.f32.mrb[0].mxu0
        %v5902 = vadd.f32 0.0, %v5901
        %v5903 = vpop.f32.mrb[0].mxu0
        %5904 = vdwg.mxu0
        %v5905 = vadd.f32 %v5692, %v5779
        %v5906 = vadd.f32 %v5693, %v5782
        %v5907 = vadd.f32 %v5694, %v5787
        %v5908 = vadd.f32 %v5695, %v5790
        %v5909 = vadd.f32 %v5696, %v5795
        %v5910 = vadd.f32 %v5697, %v5798
        %v5911 = vadd.f32 %v5698, %v5803
        %v5912 = vadd.f32 %v5699, %v5806
        %v5913 = vadd.f32 %v5700, %v5811
        %v5914 = vadd.f32 %v5701, %v5814
        %v5915 = vadd.f32 %v5702, %v5819
        %v5916 = vadd.f32 %v5703, %v5822
        %v5917 = vadd.f32 %v5704, %v5827
        %v5918 = vadd.f32 %v5705, %v5830
        %v5919 = vadd.f32 %v5706, %v5835
        %v5920 = vadd.f32 %v5707, %v5838
        %v5921 = vadd.f32 %v5708, %v5843
        %v5922 = vadd.f32 %v5709, %v5846
        %v5923 = vadd.f32 %v5710, %v5851
        %v5924 = vadd.f32 %v5711, %v5854
        %v5925 = vadd.f32 %v5712, %v5859
        %v5926 = vadd.f32 %v5713, %v5862
        %v5927 = vadd.f32 %v5714, %v5867
        %v5928 = vadd.f32 %v5715, %v5870
        %v5929 = vadd.f32 %v5716, %v5875
        %v5930 = vadd.f32 %v5717, %v5878
        %v5931 = vadd.f32 %v5718, %v5883
        %v5932 = vadd.f32 %v5719, %v5886
        %v5933 = vadd.f32 %v5720, %v5891
        %v5934 = vadd.f32 %v5721, %v5894
        %v5935 = vadd.f32 %v5722, %v5899
        %v5936 = vadd.f32 %v5723, %v5902
        %v5937 = vshrl.u32 %v4691, 16
        %v5939 = vshll.u32 %v4691, 16
        %v5941 = vrot.slane %v5939, 1
        %v5942 = vor.u32 %v5937, %v5941
        %v5944 = vshll.u32 %v4692, 16
        %v5946 = vrot.slane %v5944, 1
        %v5947 = vsel %vm1265, %v5942, %v5946
        %s5948 = scalar_lea.vmem %s2, 64
        %v5949 = vld [vmem:[%s5948] sm:$0xf]
        %v5950 = vld [vmem:[%s5948 + $0x4] sm:$0xf]
        %v5951 = vld [vmem:[%s5948 + $0x8] sm:$0xf]
        %v5952 = vld [vmem:[%s5948 + $0xc] sm:$0xf]
        %v5957 = vunpack.c.l.b16 %v5949
        %v5958 = vunpack.c.l.b16 %v5950
        %v5959 = vunpack.c.l.b16 %v5951
        %v5960 = vunpack.c.l.b16 %v5952
        %v5961 = vpack.c.b16 %v5958, %v5957
        %v5962 = vpack.c.b16 %v5960, %v5959
        %v5966 = vsel %vm1023, %v5947, 0
        %5968 = vmatprep.subr.bf16.mxu0 0
        %5969 = vmatpush1.bf16.msra.mxu0 %v5961
        %5970 = vmatprep.subr.bf16.mxu0 0
        %5971 = vmatpush1.bf16.msra.mxu0 %v5962
        %5972 = vmatprep.subr.bf16.mxu0 0
        %5973 = vmatpush1.bf16.msra.mxu0 0
        %5974 = vmatprep.subr.bf16.mxu0 0
        %5975 = vmatpush1.bf16.msra.mxu0 0
        %5976 = vmatprep.subr.bf16.mxu0 0
        %5977 = vmatpush1.bf16.msra.mxu0 0
        %5978 = vmatprep.subr.bf16.mxu0 0
        %5979 = vmatpush1.bf16.msra.mxu0 0
        %5980 = vmatprep.subr.bf16.mxu0 0
        %5981 = vmatpush1.bf16.msra.mxu0 0
        %5982 = vmatprep.subr.bf16.mxu0 0
        %5983 = vmatpush1.bf16.msra.mxu0 0
        %5984 = vmatprep.subr.bf16.mxu0 0
        %5985 = vmatpush1.bf16.msra.mxu0 0
        %5986 = vmatprep.subr.bf16.mxu0 0
        %5987 = vmatpush1.bf16.msra.mxu0 0
        %5988 = vmatprep.subr.bf16.mxu0 0
        %5989 = vmatpush1.bf16.msra.mxu0 0
        %5990 = vmatprep.subr.bf16.mxu0 0
        %5991 = vmatpush1.bf16.msra.mxu0 0
        %5992 = vmatprep.subr.bf16.mxu0 0
        %5993 = vmatpush1.bf16.msra.mxu0 0
        %5994 = vmatprep.subr.bf16.mxu0 0
        %5995 = vmatpush1.bf16.msra.mxu0 0
        %5996 = vmatprep.subr.bf16.mxu0 0
        %5997 = vmatpush1.bf16.msra.mxu0 0
        %5998 = vmatprep.subr.bf16.mxu0 0
        %5999 = vmatpush1.bf16.msra.mxu0 0
        %6000 = vmatprep.mubr.bf16.mxu0 0
        %6001 = vmatmul.mubr.bf16.gmra.mrb[0].mxu0 %v5149
        %v6002 = vpop.f32.mrb[0].mxu0
        %v6003 = vadd.f32 0.0, %v6002
        %v6004 = vpop.f32.mrb[0].mxu0
        %v6005 = vpop.f32.mrb[0].mxu0
        %v6006 = vadd.f32 0.0, %v6005
        %v6007 = vpop.f32.mrb[0].mxu0
        %6008 = vmatprep.mubr.bf16.mxu0 0
        %6009 = vmatmul.mubr.bf16.gmra.mrb[0].mxu0 %v5152
        %v6010 = vpop.f32.mrb[0].mxu0
        %v6011 = vadd.f32 0.0, %v6010
        %v6012 = vpop.f32.mrb[0].mxu0
        %v6013 = vpop.f32.mrb[0].mxu0
        %v6014 = vadd.f32 0.0, %v6013
        %v6015 = vpop.f32.mrb[0].mxu0
        %6016 = vmatprep.mubr.bf16.mxu0 0
        %6017 = vmatmul.mubr.bf16.gmra.mrb[0].mxu0 %v5155
        %v6018 = vpop.f32.mrb[0].mxu0
        %v6019 = vadd.f32 0.0, %v6018
        %v6020 = vpop.f32.mrb[0].mxu0
        %v6021 = vpop.f32.mrb[0].mxu0
        %v6022 = vadd.f32 0.0, %v6021
        %v6023 = vpop.f32.mrb[0].mxu0
        %6024 = vmatprep.mubr.bf16.mxu0 0
        %6025 = vmatmul.mubr.bf16.gmra.mrb[0].mxu0 %v5158
        %v6026 = vpop.f32.mrb[0].mxu0
        %v6027 = vadd.f32 0.0, %v6026
        %v6028 = vpop.f32.mrb[0].mxu0
        %v6029 = vpop.f32.mrb[0].mxu0
        %v6030 = vadd.f32 0.0, %v6029
        %v6031 = vpop.f32.mrb[0].mxu0
        %6032 = vmatprep.mubr.bf16.mxu0 0
        %6033 = vmatmul.mubr.bf16.gmra.mrb[0].mxu0 %v5161
        %v6034 = vpop.f32.mrb[0].mxu0
        %v6035 = vadd.f32 0.0, %v6034
        %v6036 = vpop.f32.mrb[0].mxu0
        %v6037 = vpop.f32.mrb[0].mxu0
        %v6038 = vadd.f32 0.0, %v6037
        %v6039 = vpop.f32.mrb[0].mxu0
        %6040 = vmatprep.mubr.bf16.mxu0 0
        %6041 = vmatmul.mubr.bf16.gmra.mrb[0].mxu0 %v5164
        %v6042 = vpop.f32.mrb[0].mxu0
        %v6043 = vadd.f32 0.0, %v6042
        %v6044 = vpop.f32.mrb[0].mxu0
        %v6045 = vpop.f32.mrb[0].mxu0
        %v6046 = vadd.f32 0.0, %v6045
        %v6047 = vpop.f32.mrb[0].mxu0
        %6048 = vmatprep.mubr.bf16.mxu0 0
        %6049 = vmatmul.mubr.bf16.gmra.mrb[0].mxu0 %v5167
        %v6050 = vpop.f32.mrb[0].mxu0
        %v6051 = vadd.f32 0.0, %v6050
        %v6052 = vpop.f32.mrb[0].mxu0
        %v6053 = vpop.f32.mrb[0].mxu0
        %v6054 = vadd.f32 0.0, %v6053
        %v6055 = vpop.f32.mrb[0].mxu0
        %6056 = vmatprep.mubr.bf16.mxu0 0
        %6057 = vmatmul.mubr.bf16.gmra.mrb[0].mxu0 %v5170
        %v6058 = vpop.f32.mrb[0].mxu0
        %v6059 = vadd.f32 0.0, %v6058
        %v6060 = vpop.f32.mrb[0].mxu0
        %v6061 = vpop.f32.mrb[0].mxu0
        %v6062 = vadd.f32 0.0, %v6061
        %v6063 = vpop.f32.mrb[0].mxu0
        %6064 = vmatprep.mubr.bf16.mxu0 0
        %6065 = vmatmul.mubr.bf16.gmra.mrb[0].mxu0 %v5173
        %v6066 = vpop.f32.mrb[0].mxu0
        %v6067 = vadd.f32 0.0, %v6066
        %v6068 = vpop.f32.mrb[0].mxu0
        %v6069 = vpop.f32.mrb[0].mxu0
        %v6070 = vadd.f32 0.0, %v6069
        %v6071 = vpop.f32.mrb[0].mxu0
        %6072 = vmatprep.mubr.bf16.mxu0 0
        %6073 = vmatmul.mubr.bf16.gmra.mrb[0].mxu0 %v5176
        %v6074 = vpop.f32.mrb[0].mxu0
        %v6075 = vadd.f32 0.0, %v6074
        %v6076 = vpop.f32.mrb[0].mxu0
        %v6077 = vpop.f32.mrb[0].mxu0
        %v6078 = vadd.f32 0.0, %v6077
        %v6079 = vpop.f32.mrb[0].mxu0
        %6080 = vmatprep.mubr.bf16.mxu0 0
        %6081 = vmatmul.mubr.bf16.gmra.mrb[0].mxu0 %v5179
        %v6082 = vpop.f32.mrb[0].mxu0
        %v6083 = vadd.f32 0.0, %v6082
        %v6084 = vpop.f32.mrb[0].mxu0
        %v6085 = vpop.f32.mrb[0].mxu0
        %v6086 = vadd.f32 0.0, %v6085
        %v6087 = vpop.f32.mrb[0].mxu0
        %6088 = vmatprep.mubr.bf16.mxu0 0
        %6089 = vmatmul.mubr.bf16.gmra.mrb[0].mxu0 %v5182
        %v6090 = vpop.f32.mrb[0].mxu0
        %v6091 = vadd.f32 0.0, %v6090
        %v6092 = vpop.f32.mrb[0].mxu0
        %v6093 = vpop.f32.mrb[0].mxu0
        %v6094 = vadd.f32 0.0, %v6093
        %v6095 = vpop.f32.mrb[0].mxu0
        %6096 = vmatprep.mubr.bf16.mxu0 0
        %6097 = vmatmul.mubr.bf16.gmra.mrb[0].mxu0 %v5185
        %v6098 = vpop.f32.mrb[0].mxu0
        %v6099 = vadd.f32 0.0, %v6098
        %v6100 = vpop.f32.mrb[0].mxu0
        %v6101 = vpop.f32.mrb[0].mxu0
        %v6102 = vadd.f32 0.0, %v6101
        %v6103 = vpop.f32.mrb[0].mxu0
        %6104 = vmatprep.mubr.bf16.mxu0 0
        %6105 = vmatmul.mubr.bf16.gmra.mrb[0].mxu0 %v5188
        %v6106 = vpop.f32.mrb[0].mxu0
        %v6107 = vadd.f32 0.0, %v6106
        %v6108 = vpop.f32.mrb[0].mxu0
        %v6109 = vpop.f32.mrb[0].mxu0
        %v6110 = vadd.f32 0.0, %v6109
        %v6111 = vpop.f32.mrb[0].mxu0
        %6112 = vmatprep.mubr.bf16.mxu0 0
        %6113 = vmatmul.mubr.bf16.gmra.mrb[0].mxu0 %v5191
        %v6114 = vpop.f32.mrb[0].mxu0
        %v6115 = vadd.f32 0.0, %v6114
        %v6116 = vpop.f32.mrb[0].mxu0
        %v6117 = vpop.f32.mrb[0].mxu0
        %v6118 = vadd.f32 0.0, %v6117
        %v6119 = vpop.f32.mrb[0].mxu0
        %6120 = vmatprep.mubr.bf16.mxu0 0
        %6121 = vmatmul.mubr.bf16.gmra.mrb[0].mxu0 %v5966
        %v6122 = vpop.f32.mrb[0].mxu0
        %v6123 = vadd.f32 0.0, %v6122
        %v6124 = vpop.f32.mrb[0].mxu0
        %v6125 = vpop.f32.mrb[0].mxu0
        %v6126 = vadd.f32 0.0, %v6125
        %v6127 = vpop.f32.mrb[0].mxu0
        %6128 = vdwg.mxu0
        %v6129 = vadd.f32 %v5905, %v6003
        %v6130 = vadd.f32 %v5906, %v6006
        %v6131 = vadd.f32 %v5907, %v6011
        %v6132 = vadd.f32 %v5908, %v6014
        %v6133 = vadd.f32 %v5909, %v6019
        %v6134 = vadd.f32 %v5910, %v6022
        %v6135 = vadd.f32 %v5911, %v6027
        %v6136 = vadd.f32 %v5912, %v6030
        %v6137 = vadd.f32 %v5913, %v6035
        %v6138 = vadd.f32 %v5914, %v6038
        %v6139 = vadd.f32 %v5915, %v6043
        %v6140 = vadd.f32 %v5916, %v6046
        %v6141 = vadd.f32 %v5917, %v6051
        %v6142 = vadd.f32 %v5918, %v6054
        %v6143 = vadd.f32 %v5919, %v6059
        %v6144 = vadd.f32 %v5920, %v6062
        %v6145 = vadd.f32 %v5921, %v6067
        %v6146 = vadd.f32 %v5922, %v6070
        %v6147 = vadd.f32 %v5923, %v6075
        %v6148 = vadd.f32 %v5924, %v6078
        %v6149 = vadd.f32 %v5925, %v6083
        %v6150 = vadd.f32 %v5926, %v6086
        %v6151 = vadd.f32 %v5927, %v6091
        %v6152 = vadd.f32 %v5928, %v6094
        %v6153 = vadd.f32 %v5929, %v6099
        %v6154 = vadd.f32 %v5930, %v6102
        %v6155 = vadd.f32 %v5931, %v6107
        %v6156 = vadd.f32 %v5932, %v6110
        %v6157 = vadd.f32 %v5933, %v6115
        %v6158 = vadd.f32 %v5934, %v6118
        %v6159 = vadd.f32 %v5935, %v6123
        %v6160 = vadd.f32 %v5936, %v6126
        %v6163 = vrot.slane %v4691, 1
        %v6164 = vrot.slane %v4692, 1
        %v6165 = vsel %vm1732, %v6163, %v6164
        %s6166 = scalar_lea.vmem %s2, 80
        %v6167 = vld [vmem:[%s6166] sm:$0xf]
        %v6168 = vld [vmem:[%s6166 + $0x4] sm:$0xf]
        %v6169 = vld [vmem:[%s6166 + $0x8] sm:$0xf]
        %v6170 = vld [vmem:[%s6166 + $0xc] sm:$0xf]
        %v6175 = vunpack.c.l.b16 %v6167
        %v6176 = vunpack.c.l.b16 %v6168
        %v6177 = vunpack.c.l.b16 %v6169
        %v6178 = vunpack.c.l.b16 %v6170
        %v6179 = vpack.c.b16 %v6176, %v6175
        %v6180 = vpack.c.b16 %v6178, %v6177
        %v6184 = vsel %vm1023, %v6165, 0
        %6186 = vmatprep.subr.bf16.mxu0 0
        %6187 = vmatpush1.bf16.msra.mxu0 %v6179
        %6188 = vmatprep.subr.bf16.mxu0 0
        %6189 = vmatpush1.bf16.msra.mxu0 %v6180
        %6190 = vmatprep.subr.bf16.mxu0 0
        %6191 = vmatpush1.bf16.msra.mxu0 0
        %6192 = vmatprep.subr.bf16.mxu0 0
        %6193 = vmatpush1.bf16.msra.mxu0 0
        %6194 = vmatprep.subr.bf16.mxu0 0
        %6195 = vmatpush1.bf16.msra.mxu0 0
        %6196 = vmatprep.subr.bf16.mxu0 0
        %6197 = vmatpush1.bf16.msra.mxu0 0
        %6198 = vmatprep.subr.bf16.mxu0 0
        %6199 = vmatpush1.bf16.msra.mxu0 0
        %6200 = vmatprep.subr.bf16.mxu0 0
        %6201 = vmatpush1.bf16.msra.mxu0 0
        %6202 = vmatprep.subr.bf16.mxu0 0
        %6203 = vmatpush1.bf16.msra.mxu0 0
        %6204 = vmatprep.subr.bf16.mxu0 0
        %6205 = vmatpush1.bf16.msra.mxu0 0
        %6206 = vmatprep.subr.bf16.mxu0 0
        %6207 = vmatpush1.bf16.msra.mxu0 0
        %6208 = vmatprep.subr.bf16.mxu0 0
        %6209 = vmatpush1.bf16.msra.mxu0 0
        %6210 = vmatprep.subr.bf16.mxu0 0
        %6211 = vmatpush1.bf16.msra.mxu0 0
        %6212 = vmatprep.subr.bf16.mxu0 0
        %6213 = vmatpush1.bf16.msra.mxu0 0
        %6214 = vmatprep.subr.bf16.mxu0 0
        %6215 = vmatpush1.bf16.msra.mxu0 0
        %6216 = vmatprep.subr.bf16.mxu0 0
        %6217 = vmatpush1.bf16.msra.mxu0 0
        %6218 = vmatprep.mubr.bf16.mxu0 0
        %6219 = vmatmul.mubr.bf16.gmra.mrb[0].mxu0 %v5487
        %v6220 = vpop.f32.mrb[0].mxu0
        %v6221 = vadd.f32 0.0, %v6220
        %v6222 = vpop.f32.mrb[0].mxu0
        %v6223 = vpop.f32.mrb[0].mxu0
        %v6224 = vadd.f32 0.0, %v6223
        %v6225 = vpop.f32.mrb[0].mxu0
        %6226 = vmatprep.mubr.bf16.mxu0 0
        %6227 = vmatmul.mubr.bf16.gmra.mrb[0].mxu0 %v5490
        %v6228 = vpop.f32.mrb[0].mxu0
        %v6229 = vadd.f32 0.0, %v6228
        %v6230 = vpop.f32.mrb[0].mxu0
        %v6231 = vpop.f32.mrb[0].mxu0
        %v6232 = vadd.f32 0.0, %v6231
        %v6233 = vpop.f32.mrb[0].mxu0
        %6234 = vmatprep.mubr.bf16.mxu0 0
        %6235 = vmatmul.mubr.bf16.gmra.mrb[0].mxu0 %v5493
        %v6236 = vpop.f32.mrb[0].mxu0
        %v6237 = vadd.f32 0.0, %v6236
        %v6238 = vpop.f32.mrb[0].mxu0
        %v6239 = vpop.f32.mrb[0].mxu0
        %v6240 = vadd.f32 0.0, %v6239
        %v6241 = vpop.f32.mrb[0].mxu0
        %6242 = vmatprep.mubr.bf16.mxu0 0
        %6243 = vmatmul.mubr.bf16.gmra.mrb[0].mxu0 %v5496
        %v6244 = vpop.f32.mrb[0].mxu0
        %v6245 = vadd.f32 0.0, %v6244
        %v6246 = vpop.f32.mrb[0].mxu0
        %v6247 = vpop.f32.mrb[0].mxu0
        %v6248 = vadd.f32 0.0, %v6247
        %v6249 = vpop.f32.mrb[0].mxu0
        %6250 = vmatprep.mubr.bf16.mxu0 0
        %6251 = vmatmul.mubr.bf16.gmra.mrb[0].mxu0 %v5499
        %v6252 = vpop.f32.mrb[0].mxu0
        %v6253 = vadd.f32 0.0, %v6252
        %v6254 = vpop.f32.mrb[0].mxu0
        %v6255 = vpop.f32.mrb[0].mxu0
        %v6256 = vadd.f32 0.0, %v6255
        %v6257 = vpop.f32.mrb[0].mxu0
        %6258 = vmatprep.mubr.bf16.mxu0 0
        %6259 = vmatmul.mubr.bf16.gmra.mrb[0].mxu0 %v5502
        %v6260 = vpop.f32.mrb[0].mxu0
        %v6261 = vadd.f32 0.0, %v6260
        %v6262 = vpop.f32.mrb[0].mxu0
        %v6263 = vpop.f32.mrb[0].mxu0
        %v6264 = vadd.f32 0.0, %v6263
        %v6265 = vpop.f32.mrb[0].mxu0
        %6266 = vmatprep.mubr.bf16.mxu0 0
        %6267 = vmatmul.mubr.bf16.gmra.mrb[0].mxu0 %v5505
        %v6268 = vpop.f32.mrb[0].mxu0
        %v6269 = vadd.f32 0.0, %v6268
        %v6270 = vpop.f32.mrb[0].mxu0
        %v6271 = vpop.f32.mrb[0].mxu0
        %v6272 = vadd.f32 0.0, %v6271
        %v6273 = vpop.f32.mrb[0].mxu0
        %6274 = vmatprep.mubr.bf16.mxu0 0
        %6275 = vmatmul.mubr.bf16.gmra.mrb[0].mxu0 %v5508
        %v6276 = vpop.f32.mrb[0].mxu0
        %v6277 = vadd.f32 0.0, %v6276
        %v6278 = vpop.f32.mrb[0].mxu0
        %v6279 = vpop.f32.mrb[0].mxu0
        %v6280 = vadd.f32 0.0, %v6279
        %v6281 = vpop.f32.mrb[0].mxu0
        %6282 = vmatprep.mubr.bf16.mxu0 0
        %6283 = vmatmul.mubr.bf16.gmra.mrb[0].mxu0 %v5511
        %v6284 = vpop.f32.mrb[0].mxu0
        %v6285 = vadd.f32 0.0, %v6284
        %v6286 = vpop.f32.mrb[0].mxu0
        %v6287 = vpop.f32.mrb[0].mxu0
        %v6288 = vadd.f32 0.0, %v6287
        %v6289 = vpop.f32.mrb[0].mxu0
        %6290 = vmatprep.mubr.bf16.mxu0 0
        %6291 = vmatmul.mubr.bf16.gmra.mrb[0].mxu0 %v5514
        %v6292 = vpop.f32.mrb[0].mxu0
        %v6293 = vadd.f32 0.0, %v6292
        %v6294 = vpop.f32.mrb[0].mxu0
        %v6295 = vpop.f32.mrb[0].mxu0
        %v6296 = vadd.f32 0.0, %v6295
        %v6297 = vpop.f32.mrb[0].mxu0
        %6298 = vmatprep.mubr.bf16.mxu0 0
        %6299 = vmatmul.mubr.bf16.gmra.mrb[0].mxu0 %v5517
        %v6300 = vpop.f32.mrb[0].mxu0
        %v6301 = vadd.f32 0.0, %v6300
        %v6302 = vpop.f32.mrb[0].mxu0
        %v6303 = vpop.f32.mrb[0].mxu0
        %v6304 = vadd.f32 0.0, %v6303
        %v6305 = vpop.f32.mrb[0].mxu0
        %6306 = vmatprep.mubr.bf16.mxu0 0
        %6307 = vmatmul.mubr.bf16.gmra.mrb[0].mxu0 %v5520
        %v6308 = vpop.f32.mrb[0].mxu0
        %v6309 = vadd.f32 0.0, %v6308
        %v6310 = vpop.f32.mrb[0].mxu0
        %v6311 = vpop.f32.mrb[0].mxu0
        %v6312 = vadd.f32 0.0, %v6311
        %v6313 = vpop.f32.mrb[0].mxu0
        %6314 = vmatprep.mubr.bf16.mxu0 0
        %6315 = vmatmul.mubr.bf16.gmra.mrb[0].mxu0 %v5523
        %v6316 = vpop.f32.mrb[0].mxu0
        %v6317 = vadd.f32 0.0, %v6316
        %v6318 = vpop.f32.mrb[0].mxu0
        %v6319 = vpop.f32.mrb[0].mxu0
        %v6320 = vadd.f32 0.0, %v6319
        %v6321 = vpop.f32.mrb[0].mxu0
        %6322 = vmatprep.mubr.bf16.mxu0 0
        %6323 = vmatmul.mubr.bf16.gmra.mrb[0].mxu0 %v5526
        %v6324 = vpop.f32.mrb[0].mxu0
        %v6325 = vadd.f32 0.0, %v6324
        %v6326 = vpop.f32.mrb[0].mxu0
        %v6327 = vpop.f32.mrb[0].mxu0
        %v6328 = vadd.f32 0.0, %v6327
        %v6329 = vpop.f32.mrb[0].mxu0
        %6330 = vmatprep.mubr.bf16.mxu0 0
        %6331 = vmatmul.mubr.bf16.gmra.mrb[0].mxu0 %v5529
        %v6332 = vpop.f32.mrb[0].mxu0
        %v6333 = vadd.f32 0.0, %v6332
        %v6334 = vpop.f32.mrb[0].mxu0
        %v6335 = vpop.f32.mrb[0].mxu0
        %v6336 = vadd.f32 0.0, %v6335
        %v6337 = vpop.f32.mrb[0].mxu0
        %6338 = vmatprep.mubr.bf16.mxu0 0
        %6339 = vmatmul.mubr.bf16.gmra.mrb[0].mxu0 %v6184
        %v6340 = vpop.f32.mrb[0].mxu0
        %v6341 = vadd.f32 0.0, %v6340
        %v6342 = vpop.f32.mrb[0].mxu0
        %v6343 = vpop.f32.mrb[0].mxu0
        %v6344 = vadd.f32 0.0, %v6343
        %v6345 = vpop.f32.mrb[0].mxu0
        %6346 = vdwg.mxu0
        %v6347 = vadd.f32 %v6129, %v6221
        %v6348 = vadd.f32 %v6130, %v6224
        %v6349 = vadd.f32 %v6131, %v6229
        %v6350 = vadd.f32 %v6132, %v6232
        %v6351 = vadd.f32 %v6133, %v6237
        %v6352 = vadd.f32 %v6134, %v6240
        %v6353 = vadd.f32 %v6135, %v6245
        %v6354 = vadd.f32 %v6136, %v6248
        %v6355 = vadd.f32 %v6137, %v6253
        %v6356 = vadd.f32 %v6138, %v6256
        %v6357 = vadd.f32 %v6139, %v6261
        %v6358 = vadd.f32 %v6140, %v6264
        %v6359 = vadd.f32 %v6141, %v6269
        %v6360 = vadd.f32 %v6142, %v6272
        %v6361 = vadd.f32 %v6143, %v6277
        %v6362 = vadd.f32 %v6144, %v6280
        %v6363 = vadd.f32 %v6145, %v6285
        %v6364 = vadd.f32 %v6146, %v6288
        %v6365 = vadd.f32 %v6147, %v6293
        %v6366 = vadd.f32 %v6148, %v6296
        %v6367 = vadd.f32 %v6149, %v6301
        %v6368 = vadd.f32 %v6150, %v6304
        %v6369 = vadd.f32 %v6151, %v6309
        %v6370 = vadd.f32 %v6152, %v6312
        %v6371 = vadd.f32 %v6153, %v6317
        %v6372 = vadd.f32 %v6154, %v6320
        %v6373 = vadd.f32 %v6155, %v6325
        %v6374 = vadd.f32 %v6156, %v6328
        %v6375 = vadd.f32 %v6157, %v6333
        %v6376 = vadd.f32 %v6158, %v6336
        %v6377 = vadd.f32 %v6159, %v6341
        %v6378 = vadd.f32 %v6160, %v6344
        %s6379 = scalar_lea.vmem %s2, 96
        %v6380 = vld [vmem:[%s6379] sm:$0xf]
        %v6381 = vld [vmem:[%s6379 + $0x4] sm:$0xf]
        %v6382 = vld [vmem:[%s6379 + $0x8] sm:$0xf]
        %v6383 = vld [vmem:[%s6379 + $0xc] sm:$0xf]
        %v6388 = vunpack.c.l.b16 %v6380
        %v6389 = vunpack.c.l.b16 %v6381
        %v6390 = vunpack.c.l.b16 %v6382
        %v6391 = vunpack.c.l.b16 %v6383
        %v6392 = vpack.c.b16 %v6389, %v6388
        %v6393 = vpack.c.b16 %v6391, %v6390
        %v6397 = vsel %vm1023, %v4693, 0
        %6399 = vmatprep.subr.bf16.mxu0 0
        %6400 = vmatpush1.bf16.msra.mxu0 %v6392
        %6401 = vmatprep.subr.bf16.mxu0 0
        %6402 = vmatpush1.bf16.msra.mxu0 %v6393
        %6403 = vmatprep.subr.bf16.mxu0 0
        %6404 = vmatpush1.bf16.msra.mxu0 0
        %6405 = vmatprep.subr.bf16.mxu0 0
        %6406 = vmatpush1.bf16.msra.mxu0 0
        %6407 = vmatprep.subr.bf16.mxu0 0
        %6408 = vmatpush1.bf16.msra.mxu0 0
        %6409 = vmatprep.subr.bf16.mxu0 0
        %6410 = vmatpush1.bf16.msra.mxu0 0
        %6411 = vmatprep.subr.bf16.mxu0 0
        %6412 = vmatpush1.bf16.msra.mxu0 0
        %6413 = vmatprep.subr.bf16.mxu0 0
        %6414 = vmatpush1.bf16.msra.mxu0 0
        %6415 = vmatprep.subr.bf16.mxu0 0
        %6416 = vmatpush1.bf16.msra.mxu0 0
        %6417 = vmatprep.subr.bf16.mxu0 0
        %6418 = vmatpush1.bf16.msra.mxu0 0
        %6419 = vmatprep.subr.bf16.mxu0 0
        %6420 = vmatpush1.bf16.msra.mxu0 0
        %6421 = vmatprep.subr.bf16.mxu0 0
        %6422 = vmatpush1.bf16.msra.mxu0 0
        %6423 = vmatprep.subr.bf16.mxu0 0
        %6424 = vmatpush1.bf16.msra.mxu0 0
        %6425 = vmatprep.subr.bf16.mxu0 0
        %6426 = vmatpush1.bf16.msra.mxu0 0
        %6427 = vmatprep.subr.bf16.mxu0 0
        %6428 = vmatpush1.bf16.msra.mxu0 0
        %6429 = vmatprep.subr.bf16.mxu0 0
        %6430 = vmatpush1.bf16.msra.mxu0 0
        %6431 = vmatprep.mubr.bf16.mxu0 0
        %6432 = vmatmul.mubr.bf16.gmra.mrb[0].mxu0 %v4718
        %v6433 = vpop.f32.mrb[0].mxu0
        %v6434 = vadd.f32 0.0, %v6433
        %v6435 = vpop.f32.mrb[0].mxu0
        %v6436 = vpop.f32.mrb[0].mxu0
        %v6437 = vadd.f32 0.0, %v6436
        %v6438 = vpop.f32.mrb[0].mxu0
        %6439 = vmatprep.mubr.bf16.mxu0 0
        %6440 = vmatmul.mubr.bf16.gmra.mrb[0].mxu0 %v4721
        %v6441 = vpop.f32.mrb[0].mxu0
        %v6442 = vadd.f32 0.0, %v6441
        %v6443 = vpop.f32.mrb[0].mxu0
        %v6444 = vpop.f32.mrb[0].mxu0
        %v6445 = vadd.f32 0.0, %v6444
        %v6446 = vpop.f32.mrb[0].mxu0
        %6447 = vmatprep.mubr.bf16.mxu0 0
        %6448 = vmatmul.mubr.bf16.gmra.mrb[0].mxu0 %v4724
        %v6449 = vpop.f32.mrb[0].mxu0
        %v6450 = vadd.f32 0.0, %v6449
        %v6451 = vpop.f32.mrb[0].mxu0
        %v6452 = vpop.f32.mrb[0].mxu0
        %v6453 = vadd.f32 0.0, %v6452
        %v6454 = vpop.f32.mrb[0].mxu0
        %6455 = vmatprep.mubr.bf16.mxu0 0
        %6456 = vmatmul.mubr.bf16.gmra.mrb[0].mxu0 %v4727
        %v6457 = vpop.f32.mrb[0].mxu0
        %v6458 = vadd.f32 0.0, %v6457
        %v6459 = vpop.f32.mrb[0].mxu0
        %v6460 = vpop.f32.mrb[0].mxu0
        %v6461 = vadd.f32 0.0, %v6460
        %v6462 = vpop.f32.mrb[0].mxu0
        %6463 = vmatprep.mubr.bf16.mxu0 0
        %6464 = vmatmul.mubr.bf16.gmra.mrb[0].mxu0 %v4730
        %v6465 = vpop.f32.mrb[0].mxu0
        %v6466 = vadd.f32 0.0, %v6465
        %v6467 = vpop.f32.mrb[0].mxu0
        %v6468 = vpop.f32.mrb[0].mxu0
        %v6469 = vadd.f32 0.0, %v6468
        %v6470 = vpop.f32.mrb[0].mxu0
        %6471 = vmatprep.mubr.bf16.mxu0 0
        %6472 = vmatmul.mubr.bf16.gmra.mrb[0].mxu0 %v4733
        %v6473 = vpop.f32.mrb[0].mxu0
        %v6474 = vadd.f32 0.0, %v6473
        %v6475 = vpop.f32.mrb[0].mxu0
        %v6476 = vpop.f32.mrb[0].mxu0
        %v6477 = vadd.f32 0.0, %v6476
        %v6478 = vpop.f32.mrb[0].mxu0
        %6479 = vmatprep.mubr.bf16.mxu0 0
        %6480 = vmatmul.mubr.bf16.gmra.mrb[0].mxu0 %v4736
        %v6481 = vpop.f32.mrb[0].mxu0
        %v6482 = vadd.f32 0.0, %v6481
        %v6483 = vpop.f32.mrb[0].mxu0
        %v6484 = vpop.f32.mrb[0].mxu0
        %v6485 = vadd.f32 0.0, %v6484
        %v6486 = vpop.f32.mrb[0].mxu0
        %6487 = vmatprep.mubr.bf16.mxu0 0
        %6488 = vmatmul.mubr.bf16.gmra.mrb[0].mxu0 %v4739
        %v6489 = vpop.f32.mrb[0].mxu0
        %v6490 = vadd.f32 0.0, %v6489
        %v6491 = vpop.f32.mrb[0].mxu0
        %v6492 = vpop.f32.mrb[0].mxu0
        %v6493 = vadd.f32 0.0, %v6492
        %v6494 = vpop.f32.mrb[0].mxu0
        %6495 = vmatprep.mubr.bf16.mxu0 0
        %6496 = vmatmul.mubr.bf16.gmra.mrb[0].mxu0 %v4742
        %v6497 = vpop.f32.mrb[0].mxu0
        %v6498 = vadd.f32 0.0, %v6497
        %v6499 = vpop.f32.mrb[0].mxu0
        %v6500 = vpop.f32.mrb[0].mxu0
        %v6501 = vadd.f32 0.0, %v6500
        %v6502 = vpop.f32.mrb[0].mxu0
        %6503 = vmatprep.mubr.bf16.mxu0 0
        %6504 = vmatmul.mubr.bf16.gmra.mrb[0].mxu0 %v4745
        %v6505 = vpop.f32.mrb[0].mxu0
        %v6506 = vadd.f32 0.0, %v6505
        %v6507 = vpop.f32.mrb[0].mxu0
        %v6508 = vpop.f32.mrb[0].mxu0
        %v6509 = vadd.f32 0.0, %v6508
        %v6510 = vpop.f32.mrb[0].mxu0
        %6511 = vmatprep.mubr.bf16.mxu0 0
        %6512 = vmatmul.mubr.bf16.gmra.mrb[0].mxu0 %v4748
        %v6513 = vpop.f32.mrb[0].mxu0
        %v6514 = vadd.f32 0.0, %v6513
        %v6515 = vpop.f32.mrb[0].mxu0
        %v6516 = vpop.f32.mrb[0].mxu0
        %v6517 = vadd.f32 0.0, %v6516
        %v6518 = vpop.f32.mrb[0].mxu0
        %6519 = vmatprep.mubr.bf16.mxu0 0
        %6520 = vmatmul.mubr.bf16.gmra.mrb[0].mxu0 %v4751
        %v6521 = vpop.f32.mrb[0].mxu0
        %v6522 = vadd.f32 0.0, %v6521
        %v6523 = vpop.f32.mrb[0].mxu0
        %v6524 = vpop.f32.mrb[0].mxu0
        %v6525 = vadd.f32 0.0, %v6524
        %v6526 = vpop.f32.mrb[0].mxu0
        %6527 = vmatprep.mubr.bf16.mxu0 0
        %6528 = vmatmul.mubr.bf16.gmra.mrb[0].mxu0 %v4754
        %v6529 = vpop.f32.mrb[0].mxu0
        %v6530 = vadd.f32 0.0, %v6529
        %v6531 = vpop.f32.mrb[0].mxu0
        %v6532 = vpop.f32.mrb[0].mxu0
        %v6533 = vadd.f32 0.0, %v6532
        %v6534 = vpop.f32.mrb[0].mxu0
        %6535 = vmatprep.mubr.bf16.mxu0 0
        %6536 = vmatmul.mubr.bf16.gmra.mrb[0].mxu0 %v4757
        %v6537 = vpop.f32.mrb[0].mxu0
        %v6538 = vadd.f32 0.0, %v6537
        %v6539 = vpop.f32.mrb[0].mxu0
        %v6540 = vpop.f32.mrb[0].mxu0
        %v6541 = vadd.f32 0.0, %v6540
        %v6542 = vpop.f32.mrb[0].mxu0
        %6543 = vmatprep.mubr.bf16.mxu0 0
        %6544 = vmatmul.mubr.bf16.gmra.mrb[0].mxu0 %v5742
        %v6545 = vpop.f32.mrb[0].mxu0
        %v6546 = vadd.f32 0.0, %v6545
        %v6547 = vpop.f32.mrb[0].mxu0
        %v6548 = vpop.f32.mrb[0].mxu0
        %v6549 = vadd.f32 0.0, %v6548
        %v6550 = vpop.f32.mrb[0].mxu0
        %6551 = vmatprep.mubr.bf16.mxu0 0
        %6552 = vmatmul.mubr.bf16.gmra.mrb[0].mxu0 %v6397
        %v6553 = vpop.f32.mrb[0].mxu0
        %v6554 = vadd.f32 0.0, %v6553
        %v6555 = vpop.f32.mrb[0].mxu0
        %v6556 = vpop.f32.mrb[0].mxu0
        %v6557 = vadd.f32 0.0, %v6556
        %v6558 = vpop.f32.mrb[0].mxu0
        %6559 = vdwg.mxu0
        %v6560 = vadd.f32 %v6347, %v6434
        %v6561 = vadd.f32 %v6348, %v6437
        %v6562 = vadd.f32 %v6349, %v6442
        %v6563 = vadd.f32 %v6350, %v6445
        %v6564 = vadd.f32 %v6351, %v6450
        %v6565 = vadd.f32 %v6352, %v6453
        %v6566 = vadd.f32 %v6353, %v6458
        %v6567 = vadd.f32 %v6354, %v6461
        %v6568 = vadd.f32 %v6355, %v6466
        %v6569 = vadd.f32 %v6356, %v6469
        %v6570 = vadd.f32 %v6357, %v6474
        %v6571 = vadd.f32 %v6358, %v6477
        %v6572 = vadd.f32 %v6359, %v6482
        %v6573 = vadd.f32 %v6360, %v6485
        %v6574 = vadd.f32 %v6361, %v6490
        %v6575 = vadd.f32 %v6362, %v6493
        %v6576 = vadd.f32 %v6363, %v6498
        %v6577 = vadd.f32 %v6364, %v6501
        %v6578 = vadd.f32 %v6365, %v6506
        %v6579 = vadd.f32 %v6366, %v6509
        %v6580 = vadd.f32 %v6367, %v6514
        %v6581 = vadd.f32 %v6368, %v6517
        %v6582 = vadd.f32 %v6369, %v6522
        %v6583 = vadd.f32 %v6370, %v6525
        %v6584 = vadd.f32 %v6371, %v6530
        %v6585 = vadd.f32 %v6372, %v6533
        %v6586 = vadd.f32 %v6373, %v6538
        %v6587 = vadd.f32 %v6374, %v6541
        %v6588 = vadd.f32 %v6375, %v6546
        %v6589 = vadd.f32 %v6376, %v6549
        %v6590 = vadd.f32 %v6377, %v6554
        %v6591 = vadd.f32 %v6378, %v6557
        %v6592 = vshrl.u32 %v4693, 16
        %v6594 = vshll.u32 %v4693, 16
        %v6596 = vrot.slane %v6594, 1
        %v6597 = vor.u32 %v6592, %v6596
        %v6599 = vshll.u32 %v4694, 16
        %v6601 = vrot.slane %v6599, 1
        %v6602 = vsel %vm1265, %v6597, %v6601
        %s6603 = scalar_lea.vmem %s2, 112
        %v6604 = vld [vmem:[%s6603] sm:$0xf]
        %v6605 = vld [vmem:[%s6603 + $0x4] sm:$0xf]
        %v6606 = vld [vmem:[%s6603 + $0x8] sm:$0xf]
        %v6607 = vld [vmem:[%s6603 + $0xc] sm:$0xf]
        %v6612 = vunpack.c.l.b16 %v6604
        %v6613 = vunpack.c.l.b16 %v6605
        %v6614 = vunpack.c.l.b16 %v6606
        %v6615 = vunpack.c.l.b16 %v6607
        %v6616 = vpack.c.b16 %v6613, %v6612
        %v6617 = vpack.c.b16 %v6615, %v6614
        %v6621 = vsel %vm1023, %v6602, 0
        %6623 = vmatprep.subr.bf16.mxu0 0
        %6624 = vmatpush1.bf16.msra.mxu0 %v6616
        %6625 = vmatprep.subr.bf16.mxu0 0
        %6626 = vmatpush1.bf16.msra.mxu0 %v6617
        %6627 = vmatprep.subr.bf16.mxu0 0
        %6628 = vmatpush1.bf16.msra.mxu0 0
        %6629 = vmatprep.subr.bf16.mxu0 0
        %6630 = vmatpush1.bf16.msra.mxu0 0
        %6631 = vmatprep.subr.bf16.mxu0 0
        %6632 = vmatpush1.bf16.msra.mxu0 0
        %6633 = vmatprep.subr.bf16.mxu0 0
        %6634 = vmatpush1.bf16.msra.mxu0 0
        %6635 = vmatprep.subr.bf16.mxu0 0
        %6636 = vmatpush1.bf16.msra.mxu0 0
        %6637 = vmatprep.subr.bf16.mxu0 0
        %6638 = vmatpush1.bf16.msra.mxu0 0
        %6639 = vmatprep.subr.bf16.mxu0 0
        %6640 = vmatpush1.bf16.msra.mxu0 0
        %6641 = vmatprep.subr.bf16.mxu0 0
        %6642 = vmatpush1.bf16.msra.mxu0 0
        %6643 = vmatprep.subr.bf16.mxu0 0
        %6644 = vmatpush1.bf16.msra.mxu0 0
        %6645 = vmatprep.subr.bf16.mxu0 0
        %6646 = vmatpush1.bf16.msra.mxu0 0
        %6647 = vmatprep.subr.bf16.mxu0 0
        %6648 = vmatpush1.bf16.msra.mxu0 0
        %6649 = vmatprep.subr.bf16.mxu0 0
        %6650 = vmatpush1.bf16.msra.mxu0 0
        %6651 = vmatprep.subr.bf16.mxu0 0
        %6652 = vmatpush1.bf16.msra.mxu0 0
        %6653 = vmatprep.subr.bf16.mxu0 0
        %6654 = vmatpush1.bf16.msra.mxu0 0
        %6655 = vmatprep.mubr.bf16.mxu0 0
        %6656 = vmatmul.mubr.bf16.gmra.mrb[0].mxu0 %v5152
        %v6657 = vpop.f32.mrb[0].mxu0
        %v6658 = vadd.f32 0.0, %v6657
        %v6659 = vpop.f32.mrb[0].mxu0
        %v6660 = vpop.f32.mrb[0].mxu0
        %v6661 = vadd.f32 0.0, %v6660
        %v6662 = vpop.f32.mrb[0].mxu0
        %6663 = vmatprep.mubr.bf16.mxu0 0
        %6664 = vmatmul.mubr.bf16.gmra.mrb[0].mxu0 %v5155
        %v6665 = vpop.f32.mrb[0].mxu0
        %v6666 = vadd.f32 0.0, %v6665
        %v6667 = vpop.f32.mrb[0].mxu0
        %v6668 = vpop.f32.mrb[0].mxu0
        %v6669 = vadd.f32 0.0, %v6668
        %v6670 = vpop.f32.mrb[0].mxu0
        %6671 = vmatprep.mubr.bf16.mxu0 0
        %6672 = vmatmul.mubr.bf16.gmra.mrb[0].mxu0 %v5158
        %v6673 = vpop.f32.mrb[0].mxu0
        %v6674 = vadd.f32 0.0, %v6673
        %v6675 = vpop.f32.mrb[0].mxu0
        %v6676 = vpop.f32.mrb[0].mxu0
        %v6677 = vadd.f32 0.0, %v6676
        %v6678 = vpop.f32.mrb[0].mxu0
        %6679 = vmatprep.mubr.bf16.mxu0 0
        %6680 = vmatmul.mubr.bf16.gmra.mrb[0].mxu0 %v5161
        %v6681 = vpop.f32.mrb[0].mxu0
        %v6682 = vadd.f32 0.0, %v6681
        %v6683 = vpop.f32.mrb[0].mxu0
        %v6684 = vpop.f32.mrb[0].mxu0
        %v6685 = vadd.f32 0.0, %v6684
        %v6686 = vpop.f32.mrb[0].mxu0
        %6687 = vmatprep.mubr.bf16.mxu0 0
        %6688 = vmatmul.mubr.bf16.gmra.mrb[0].mxu0 %v5164
        %v6689 = vpop.f32.mrb[0].mxu0
        %v6690 = vadd.f32 0.0, %v6689
        %v6691 = vpop.f32.mrb[0].mxu0
        %v6692 = vpop.f32.mrb[0].mxu0
        %v6693 = vadd.f32 0.0, %v6692
        %v6694 = vpop.f32.mrb[0].mxu0
        %6695 = vmatprep.mubr.bf16.mxu0 0
        %6696 = vmatmul.mubr.bf16.gmra.mrb[0].mxu0 %v5167
        %v6697 = vpop.f32.mrb[0].mxu0
        %v6698 = vadd.f32 0.0, %v6697
        %v6699 = vpop.f32.mrb[0].mxu0
        %v6700 = vpop.f32.mrb[0].mxu0
        %v6701 = vadd.f32 0.0, %v6700
        %v6702 = vpop.f32.mrb[0].mxu0
        %6703 = vmatprep.mubr.bf16.mxu0 0
        %6704 = vmatmul.mubr.bf16.gmra.mrb[0].mxu0 %v5170
        %v6705 = vpop.f32.mrb[0].mxu0
        %v6706 = vadd.f32 0.0, %v6705
        %v6707 = vpop.f32.mrb[0].mxu0
        %v6708 = vpop.f32.mrb[0].mxu0
        %v6709 = vadd.f32 0.0, %v6708
        %v6710 = vpop.f32.mrb[0].mxu0
        %6711 = vmatprep.mubr.bf16.mxu0 0
        %6712 = vmatmul.mubr.bf16.gmra.mrb[0].mxu0 %v5173
        %v6713 = vpop.f32.mrb[0].mxu0
        %v6714 = vadd.f32 0.0, %v6713
        %v6715 = vpop.f32.mrb[0].mxu0
        %v6716 = vpop.f32.mrb[0].mxu0
        %v6717 = vadd.f32 0.0, %v6716
        %v6718 = vpop.f32.mrb[0].mxu0
        %6719 = vmatprep.mubr.bf16.mxu0 0
        %6720 = vmatmul.mubr.bf16.gmra.mrb[0].mxu0 %v5176
        %v6721 = vpop.f32.mrb[0].mxu0
        %v6722 = vadd.f32 0.0, %v6721
        %v6723 = vpop.f32.mrb[0].mxu0
        %v6724 = vpop.f32.mrb[0].mxu0
        %v6725 = vadd.f32 0.0, %v6724
        %v6726 = vpop.f32.mrb[0].mxu0
        %6727 = vmatprep.mubr.bf16.mxu0 0
        %6728 = vmatmul.mubr.bf16.gmra.mrb[0].mxu0 %v5179
        %v6729 = vpop.f32.mrb[0].mxu0
        %v6730 = vadd.f32 0.0, %v6729
        %v6731 = vpop.f32.mrb[0].mxu0
        %v6732 = vpop.f32.mrb[0].mxu0
        %v6733 = vadd.f32 0.0, %v6732
        %v6734 = vpop.f32.mrb[0].mxu0
        %6735 = vmatprep.mubr.bf16.mxu0 0
        %6736 = vmatmul.mubr.bf16.gmra.mrb[0].mxu0 %v5182
        %v6737 = vpop.f32.mrb[0].mxu0
        %v6738 = vadd.f32 0.0, %v6737
        %v6739 = vpop.f32.mrb[0].mxu0
        %v6740 = vpop.f32.mrb[0].mxu0
        %v6741 = vadd.f32 0.0, %v6740
        %v6742 = vpop.f32.mrb[0].mxu0
        %6743 = vmatprep.mubr.bf16.mxu0 0
        %6744 = vmatmul.mubr.bf16.gmra.mrb[0].mxu0 %v5185
        %v6745 = vpop.f32.mrb[0].mxu0
        %v6746 = vadd.f32 0.0, %v6745
        %v6747 = vpop.f32.mrb[0].mxu0
        %v6748 = vpop.f32.mrb[0].mxu0
        %v6749 = vadd.f32 0.0, %v6748
        %v6750 = vpop.f32.mrb[0].mxu0
        %6751 = vmatprep.mubr.bf16.mxu0 0
        %6752 = vmatmul.mubr.bf16.gmra.mrb[0].mxu0 %v5188
        %v6753 = vpop.f32.mrb[0].mxu0
        %v6754 = vadd.f32 0.0, %v6753
        %v6755 = vpop.f32.mrb[0].mxu0
        %v6756 = vpop.f32.mrb[0].mxu0
        %v6757 = vadd.f32 0.0, %v6756
        %v6758 = vpop.f32.mrb[0].mxu0
        %6759 = vmatprep.mubr.bf16.mxu0 0
        %6760 = vmatmul.mubr.bf16.gmra.mrb[0].mxu0 %v5191
        %v6761 = vpop.f32.mrb[0].mxu0
        %v6762 = vadd.f32 0.0, %v6761
        %v6763 = vpop.f32.mrb[0].mxu0
        %v6764 = vpop.f32.mrb[0].mxu0
        %v6765 = vadd.f32 0.0, %v6764
        %v6766 = vpop.f32.mrb[0].mxu0
        %6767 = vmatprep.mubr.bf16.mxu0 0
        %6768 = vmatmul.mubr.bf16.gmra.mrb[0].mxu0 %v5966
        %v6769 = vpop.f32.mrb[0].mxu0
        %v6770 = vadd.f32 0.0, %v6769
        %v6771 = vpop.f32.mrb[0].mxu0
        %v6772 = vpop.f32.mrb[0].mxu0
        %v6773 = vadd.f32 0.0, %v6772
        %v6774 = vpop.f32.mrb[0].mxu0
        %6775 = vmatprep.mubr.bf16.mxu0 0
        %6776 = vmatmul.mubr.bf16.gmra.mrb[0].mxu0 %v6621
        %v6777 = vpop.f32.mrb[0].mxu0
        %v6778 = vadd.f32 0.0, %v6777
        %v6779 = vpop.f32.mrb[0].mxu0
        %v6780 = vpop.f32.mrb[0].mxu0
        %v6781 = vadd.f32 0.0, %v6780
        %v6782 = vpop.f32.mrb[0].mxu0
        %6783 = vdwg.mxu0
        %v6784 = vadd.f32 %v6560, %v6658
        %v6785 = vadd.f32 %v6561, %v6661
        %v6786 = vadd.f32 %v6562, %v6666
        %v6787 = vadd.f32 %v6563, %v6669
        %v6788 = vadd.f32 %v6564, %v6674
        %v6789 = vadd.f32 %v6565, %v6677
        %v6790 = vadd.f32 %v6566, %v6682
        %v6791 = vadd.f32 %v6567, %v6685
        %v6792 = vadd.f32 %v6568, %v6690
        %v6793 = vadd.f32 %v6569, %v6693
        %v6794 = vadd.f32 %v6570, %v6698
        %v6795 = vadd.f32 %v6571, %v6701
        %v6796 = vadd.f32 %v6572, %v6706
        %v6797 = vadd.f32 %v6573, %v6709
        %v6798 = vadd.f32 %v6574, %v6714
        %v6799 = vadd.f32 %v6575, %v6717
        %v6800 = vadd.f32 %v6576, %v6722
        %v6801 = vadd.f32 %v6577, %v6725
        %v6802 = vadd.f32 %v6578, %v6730
        %v6803 = vadd.f32 %v6579, %v6733
        %v6804 = vadd.f32 %v6580, %v6738
        %v6805 = vadd.f32 %v6581, %v6741
        %v6806 = vadd.f32 %v6582, %v6746
        %v6807 = vadd.f32 %v6583, %v6749
        %v6808 = vadd.f32 %v6584, %v6754
        %v6809 = vadd.f32 %v6585, %v6757
        %v6810 = vadd.f32 %v6586, %v6762
        %v6811 = vadd.f32 %v6587, %v6765
        %v6812 = vadd.f32 %v6588, %v6770
        %v6813 = vadd.f32 %v6589, %v6773
        %v6814 = vadd.f32 %v6590, %v6778
        %v6815 = vadd.f32 %v6591, %v6781
        %v6818 = vrot.slane %v4693, 1
        %v6819 = vrot.slane %v4694, 1
        %v6820 = vsel %vm1732, %v6818, %v6819
        %s6821 = scalar_lea.vmem %s2, 128
        %v6822 = vld [vmem:[%s6821] sm:$0xf]
        %v6823 = vld [vmem:[%s6821 + $0x4] sm:$0xf]
        %v6824 = vld [vmem:[%s6821 + $0x8] sm:$0xf]
        %v6825 = vld [vmem:[%s6821 + $0xc] sm:$0xf]
        %v6830 = vunpack.c.l.b16 %v6822
        %v6831 = vunpack.c.l.b16 %v6823
        %v6832 = vunpack.c.l.b16 %v6824
        %v6833 = vunpack.c.l.b16 %v6825
        %v6834 = vpack.c.b16 %v6831, %v6830
        %v6835 = vpack.c.b16 %v6833, %v6832
        %v6839 = vsel %vm1023, %v6820, 0
        %6841 = vmatprep.subr.bf16.mxu0 0
        %6842 = vmatpush1.bf16.msra.mxu0 %v6834
        %6843 = vmatprep.subr.bf16.mxu0 0
        %6844 = vmatpush1.bf16.msra.mxu0 %v6835
        %6845 = vmatprep.subr.bf16.mxu0 0
        %6846 = vmatpush1.bf16.msra.mxu0 0
        %6847 = vmatprep.subr.bf16.mxu0 0
        %6848 = vmatpush1.bf16.msra.mxu0 0
        %6849 = vmatprep.subr.bf16.mxu0 0
        %6850 = vmatpush1.bf16.msra.mxu0 0
        %6851 = vmatprep.subr.bf16.mxu0 0
        %6852 = vmatpush1.bf16.msra.mxu0 0
        %6853 = vmatprep.subr.bf16.mxu0 0
        %6854 = vmatpush1.bf16.msra.mxu0 0
        %6855 = vmatprep.subr.bf16.mxu0 0
        %6856 = vmatpush1.bf16.msra.mxu0 0
        %6857 = vmatprep.subr.bf16.mxu0 0
        %6858 = vmatpush1.bf16.msra.mxu0 0
        %6859 = vmatprep.subr.bf16.mxu0 0
        %6860 = vmatpush1.bf16.msra.mxu0 0
        %6861 = vmatprep.subr.bf16.mxu0 0
        %6862 = vmatpush1.bf16.msra.mxu0 0
        %6863 = vmatprep.subr.bf16.mxu0 0
        %6864 = vmatpush1.bf16.msra.mxu0 0
        %6865 = vmatprep.subr.bf16.mxu0 0
        %6866 = vmatpush1.bf16.msra.mxu0 0
        %6867 = vmatprep.subr.bf16.mxu0 0
        %6868 = vmatpush1.bf16.msra.mxu0 0
        %6869 = vmatprep.subr.bf16.mxu0 0
        %6870 = vmatpush1.bf16.msra.mxu0 0
        %6871 = vmatprep.subr.bf16.mxu0 0
        %6872 = vmatpush1.bf16.msra.mxu0 0
        %6873 = vmatprep.mubr.bf16.mxu0 0
        %6874 = vmatmul.mubr.bf16.gmra.mrb[0].mxu0 %v5490
        %v6875 = vpop.f32.mrb[0].mxu0
        %v6876 = vadd.f32 0.0, %v6875
        %v6877 = vpop.f32.mrb[0].mxu0
        %v6878 = vpop.f32.mrb[0].mxu0
        %v6879 = vadd.f32 0.0, %v6878
        %v6880 = vpop.f32.mrb[0].mxu0
        %6881 = vmatprep.mubr.bf16.mxu0 0
        %6882 = vmatmul.mubr.bf16.gmra.mrb[0].mxu0 %v5493
        %v6883 = vpop.f32.mrb[0].mxu0
        %v6884 = vadd.f32 0.0, %v6883
        %v6885 = vpop.f32.mrb[0].mxu0
        %v6886 = vpop.f32.mrb[0].mxu0
        %v6887 = vadd.f32 0.0, %v6886
        %v6888 = vpop.f32.mrb[0].mxu0
        %6889 = vmatprep.mubr.bf16.mxu0 0
        %6890 = vmatmul.mubr.bf16.gmra.mrb[0].mxu0 %v5496
        %v6891 = vpop.f32.mrb[0].mxu0
        %v6892 = vadd.f32 0.0, %v6891
        %v6893 = vpop.f32.mrb[0].mxu0
        %v6894 = vpop.f32.mrb[0].mxu0
        %v6895 = vadd.f32 0.0, %v6894
        %v6896 = vpop.f32.mrb[0].mxu0
        %6897 = vmatprep.mubr.bf16.mxu0 0
        %6898 = vmatmul.mubr.bf16.gmra.mrb[0].mxu0 %v5499
        %v6899 = vpop.f32.mrb[0].mxu0
        %v6900 = vadd.f32 0.0, %v6899
        %v6901 = vpop.f32.mrb[0].mxu0
        %v6902 = vpop.f32.mrb[0].mxu0
        %v6903 = vadd.f32 0.0, %v6902
        %v6904 = vpop.f32.mrb[0].mxu0
        %6905 = vmatprep.mubr.bf16.mxu0 0
        %6906 = vmatmul.mubr.bf16.gmra.mrb[0].mxu0 %v5502
        %v6907 = vpop.f32.mrb[0].mxu0
        %v6908 = vadd.f32 0.0, %v6907
        %v6909 = vpop.f32.mrb[0].mxu0
        %v6910 = vpop.f32.mrb[0].mxu0
        %v6911 = vadd.f32 0.0, %v6910
        %v6912 = vpop.f32.mrb[0].mxu0
        %6913 = vmatprep.mubr.bf16.mxu0 0
        %6914 = vmatmul.mubr.bf16.gmra.mrb[0].mxu0 %v5505
        %v6915 = vpop.f32.mrb[0].mxu0
        %v6916 = vadd.f32 0.0, %v6915
        %v6917 = vpop.f32.mrb[0].mxu0
        %v6918 = vpop.f32.mrb[0].mxu0
        %v6919 = vadd.f32 0.0, %v6918
        %v6920 = vpop.f32.mrb[0].mxu0
        %6921 = vmatprep.mubr.bf16.mxu0 0
        %6922 = vmatmul.mubr.bf16.gmra.mrb[0].mxu0 %v5508
        %v6923 = vpop.f32.mrb[0].mxu0
        %v6924 = vadd.f32 0.0, %v6923
        %v6925 = vpop.f32.mrb[0].mxu0
        %v6926 = vpop.f32.mrb[0].mxu0
        %v6927 = vadd.f32 0.0, %v6926
        %v6928 = vpop.f32.mrb[0].mxu0
        %6929 = vmatprep.mubr.bf16.mxu0 0
        %6930 = vmatmul.mubr.bf16.gmra.mrb[0].mxu0 %v5511
        %v6931 = vpop.f32.mrb[0].mxu0
        %v6932 = vadd.f32 0.0, %v6931
        %v6933 = vpop.f32.mrb[0].mxu0
        %v6934 = vpop.f32.mrb[0].mxu0
        %v6935 = vadd.f32 0.0, %v6934
        %v6936 = vpop.f32.mrb[0].mxu0
        %6937 = vmatprep.mubr.bf16.mxu0 0
        %6938 = vmatmul.mubr.bf16.gmra.mrb[0].mxu0 %v5514
        %v6939 = vpop.f32.mrb[0].mxu0
        %v6940 = vadd.f32 0.0, %v6939
        %v6941 = vpop.f32.mrb[0].mxu0
        %v6942 = vpop.f32.mrb[0].mxu0
        %v6943 = vadd.f32 0.0, %v6942
        %v6944 = vpop.f32.mrb[0].mxu0
        %6945 = vmatprep.mubr.bf16.mxu0 0
        %6946 = vmatmul.mubr.bf16.gmra.mrb[0].mxu0 %v5517
        %v6947 = vpop.f32.mrb[0].mxu0
        %v6948 = vadd.f32 0.0, %v6947
        %v6949 = vpop.f32.mrb[0].mxu0
        %v6950 = vpop.f32.mrb[0].mxu0
        %v6951 = vadd.f32 0.0, %v6950
        %v6952 = vpop.f32.mrb[0].mxu0
        %6953 = vmatprep.mubr.bf16.mxu0 0
        %6954 = vmatmul.mubr.bf16.gmra.mrb[0].mxu0 %v5520
        %v6955 = vpop.f32.mrb[0].mxu0
        %v6956 = vadd.f32 0.0, %v6955
        %v6957 = vpop.f32.mrb[0].mxu0
        %v6958 = vpop.f32.mrb[0].mxu0
        %v6959 = vadd.f32 0.0, %v6958
        %v6960 = vpop.f32.mrb[0].mxu0
        %6961 = vmatprep.mubr.bf16.mxu0 0
        %6962 = vmatmul.mubr.bf16.gmra.mrb[0].mxu0 %v5523
        %v6963 = vpop.f32.mrb[0].mxu0
        %v6964 = vadd.f32 0.0, %v6963
        %v6965 = vpop.f32.mrb[0].mxu0
        %v6966 = vpop.f32.mrb[0].mxu0
        %v6967 = vadd.f32 0.0, %v6966
        %v6968 = vpop.f32.mrb[0].mxu0
        %6969 = vmatprep.mubr.bf16.mxu0 0
        %6970 = vmatmul.mubr.bf16.gmra.mrb[0].mxu0 %v5526
        %v6971 = vpop.f32.mrb[0].mxu0
        %v6972 = vadd.f32 0.0, %v6971
        %v6973 = vpop.f32.mrb[0].mxu0
        %v6974 = vpop.f32.mrb[0].mxu0
        %v6975 = vadd.f32 0.0, %v6974
        %v6976 = vpop.f32.mrb[0].mxu0
        %6977 = vmatprep.mubr.bf16.mxu0 0
        %6978 = vmatmul.mubr.bf16.gmra.mrb[0].mxu0 %v5529
        %v6979 = vpop.f32.mrb[0].mxu0
        %v6980 = vadd.f32 0.0, %v6979
        %v6981 = vpop.f32.mrb[0].mxu0
        %v6982 = vpop.f32.mrb[0].mxu0
        %v6983 = vadd.f32 0.0, %v6982
        %v6984 = vpop.f32.mrb[0].mxu0
        %6985 = vmatprep.mubr.bf16.mxu0 0
        %6986 = vmatmul.mubr.bf16.gmra.mrb[0].mxu0 %v6184
        %v6987 = vpop.f32.mrb[0].mxu0
        %v6988 = vadd.f32 0.0, %v6987
        %v6989 = vpop.f32.mrb[0].mxu0
        %v6990 = vpop.f32.mrb[0].mxu0
        %v6991 = vadd.f32 0.0, %v6990
        %v6992 = vpop.f32.mrb[0].mxu0
        %6993 = vmatprep.mubr.bf16.mxu0 0
        %6994 = vmatmul.mubr.bf16.gmra.mrb[0].mxu0 %v6839
        %v6995 = vpop.f32.mrb[0].mxu0
        %v6996 = vadd.f32 0.0, %v6995
        %v6997 = vpop.f32.mrb[0].mxu0
        %v6998 = vpop.f32.mrb[0].mxu0
        %v6999 = vadd.f32 0.0, %v6998
        %v7000 = vpop.f32.mrb[0].mxu0
        %7001 = vdwg.mxu0
        %v7002 = vadd.f32 %v6784, %v6876
        %v7003 = vadd.f32 %v6785, %v6879
        %v7004 = vadd.f32 %v6786, %v6884
        %v7005 = vadd.f32 %v6787, %v6887
        %v7006 = vadd.f32 %v6788, %v6892
        %v7007 = vadd.f32 %v6789, %v6895
        %v7008 = vadd.f32 %v6790, %v6900
        %v7009 = vadd.f32 %v6791, %v6903
        %v7010 = vadd.f32 %v6792, %v6908
        %v7011 = vadd.f32 %v6793, %v6911
        %v7012 = vadd.f32 %v6794, %v6916
        %v7013 = vadd.f32 %v6795, %v6919
        %v7014 = vadd.f32 %v6796, %v6924
        %v7015 = vadd.f32 %v6797, %v6927
        %v7016 = vadd.f32 %v6798, %v6932
        %v7017 = vadd.f32 %v6799, %v6935
        %v7018 = vadd.f32 %v6800, %v6940
        %v7019 = vadd.f32 %v6801, %v6943
        %v7020 = vadd.f32 %v6802, %v6948
        %v7021 = vadd.f32 %v6803, %v6951
        %v7022 = vadd.f32 %v6804, %v6956
        %v7023 = vadd.f32 %v6805, %v6959
        %v7024 = vadd.f32 %v6806, %v6964
        %v7025 = vadd.f32 %v6807, %v6967
        %v7026 = vadd.f32 %v6808, %v6972
        %v7027 = vadd.f32 %v6809, %v6975
        %v7028 = vadd.f32 %v6810, %v6980
        %v7029 = vadd.f32 %v6811, %v6983
        %v7030 = vadd.f32 %v6812, %v6988
        %v7031 = vadd.f32 %v6813, %v6991
        %v7032 = vadd.f32 %v6814, %v6996
        %v7033 = vadd.f32 %v6815, %v6999
        %v7034 = vld [vmem:[#allocation4] sm:$0xff]
        %v7035 = vld [vmem:[#allocation4 + $0x8] sm:$0xff]
        %v7036 = vld [vmem:[#allocation4 + $0x10] sm:$0x3]
        %v7037 = vld [vmem:[#allocation4 + $0x18] sm:$0xff]
        %v7038 = vld [vmem:[#allocation4 + $0x20] sm:$0xff]
        %v7039 = vld [vmem:[#allocation4 + $0x28] sm:$0x3]
        %v7040 = vld [vmem:[#allocation4 + $0x30] sm:$0xff]
        %v7041 = vld [vmem:[#allocation4 + $0x38] sm:$0xff]
        %v7042 = vld [vmem:[#allocation4 + $0x40] sm:$0x3]
        %v7043 = vld [vmem:[#allocation4 + $0x48] sm:$0xff]
        %v7044 = vld [vmem:[#allocation4 + $0x50] sm:$0xff]
        %v7045 = vld [vmem:[#allocation4 + $0x58] sm:$0x3]
        %v7046 = vld [vmem:[#allocation4 + $0x60] sm:$0xff]
        %v7047 = vld [vmem:[#allocation4 + $0x68] sm:$0xff]
        %v7048 = vld [vmem:[#allocation4 + $0x70] sm:$0x3]
        %v7049 = vld [vmem:[#allocation4 + $0x78] sm:$0xff]
        %v7050 = vld [vmem:[#allocation4 + $0x80] sm:$0xff]
        %v7051 = vld [vmem:[#allocation4 + $0x88] sm:$0x3]
        %v7052 = vld [vmem:[#allocation4 + $0x90] sm:$0xff]
        %v7053 = vld [vmem:[#allocation4 + $0x98] sm:$0xff]
        %v7054 = vld [vmem:[#allocation4 + $0xa0] sm:$0x3]
        %v7055 = vld [vmem:[#allocation4 + $0xa8] sm:$0xff]
        %v7056 = vld [vmem:[#allocation4 + $0xb0] sm:$0xff]
        %v7057 = vld [vmem:[#allocation4 + $0xb8] sm:$0x3]
        %v7058 = vld [vmem:[#allocation4 + $0xc0] sm:$0xff]
        %v7059 = vld [vmem:[#allocation4 + $0xc8] sm:$0xff]
        %v7060 = vld [vmem:[#allocation4 + $0xd0] sm:$0x3]
        %v7061 = vld [vmem:[#allocation4 + $0xd8] sm:$0xff]
        %v7062 = vld [vmem:[#allocation4 + $0xe0] sm:$0xff]
        %v7063 = vld [vmem:[#allocation4 + $0xe8] sm:$0x3]
        %v7064 = vld [vmem:[#allocation4 + $0xf0] sm:$0xff]
        %v7065 = vld [vmem:[#allocation4 + $0xf8] sm:$0xff]
        %v7066 = vld [vmem:[#allocation4 + $0x100] sm:$0x3]
        %v7067 = vld [vmem:[#allocation4 + $0x108] sm:$0xff]
        %v7068 = vld [vmem:[#allocation4 + $0x110] sm:$0xff]
        %v7069 = vld [vmem:[#allocation4 + $0x118] sm:$0x3]
        %v7070 = vld [vmem:[#allocation4 + $0x120] sm:$0xff]
        %v7071 = vld [vmem:[#allocation4 + $0x128] sm:$0xff]
        %v7072 = vld [vmem:[#allocation4 + $0x130] sm:$0x3]
        %v7073 = vld [vmem:[#allocation4 + $0x138] sm:$0xff]
        %v7074 = vld [vmem:[#allocation4 + $0x140] sm:$0xff]
        %v7075 = vld [vmem:[#allocation4 + $0x148] sm:$0x3]
        %v7076 = vld [vmem:[#allocation4 + $0x150] sm:$0xff]
        %v7077 = vld [vmem:[#allocation4 + $0x158] sm:$0xff]
        %v7078 = vld [vmem:[#allocation4 + $0x160] sm:$0x3]
        %v7079 = vld [vmem:[#allocation4 + $0x168] sm:$0xff]
        %v7080 = vld [vmem:[#allocation4 + $0x170] sm:$0xff]
        %v7081 = vld [vmem:[#allocation4 + $0x178] sm:$0x3]
        %v7082 = vld [vmem:[#allocation4 + $0x180] sm:$0xff]
        %v7083 = vld [vmem:[#allocation4 + $0x188] sm:$0xff]
        %v7084 = vld [vmem:[#allocation4 + $0x190] sm:$0x3]
        %v7085 = vld [vmem:[#allocation4 + $0x198] sm:$0xff]
        %v7086 = vld [vmem:[#allocation4 + $0x1a0] sm:$0xff]
        %v7087 = vld [vmem:[#allocation4 + $0x1a8] sm:$0x3]
        %v7088 = vpack.c.bf16 %v7035, %v7034
        %v7089 = vpack.c.bf16 %v7036, %v7036
        %v7090 = vpack.c.bf16 %v7038, %v7037
        %v7091 = vpack.c.bf16 %v7039, %v7039
        %v7092 = vpack.c.bf16 %v7041, %v7040
        %v7093 = vpack.c.bf16 %v7042, %v7042
        %v7094 = vpack.c.bf16 %v7044, %v7043
        %v7095 = vpack.c.bf16 %v7045, %v7045
        %v7096 = vpack.c.bf16 %v7047, %v7046
        %v7097 = vpack.c.bf16 %v7048, %v7048
        %v7098 = vpack.c.bf16 %v7050, %v7049
        %v7099 = vpack.c.bf16 %v7051, %v7051
        %v7100 = vpack.c.bf16 %v7053, %v7052
        %v7101 = vpack.c.bf16 %v7054, %v7054
        %v7102 = vpack.c.bf16 %v7056, %v7055
        %v7103 = vpack.c.bf16 %v7057, %v7057
        %v7104 = vpack.c.bf16 %v7059, %v7058
        %v7105 = vpack.c.bf16 %v7060, %v7060
        %v7106 = vpack.c.bf16 %v7062, %v7061
        %v7107 = vpack.c.bf16 %v7063, %v7063
        %v7108 = vpack.c.bf16 %v7065, %v7064
        %v7109 = vpack.c.bf16 %v7066, %v7066
        %v7110 = vpack.c.bf16 %v7068, %v7067
        %v7111 = vpack.c.bf16 %v7069, %v7069
        %v7112 = vpack.c.bf16 %v7071, %v7070
        %v7113 = vpack.c.bf16 %v7072, %v7072
        %v7114 = vpack.c.bf16 %v7074, %v7073
        %v7115 = vpack.c.bf16 %v7075, %v7075
        %v7116 = vpack.c.bf16 %v7077, %v7076
        %v7117 = vpack.c.bf16 %v7078, %v7078
        %v7118 = vpack.c.bf16 %v7080, %v7079
        %v7119 = vpack.c.bf16 %v7081, %v7081
        %v7120 = vpack.c.bf16 %v7083, %v7082
        %v7121 = vpack.c.bf16 %v7084, %v7084
        %v7122 = vpack.c.bf16 %v7086, %v7085
        %v7123 = vpack.c.bf16 %v7087, %v7087
        %v7124 = vld [vmem:[%s4] sm:$0xf]
        %v7125 = vld [vmem:[%s4 + $0x4] sm:$0xf]
        %v7126 = vld [vmem:[%s4 + $0x8] sm:$0xf]
        %v7127 = vld [vmem:[%s4 + $0xc] sm:$0xf]
        %v7132 = vunpack.c.l.b16 %v7124
        %v7133 = vunpack.c.l.b16 %v7125
        %v7134 = vunpack.c.l.b16 %v7126
        %v7135 = vunpack.c.l.b16 %v7127
        %v7136 = vpack.c.b16 %v7133, %v7132
        %v7137 = vpack.c.b16 %v7135, %v7134
        %v7141 = vsel %vm1023, %v7088, 0
        %v7144 = vsel %vm1023, %v7090, 0
        %v7147 = vsel %vm1023, %v7092, 0
        %v7150 = vsel %vm1023, %v7094, 0
        %v7153 = vsel %vm1023, %v7096, 0
        %v7156 = vsel %vm1023, %v7098, 0
        %v7159 = vsel %vm1023, %v7100, 0
        %v7162 = vsel %vm1023, %v7102, 0
        %v7165 = vsel %vm1023, %v7104, 0
        %v7168 = vsel %vm1023, %v7106, 0
        %v7171 = vsel %vm1023, %v7108, 0
        %v7174 = vsel %vm1023, %v7110, 0
        %v7177 = vsel %vm1023, %v7112, 0
        %v7180 = vsel %vm1023, %v7114, 0
        %v7183 = vsel %vm1023, %v7116, 0
        %v7186 = vsel %vm1023, %v7118, 0
        %7188 = vmatprep.subr.bf16.mxu0 0
        %7189 = vmatpush1.bf16.msra.mxu0 %v7136
        %7190 = vmatprep.subr.bf16.mxu0 0
        %7191 = vmatpush1.bf16.msra.mxu0 %v7137
        %7192 = vmatprep.subr.bf16.mxu0 0
        %7193 = vmatpush1.bf16.msra.mxu0 0
        %7194 = vmatprep.subr.bf16.mxu0 0
        %7195 = vmatpush1.bf16.msra.mxu0 0
        %7196 = vmatprep.subr.bf16.mxu0 0
        %7197 = vmatpush1.bf16.msra.mxu0 0
        %7198 = vmatprep.subr.bf16.mxu0 0
        %7199 = vmatpush1.bf16.msra.mxu0 0
        %7200 = vmatprep.subr.bf16.mxu0 0
        %7201 = vmatpush1.bf16.msra.mxu0 0
        %7202 = vmatprep.subr.bf16.mxu0 0
        %7203 = vmatpush1.bf16.msra.mxu0 0
        %7204 = vmatprep.subr.bf16.mxu0 0
        %7205 = vmatpush1.bf16.msra.mxu0 0
        %7206 = vmatprep.subr.bf16.mxu0 0
        %7207 = vmatpush1.bf16.msra.mxu0 0
        %7208 = vmatprep.subr.bf16.mxu0 0
        %7209 = vmatpush1.bf16.msra.mxu0 0
        %7210 = vmatprep.subr.bf16.mxu0 0
        %7211 = vmatpush1.bf16.msra.mxu0 0
        %7212 = vmatprep.subr.bf16.mxu0 0
        %7213 = vmatpush1.bf16.msra.mxu0 0
        %7214 = vmatprep.subr.bf16.mxu0 0
        %7215 = vmatpush1.bf16.msra.mxu0 0
        %7216 = vmatprep.subr.bf16.mxu0 0
        %7217 = vmatpush1.bf16.msra.mxu0 0
        %7218 = vmatprep.subr.bf16.mxu0 0
        %7219 = vmatpush1.bf16.msra.mxu0 0
        %7220 = vmatprep.mubr.bf16.mxu0 0
        %7221 = vmatmul.mubr.bf16.gmra.mrb[0].mxu0 %v7141
        %v7222 = vpop.f32.mrb[0].mxu0
        %v7223 = vadd.f32 0.0, %v7222
        %v7224 = vpop.f32.mrb[0].mxu0
        %v7225 = vpop.f32.mrb[0].mxu0
        %v7226 = vadd.f32 0.0, %v7225
        %v7227 = vpop.f32.mrb[0].mxu0
        %7228 = vmatprep.mubr.bf16.mxu0 0
        %7229 = vmatmul.mubr.bf16.gmra.mrb[0].mxu0 %v7144
        %v7230 = vpop.f32.mrb[0].mxu0
        %v7231 = vadd.f32 0.0, %v7230
        %v7232 = vpop.f32.mrb[0].mxu0
        %v7233 = vpop.f32.mrb[0].mxu0
        %v7234 = vadd.f32 0.0, %v7233
        %v7235 = vpop.f32.mrb[0].mxu0
        %7236 = vmatprep.mubr.bf16.mxu0 0
        %7237 = vmatmul.mubr.bf16.gmra.mrb[0].mxu0 %v7147
        %v7238 = vpop.f32.mrb[0].mxu0
        %v7239 = vadd.f32 0.0, %v7238
        %v7240 = vpop.f32.mrb[0].mxu0
        %v7241 = vpop.f32.mrb[0].mxu0
        %v7242 = vadd.f32 0.0, %v7241
        %v7243 = vpop.f32.mrb[0].mxu0
        %7244 = vmatprep.mubr.bf16.mxu0 0
        %7245 = vmatmul.mubr.bf16.gmra.mrb[0].mxu0 %v7150
        %v7246 = vpop.f32.mrb[0].mxu0
        %v7247 = vadd.f32 0.0, %v7246
        %v7248 = vpop.f32.mrb[0].mxu0
        %v7249 = vpop.f32.mrb[0].mxu0
        %v7250 = vadd.f32 0.0, %v7249
        %v7251 = vpop.f32.mrb[0].mxu0
        %7252 = vmatprep.mubr.bf16.mxu0 0
        %7253 = vmatmul.mubr.bf16.gmra.mrb[0].mxu0 %v7153
        %v7254 = vpop.f32.mrb[0].mxu0
        %v7255 = vadd.f32 0.0, %v7254
        %v7256 = vpop.f32.mrb[0].mxu0
        %v7257 = vpop.f32.mrb[0].mxu0
        %v7258 = vadd.f32 0.0, %v7257
        %v7259 = vpop.f32.mrb[0].mxu0
        %7260 = vmatprep.mubr.bf16.mxu0 0
        %7261 = vmatmul.mubr.bf16.gmra.mrb[0].mxu0 %v7156
        %v7262 = vpop.f32.mrb[0].mxu0
        %v7263 = vadd.f32 0.0, %v7262
        %v7264 = vpop.f32.mrb[0].mxu0
        %v7265 = vpop.f32.mrb[0].mxu0
        %v7266 = vadd.f32 0.0, %v7265
        %v7267 = vpop.f32.mrb[0].mxu0
        %7268 = vmatprep.mubr.bf16.mxu0 0
        %7269 = vmatmul.mubr.bf16.gmra.mrb[0].mxu0 %v7159
        %v7270 = vpop.f32.mrb[0].mxu0
        %v7271 = vadd.f32 0.0, %v7270
        %v7272 = vpop.f32.mrb[0].mxu0
        %v7273 = vpop.f32.mrb[0].mxu0
        %v7274 = vadd.f32 0.0, %v7273
        %v7275 = vpop.f32.mrb[0].mxu0
        %7276 = vmatprep.mubr.bf16.mxu0 0
        %7277 = vmatmul.mubr.bf16.gmra.mrb[0].mxu0 %v7162
        %v7278 = vpop.f32.mrb[0].mxu0
        %v7279 = vadd.f32 0.0, %v7278
        %v7280 = vpop.f32.mrb[0].mxu0
        %v7281 = vpop.f32.mrb[0].mxu0
        %v7282 = vadd.f32 0.0, %v7281
        %v7283 = vpop.f32.mrb[0].mxu0
        %7284 = vmatprep.mubr.bf16.mxu0 0
        %7285 = vmatmul.mubr.bf16.gmra.mrb[0].mxu0 %v7165
        %v7286 = vpop.f32.mrb[0].mxu0
        %v7287 = vadd.f32 0.0, %v7286
        %v7288 = vpop.f32.mrb[0].mxu0
        %v7289 = vpop.f32.mrb[0].mxu0
        %v7290 = vadd.f32 0.0, %v7289
        %v7291 = vpop.f32.mrb[0].mxu0
        %7292 = vmatprep.mubr.bf16.mxu0 0
        %7293 = vmatmul.mubr.bf16.gmra.mrb[0].mxu0 %v7168
        %v7294 = vpop.f32.mrb[0].mxu0
        %v7295 = vadd.f32 0.0, %v7294
        %v7296 = vpop.f32.mrb[0].mxu0
        %v7297 = vpop.f32.mrb[0].mxu0
        %v7298 = vadd.f32 0.0, %v7297
        %v7299 = vpop.f32.mrb[0].mxu0
        %7300 = vmatprep.mubr.bf16.mxu0 0
        %7301 = vmatmul.mubr.bf16.gmra.mrb[0].mxu0 %v7171
        %v7302 = vpop.f32.mrb[0].mxu0
        %v7303 = vadd.f32 0.0, %v7302
        %v7304 = vpop.f32.mrb[0].mxu0
        %v7305 = vpop.f32.mrb[0].mxu0
        %v7306 = vadd.f32 0.0, %v7305
        %v7307 = vpop.f32.mrb[0].mxu0
        %7308 = vmatprep.mubr.bf16.mxu0 0
        %7309 = vmatmul.mubr.bf16.gmra.mrb[0].mxu0 %v7174
        %v7310 = vpop.f32.mrb[0].mxu0
        %v7311 = vadd.f32 0.0, %v7310
        %v7312 = vpop.f32.mrb[0].mxu0
        %v7313 = vpop.f32.mrb[0].mxu0
        %v7314 = vadd.f32 0.0, %v7313
        %v7315 = vpop.f32.mrb[0].mxu0
        %7316 = vmatprep.mubr.bf16.mxu0 0
        %7317 = vmatmul.mubr.bf16.gmra.mrb[0].mxu0 %v7177
        %v7318 = vpop.f32.mrb[0].mxu0
        %v7319 = vadd.f32 0.0, %v7318
        %v7320 = vpop.f32.mrb[0].mxu0
        %v7321 = vpop.f32.mrb[0].mxu0
        %v7322 = vadd.f32 0.0, %v7321
        %v7323 = vpop.f32.mrb[0].mxu0
        %7324 = vmatprep.mubr.bf16.mxu0 0
        %7325 = vmatmul.mubr.bf16.gmra.mrb[0].mxu0 %v7180
        %v7326 = vpop.f32.mrb[0].mxu0
        %v7327 = vadd.f32 0.0, %v7326
        %v7328 = vpop.f32.mrb[0].mxu0
        %v7329 = vpop.f32.mrb[0].mxu0
        %v7330 = vadd.f32 0.0, %v7329
        %v7331 = vpop.f32.mrb[0].mxu0
        %7332 = vmatprep.mubr.bf16.mxu0 0
        %7333 = vmatmul.mubr.bf16.gmra.mrb[0].mxu0 %v7183
        %v7334 = vpop.f32.mrb[0].mxu0
        %v7335 = vadd.f32 0.0, %v7334
        %v7336 = vpop.f32.mrb[0].mxu0
        %v7337 = vpop.f32.mrb[0].mxu0
        %v7338 = vadd.f32 0.0, %v7337
        %v7339 = vpop.f32.mrb[0].mxu0
        %7340 = vmatprep.mubr.bf16.mxu0 0
        %7341 = vmatmul.mubr.bf16.gmra.mrb[0].mxu0 %v7186
        %v7342 = vpop.f32.mrb[0].mxu0
        %v7343 = vadd.f32 0.0, %v7342
        %v7344 = vpop.f32.mrb[0].mxu0
        %v7345 = vpop.f32.mrb[0].mxu0
        %v7346 = vadd.f32 0.0, %v7345
        %v7347 = vpop.f32.mrb[0].mxu0
        %7348 = vdwg.mxu0
        %v7349 = vadd.f32 %v7002, %v7223
        %v7350 = vadd.f32 %v7003, %v7226
        %v7351 = vadd.f32 %v7004, %v7231
        %v7352 = vadd.f32 %v7005, %v7234
        %v7353 = vadd.f32 %v7006, %v7239
        %v7354 = vadd.f32 %v7007, %v7242
        %v7355 = vadd.f32 %v7008, %v7247
        %v7356 = vadd.f32 %v7009, %v7250
        %v7357 = vadd.f32 %v7010, %v7255
        %v7358 = vadd.f32 %v7011, %v7258
        %v7359 = vadd.f32 %v7012, %v7263
        %v7360 = vadd.f32 %v7013, %v7266
        %v7361 = vadd.f32 %v7014, %v7271
        %v7362 = vadd.f32 %v7015, %v7274
        %v7363 = vadd.f32 %v7016, %v7279
        %v7364 = vadd.f32 %v7017, %v7282
        %v7365 = vadd.f32 %v7018, %v7287
        %v7366 = vadd.f32 %v7019, %v7290
        %v7367 = vadd.f32 %v7020, %v7295
        %v7368 = vadd.f32 %v7021, %v7298
        %v7369 = vadd.f32 %v7022, %v7303
        %v7370 = vadd.f32 %v7023, %v7306
        %v7371 = vadd.f32 %v7024, %v7311
        %v7372 = vadd.f32 %v7025, %v7314
        %v7373 = vadd.f32 %v7026, %v7319
        %v7374 = vadd.f32 %v7027, %v7322
        %v7375 = vadd.f32 %v7028, %v7327
        %v7376 = vadd.f32 %v7029, %v7330
        %v7377 = vadd.f32 %v7030, %v7335
        %v7378 = vadd.f32 %v7031, %v7338
        %v7379 = vadd.f32 %v7032, %v7343
        %v7380 = vadd.f32 %v7033, %v7346
        %v7381 = vshrl.u32 %v7088, 16
        %v7383 = vshll.u32 %v7088, 16
        %v7385 = vrot.slane %v7383, 1
        %v7386 = vor.u32 %v7381, %v7385
        %v7388 = vshll.u32 %v7089, 16
        %v7390 = vrot.slane %v7388, 1
        %v7391 = vsel %vm1265, %v7386, %v7390
        %v7392 = vshrl.u32 %v7090, 16
        %v7394 = vshll.u32 %v7090, 16
        %v7396 = vrot.slane %v7394, 1
        %v7397 = vor.u32 %v7392, %v7396
        %v7399 = vshll.u32 %v7091, 16
        %v7401 = vrot.slane %v7399, 1
        %v7402 = vsel %vm1265, %v7397, %v7401
        %v7403 = vshrl.u32 %v7092, 16
        %v7405 = vshll.u32 %v7092, 16
        %v7407 = vrot.slane %v7405, 1
        %v7408 = vor.u32 %v7403, %v7407
        %v7410 = vshll.u32 %v7093, 16
        %v7412 = vrot.slane %v7410, 1
        %v7413 = vsel %vm1265, %v7408, %v7412
        %v7414 = vshrl.u32 %v7094, 16
        %v7416 = vshll.u32 %v7094, 16
        %v7418 = vrot.slane %v7416, 1
        %v7419 = vor.u32 %v7414, %v7418
        %v7421 = vshll.u32 %v7095, 16
        %v7423 = vrot.slane %v7421, 1
        %v7424 = vsel %vm1265, %v7419, %v7423
        %v7425 = vshrl.u32 %v7096, 16
        %v7427 = vshll.u32 %v7096, 16
        %v7429 = vrot.slane %v7427, 1
        %v7430 = vor.u32 %v7425, %v7429
        %v7432 = vshll.u32 %v7097, 16
        %v7434 = vrot.slane %v7432, 1
        %v7435 = vsel %vm1265, %v7430, %v7434
        %v7436 = vshrl.u32 %v7098, 16
        %v7438 = vshll.u32 %v7098, 16
        %v7440 = vrot.slane %v7438, 1
        %v7441 = vor.u32 %v7436, %v7440
        %v7443 = vshll.u32 %v7099, 16
        %v7445 = vrot.slane %v7443, 1
        %v7446 = vsel %vm1265, %v7441, %v7445
        %v7447 = vshrl.u32 %v7100, 16
        %v7449 = vshll.u32 %v7100, 16
        %v7451 = vrot.slane %v7449, 1
        %v7452 = vor.u32 %v7447, %v7451
        %v7454 = vshll.u32 %v7101, 16
        %v7456 = vrot.slane %v7454, 1
        %v7457 = vsel %vm1265, %v7452, %v7456
        %v7458 = vshrl.u32 %v7102, 16
        %v7460 = vshll.u32 %v7102, 16
        %v7462 = vrot.slane %v7460, 1
        %v7463 = vor.u32 %v7458, %v7462
        %v7465 = vshll.u32 %v7103, 16
        %v7467 = vrot.slane %v7465, 1
        %v7468 = vsel %vm1265, %v7463, %v7467
        %v7469 = vshrl.u32 %v7104, 16
        %v7471 = vshll.u32 %v7104, 16
        %v7473 = vrot.slane %v7471, 1
        %v7474 = vor.u32 %v7469, %v7473
        %v7476 = vshll.u32 %v7105, 16
        %v7478 = vrot.slane %v7476, 1
        %v7479 = vsel %vm1265, %v7474, %v7478
        %v7480 = vshrl.u32 %v7106, 16
        %v7482 = vshll.u32 %v7106, 16
        %v7484 = vrot.slane %v7482, 1
        %v7485 = vor.u32 %v7480, %v7484
        %v7487 = vshll.u32 %v7107, 16
        %v7489 = vrot.slane %v7487, 1
        %v7490 = vsel %vm1265, %v7485, %v7489
        %v7491 = vshrl.u32 %v7108, 16
        %v7493 = vshll.u32 %v7108, 16
        %v7495 = vrot.slane %v7493, 1
        %v7496 = vor.u32 %v7491, %v7495
        %v7498 = vshll.u32 %v7109, 16
        %v7500 = vrot.slane %v7498, 1
        %v7501 = vsel %vm1265, %v7496, %v7500
        %v7502 = vshrl.u32 %v7110, 16
        %v7504 = vshll.u32 %v7110, 16
        %v7506 = vrot.slane %v7504, 1
        %v7507 = vor.u32 %v7502, %v7506
        %v7509 = vshll.u32 %v7111, 16
        %v7511 = vrot.slane %v7509, 1
        %v7512 = vsel %vm1265, %v7507, %v7511
        %v7513 = vshrl.u32 %v7112, 16
        %v7515 = vshll.u32 %v7112, 16
        %v7517 = vrot.slane %v7515, 1
        %v7518 = vor.u32 %v7513, %v7517
        %v7520 = vshll.u32 %v7113, 16
        %v7522 = vrot.slane %v7520, 1
        %v7523 = vsel %vm1265, %v7518, %v7522
        %v7524 = vshrl.u32 %v7114, 16
        %v7526 = vshll.u32 %v7114, 16
        %v7528 = vrot.slane %v7526, 1
        %v7529 = vor.u32 %v7524, %v7528
        %v7531 = vshll.u32 %v7115, 16
        %v7533 = vrot.slane %v7531, 1
        %v7534 = vsel %vm1265, %v7529, %v7533
        %v7535 = vshrl.u32 %v7116, 16
        %v7537 = vshll.u32 %v7116, 16
        %v7539 = vrot.slane %v7537, 1
        %v7540 = vor.u32 %v7535, %v7539
        %v7542 = vshll.u32 %v7117, 16
        %v7544 = vrot.slane %v7542, 1
        %v7545 = vsel %vm1265, %v7540, %v7544
        %v7546 = vshrl.u32 %v7118, 16
        %v7548 = vshll.u32 %v7118, 16
        %v7550 = vrot.slane %v7548, 1
        %v7551 = vor.u32 %v7546, %v7550
        %v7553 = vshll.u32 %v7119, 16
        %v7555 = vrot.slane %v7553, 1
        %v7556 = vsel %vm1265, %v7551, %v7555
        %s7557 = scalar_lea.vmem %s4, 16
        %v7558 = vld [vmem:[%s7557] sm:$0xf]
        %v7559 = vld [vmem:[%s7557 + $0x4] sm:$0xf]
        %v7560 = vld [vmem:[%s7557 + $0x8] sm:$0xf]
        %v7561 = vld [vmem:[%s7557 + $0xc] sm:$0xf]
        %v7566 = vunpack.c.l.b16 %v7558
        %v7567 = vunpack.c.l.b16 %v7559
        %v7568 = vunpack.c.l.b16 %v7560
        %v7569 = vunpack.c.l.b16 %v7561
        %v7570 = vpack.c.b16 %v7567, %v7566
        %v7571 = vpack.c.b16 %v7569, %v7568
        %v7575 = vsel %vm1023, %v7391, 0
        %v7578 = vsel %vm1023, %v7402, 0
        %v7581 = vsel %vm1023, %v7413, 0
        %v7584 = vsel %vm1023, %v7424, 0
        %v7587 = vsel %vm1023, %v7435, 0
        %v7590 = vsel %vm1023, %v7446, 0
        %v7593 = vsel %vm1023, %v7457, 0
        %v7596 = vsel %vm1023, %v7468, 0
        %v7599 = vsel %vm1023, %v7479, 0
        %v7602 = vsel %vm1023, %v7490, 0
        %v7605 = vsel %vm1023, %v7501, 0
        %v7608 = vsel %vm1023, %v7512, 0
        %v7611 = vsel %vm1023, %v7523, 0
        %v7614 = vsel %vm1023, %v7534, 0
        %v7617 = vsel %vm1023, %v7545, 0
        %v7620 = vsel %vm1023, %v7556, 0
        %7622 = vmatprep.subr.bf16.mxu0 0
        %7623 = vmatpush1.bf16.msra.mxu0 %v7570
        %7624 = vmatprep.subr.bf16.mxu0 0
        %7625 = vmatpush1.bf16.msra.mxu0 %v7571
        %7626 = vmatprep.subr.bf16.mxu0 0
        %7627 = vmatpush1.bf16.msra.mxu0 0
        %7628 = vmatprep.subr.bf16.mxu0 0
        %7629 = vmatpush1.bf16.msra.mxu0 0
        %7630 = vmatprep.subr.bf16.mxu0 0
        %7631 = vmatpush1.bf16.msra.mxu0 0
        %7632 = vmatprep.subr.bf16.mxu0 0
        %7633 = vmatpush1.bf16.msra.mxu0 0
        %7634 = vmatprep.subr.bf16.mxu0 0
        %7635 = vmatpush1.bf16.msra.mxu0 0
        %7636 = vmatprep.subr.bf16.mxu0 0
        %7637 = vmatpush1.bf16.msra.mxu0 0
        %7638 = vmatprep.subr.bf16.mxu0 0
        %7639 = vmatpush1.bf16.msra.mxu0 0
        %7640 = vmatprep.subr.bf16.mxu0 0
        %7641 = vmatpush1.bf16.msra.mxu0 0
        %7642 = vmatprep.subr.bf16.mxu0 0
        %7643 = vmatpush1.bf16.msra.mxu0 0
        %7644 = vmatprep.subr.bf16.mxu0 0
        %7645 = vmatpush1.bf16.msra.mxu0 0
        %7646 = vmatprep.subr.bf16.mxu0 0
        %7647 = vmatpush1.bf16.msra.mxu0 0
        %7648 = vmatprep.subr.bf16.mxu0 0
        %7649 = vmatpush1.bf16.msra.mxu0 0
        %7650 = vmatprep.subr.bf16.mxu0 0
        %7651 = vmatpush1.bf16.msra.mxu0 0
        %7652 = vmatprep.subr.bf16.mxu0 0
        %7653 = vmatpush1.bf16.msra.mxu0 0
        %7654 = vmatprep.mubr.bf16.mxu0 0
        %7655 = vmatmul.mubr.bf16.gmra.mrb[0].mxu0 %v7575
        %v7656 = vpop.f32.mrb[0].mxu0
        %v7657 = vadd.f32 0.0, %v7656
        %v7658 = vpop.f32.mrb[0].mxu0
        %v7659 = vpop.f32.mrb[0].mxu0
        %v7660 = vadd.f32 0.0, %v7659
        %v7661 = vpop.f32.mrb[0].mxu0
        %7662 = vmatprep.mubr.bf16.mxu0 0
        %7663 = vmatmul.mubr.bf16.gmra.mrb[0].mxu0 %v7578
        %v7664 = vpop.f32.mrb[0].mxu0
        %v7665 = vadd.f32 0.0, %v7664
        %v7666 = vpop.f32.mrb[0].mxu0
        %v7667 = vpop.f32.mrb[0].mxu0
        %v7668 = vadd.f32 0.0, %v7667
        %v7669 = vpop.f32.mrb[0].mxu0
        %7670 = vmatprep.mubr.bf16.mxu0 0
        %7671 = vmatmul.mubr.bf16.gmra.mrb[0].mxu0 %v7581
        %v7672 = vpop.f32.mrb[0].mxu0
        %v7673 = vadd.f32 0.0, %v7672
        %v7674 = vpop.f32.mrb[0].mxu0
        %v7675 = vpop.f32.mrb[0].mxu0
        %v7676 = vadd.f32 0.0, %v7675
        %v7677 = vpop.f32.mrb[0].mxu0
        %7678 = vmatprep.mubr.bf16.mxu0 0
        %7679 = vmatmul.mubr.bf16.gmra.mrb[0].mxu0 %v7584
        %v7680 = vpop.f32.mrb[0].mxu0
        %v7681 = vadd.f32 0.0, %v7680
        %v7682 = vpop.f32.mrb[0].mxu0
        %v7683 = vpop.f32.mrb[0].mxu0
        %v7684 = vadd.f32 0.0, %v7683
        %v7685 = vpop.f32.mrb[0].mxu0
        %7686 = vmatprep.mubr.bf16.mxu0 0
        %7687 = vmatmul.mubr.bf16.gmra.mrb[0].mxu0 %v7587
        %v7688 = vpop.f32.mrb[0].mxu0
        %v7689 = vadd.f32 0.0, %v7688
        %v7690 = vpop.f32.mrb[0].mxu0
        %v7691 = vpop.f32.mrb[0].mxu0
        %v7692 = vadd.f32 0.0, %v7691
        %v7693 = vpop.f32.mrb[0].mxu0
        %7694 = vmatprep.mubr.bf16.mxu0 0
        %7695 = vmatmul.mubr.bf16.gmra.mrb[0].mxu0 %v7590
        %v7696 = vpop.f32.mrb[0].mxu0
        %v7697 = vadd.f32 0.0, %v7696
        %v7698 = vpop.f32.mrb[0].mxu0
        %v7699 = vpop.f32.mrb[0].mxu0
        %v7700 = vadd.f32 0.0, %v7699
        %v7701 = vpop.f32.mrb[0].mxu0
        %7702 = vmatprep.mubr.bf16.mxu0 0
        %7703 = vmatmul.mubr.bf16.gmra.mrb[0].mxu0 %v7593
        %v7704 = vpop.f32.mrb[0].mxu0
        %v7705 = vadd.f32 0.0, %v7704
        %v7706 = vpop.f32.mrb[0].mxu0
        %v7707 = vpop.f32.mrb[0].mxu0
        %v7708 = vadd.f32 0.0, %v7707
        %v7709 = vpop.f32.mrb[0].mxu0
        %7710 = vmatprep.mubr.bf16.mxu0 0
        %7711 = vmatmul.mubr.bf16.gmra.mrb[0].mxu0 %v7596
        %v7712 = vpop.f32.mrb[0].mxu0
        %v7713 = vadd.f32 0.0, %v7712
        %v7714 = vpop.f32.mrb[0].mxu0
        %v7715 = vpop.f32.mrb[0].mxu0
        %v7716 = vadd.f32 0.0, %v7715
        %v7717 = vpop.f32.mrb[0].mxu0
        %7718 = vmatprep.mubr.bf16.mxu0 0
        %7719 = vmatmul.mubr.bf16.gmra.mrb[0].mxu0 %v7599
        %v7720 = vpop.f32.mrb[0].mxu0
        %v7721 = vadd.f32 0.0, %v7720
        %v7722 = vpop.f32.mrb[0].mxu0
        %v7723 = vpop.f32.mrb[0].mxu0
        %v7724 = vadd.f32 0.0, %v7723
        %v7725 = vpop.f32.mrb[0].mxu0
        %7726 = vmatprep.mubr.bf16.mxu0 0
        %7727 = vmatmul.mubr.bf16.gmra.mrb[0].mxu0 %v7602
        %v7728 = vpop.f32.mrb[0].mxu0
        %v7729 = vadd.f32 0.0, %v7728
        %v7730 = vpop.f32.mrb[0].mxu0
        %v7731 = vpop.f32.mrb[0].mxu0
        %v7732 = vadd.f32 0.0, %v7731
        %v7733 = vpop.f32.mrb[0].mxu0
        %7734 = vmatprep.mubr.bf16.mxu0 0
        %7735 = vmatmul.mubr.bf16.gmra.mrb[0].mxu0 %v7605
        %v7736 = vpop.f32.mrb[0].mxu0
        %v7737 = vadd.f32 0.0, %v7736
        %v7738 = vpop.f32.mrb[0].mxu0
        %v7739 = vpop.f32.mrb[0].mxu0
        %v7740 = vadd.f32 0.0, %v7739
        %v7741 = vpop.f32.mrb[0].mxu0
        %7742 = vmatprep.mubr.bf16.mxu0 0
        %7743 = vmatmul.mubr.bf16.gmra.mrb[0].mxu0 %v7608
        %v7744 = vpop.f32.mrb[0].mxu0
        %v7745 = vadd.f32 0.0, %v7744
        %v7746 = vpop.f32.mrb[0].mxu0
        %v7747 = vpop.f32.mrb[0].mxu0
        %v7748 = vadd.f32 0.0, %v7747
        %v7749 = vpop.f32.mrb[0].mxu0
        %7750 = vmatprep.mubr.bf16.mxu0 0
        %7751 = vmatmul.mubr.bf16.gmra.mrb[0].mxu0 %v7611
        %v7752 = vpop.f32.mrb[0].mxu0
        %v7753 = vadd.f32 0.0, %v7752
        %v7754 = vpop.f32.mrb[0].mxu0
        %v7755 = vpop.f32.mrb[0].mxu0
        %v7756 = vadd.f32 0.0, %v7755
        %v7757 = vpop.f32.mrb[0].mxu0
        %7758 = vmatprep.mubr.bf16.mxu0 0
        %7759 = vmatmul.mubr.bf16.gmra.mrb[0].mxu0 %v7614
        %v7760 = vpop.f32.mrb[0].mxu0
        %v7761 = vadd.f32 0.0, %v7760
        %v7762 = vpop.f32.mrb[0].mxu0
        %v7763 = vpop.f32.mrb[0].mxu0
        %v7764 = vadd.f32 0.0, %v7763
        %v7765 = vpop.f32.mrb[0].mxu0
        %7766 = vmatprep.mubr.bf16.mxu0 0
        %7767 = vmatmul.mubr.bf16.gmra.mrb[0].mxu0 %v7617
        %v7768 = vpop.f32.mrb[0].mxu0
        %v7769 = vadd.f32 0.0, %v7768
        %v7770 = vpop.f32.mrb[0].mxu0
        %v7771 = vpop.f32.mrb[0].mxu0
        %v7772 = vadd.f32 0.0, %v7771
        %v7773 = vpop.f32.mrb[0].mxu0
        %7774 = vmatprep.mubr.bf16.mxu0 0
        %7775 = vmatmul.mubr.bf16.gmra.mrb[0].mxu0 %v7620
        %v7776 = vpop.f32.mrb[0].mxu0
        %v7777 = vadd.f32 0.0, %v7776
        %v7778 = vpop.f32.mrb[0].mxu0
        %v7779 = vpop.f32.mrb[0].mxu0
        %v7780 = vadd.f32 0.0, %v7779
        %v7781 = vpop.f32.mrb[0].mxu0
        %7782 = vdwg.mxu0
        %v7783 = vadd.f32 %v7349, %v7657
        %v7784 = vadd.f32 %v7350, %v7660
        %v7785 = vadd.f32 %v7351, %v7665
        %v7786 = vadd.f32 %v7352, %v7668
        %v7787 = vadd.f32 %v7353, %v7673
        %v7788 = vadd.f32 %v7354, %v7676
        %v7789 = vadd.f32 %v7355, %v7681
        %v7790 = vadd.f32 %v7356, %v7684
        %v7791 = vadd.f32 %v7357, %v7689
        %v7792 = vadd.f32 %v7358, %v7692
        %v7793 = vadd.f32 %v7359, %v7697
        %v7794 = vadd.f32 %v7360, %v7700
        %v7795 = vadd.f32 %v7361, %v7705
        %v7796 = vadd.f32 %v7362, %v7708
        %v7797 = vadd.f32 %v7363, %v7713
        %v7798 = vadd.f32 %v7364, %v7716
        %v7799 = vadd.f32 %v7365, %v7721
        %v7800 = vadd.f32 %v7366, %v7724
        %v7801 = vadd.f32 %v7367, %v7729
        %v7802 = vadd.f32 %v7368, %v7732
        %v7803 = vadd.f32 %v7369, %v7737
        %v7804 = vadd.f32 %v7370, %v7740
        %v7805 = vadd.f32 %v7371, %v7745
        %v7806 = vadd.f32 %v7372, %v7748
        %v7807 = vadd.f32 %v7373, %v7753
        %v7808 = vadd.f32 %v7374, %v7756
        %v7809 = vadd.f32 %v7375, %v7761
        %v7810 = vadd.f32 %v7376, %v7764
        %v7811 = vadd.f32 %v7377, %v7769
        %v7812 = vadd.f32 %v7378, %v7772
        %v7813 = vadd.f32 %v7379, %v7777
        %v7814 = vadd.f32 %v7380, %v7780
        %v7847 = vrot.slane %v7088, 1
        %v7848 = vrot.slane %v7089, 1
        %v7849 = vsel %vm1732, %v7847, %v7848
        %v7850 = vrot.slane %v7090, 1
        %v7851 = vrot.slane %v7091, 1
        %v7852 = vsel %vm1732, %v7850, %v7851
        %v7853 = vrot.slane %v7092, 1
        %v7854 = vrot.slane %v7093, 1
        %v7855 = vsel %vm1732, %v7853, %v7854
        %v7856 = vrot.slane %v7094, 1
        %v7857 = vrot.slane %v7095, 1
        %v7858 = vsel %vm1732, %v7856, %v7857
        %v7859 = vrot.slane %v7096, 1
        %v7860 = vrot.slane %v7097, 1
        %v7861 = vsel %vm1732, %v7859, %v7860
        %v7862 = vrot.slane %v7098, 1
        %v7863 = vrot.slane %v7099, 1
        %v7864 = vsel %vm1732, %v7862, %v7863
        %v7865 = vrot.slane %v7100, 1
        %v7866 = vrot.slane %v7101, 1
        %v7867 = vsel %vm1732, %v7865, %v7866
        %v7868 = vrot.slane %v7102, 1
        %v7869 = vrot.slane %v7103, 1
        %v7870 = vsel %vm1732, %v7868, %v7869
        %v7871 = vrot.slane %v7104, 1
        %v7872 = vrot.slane %v7105, 1
        %v7873 = vsel %vm1732, %v7871, %v7872
        %v7874 = vrot.slane %v7106, 1
        %v7875 = vrot.slane %v7107, 1
        %v7876 = vsel %vm1732, %v7874, %v7875
        %v7877 = vrot.slane %v7108, 1
        %v7878 = vrot.slane %v7109, 1
        %v7879 = vsel %vm1732, %v7877, %v7878
        %v7880 = vrot.slane %v7110, 1
        %v7881 = vrot.slane %v7111, 1
        %v7882 = vsel %vm1732, %v7880, %v7881
        %v7883 = vrot.slane %v7112, 1
        %v7884 = vrot.slane %v7113, 1
        %v7885 = vsel %vm1732, %v7883, %v7884
        %v7886 = vrot.slane %v7114, 1
        %v7887 = vrot.slane %v7115, 1
        %v7888 = vsel %vm1732, %v7886, %v7887
        %v7889 = vrot.slane %v7116, 1
        %v7890 = vrot.slane %v7117, 1
        %v7891 = vsel %vm1732, %v7889, %v7890
        %v7892 = vrot.slane %v7118, 1
        %v7893 = vrot.slane %v7119, 1
        %v7894 = vsel %vm1732, %v7892, %v7893
        %s7895 = scalar_lea.vmem %s4, 32
        %v7896 = vld [vmem:[%s7895] sm:$0xf]
        %v7897 = vld [vmem:[%s7895 + $0x4] sm:$0xf]
        %v7898 = vld [vmem:[%s7895 + $0x8] sm:$0xf]
        %v7899 = vld [vmem:[%s7895 + $0xc] sm:$0xf]
        %v7904 = vunpack.c.l.b16 %v7896
        %v7905 = vunpack.c.l.b16 %v7897
        %v7906 = vunpack.c.l.b16 %v7898
        %v7907 = vunpack.c.l.b16 %v7899
        %v7908 = vpack.c.b16 %v7905, %v7904
        %v7909 = vpack.c.b16 %v7907, %v7906
        %v7913 = vsel %vm1023, %v7849, 0
        %v7916 = vsel %vm1023, %v7852, 0
        %v7919 = vsel %vm1023, %v7855, 0
        %v7922 = vsel %vm1023, %v7858, 0
        %v7925 = vsel %vm1023, %v7861, 0
        %v7928 = vsel %vm1023, %v7864, 0
        %v7931 = vsel %vm1023, %v7867, 0
        %v7934 = vsel %vm1023, %v7870, 0
        %v7937 = vsel %vm1023, %v7873, 0
        %v7940 = vsel %vm1023, %v7876, 0
        %v7943 = vsel %vm1023, %v7879, 0
        %v7946 = vsel %vm1023, %v7882, 0
        %v7949 = vsel %vm1023, %v7885, 0
        %v7952 = vsel %vm1023, %v7888, 0
        %v7955 = vsel %vm1023, %v7891, 0
        %v7958 = vsel %vm1023, %v7894, 0
        %7960 = vmatprep.subr.bf16.mxu0 0
        %7961 = vmatpush1.bf16.msra.mxu0 %v7908
        %7962 = vmatprep.subr.bf16.mxu0 0
        %7963 = vmatpush1.bf16.msra.mxu0 %v7909
        %7964 = vmatprep.subr.bf16.mxu0 0
        %7965 = vmatpush1.bf16.msra.mxu0 0
        %7966 = vmatprep.subr.bf16.mxu0 0
        %7967 = vmatpush1.bf16.msra.mxu0 0
        %7968 = vmatprep.subr.bf16.mxu0 0
        %7969 = vmatpush1.bf16.msra.mxu0 0
        %7970 = vmatprep.subr.bf16.mxu0 0
        %7971 = vmatpush1.bf16.msra.mxu0 0
        %7972 = vmatprep.subr.bf16.mxu0 0
        %7973 = vmatpush1.bf16.msra.mxu0 0
        %7974 = vmatprep.subr.bf16.mxu0 0
        %7975 = vmatpush1.bf16.msra.mxu0 0
        %7976 = vmatprep.subr.bf16.mxu0 0
        %7977 = vmatpush1.bf16.msra.mxu0 0
        %7978 = vmatprep.subr.bf16.mxu0 0
        %7979 = vmatpush1.bf16.msra.mxu0 0
        %7980 = vmatprep.subr.bf16.mxu0 0
        %7981 = vmatpush1.bf16.msra.mxu0 0
        %7982 = vmatprep.subr.bf16.mxu0 0
        %7983 = vmatpush1.bf16.msra.mxu0 0
        %7984 = vmatprep.subr.bf16.mxu0 0
        %7985 = vmatpush1.bf16.msra.mxu0 0
        %7986 = vmatprep.subr.bf16.mxu0 0
        %7987 = vmatpush1.bf16.msra.mxu0 0
        %7988 = vmatprep.subr.bf16.mxu0 0
        %7989 = vmatpush1.bf16.msra.mxu0 0
        %7990 = vmatprep.subr.bf16.mxu0 0
        %7991 = vmatpush1.bf16.msra.mxu0 0
        %7992 = vmatprep.mubr.bf16.mxu0 0
        %7993 = vmatmul.mubr.bf16.gmra.mrb[0].mxu0 %v7913
        %v7994 = vpop.f32.mrb[0].mxu0
        %v7995 = vadd.f32 0.0, %v7994
        %v7996 = vpop.f32.mrb[0].mxu0
        %v7997 = vpop.f32.mrb[0].mxu0
        %v7998 = vadd.f32 0.0, %v7997
        %v7999 = vpop.f32.mrb[0].mxu0
        %8000 = vmatprep.mubr.bf16.mxu0 0
        %8001 = vmatmul.mubr.bf16.gmra.mrb[0].mxu0 %v7916
        %v8002 = vpop.f32.mrb[0].mxu0
        %v8003 = vadd.f32 0.0, %v8002
        %v8004 = vpop.f32.mrb[0].mxu0
        %v8005 = vpop.f32.mrb[0].mxu0
        %v8006 = vadd.f32 0.0, %v8005
        %v8007 = vpop.f32.mrb[0].mxu0
        %8008 = vmatprep.mubr.bf16.mxu0 0
        %8009 = vmatmul.mubr.bf16.gmra.mrb[0].mxu0 %v7919
        %v8010 = vpop.f32.mrb[0].mxu0
        %v8011 = vadd.f32 0.0, %v8010
        %v8012 = vpop.f32.mrb[0].mxu0
        %v8013 = vpop.f32.mrb[0].mxu0
        %v8014 = vadd.f32 0.0, %v8013
        %v8015 = vpop.f32.mrb[0].mxu0
        %8016 = vmatprep.mubr.bf16.mxu0 0
        %8017 = vmatmul.mubr.bf16.gmra.mrb[0].mxu0 %v7922
        %v8018 = vpop.f32.mrb[0].mxu0
        %v8019 = vadd.f32 0.0, %v8018
        %v8020 = vpop.f32.mrb[0].mxu0
        %v8021 = vpop.f32.mrb[0].mxu0
        %v8022 = vadd.f32 0.0, %v8021
        %v8023 = vpop.f32.mrb[0].mxu0
        %8024 = vmatprep.mubr.bf16.mxu0 0
        %8025 = vmatmul.mubr.bf16.gmra.mrb[0].mxu0 %v7925
        %v8026 = vpop.f32.mrb[0].mxu0
        %v8027 = vadd.f32 0.0, %v8026
        %v8028 = vpop.f32.mrb[0].mxu0
        %v8029 = vpop.f32.mrb[0].mxu0
        %v8030 = vadd.f32 0.0, %v8029
        %v8031 = vpop.f32.mrb[0].mxu0
        %8032 = vmatprep.mubr.bf16.mxu0 0
        %8033 = vmatmul.mubr.bf16.gmra.mrb[0].mxu0 %v7928
        %v8034 = vpop.f32.mrb[0].mxu0
        %v8035 = vadd.f32 0.0, %v8034
        %v8036 = vpop.f32.mrb[0].mxu0
        %v8037 = vpop.f32.mrb[0].mxu0
        %v8038 = vadd.f32 0.0, %v8037
        %v8039 = vpop.f32.mrb[0].mxu0
        %8040 = vmatprep.mubr.bf16.mxu0 0
        %8041 = vmatmul.mubr.bf16.gmra.mrb[0].mxu0 %v7931
        %v8042 = vpop.f32.mrb[0].mxu0
        %v8043 = vadd.f32 0.0, %v8042
        %v8044 = vpop.f32.mrb[0].mxu0
        %v8045 = vpop.f32.mrb[0].mxu0
        %v8046 = vadd.f32 0.0, %v8045
        %v8047 = vpop.f32.mrb[0].mxu0
        %8048 = vmatprep.mubr.bf16.mxu0 0
        %8049 = vmatmul.mubr.bf16.gmra.mrb[0].mxu0 %v7934
        %v8050 = vpop.f32.mrb[0].mxu0
        %v8051 = vadd.f32 0.0, %v8050
        %v8052 = vpop.f32.mrb[0].mxu0
        %v8053 = vpop.f32.mrb[0].mxu0
        %v8054 = vadd.f32 0.0, %v8053
        %v8055 = vpop.f32.mrb[0].mxu0
        %8056 = vmatprep.mubr.bf16.mxu0 0
        %8057 = vmatmul.mubr.bf16.gmra.mrb[0].mxu0 %v7937
        %v8058 = vpop.f32.mrb[0].mxu0
        %v8059 = vadd.f32 0.0, %v8058
        %v8060 = vpop.f32.mrb[0].mxu0
        %v8061 = vpop.f32.mrb[0].mxu0
        %v8062 = vadd.f32 0.0, %v8061
        %v8063 = vpop.f32.mrb[0].mxu0
        %8064 = vmatprep.mubr.bf16.mxu0 0
        %8065 = vmatmul.mubr.bf16.gmra.mrb[0].mxu0 %v7940
        %v8066 = vpop.f32.mrb[0].mxu0
        %v8067 = vadd.f32 0.0, %v8066
        %v8068 = vpop.f32.mrb[0].mxu0
        %v8069 = vpop.f32.mrb[0].mxu0
        %v8070 = vadd.f32 0.0, %v8069
        %v8071 = vpop.f32.mrb[0].mxu0
        %8072 = vmatprep.mubr.bf16.mxu0 0
        %8073 = vmatmul.mubr.bf16.gmra.mrb[0].mxu0 %v7943
        %v8074 = vpop.f32.mrb[0].mxu0
        %v8075 = vadd.f32 0.0, %v8074
        %v8076 = vpop.f32.mrb[0].mxu0
        %v8077 = vpop.f32.mrb[0].mxu0
        %v8078 = vadd.f32 0.0, %v8077
        %v8079 = vpop.f32.mrb[0].mxu0
        %8080 = vmatprep.mubr.bf16.mxu0 0
        %8081 = vmatmul.mubr.bf16.gmra.mrb[0].mxu0 %v7946
        %v8082 = vpop.f32.mrb[0].mxu0
        %v8083 = vadd.f32 0.0, %v8082
        %v8084 = vpop.f32.mrb[0].mxu0
        %v8085 = vpop.f32.mrb[0].mxu0
        %v8086 = vadd.f32 0.0, %v8085
        %v8087 = vpop.f32.mrb[0].mxu0
        %8088 = vmatprep.mubr.bf16.mxu0 0
        %8089 = vmatmul.mubr.bf16.gmra.mrb[0].mxu0 %v7949
        %v8090 = vpop.f32.mrb[0].mxu0
        %v8091 = vadd.f32 0.0, %v8090
        %v8092 = vpop.f32.mrb[0].mxu0
        %v8093 = vpop.f32.mrb[0].mxu0
        %v8094 = vadd.f32 0.0, %v8093
        %v8095 = vpop.f32.mrb[0].mxu0
        %8096 = vmatprep.mubr.bf16.mxu0 0
        %8097 = vmatmul.mubr.bf16.gmra.mrb[0].mxu0 %v7952
        %v8098 = vpop.f32.mrb[0].mxu0
        %v8099 = vadd.f32 0.0, %v8098
        %v8100 = vpop.f32.mrb[0].mxu0
        %v8101 = vpop.f32.mrb[0].mxu0
        %v8102 = vadd.f32 0.0, %v8101
        %v8103 = vpop.f32.mrb[0].mxu0
        %8104 = vmatprep.mubr.bf16.mxu0 0
        %8105 = vmatmul.mubr.bf16.gmra.mrb[0].mxu0 %v7955
        %v8106 = vpop.f32.mrb[0].mxu0
        %v8107 = vadd.f32 0.0, %v8106
        %v8108 = vpop.f32.mrb[0].mxu0
        %v8109 = vpop.f32.mrb[0].mxu0
        %v8110 = vadd.f32 0.0, %v8109
        %v8111 = vpop.f32.mrb[0].mxu0
        %8112 = vmatprep.mubr.bf16.mxu0 0
        %8113 = vmatmul.mubr.bf16.gmra.mrb[0].mxu0 %v7958
        %v8114 = vpop.f32.mrb[0].mxu0
        %v8115 = vadd.f32 0.0, %v8114
        %v8116 = vpop.f32.mrb[0].mxu0
        %v8117 = vpop.f32.mrb[0].mxu0
        %v8118 = vadd.f32 0.0, %v8117
        %v8119 = vpop.f32.mrb[0].mxu0
        %8120 = vdwg.mxu0
        %v8121 = vadd.f32 %v7783, %v7995
        %v8122 = vadd.f32 %v7784, %v7998
        %v8123 = vadd.f32 %v7785, %v8003
        %v8124 = vadd.f32 %v7786, %v8006
        %v8125 = vadd.f32 %v7787, %v8011
        %v8126 = vadd.f32 %v7788, %v8014
        %v8127 = vadd.f32 %v7789, %v8019
        %v8128 = vadd.f32 %v7790, %v8022
        %v8129 = vadd.f32 %v7791, %v8027
        %v8130 = vadd.f32 %v7792, %v8030
        %v8131 = vadd.f32 %v7793, %v8035
        %v8132 = vadd.f32 %v7794, %v8038
        %v8133 = vadd.f32 %v7795, %v8043
        %v8134 = vadd.f32 %v7796, %v8046
        %v8135 = vadd.f32 %v7797, %v8051
        %v8136 = vadd.f32 %v7798, %v8054
        %v8137 = vadd.f32 %v7799, %v8059
        %v8138 = vadd.f32 %v7800, %v8062
        %v8139 = vadd.f32 %v7801, %v8067
        %v8140 = vadd.f32 %v7802, %v8070
        %v8141 = vadd.f32 %v7803, %v8075
        %v8142 = vadd.f32 %v7804, %v8078
        %v8143 = vadd.f32 %v7805, %v8083
        %v8144 = vadd.f32 %v7806, %v8086
        %v8145 = vadd.f32 %v7807, %v8091
        %v8146 = vadd.f32 %v7808, %v8094
        %v8147 = vadd.f32 %v7809, %v8099
        %v8148 = vadd.f32 %v7810, %v8102
        %v8149 = vadd.f32 %v7811, %v8107
        %v8150 = vadd.f32 %v7812, %v8110
        %v8151 = vadd.f32 %v7813, %v8115
        %v8152 = vadd.f32 %v7814, %v8118
        %s8153 = scalar_lea.vmem %s4, 48
        %v8154 = vld [vmem:[%s8153] sm:$0xf]
        %v8155 = vld [vmem:[%s8153 + $0x4] sm:$0xf]
        %v8156 = vld [vmem:[%s8153 + $0x8] sm:$0xf]
        %v8157 = vld [vmem:[%s8153 + $0xc] sm:$0xf]
        %v8162 = vunpack.c.l.b16 %v8154
        %v8163 = vunpack.c.l.b16 %v8155
        %v8164 = vunpack.c.l.b16 %v8156
        %v8165 = vunpack.c.l.b16 %v8157
        %v8166 = vpack.c.b16 %v8163, %v8162
        %v8167 = vpack.c.b16 %v8165, %v8164
        %v8171 = vsel %vm1023, %v7120, 0
        %8173 = vmatprep.subr.bf16.mxu0 0
        %8174 = vmatpush1.bf16.msra.mxu0 %v8166
        %8175 = vmatprep.subr.bf16.mxu0 0
        %8176 = vmatpush1.bf16.msra.mxu0 %v8167
        %8177 = vmatprep.subr.bf16.mxu0 0
        %8178 = vmatpush1.bf16.msra.mxu0 0
        %8179 = vmatprep.subr.bf16.mxu0 0
        %8180 = vmatpush1.bf16.msra.mxu0 0
        %8181 = vmatprep.subr.bf16.mxu0 0
        %8182 = vmatpush1.bf16.msra.mxu0 0
        %8183 = vmatprep.subr.bf16.mxu0 0
        %8184 = vmatpush1.bf16.msra.mxu0 0
        %8185 = vmatprep.subr.bf16.mxu0 0
        %8186 = vmatpush1.bf16.msra.mxu0 0
        %8187 = vmatprep.subr.bf16.mxu0 0
        %8188 = vmatpush1.bf16.msra.mxu0 0
        %8189 = vmatprep.subr.bf16.mxu0 0
        %8190 = vmatpush1.bf16.msra.mxu0 0
        %8191 = vmatprep.subr.bf16.mxu0 0
        %8192 = vmatpush1.bf16.msra.mxu0 0
        %8193 = vmatprep.subr.bf16.mxu0 0
        %8194 = vmatpush1.bf16.msra.mxu0 0
        %8195 = vmatprep.subr.bf16.mxu0 0
        %8196 = vmatpush1.bf16.msra.mxu0 0
        %8197 = vmatprep.subr.bf16.mxu0 0
        %8198 = vmatpush1.bf16.msra.mxu0 0
        %8199 = vmatprep.subr.bf16.mxu0 0
        %8200 = vmatpush1.bf16.msra.mxu0 0
        %8201 = vmatprep.subr.bf16.mxu0 0
        %8202 = vmatpush1.bf16.msra.mxu0 0
        %8203 = vmatprep.subr.bf16.mxu0 0
        %8204 = vmatpush1.bf16.msra.mxu0 0
        %8205 = vmatprep.mubr.bf16.mxu0 0
        %8206 = vmatmul.mubr.bf16.gmra.mrb[0].mxu0 %v7144
        %v8207 = vpop.f32.mrb[0].mxu0
        %v8208 = vadd.f32 0.0, %v8207
        %v8209 = vpop.f32.mrb[0].mxu0
        %v8210 = vpop.f32.mrb[0].mxu0
        %v8211 = vadd.f32 0.0, %v8210
        %v8212 = vpop.f32.mrb[0].mxu0
        %8213 = vmatprep.mubr.bf16.mxu0 0
        %8214 = vmatmul.mubr.bf16.gmra.mrb[0].mxu0 %v7147
        %v8215 = vpop.f32.mrb[0].mxu0
        %v8216 = vadd.f32 0.0, %v8215
        %v8217 = vpop.f32.mrb[0].mxu0
        %v8218 = vpop.f32.mrb[0].mxu0
        %v8219 = vadd.f32 0.0, %v8218
        %v8220 = vpop.f32.mrb[0].mxu0
        %8221 = vmatprep.mubr.bf16.mxu0 0
        %8222 = vmatmul.mubr.bf16.gmra.mrb[0].mxu0 %v7150
        %v8223 = vpop.f32.mrb[0].mxu0
        %v8224 = vadd.f32 0.0, %v8223
        %v8225 = vpop.f32.mrb[0].mxu0
        %v8226 = vpop.f32.mrb[0].mxu0
        %v8227 = vadd.f32 0.0, %v8226
        %v8228 = vpop.f32.mrb[0].mxu0
        %8229 = vmatprep.mubr.bf16.mxu0 0
        %8230 = vmatmul.mubr.bf16.gmra.mrb[0].mxu0 %v7153
        %v8231 = vpop.f32.mrb[0].mxu0
        %v8232 = vadd.f32 0.0, %v8231
        %v8233 = vpop.f32.mrb[0].mxu0
        %v8234 = vpop.f32.mrb[0].mxu0
        %v8235 = vadd.f32 0.0, %v8234
        %v8236 = vpop.f32.mrb[0].mxu0
        %8237 = vmatprep.mubr.bf16.mxu0 0
        %8238 = vmatmul.mubr.bf16.gmra.mrb[0].mxu0 %v7156
        %v8239 = vpop.f32.mrb[0].mxu0
        %v8240 = vadd.f32 0.0, %v8239
        %v8241 = vpop.f32.mrb[0].mxu0
        %v8242 = vpop.f32.mrb[0].mxu0
        %v8243 = vadd.f32 0.0, %v8242
        %v8244 = vpop.f32.mrb[0].mxu0
        %8245 = vmatprep.mubr.bf16.mxu0 0
        %8246 = vmatmul.mubr.bf16.gmra.mrb[0].mxu0 %v7159
        %v8247 = vpop.f32.mrb[0].mxu0
        %v8248 = vadd.f32 0.0, %v8247
        %v8249 = vpop.f32.mrb[0].mxu0
        %v8250 = vpop.f32.mrb[0].mxu0
        %v8251 = vadd.f32 0.0, %v8250
        %v8252 = vpop.f32.mrb[0].mxu0
        %8253 = vmatprep.mubr.bf16.mxu0 0
        %8254 = vmatmul.mubr.bf16.gmra.mrb[0].mxu0 %v7162
        %v8255 = vpop.f32.mrb[0].mxu0
        %v8256 = vadd.f32 0.0, %v8255
        %v8257 = vpop.f32.mrb[0].mxu0
        %v8258 = vpop.f32.mrb[0].mxu0
        %v8259 = vadd.f32 0.0, %v8258
        %v8260 = vpop.f32.mrb[0].mxu0
        %8261 = vmatprep.mubr.bf16.mxu0 0
        %8262 = vmatmul.mubr.bf16.gmra.mrb[0].mxu0 %v7165
        %v8263 = vpop.f32.mrb[0].mxu0
        %v8264 = vadd.f32 0.0, %v8263
        %v8265 = vpop.f32.mrb[0].mxu0
        %v8266 = vpop.f32.mrb[0].mxu0
        %v8267 = vadd.f32 0.0, %v8266
        %v8268 = vpop.f32.mrb[0].mxu0
        %8269 = vmatprep.mubr.bf16.mxu0 0
        %8270 = vmatmul.mubr.bf16.gmra.mrb[0].mxu0 %v7168
        %v8271 = vpop.f32.mrb[0].mxu0
        %v8272 = vadd.f32 0.0, %v8271
        %v8273 = vpop.f32.mrb[0].mxu0
        %v8274 = vpop.f32.mrb[0].mxu0
        %v8275 = vadd.f32 0.0, %v8274
        %v8276 = vpop.f32.mrb[0].mxu0
        %8277 = vmatprep.mubr.bf16.mxu0 0
        %8278 = vmatmul.mubr.bf16.gmra.mrb[0].mxu0 %v7171
        %v8279 = vpop.f32.mrb[0].mxu0
        %v8280 = vadd.f32 0.0, %v8279
        %v8281 = vpop.f32.mrb[0].mxu0
        %v8282 = vpop.f32.mrb[0].mxu0
        %v8283 = vadd.f32 0.0, %v8282
        %v8284 = vpop.f32.mrb[0].mxu0
        %8285 = vmatprep.mubr.bf16.mxu0 0
        %8286 = vmatmul.mubr.bf16.gmra.mrb[0].mxu0 %v7174
        %v8287 = vpop.f32.mrb[0].mxu0
        %v8288 = vadd.f32 0.0, %v8287
        %v8289 = vpop.f32.mrb[0].mxu0
        %v8290 = vpop.f32.mrb[0].mxu0
        %v8291 = vadd.f32 0.0, %v8290
        %v8292 = vpop.f32.mrb[0].mxu0
        %8293 = vmatprep.mubr.bf16.mxu0 0
        %8294 = vmatmul.mubr.bf16.gmra.mrb[0].mxu0 %v7177
        %v8295 = vpop.f32.mrb[0].mxu0
        %v8296 = vadd.f32 0.0, %v8295
        %v8297 = vpop.f32.mrb[0].mxu0
        %v8298 = vpop.f32.mrb[0].mxu0
        %v8299 = vadd.f32 0.0, %v8298
        %v8300 = vpop.f32.mrb[0].mxu0
        %8301 = vmatprep.mubr.bf16.mxu0 0
        %8302 = vmatmul.mubr.bf16.gmra.mrb[0].mxu0 %v7180
        %v8303 = vpop.f32.mrb[0].mxu0
        %v8304 = vadd.f32 0.0, %v8303
        %v8305 = vpop.f32.mrb[0].mxu0
        %v8306 = vpop.f32.mrb[0].mxu0
        %v8307 = vadd.f32 0.0, %v8306
        %v8308 = vpop.f32.mrb[0].mxu0
        %8309 = vmatprep.mubr.bf16.mxu0 0
        %8310 = vmatmul.mubr.bf16.gmra.mrb[0].mxu0 %v7183
        %v8311 = vpop.f32.mrb[0].mxu0
        %v8312 = vadd.f32 0.0, %v8311
        %v8313 = vpop.f32.mrb[0].mxu0
        %v8314 = vpop.f32.mrb[0].mxu0
        %v8315 = vadd.f32 0.0, %v8314
        %v8316 = vpop.f32.mrb[0].mxu0
        %8317 = vmatprep.mubr.bf16.mxu0 0
        %8318 = vmatmul.mubr.bf16.gmra.mrb[0].mxu0 %v7186
        %v8319 = vpop.f32.mrb[0].mxu0
        %v8320 = vadd.f32 0.0, %v8319
        %v8321 = vpop.f32.mrb[0].mxu0
        %v8322 = vpop.f32.mrb[0].mxu0
        %v8323 = vadd.f32 0.0, %v8322
        %v8324 = vpop.f32.mrb[0].mxu0
        %8325 = vmatprep.mubr.bf16.mxu0 0
        %8326 = vmatmul.mubr.bf16.gmra.mrb[0].mxu0 %v8171
        %v8327 = vpop.f32.mrb[0].mxu0
        %v8328 = vadd.f32 0.0, %v8327
        %v8329 = vpop.f32.mrb[0].mxu0
        %v8330 = vpop.f32.mrb[0].mxu0
        %v8331 = vadd.f32 0.0, %v8330
        %v8332 = vpop.f32.mrb[0].mxu0
        %8333 = vdwg.mxu0
        %v8334 = vadd.f32 %v8121, %v8208
        %v8335 = vadd.f32 %v8122, %v8211
        %v8336 = vadd.f32 %v8123, %v8216
        %v8337 = vadd.f32 %v8124, %v8219
        %v8338 = vadd.f32 %v8125, %v8224
        %v8339 = vadd.f32 %v8126, %v8227
        %v8340 = vadd.f32 %v8127, %v8232
        %v8341 = vadd.f32 %v8128, %v8235
        %v8342 = vadd.f32 %v8129, %v8240
        %v8343 = vadd.f32 %v8130, %v8243
        %v8344 = vadd.f32 %v8131, %v8248
        %v8345 = vadd.f32 %v8132, %v8251
        %v8346 = vadd.f32 %v8133, %v8256
        %v8347 = vadd.f32 %v8134, %v8259
        %v8348 = vadd.f32 %v8135, %v8264
        %v8349 = vadd.f32 %v8136, %v8267
        %v8350 = vadd.f32 %v8137, %v8272
        %v8351 = vadd.f32 %v8138, %v8275
        %v8352 = vadd.f32 %v8139, %v8280
        %v8353 = vadd.f32 %v8140, %v8283
        %v8354 = vadd.f32 %v8141, %v8288
        %v8355 = vadd.f32 %v8142, %v8291
        %v8356 = vadd.f32 %v8143, %v8296
        %v8357 = vadd.f32 %v8144, %v8299
        %v8358 = vadd.f32 %v8145, %v8304
        %v8359 = vadd.f32 %v8146, %v8307
        %v8360 = vadd.f32 %v8147, %v8312
        %v8361 = vadd.f32 %v8148, %v8315
        %v8362 = vadd.f32 %v8149, %v8320
        %v8363 = vadd.f32 %v8150, %v8323
        %v8364 = vadd.f32 %v8151, %v8328
        %v8365 = vadd.f32 %v8152, %v8331
        %v8366 = vshrl.u32 %v7120, 16
        %v8368 = vshll.u32 %v7120, 16
        %v8370 = vrot.slane %v8368, 1
        %v8371 = vor.u32 %v8366, %v8370
        %v8373 = vshll.u32 %v7121, 16
        %v8375 = vrot.slane %v8373, 1
        %v8376 = vsel %vm1265, %v8371, %v8375
        %s8377 = scalar_lea.vmem %s4, 64
        %v8378 = vld [vmem:[%s8377] sm:$0xf]
        %v8379 = vld [vmem:[%s8377 + $0x4] sm:$0xf]
        %v8380 = vld [vmem:[%s8377 + $0x8] sm:$0xf]
        %v8381 = vld [vmem:[%s8377 + $0xc] sm:$0xf]
        %v8386 = vunpack.c.l.b16 %v8378
        %v8387 = vunpack.c.l.b16 %v8379
        %v8388 = vunpack.c.l.b16 %v8380
        %v8389 = vunpack.c.l.b16 %v8381
        %v8390 = vpack.c.b16 %v8387, %v8386
        %v8391 = vpack.c.b16 %v8389, %v8388
        %v8395 = vsel %vm1023, %v8376, 0
        %8397 = vmatprep.subr.bf16.mxu0 0
        %8398 = vmatpush1.bf16.msra.mxu0 %v8390
        %8399 = vmatprep.subr.bf16.mxu0 0
        %8400 = vmatpush1.bf16.msra.mxu0 %v8391
        %8401 = vmatprep.subr.bf16.mxu0 0
        %8402 = vmatpush1.bf16.msra.mxu0 0
        %8403 = vmatprep.subr.bf16.mxu0 0
        %8404 = vmatpush1.bf16.msra.mxu0 0
        %8405 = vmatprep.subr.bf16.mxu0 0
        %8406 = vmatpush1.bf16.msra.mxu0 0
        %8407 = vmatprep.subr.bf16.mxu0 0
        %8408 = vmatpush1.bf16.msra.mxu0 0
        %8409 = vmatprep.subr.bf16.mxu0 0
        %8410 = vmatpush1.bf16.msra.mxu0 0
        %8411 = vmatprep.subr.bf16.mxu0 0
        %8412 = vmatpush1.bf16.msra.mxu0 0
        %8413 = vmatprep.subr.bf16.mxu0 0
        %8414 = vmatpush1.bf16.msra.mxu0 0
        %8415 = vmatprep.subr.bf16.mxu0 0
        %8416 = vmatpush1.bf16.msra.mxu0 0
        %8417 = vmatprep.subr.bf16.mxu0 0
        %8418 = vmatpush1.bf16.msra.mxu0 0
        %8419 = vmatprep.subr.bf16.mxu0 0
        %8420 = vmatpush1.bf16.msra.mxu0 0
        %8421 = vmatprep.subr.bf16.mxu0 0
        %8422 = vmatpush1.bf16.msra.mxu0 0
        %8423 = vmatprep.subr.bf16.mxu0 0
        %8424 = vmatpush1.bf16.msra.mxu0 0
        %8425 = vmatprep.subr.bf16.mxu0 0
        %8426 = vmatpush1.bf16.msra.mxu0 0
        %8427 = vmatprep.subr.bf16.mxu0 0
        %8428 = vmatpush1.bf16.msra.mxu0 0
        %8429 = vmatprep.mubr.bf16.mxu0 0
        %8430 = vmatmul.mubr.bf16.gmra.mrb[0].mxu0 %v7578
        %v8431 = vpop.f32.mrb[0].mxu0
        %v8432 = vadd.f32 0.0, %v8431
        %v8433 = vpop.f32.mrb[0].mxu0
        %v8434 = vpop.f32.mrb[0].mxu0
        %v8435 = vadd.f32 0.0, %v8434
        %v8436 = vpop.f32.mrb[0].mxu0
        %8437 = vmatprep.mubr.bf16.mxu0 0
        %8438 = vmatmul.mubr.bf16.gmra.mrb[0].mxu0 %v7581
        %v8439 = vpop.f32.mrb[0].mxu0
        %v8440 = vadd.f32 0.0, %v8439
        %v8441 = vpop.f32.mrb[0].mxu0
        %v8442 = vpop.f32.mrb[0].mxu0
        %v8443 = vadd.f32 0.0, %v8442
        %v8444 = vpop.f32.mrb[0].mxu0
        %8445 = vmatprep.mubr.bf16.mxu0 0
        %8446 = vmatmul.mubr.bf16.gmra.mrb[0].mxu0 %v7584
        %v8447 = vpop.f32.mrb[0].mxu0
        %v8448 = vadd.f32 0.0, %v8447
        %v8449 = vpop.f32.mrb[0].mxu0
        %v8450 = vpop.f32.mrb[0].mxu0
        %v8451 = vadd.f32 0.0, %v8450
        %v8452 = vpop.f32.mrb[0].mxu0
        %8453 = vmatprep.mubr.bf16.mxu0 0
        %8454 = vmatmul.mubr.bf16.gmra.mrb[0].mxu0 %v7587
        %v8455 = vpop.f32.mrb[0].mxu0
        %v8456 = vadd.f32 0.0, %v8455
        %v8457 = vpop.f32.mrb[0].mxu0
        %v8458 = vpop.f32.mrb[0].mxu0
        %v8459 = vadd.f32 0.0, %v8458
        %v8460 = vpop.f32.mrb[0].mxu0
        %8461 = vmatprep.mubr.bf16.mxu0 0
        %8462 = vmatmul.mubr.bf16.gmra.mrb[0].mxu0 %v7590
        %v8463 = vpop.f32.mrb[0].mxu0
        %v8464 = vadd.f32 0.0, %v8463
        %v8465 = vpop.f32.mrb[0].mxu0
        %v8466 = vpop.f32.mrb[0].mxu0
        %v8467 = vadd.f32 0.0, %v8466
        %v8468 = vpop.f32.mrb[0].mxu0
        %8469 = vmatprep.mubr.bf16.mxu0 0
        %8470 = vmatmul.mubr.bf16.gmra.mrb[0].mxu0 %v7593
        %v8471 = vpop.f32.mrb[0].mxu0
        %v8472 = vadd.f32 0.0, %v8471
        %v8473 = vpop.f32.mrb[0].mxu0
        %v8474 = vpop.f32.mrb[0].mxu0
        %v8475 = vadd.f32 0.0, %v8474
        %v8476 = vpop.f32.mrb[0].mxu0
        %8477 = vmatprep.mubr.bf16.mxu0 0
        %8478 = vmatmul.mubr.bf16.gmra.mrb[0].mxu0 %v7596
        %v8479 = vpop.f32.mrb[0].mxu0
        %v8480 = vadd.f32 0.0, %v8479
        %v8481 = vpop.f32.mrb[0].mxu0
        %v8482 = vpop.f32.mrb[0].mxu0
        %v8483 = vadd.f32 0.0, %v8482
        %v8484 = vpop.f32.mrb[0].mxu0
        %8485 = vmatprep.mubr.bf16.mxu0 0
        %8486 = vmatmul.mubr.bf16.gmra.mrb[0].mxu0 %v7599
        %v8487 = vpop.f32.mrb[0].mxu0
        %v8488 = vadd.f32 0.0, %v8487
        %v8489 = vpop.f32.mrb[0].mxu0
        %v8490 = vpop.f32.mrb[0].mxu0
        %v8491 = vadd.f32 0.0, %v8490
        %v8492 = vpop.f32.mrb[0].mxu0
        %8493 = vmatprep.mubr.bf16.mxu0 0
        %8494 = vmatmul.mubr.bf16.gmra.mrb[0].mxu0 %v7602
        %v8495 = vpop.f32.mrb[0].mxu0
        %v8496 = vadd.f32 0.0, %v8495
        %v8497 = vpop.f32.mrb[0].mxu0
        %v8498 = vpop.f32.mrb[0].mxu0
        %v8499 = vadd.f32 0.0, %v8498
        %v8500 = vpop.f32.mrb[0].mxu0
        %8501 = vmatprep.mubr.bf16.mxu0 0
        %8502 = vmatmul.mubr.bf16.gmra.mrb[0].mxu0 %v7605
        %v8503 = vpop.f32.mrb[0].mxu0
        %v8504 = vadd.f32 0.0, %v8503
        %v8505 = vpop.f32.mrb[0].mxu0
        %v8506 = vpop.f32.mrb[0].mxu0
        %v8507 = vadd.f32 0.0, %v8506
        %v8508 = vpop.f32.mrb[0].mxu0
        %8509 = vmatprep.mubr.bf16.mxu0 0
        %8510 = vmatmul.mubr.bf16.gmra.mrb[0].mxu0 %v7608
        %v8511 = vpop.f32.mrb[0].mxu0
        %v8512 = vadd.f32 0.0, %v8511
        %v8513 = vpop.f32.mrb[0].mxu0
        %v8514 = vpop.f32.mrb[0].mxu0
        %v8515 = vadd.f32 0.0, %v8514
        %v8516 = vpop.f32.mrb[0].mxu0
        %8517 = vmatprep.mubr.bf16.mxu0 0
        %8518 = vmatmul.mubr.bf16.gmra.mrb[0].mxu0 %v7611
        %v8519 = vpop.f32.mrb[0].mxu0
        %v8520 = vadd.f32 0.0, %v8519
        %v8521 = vpop.f32.mrb[0].mxu0
        %v8522 = vpop.f32.mrb[0].mxu0
        %v8523 = vadd.f32 0.0, %v8522
        %v8524 = vpop.f32.mrb[0].mxu0
        %8525 = vmatprep.mubr.bf16.mxu0 0
        %8526 = vmatmul.mubr.bf16.gmra.mrb[0].mxu0 %v7614
        %v8527 = vpop.f32.mrb[0].mxu0
        %v8528 = vadd.f32 0.0, %v8527
        %v8529 = vpop.f32.mrb[0].mxu0
        %v8530 = vpop.f32.mrb[0].mxu0
        %v8531 = vadd.f32 0.0, %v8530
        %v8532 = vpop.f32.mrb[0].mxu0
        %8533 = vmatprep.mubr.bf16.mxu0 0
        %8534 = vmatmul.mubr.bf16.gmra.mrb[0].mxu0 %v7617
        %v8535 = vpop.f32.mrb[0].mxu0
        %v8536 = vadd.f32 0.0, %v8535
        %v8537 = vpop.f32.mrb[0].mxu0
        %v8538 = vpop.f32.mrb[0].mxu0
        %v8539 = vadd.f32 0.0, %v8538
        %v8540 = vpop.f32.mrb[0].mxu0
        %8541 = vmatprep.mubr.bf16.mxu0 0
        %8542 = vmatmul.mubr.bf16.gmra.mrb[0].mxu0 %v7620
        %v8543 = vpop.f32.mrb[0].mxu0
        %v8544 = vadd.f32 0.0, %v8543
        %v8545 = vpop.f32.mrb[0].mxu0
        %v8546 = vpop.f32.mrb[0].mxu0
        %v8547 = vadd.f32 0.0, %v8546
        %v8548 = vpop.f32.mrb[0].mxu0
        %8549 = vmatprep.mubr.bf16.mxu0 0
        %8550 = vmatmul.mubr.bf16.gmra.mrb[0].mxu0 %v8395
        %v8551 = vpop.f32.mrb[0].mxu0
        %v8552 = vadd.f32 0.0, %v8551
        %v8553 = vpop.f32.mrb[0].mxu0
        %v8554 = vpop.f32.mrb[0].mxu0
        %v8555 = vadd.f32 0.0, %v8554
        %v8556 = vpop.f32.mrb[0].mxu0
        %8557 = vdwg.mxu0
        %v8558 = vadd.f32 %v8334, %v8432
        %v8559 = vadd.f32 %v8335, %v8435
        %v8560 = vadd.f32 %v8336, %v8440
        %v8561 = vadd.f32 %v8337, %v8443
        %v8562 = vadd.f32 %v8338, %v8448
        %v8563 = vadd.f32 %v8339, %v8451
        %v8564 = vadd.f32 %v8340, %v8456
        %v8565 = vadd.f32 %v8341, %v8459
        %v8566 = vadd.f32 %v8342, %v8464
        %v8567 = vadd.f32 %v8343, %v8467
        %v8568 = vadd.f32 %v8344, %v8472
        %v8569 = vadd.f32 %v8345, %v8475
        %v8570 = vadd.f32 %v8346, %v8480
        %v8571 = vadd.f32 %v8347, %v8483
        %v8572 = vadd.f32 %v8348, %v8488
        %v8573 = vadd.f32 %v8349, %v8491
        %v8574 = vadd.f32 %v8350, %v8496
        %v8575 = vadd.f32 %v8351, %v8499
        %v8576 = vadd.f32 %v8352, %v8504
        %v8577 = vadd.f32 %v8353, %v8507
        %v8578 = vadd.f32 %v8354, %v8512
        %v8579 = vadd.f32 %v8355, %v8515
        %v8580 = vadd.f32 %v8356, %v8520
        %v8581 = vadd.f32 %v8357, %v8523
        %v8582 = vadd.f32 %v8358, %v8528
        %v8583 = vadd.f32 %v8359, %v8531
        %v8584 = vadd.f32 %v8360, %v8536
        %v8585 = vadd.f32 %v8361, %v8539
        %v8586 = vadd.f32 %v8362, %v8544
        %v8587 = vadd.f32 %v8363, %v8547
        %v8588 = vadd.f32 %v8364, %v8552
        %v8589 = vadd.f32 %v8365, %v8555
        %v8592 = vrot.slane %v7120, 1
        %v8593 = vrot.slane %v7121, 1
        %v8594 = vsel %vm1732, %v8592, %v8593
        %s8595 = scalar_lea.vmem %s4, 80
        %v8596 = vld [vmem:[%s8595] sm:$0xf]
        %v8597 = vld [vmem:[%s8595 + $0x4] sm:$0xf]
        %v8598 = vld [vmem:[%s8595 + $0x8] sm:$0xf]
        %v8599 = vld [vmem:[%s8595 + $0xc] sm:$0xf]
        %v8604 = vunpack.c.l.b16 %v8596
        %v8605 = vunpack.c.l.b16 %v8597
        %v8606 = vunpack.c.l.b16 %v8598
        %v8607 = vunpack.c.l.b16 %v8599
        %v8608 = vpack.c.b16 %v8605, %v8604
        %v8609 = vpack.c.b16 %v8607, %v8606
        %v8613 = vsel %vm1023, %v8594, 0
        %8615 = vmatprep.subr.bf16.mxu0 0
        %8616 = vmatpush1.bf16.msra.mxu0 %v8608
        %8617 = vmatprep.subr.bf16.mxu0 0
        %8618 = vmatpush1.bf16.msra.mxu0 %v8609
        %8619 = vmatprep.subr.bf16.mxu0 0
        %8620 = vmatpush1.bf16.msra.mxu0 0
        %8621 = vmatprep.subr.bf16.mxu0 0
        %8622 = vmatpush1.bf16.msra.mxu0 0
        %8623 = vmatprep.subr.bf16.mxu0 0
        %8624 = vmatpush1.bf16.msra.mxu0 0
        %8625 = vmatprep.subr.bf16.mxu0 0
        %8626 = vmatpush1.bf16.msra.mxu0 0
        %8627 = vmatprep.subr.bf16.mxu0 0
        %8628 = vmatpush1.bf16.msra.mxu0 0
        %8629 = vmatprep.subr.bf16.mxu0 0
        %8630 = vmatpush1.bf16.msra.mxu0 0
        %8631 = vmatprep.subr.bf16.mxu0 0
        %8632 = vmatpush1.bf16.msra.mxu0 0
        %8633 = vmatprep.subr.bf16.mxu0 0
        %8634 = vmatpush1.bf16.msra.mxu0 0
        %8635 = vmatprep.subr.bf16.mxu0 0
        %8636 = vmatpush1.bf16.msra.mxu0 0
        %8637 = vmatprep.subr.bf16.mxu0 0
        %8638 = vmatpush1.bf16.msra.mxu0 0
        %8639 = vmatprep.subr.bf16.mxu0 0
        %8640 = vmatpush1.bf16.msra.mxu0 0
        %8641 = vmatprep.subr.bf16.mxu0 0
        %8642 = vmatpush1.bf16.msra.mxu0 0
        %8643 = vmatprep.subr.bf16.mxu0 0
        %8644 = vmatpush1.bf16.msra.mxu0 0
        %8645 = vmatprep.subr.bf16.mxu0 0
        %8646 = vmatpush1.bf16.msra.mxu0 0
        %8647 = vmatprep.mubr.bf16.mxu0 0
        %8648 = vmatmul.mubr.bf16.gmra.mrb[0].mxu0 %v7916
        %v8649 = vpop.f32.mrb[0].mxu0
        %v8650 = vadd.f32 0.0, %v8649
        %v8651 = vpop.f32.mrb[0].mxu0
        %v8652 = vpop.f32.mrb[0].mxu0
        %v8653 = vadd.f32 0.0, %v8652
        %v8654 = vpop.f32.mrb[0].mxu0
        %8655 = vmatprep.mubr.bf16.mxu0 0
        %8656 = vmatmul.mubr.bf16.gmra.mrb[0].mxu0 %v7919
        %v8657 = vpop.f32.mrb[0].mxu0
        %v8658 = vadd.f32 0.0, %v8657
        %v8659 = vpop.f32.mrb[0].mxu0
        %v8660 = vpop.f32.mrb[0].mxu0
        %v8661 = vadd.f32 0.0, %v8660
        %v8662 = vpop.f32.mrb[0].mxu0
        %8663 = vmatprep.mubr.bf16.mxu0 0
        %8664 = vmatmul.mubr.bf16.gmra.mrb[0].mxu0 %v7922
        %v8665 = vpop.f32.mrb[0].mxu0
        %v8666 = vadd.f32 0.0, %v8665
        %v8667 = vpop.f32.mrb[0].mxu0
        %v8668 = vpop.f32.mrb[0].mxu0
        %v8669 = vadd.f32 0.0, %v8668
        %v8670 = vpop.f32.mrb[0].mxu0
        %8671 = vmatprep.mubr.bf16.mxu0 0
        %8672 = vmatmul.mubr.bf16.gmra.mrb[0].mxu0 %v7925
        %v8673 = vpop.f32.mrb[0].mxu0
        %v8674 = vadd.f32 0.0, %v8673
        %v8675 = vpop.f32.mrb[0].mxu0
        %v8676 = vpop.f32.mrb[0].mxu0
        %v8677 = vadd.f32 0.0, %v8676
        %v8678 = vpop.f32.mrb[0].mxu0
        %8679 = vmatprep.mubr.bf16.mxu0 0
        %8680 = vmatmul.mubr.bf16.gmra.mrb[0].mxu0 %v7928
        %v8681 = vpop.f32.mrb[0].mxu0
        %v8682 = vadd.f32 0.0, %v8681
        %v8683 = vpop.f32.mrb[0].mxu0
        %v8684 = vpop.f32.mrb[0].mxu0
        %v8685 = vadd.f32 0.0, %v8684
        %v8686 = vpop.f32.mrb[0].mxu0
        %8687 = vmatprep.mubr.bf16.mxu0 0
        %8688 = vmatmul.mubr.bf16.gmra.mrb[0].mxu0 %v7931
        %v8689 = vpop.f32.mrb[0].mxu0
        %v8690 = vadd.f32 0.0, %v8689
        %v8691 = vpop.f32.mrb[0].mxu0
        %v8692 = vpop.f32.mrb[0].mxu0
        %v8693 = vadd.f32 0.0, %v8692
        %v8694 = vpop.f32.mrb[0].mxu0
        %8695 = vmatprep.mubr.bf16.mxu0 0
        %8696 = vmatmul.mubr.bf16.gmra.mrb[0].mxu0 %v7934
        %v8697 = vpop.f32.mrb[0].mxu0
        %v8698 = vadd.f32 0.0, %v8697
        %v8699 = vpop.f32.mrb[0].mxu0
        %v8700 = vpop.f32.mrb[0].mxu0
        %v8701 = vadd.f32 0.0, %v8700
        %v8702 = vpop.f32.mrb[0].mxu0
        %8703 = vmatprep.mubr.bf16.mxu0 0
        %8704 = vmatmul.mubr.bf16.gmra.mrb[0].mxu0 %v7937
        %v8705 = vpop.f32.mrb[0].mxu0
        %v8706 = vadd.f32 0.0, %v8705
        %v8707 = vpop.f32.mrb[0].mxu0
        %v8708 = vpop.f32.mrb[0].mxu0
        %v8709 = vadd.f32 0.0, %v8708
        %v8710 = vpop.f32.mrb[0].mxu0
        %8711 = vmatprep.mubr.bf16.mxu0 0
        %8712 = vmatmul.mubr.bf16.gmra.mrb[0].mxu0 %v7940
        %v8713 = vpop.f32.mrb[0].mxu0
        %v8714 = vadd.f32 0.0, %v8713
        %v8715 = vpop.f32.mrb[0].mxu0
        %v8716 = vpop.f32.mrb[0].mxu0
        %v8717 = vadd.f32 0.0, %v8716
        %v8718 = vpop.f32.mrb[0].mxu0
        %8719 = vmatprep.mubr.bf16.mxu0 0
        %8720 = vmatmul.mubr.bf16.gmra.mrb[0].mxu0 %v7943
        %v8721 = vpop.f32.mrb[0].mxu0
        %v8722 = vadd.f32 0.0, %v8721
        %v8723 = vpop.f32.mrb[0].mxu0
        %v8724 = vpop.f32.mrb[0].mxu0
        %v8725 = vadd.f32 0.0, %v8724
        %v8726 = vpop.f32.mrb[0].mxu0
        %8727 = vmatprep.mubr.bf16.mxu0 0
        %8728 = vmatmul.mubr.bf16.gmra.mrb[0].mxu0 %v7946
        %v8729 = vpop.f32.mrb[0].mxu0
        %v8730 = vadd.f32 0.0, %v8729
        %v8731 = vpop.f32.mrb[0].mxu0
        %v8732 = vpop.f32.mrb[0].mxu0
        %v8733 = vadd.f32 0.0, %v8732
        %v8734 = vpop.f32.mrb[0].mxu0
        %8735 = vmatprep.mubr.bf16.mxu0 0
        %8736 = vmatmul.mubr.bf16.gmra.mrb[0].mxu0 %v7949
        %v8737 = vpop.f32.mrb[0].mxu0
        %v8738 = vadd.f32 0.0, %v8737
        %v8739 = vpop.f32.mrb[0].mxu0
        %v8740 = vpop.f32.mrb[0].mxu0
        %v8741 = vadd.f32 0.0, %v8740
        %v8742 = vpop.f32.mrb[0].mxu0
        %8743 = vmatprep.mubr.bf16.mxu0 0
        %8744 = vmatmul.mubr.bf16.gmra.mrb[0].mxu0 %v7952
        %v8745 = vpop.f32.mrb[0].mxu0
        %v8746 = vadd.f32 0.0, %v8745
        %v8747 = vpop.f32.mrb[0].mxu0
        %v8748 = vpop.f32.mrb[0].mxu0
        %v8749 = vadd.f32 0.0, %v8748
        %v8750 = vpop.f32.mrb[0].mxu0
        %8751 = vmatprep.mubr.bf16.mxu0 0
        %8752 = vmatmul.mubr.bf16.gmra.mrb[0].mxu0 %v7955
        %v8753 = vpop.f32.mrb[0].mxu0
        %v8754 = vadd.f32 0.0, %v8753
        %v8755 = vpop.f32.mrb[0].mxu0
        %v8756 = vpop.f32.mrb[0].mxu0
        %v8757 = vadd.f32 0.0, %v8756
        %v8758 = vpop.f32.mrb[0].mxu0
        %8759 = vmatprep.mubr.bf16.mxu0 0
        %8760 = vmatmul.mubr.bf16.gmra.mrb[0].mxu0 %v7958
        %v8761 = vpop.f32.mrb[0].mxu0
        %v8762 = vadd.f32 0.0, %v8761
        %v8763 = vpop.f32.mrb[0].mxu0
        %v8764 = vpop.f32.mrb[0].mxu0
        %v8765 = vadd.f32 0.0, %v8764
        %v8766 = vpop.f32.mrb[0].mxu0
        %8767 = vmatprep.mubr.bf16.mxu0 0
        %8768 = vmatmul.mubr.bf16.gmra.mrb[0].mxu0 %v8613
        %v8769 = vpop.f32.mrb[0].mxu0
        %v8770 = vadd.f32 0.0, %v8769
        %v8771 = vpop.f32.mrb[0].mxu0
        %v8772 = vpop.f32.mrb[0].mxu0
        %v8773 = vadd.f32 0.0, %v8772
        %v8774 = vpop.f32.mrb[0].mxu0
        %8775 = vdwg.mxu0
        %v8776 = vadd.f32 %v8558, %v8650
        %v8777 = vadd.f32 %v8559, %v8653
        %v8778 = vadd.f32 %v8560, %v8658
        %v8779 = vadd.f32 %v8561, %v8661
        %v8780 = vadd.f32 %v8562, %v8666
        %v8781 = vadd.f32 %v8563, %v8669
        %v8782 = vadd.f32 %v8564, %v8674
        %v8783 = vadd.f32 %v8565, %v8677
        %v8784 = vadd.f32 %v8566, %v8682
        %v8785 = vadd.f32 %v8567, %v8685
        %v8786 = vadd.f32 %v8568, %v8690
        %v8787 = vadd.f32 %v8569, %v8693
        %v8788 = vadd.f32 %v8570, %v8698
        %v8789 = vadd.f32 %v8571, %v8701
        %v8790 = vadd.f32 %v8572, %v8706
        %v8791 = vadd.f32 %v8573, %v8709
        %v8792 = vadd.f32 %v8574, %v8714
        %v8793 = vadd.f32 %v8575, %v8717
        %v8794 = vadd.f32 %v8576, %v8722
        %v8795 = vadd.f32 %v8577, %v8725
        %v8796 = vadd.f32 %v8578, %v8730
        %v8797 = vadd.f32 %v8579, %v8733
        %v8798 = vadd.f32 %v8580, %v8738
        %v8799 = vadd.f32 %v8581, %v8741
        %v8800 = vadd.f32 %v8582, %v8746
        %v8801 = vadd.f32 %v8583, %v8749
        %v8802 = vadd.f32 %v8584, %v8754
        %v8803 = vadd.f32 %v8585, %v8757
        %v8804 = vadd.f32 %v8586, %v8762
        %v8805 = vadd.f32 %v8587, %v8765
        %v8806 = vadd.f32 %v8588, %v8770
        %v8807 = vadd.f32 %v8589, %v8773
        %s8808 = scalar_lea.vmem %s4, 96
        %v8809 = vld [vmem:[%s8808] sm:$0xf]
        %v8810 = vld [vmem:[%s8808 + $0x4] sm:$0xf]
        %v8811 = vld [vmem:[%s8808 + $0x8] sm:$0xf]
        %v8812 = vld [vmem:[%s8808 + $0xc] sm:$0xf]
        %v8817 = vunpack.c.l.b16 %v8809
        %v8818 = vunpack.c.l.b16 %v8810
        %v8819 = vunpack.c.l.b16 %v8811
        %v8820 = vunpack.c.l.b16 %v8812
        %v8821 = vpack.c.b16 %v8818, %v8817
        %v8822 = vpack.c.b16 %v8820, %v8819
        %v8826 = vsel %vm1023, %v7122, 0
        %8828 = vmatprep.subr.bf16.mxu0 0
        %8829 = vmatpush1.bf16.msra.mxu0 %v8821
        %8830 = vmatprep.subr.bf16.mxu0 0
        %8831 = vmatpush1.bf16.msra.mxu0 %v8822
        %8832 = vmatprep.subr.bf16.mxu0 0
        %8833 = vmatpush1.bf16.msra.mxu0 0
        %8834 = vmatprep.subr.bf16.mxu0 0
        %8835 = vmatpush1.bf16.msra.mxu0 0
        %8836 = vmatprep.subr.bf16.mxu0 0
        %8837 = vmatpush1.bf16.msra.mxu0 0
        %8838 = vmatprep.subr.bf16.mxu0 0
        %8839 = vmatpush1.bf16.msra.mxu0 0
        %8840 = vmatprep.subr.bf16.mxu0 0
        %8841 = vmatpush1.bf16.msra.mxu0 0
        %8842 = vmatprep.subr.bf16.mxu0 0
        %8843 = vmatpush1.bf16.msra.mxu0 0
        %8844 = vmatprep.subr.bf16.mxu0 0
        %8845 = vmatpush1.bf16.msra.mxu0 0
        %8846 = vmatprep.subr.bf16.mxu0 0
        %8847 = vmatpush1.bf16.msra.mxu0 0
        %8848 = vmatprep.subr.bf16.mxu0 0
        %8849 = vmatpush1.bf16.msra.mxu0 0
        %8850 = vmatprep.subr.bf16.mxu0 0
        %8851 = vmatpush1.bf16.msra.mxu0 0
        %8852 = vmatprep.subr.bf16.mxu0 0
        %8853 = vmatpush1.bf16.msra.mxu0 0
        %8854 = vmatprep.subr.bf16.mxu0 0
        %8855 = vmatpush1.bf16.msra.mxu0 0
        %8856 = vmatprep.subr.bf16.mxu0 0
        %8857 = vmatpush1.bf16.msra.mxu0 0
        %8858 = vmatprep.subr.bf16.mxu0 0
        %8859 = vmatpush1.bf16.msra.mxu0 0
        %8860 = vmatprep.mubr.bf16.mxu0 0
        %8861 = vmatmul.mubr.bf16.gmra.mrb[0].mxu0 %v7147
        %v8862 = vpop.f32.mrb[0].mxu0
        %v8863 = vadd.f32 0.0, %v8862
        %v8864 = vpop.f32.mrb[0].mxu0
        %v8865 = vpop.f32.mrb[0].mxu0
        %v8866 = vadd.f32 0.0, %v8865
        %v8867 = vpop.f32.mrb[0].mxu0
        %8868 = vmatprep.mubr.bf16.mxu0 0
        %8869 = vmatmul.mubr.bf16.gmra.mrb[0].mxu0 %v7150
        %v8870 = vpop.f32.mrb[0].mxu0
        %v8871 = vadd.f32 0.0, %v8870
        %v8872 = vpop.f32.mrb[0].mxu0
        %v8873 = vpop.f32.mrb[0].mxu0
        %v8874 = vadd.f32 0.0, %v8873
        %v8875 = vpop.f32.mrb[0].mxu0
        %8876 = vmatprep.mubr.bf16.mxu0 0
        %8877 = vmatmul.mubr.bf16.gmra.mrb[0].mxu0 %v7153
        %v8878 = vpop.f32.mrb[0].mxu0
        %v8879 = vadd.f32 0.0, %v8878
        %v8880 = vpop.f32.mrb[0].mxu0
        %v8881 = vpop.f32.mrb[0].mxu0
        %v8882 = vadd.f32 0.0, %v8881
        %v8883 = vpop.f32.mrb[0].mxu0
        %8884 = vmatprep.mubr.bf16.mxu0 0
        %8885 = vmatmul.mubr.bf16.gmra.mrb[0].mxu0 %v7156
        %v8886 = vpop.f32.mrb[0].mxu0
        %v8887 = vadd.f32 0.0, %v8886
        %v8888 = vpop.f32.mrb[0].mxu0
        %v8889 = vpop.f32.mrb[0].mxu0
        %v8890 = vadd.f32 0.0, %v8889
        %v8891 = vpop.f32.mrb[0].mxu0
        %8892 = vmatprep.mubr.bf16.mxu0 0
        %8893 = vmatmul.mubr.bf16.gmra.mrb[0].mxu0 %v7159
        %v8894 = vpop.f32.mrb[0].mxu0
        %v8895 = vadd.f32 0.0, %v8894
        %v8896 = vpop.f32.mrb[0].mxu0
        %v8897 = vpop.f32.mrb[0].mxu0
        %v8898 = vadd.f32 0.0, %v8897
        %v8899 = vpop.f32.mrb[0].mxu0
        %8900 = vmatprep.mubr.bf16.mxu0 0
        %8901 = vmatmul.mubr.bf16.gmra.mrb[0].mxu0 %v7162
        %v8902 = vpop.f32.mrb[0].mxu0
        %v8903 = vadd.f32 0.0, %v8902
        %v8904 = vpop.f32.mrb[0].mxu0
        %v8905 = vpop.f32.mrb[0].mxu0
        %v8906 = vadd.f32 0.0, %v8905
        %v8907 = vpop.f32.mrb[0].mxu0
        %8908 = vmatprep.mubr.bf16.mxu0 0
        %8909 = vmatmul.mubr.bf16.gmra.mrb[0].mxu0 %v7165
        %v8910 = vpop.f32.mrb[0].mxu0
        %v8911 = vadd.f32 0.0, %v8910
        %v8912 = vpop.f32.mrb[0].mxu0
        %v8913 = vpop.f32.mrb[0].mxu0
        %v8914 = vadd.f32 0.0, %v8913
        %v8915 = vpop.f32.mrb[0].mxu0
        %8916 = vmatprep.mubr.bf16.mxu0 0
        %8917 = vmatmul.mubr.bf16.gmra.mrb[0].mxu0 %v7168
        %v8918 = vpop.f32.mrb[0].mxu0
        %v8919 = vadd.f32 0.0, %v8918
        %v8920 = vpop.f32.mrb[0].mxu0
        %v8921 = vpop.f32.mrb[0].mxu0
        %v8922 = vadd.f32 0.0, %v8921
        %v8923 = vpop.f32.mrb[0].mxu0
        %8924 = vmatprep.mubr.bf16.mxu0 0
        %8925 = vmatmul.mubr.bf16.gmra.mrb[0].mxu0 %v7171
        %v8926 = vpop.f32.mrb[0].mxu0
        %v8927 = vadd.f32 0.0, %v8926
        %v8928 = vpop.f32.mrb[0].mxu0
        %v8929 = vpop.f32.mrb[0].mxu0
        %v8930 = vadd.f32 0.0, %v8929
        %v8931 = vpop.f32.mrb[0].mxu0
        %8932 = vmatprep.mubr.bf16.mxu0 0
        %8933 = vmatmul.mubr.bf16.gmra.mrb[0].mxu0 %v7174
        %v8934 = vpop.f32.mrb[0].mxu0
        %v8935 = vadd.f32 0.0, %v8934
        %v8936 = vpop.f32.mrb[0].mxu0
        %v8937 = vpop.f32.mrb[0].mxu0
        %v8938 = vadd.f32 0.0, %v8937
        %v8939 = vpop.f32.mrb[0].mxu0
        %8940 = vmatprep.mubr.bf16.mxu0 0
        %8941 = vmatmul.mubr.bf16.gmra.mrb[0].mxu0 %v7177
        %v8942 = vpop.f32.mrb[0].mxu0
        %v8943 = vadd.f32 0.0, %v8942
        %v8944 = vpop.f32.mrb[0].mxu0
        %v8945 = vpop.f32.mrb[0].mxu0
        %v8946 = vadd.f32 0.0, %v8945
        %v8947 = vpop.f32.mrb[0].mxu0
        %8948 = vmatprep.mubr.bf16.mxu0 0
        %8949 = vmatmul.mubr.bf16.gmra.mrb[0].mxu0 %v7180
        %v8950 = vpop.f32.mrb[0].mxu0
        %v8951 = vadd.f32 0.0, %v8950
        %v8952 = vpop.f32.mrb[0].mxu0
        %v8953 = vpop.f32.mrb[0].mxu0
        %v8954 = vadd.f32 0.0, %v8953
        %v8955 = vpop.f32.mrb[0].mxu0
        %8956 = vmatprep.mubr.bf16.mxu0 0
        %8957 = vmatmul.mubr.bf16.gmra.mrb[0].mxu0 %v7183
        %v8958 = vpop.f32.mrb[0].mxu0
        %v8959 = vadd.f32 0.0, %v8958
        %v8960 = vpop.f32.mrb[0].mxu0
        %v8961 = vpop.f32.mrb[0].mxu0
        %v8962 = vadd.f32 0.0, %v8961
        %v8963 = vpop.f32.mrb[0].mxu0
        %8964 = vmatprep.mubr.bf16.mxu0 0
        %8965 = vmatmul.mubr.bf16.gmra.mrb[0].mxu0 %v7186
        %v8966 = vpop.f32.mrb[0].mxu0
        %v8967 = vadd.f32 0.0, %v8966
        %v8968 = vpop.f32.mrb[0].mxu0
        %v8969 = vpop.f32.mrb[0].mxu0
        %v8970 = vadd.f32 0.0, %v8969
        %v8971 = vpop.f32.mrb[0].mxu0
        %8972 = vmatprep.mubr.bf16.mxu0 0
        %8973 = vmatmul.mubr.bf16.gmra.mrb[0].mxu0 %v8171
        %v8974 = vpop.f32.mrb[0].mxu0
        %v8975 = vadd.f32 0.0, %v8974
        %v8976 = vpop.f32.mrb[0].mxu0
        %v8977 = vpop.f32.mrb[0].mxu0
        %v8978 = vadd.f32 0.0, %v8977
        %v8979 = vpop.f32.mrb[0].mxu0
        %8980 = vmatprep.mubr.bf16.mxu0 0
        %8981 = vmatmul.mubr.bf16.gmra.mrb[0].mxu0 %v8826
        %v8982 = vpop.f32.mrb[0].mxu0
        %v8983 = vadd.f32 0.0, %v8982
        %v8984 = vpop.f32.mrb[0].mxu0
        %v8985 = vpop.f32.mrb[0].mxu0
        %v8986 = vadd.f32 0.0, %v8985
        %v8987 = vpop.f32.mrb[0].mxu0
        %8988 = vdwg.mxu0
        %v8989 = vadd.f32 %v8776, %v8863
        %v8990 = vadd.f32 %v8777, %v8866
        %v8991 = vadd.f32 %v8778, %v8871
        %v8992 = vadd.f32 %v8779, %v8874
        %v8993 = vadd.f32 %v8780, %v8879
        %v8994 = vadd.f32 %v8781, %v8882
        %v8995 = vadd.f32 %v8782, %v8887
        %v8996 = vadd.f32 %v8783, %v8890
        %v8997 = vadd.f32 %v8784, %v8895
        %v8998 = vadd.f32 %v8785, %v8898
        %v8999 = vadd.f32 %v8786, %v8903
        %v9000 = vadd.f32 %v8787, %v8906
        %v9001 = vadd.f32 %v8788, %v8911
        %v9002 = vadd.f32 %v8789, %v8914
        %v9003 = vadd.f32 %v8790, %v8919
        %v9004 = vadd.f32 %v8791, %v8922
        %v9005 = vadd.f32 %v8792, %v8927
        %v9006 = vadd.f32 %v8793, %v8930
        %v9007 = vadd.f32 %v8794, %v8935
        %v9008 = vadd.f32 %v8795, %v8938
        %v9009 = vadd.f32 %v8796, %v8943
        %v9010 = vadd.f32 %v8797, %v8946
        %v9011 = vadd.f32 %v8798, %v8951
        %v9012 = vadd.f32 %v8799, %v8954
        %v9013 = vadd.f32 %v8800, %v8959
        %v9014 = vadd.f32 %v8801, %v8962
        %v9015 = vadd.f32 %v8802, %v8967
        %v9016 = vadd.f32 %v8803, %v8970
        %v9017 = vadd.f32 %v8804, %v8975
        %v9018 = vadd.f32 %v8805, %v8978
        %v9019 = vadd.f32 %v8806, %v8983
        %v9020 = vadd.f32 %v8807, %v8986
        %v9021 = vshrl.u32 %v7122, 16
        %v9023 = vshll.u32 %v7122, 16
        %v9025 = vrot.slane %v9023, 1
        %v9026 = vor.u32 %v9021, %v9025
        %v9028 = vshll.u32 %v7123, 16
        %v9030 = vrot.slane %v9028, 1
        %v9031 = vsel %vm1265, %v9026, %v9030
        %s9032 = scalar_lea.vmem %s4, 112
        %v9033 = vld [vmem:[%s9032] sm:$0xf]
        %v9034 = vld [vmem:[%s9032 + $0x4] sm:$0xf]
        %v9035 = vld [vmem:[%s9032 + $0x8] sm:$0xf]
        %v9036 = vld [vmem:[%s9032 + $0xc] sm:$0xf]
        %v9041 = vunpack.c.l.b16 %v9033
        %v9042 = vunpack.c.l.b16 %v9034
        %v9043 = vunpack.c.l.b16 %v9035
        %v9044 = vunpack.c.l.b16 %v9036
        %v9045 = vpack.c.b16 %v9042, %v9041
        %v9046 = vpack.c.b16 %v9044, %v9043
        %v9050 = vsel %vm1023, %v9031, 0
        %9052 = vmatprep.subr.bf16.mxu0 0
        %9053 = vmatpush1.bf16.msra.mxu0 %v9045
        %9054 = vmatprep.subr.bf16.mxu0 0
        %9055 = vmatpush1.bf16.msra.mxu0 %v9046
        %9056 = vmatprep.subr.bf16.mxu0 0
        %9057 = vmatpush1.bf16.msra.mxu0 0
        %9058 = vmatprep.subr.bf16.mxu0 0
        %9059 = vmatpush1.bf16.msra.mxu0 0
        %9060 = vmatprep.subr.bf16.mxu0 0
        %9061 = vmatpush1.bf16.msra.mxu0 0
        %9062 = vmatprep.subr.bf16.mxu0 0
        %9063 = vmatpush1.bf16.msra.mxu0 0
        %9064 = vmatprep.subr.bf16.mxu0 0
        %9065 = vmatpush1.bf16.msra.mxu0 0
        %9066 = vmatprep.subr.bf16.mxu0 0
        %9067 = vmatpush1.bf16.msra.mxu0 0
        %9068 = vmatprep.subr.bf16.mxu0 0
        %9069 = vmatpush1.bf16.msra.mxu0 0
        %9070 = vmatprep.subr.bf16.mxu0 0
        %9071 = vmatpush1.bf16.msra.mxu0 0
        %9072 = vmatprep.subr.bf16.mxu0 0
        %9073 = vmatpush1.bf16.msra.mxu0 0
        %9074 = vmatprep.subr.bf16.mxu0 0
        %9075 = vmatpush1.bf16.msra.mxu0 0
        %9076 = vmatprep.subr.bf16.mxu0 0
        %9077 = vmatpush1.bf16.msra.mxu0 0
        %9078 = vmatprep.subr.bf16.mxu0 0
        %9079 = vmatpush1.bf16.msra.mxu0 0
        %9080 = vmatprep.subr.bf16.mxu0 0
        %9081 = vmatpush1.bf16.msra.mxu0 0
        %9082 = vmatprep.subr.bf16.mxu0 0
        %9083 = vmatpush1.bf16.msra.mxu0 0
        %9084 = vmatprep.mubr.bf16.mxu0 0
        %9085 = vmatmul.mubr.bf16.gmra.mrb[0].mxu0 %v7581
        %v9086 = vpop.f32.mrb[0].mxu0
        %v9087 = vadd.f32 0.0, %v9086
        %v9088 = vpop.f32.mrb[0].mxu0
        %v9089 = vpop.f32.mrb[0].mxu0
        %v9090 = vadd.f32 0.0, %v9089
        %v9091 = vpop.f32.mrb[0].mxu0
        %9092 = vmatprep.mubr.bf16.mxu0 0
        %9093 = vmatmul.mubr.bf16.gmra.mrb[0].mxu0 %v7584
        %v9094 = vpop.f32.mrb[0].mxu0
        %v9095 = vadd.f32 0.0, %v9094
        %v9096 = vpop.f32.mrb[0].mxu0
        %v9097 = vpop.f32.mrb[0].mxu0
        %v9098 = vadd.f32 0.0, %v9097
        %v9099 = vpop.f32.mrb[0].mxu0
        %9100 = vmatprep.mubr.bf16.mxu0 0
        %9101 = vmatmul.mubr.bf16.gmra.mrb[0].mxu0 %v7587
        %v9102 = vpop.f32.mrb[0].mxu0
        %v9103 = vadd.f32 0.0, %v9102
        %v9104 = vpop.f32.mrb[0].mxu0
        %v9105 = vpop.f32.mrb[0].mxu0
        %v9106 = vadd.f32 0.0, %v9105
        %v9107 = vpop.f32.mrb[0].mxu0
        %9108 = vmatprep.mubr.bf16.mxu0 0
        %9109 = vmatmul.mubr.bf16.gmra.mrb[0].mxu0 %v7590
        %v9110 = vpop.f32.mrb[0].mxu0
        %v9111 = vadd.f32 0.0, %v9110
        %v9112 = vpop.f32.mrb[0].mxu0
        %v9113 = vpop.f32.mrb[0].mxu0
        %v9114 = vadd.f32 0.0, %v9113
        %v9115 = vpop.f32.mrb[0].mxu0
        %9116 = vmatprep.mubr.bf16.mxu0 0
        %9117 = vmatmul.mubr.bf16.gmra.mrb[0].mxu0 %v7593
        %v9118 = vpop.f32.mrb[0].mxu0
        %v9119 = vadd.f32 0.0, %v9118
        %v9120 = vpop.f32.mrb[0].mxu0
        %v9121 = vpop.f32.mrb[0].mxu0
        %v9122 = vadd.f32 0.0, %v9121
        %v9123 = vpop.f32.mrb[0].mxu0
        %9124 = vmatprep.mubr.bf16.mxu0 0
        %9125 = vmatmul.mubr.bf16.gmra.mrb[0].mxu0 %v7596
        %v9126 = vpop.f32.mrb[0].mxu0
        %v9127 = vadd.f32 0.0, %v9126
        %v9128 = vpop.f32.mrb[0].mxu0
        %v9129 = vpop.f32.mrb[0].mxu0
        %v9130 = vadd.f32 0.0, %v9129
        %v9131 = vpop.f32.mrb[0].mxu0
        %9132 = vmatprep.mubr.bf16.mxu0 0
        %9133 = vmatmul.mubr.bf16.gmra.mrb[0].mxu0 %v7599
        %v9134 = vpop.f32.mrb[0].mxu0
        %v9135 = vadd.f32 0.0, %v9134
        %v9136 = vpop.f32.mrb[0].mxu0
        %v9137 = vpop.f32.mrb[0].mxu0
        %v9138 = vadd.f32 0.0, %v9137
        %v9139 = vpop.f32.mrb[0].mxu0
        %9140 = vmatprep.mubr.bf16.mxu0 0
        %9141 = vmatmul.mubr.bf16.gmra.mrb[0].mxu0 %v7602
        %v9142 = vpop.f32.mrb[0].mxu0
        %v9143 = vadd.f32 0.0, %v9142
        %v9144 = vpop.f32.mrb[0].mxu0
        %v9145 = vpop.f32.mrb[0].mxu0
        %v9146 = vadd.f32 0.0, %v9145
        %v9147 = vpop.f32.mrb[0].mxu0
        %9148 = vmatprep.mubr.bf16.mxu0 0
        %9149 = vmatmul.mubr.bf16.gmra.mrb[0].mxu0 %v7605
        %v9150 = vpop.f32.mrb[0].mxu0
        %v9151 = vadd.f32 0.0, %v9150
        %v9152 = vpop.f32.mrb[0].mxu0
        %v9153 = vpop.f32.mrb[0].mxu0
        %v9154 = vadd.f32 0.0, %v9153
        %v9155 = vpop.f32.mrb[0].mxu0
        %9156 = vmatprep.mubr.bf16.mxu0 0
        %9157 = vmatmul.mubr.bf16.gmra.mrb[0].mxu0 %v7608
        %v9158 = vpop.f32.mrb[0].mxu0
        %v9159 = vadd.f32 0.0, %v9158
        %v9160 = vpop.f32.mrb[0].mxu0
        %v9161 = vpop.f32.mrb[0].mxu0
        %v9162 = vadd.f32 0.0, %v9161
        %v9163 = vpop.f32.mrb[0].mxu0
        %9164 = vmatprep.mubr.bf16.mxu0 0
        %9165 = vmatmul.mubr.bf16.gmra.mrb[0].mxu0 %v7611
        %v9166 = vpop.f32.mrb[0].mxu0
        %v9167 = vadd.f32 0.0, %v9166
        %v9168 = vpop.f32.mrb[0].mxu0
        %v9169 = vpop.f32.mrb[0].mxu0
        %v9170 = vadd.f32 0.0, %v9169
        %v9171 = vpop.f32.mrb[0].mxu0
        %9172 = vmatprep.mubr.bf16.mxu0 0
        %9173 = vmatmul.mubr.bf16.gmra.mrb[0].mxu0 %v7614
        %v9174 = vpop.f32.mrb[0].mxu0
        %v9175 = vadd.f32 0.0, %v9174
        %v9176 = vpop.f32.mrb[0].mxu0
        %v9177 = vpop.f32.mrb[0].mxu0
        %v9178 = vadd.f32 0.0, %v9177
        %v9179 = vpop.f32.mrb[0].mxu0
        %9180 = vmatprep.mubr.bf16.mxu0 0
        %9181 = vmatmul.mubr.bf16.gmra.mrb[0].mxu0 %v7617
        %v9182 = vpop.f32.mrb[0].mxu0
        %v9183 = vadd.f32 0.0, %v9182
        %v9184 = vpop.f32.mrb[0].mxu0
        %v9185 = vpop.f32.mrb[0].mxu0
        %v9186 = vadd.f32 0.0, %v9185
        %v9187 = vpop.f32.mrb[0].mxu0
        %9188 = vmatprep.mubr.bf16.mxu0 0
        %9189 = vmatmul.mubr.bf16.gmra.mrb[0].mxu0 %v7620
        %v9190 = vpop.f32.mrb[0].mxu0
        %v9191 = vadd.f32 0.0, %v9190
        %v9192 = vpop.f32.mrb[0].mxu0
        %v9193 = vpop.f32.mrb[0].mxu0
        %v9194 = vadd.f32 0.0, %v9193
        %v9195 = vpop.f32.mrb[0].mxu0
        %9196 = vmatprep.mubr.bf16.mxu0 0
        %9197 = vmatmul.mubr.bf16.gmra.mrb[0].mxu0 %v8395
        %v9198 = vpop.f32.mrb[0].mxu0
        %v9199 = vadd.f32 0.0, %v9198
        %v9200 = vpop.f32.mrb[0].mxu0
        %v9201 = vpop.f32.mrb[0].mxu0
        %v9202 = vadd.f32 0.0, %v9201
        %v9203 = vpop.f32.mrb[0].mxu0
        %9204 = vmatprep.mubr.bf16.mxu0 0
        %9205 = vmatmul.mubr.bf16.gmra.mrb[0].mxu0 %v9050
        %v9206 = vpop.f32.mrb[0].mxu0
        %v9207 = vadd.f32 0.0, %v9206
        %v9208 = vpop.f32.mrb[0].mxu0
        %v9209 = vpop.f32.mrb[0].mxu0
        %v9210 = vadd.f32 0.0, %v9209
        %v9211 = vpop.f32.mrb[0].mxu0
        %9212 = vdwg.mxu0
        %v9213 = vadd.f32 %v8989, %v9087
        %v9214 = vadd.f32 %v8990, %v9090
        %v9215 = vadd.f32 %v8991, %v9095
        %v9216 = vadd.f32 %v8992, %v9098
        %v9217 = vadd.f32 %v8993, %v9103
        %v9218 = vadd.f32 %v8994, %v9106
        %v9219 = vadd.f32 %v8995, %v9111
        %v9220 = vadd.f32 %v8996, %v9114
        %v9221 = vadd.f32 %v8997, %v9119
        %v9222 = vadd.f32 %v8998, %v9122
        %v9223 = vadd.f32 %v8999, %v9127
        %v9224 = vadd.f32 %v9000, %v9130
        %v9225 = vadd.f32 %v9001, %v9135
        %v9226 = vadd.f32 %v9002, %v9138
        %v9227 = vadd.f32 %v9003, %v9143
        %v9228 = vadd.f32 %v9004, %v9146
        %v9229 = vadd.f32 %v9005, %v9151
        %v9230 = vadd.f32 %v9006, %v9154
        %v9231 = vadd.f32 %v9007, %v9159
        %v9232 = vadd.f32 %v9008, %v9162
        %v9233 = vadd.f32 %v9009, %v9167
        %v9234 = vadd.f32 %v9010, %v9170
        %v9235 = vadd.f32 %v9011, %v9175
        %v9236 = vadd.f32 %v9012, %v9178
        %v9237 = vadd.f32 %v9013, %v9183
        %v9238 = vadd.f32 %v9014, %v9186
        %v9239 = vadd.f32 %v9015, %v9191
        %v9240 = vadd.f32 %v9016, %v9194
        %v9241 = vadd.f32 %v9017, %v9199
        %v9242 = vadd.f32 %v9018, %v9202
        %v9243 = vadd.f32 %v9019, %v9207
        %v9244 = vadd.f32 %v9020, %v9210
        %v9247 = vrot.slane %v7122, 1
        %v9248 = vrot.slane %v7123, 1
        %v9249 = vsel %vm1732, %v9247, %v9248
        %s9250 = scalar_lea.vmem %s4, 128
        %v9251 = vld [vmem:[%s9250] sm:$0xf]
        %v9252 = vld [vmem:[%s9250 + $0x4] sm:$0xf]
        %v9253 = vld [vmem:[%s9250 + $0x8] sm:$0xf]
        %v9254 = vld [vmem:[%s9250 + $0xc] sm:$0xf]
        %v9259 = vunpack.c.l.b16 %v9251
        %v9260 = vunpack.c.l.b16 %v9252
        %v9261 = vunpack.c.l.b16 %v9253
        %v9262 = vunpack.c.l.b16 %v9254
        %v9263 = vpack.c.b16 %v9260, %v9259
        %v9264 = vpack.c.b16 %v9262, %v9261
        %v9268 = vsel %vm1023, %v9249, 0
        %9270 = vmatprep.subr.bf16.mxu0 0
        %9271 = vmatpush1.bf16.msra.mxu0 %v9263
        %9272 = vmatprep.subr.bf16.mxu0 0
        %9273 = vmatpush1.bf16.msra.mxu0 %v9264
        %9274 = vmatprep.subr.bf16.mxu0 0
        %9275 = vmatpush1.bf16.msra.mxu0 0
        %9276 = vmatprep.subr.bf16.mxu0 0
        %9277 = vmatpush1.bf16.msra.mxu0 0
        %9278 = vmatprep.subr.bf16.mxu0 0
        %9279 = vmatpush1.bf16.msra.mxu0 0
        %9280 = vmatprep.subr.bf16.mxu0 0
        %9281 = vmatpush1.bf16.msra.mxu0 0
        %9282 = vmatprep.subr.bf16.mxu0 0
        %9283 = vmatpush1.bf16.msra.mxu0 0
        %9284 = vmatprep.subr.bf16.mxu0 0
        %9285 = vmatpush1.bf16.msra.mxu0 0
        %9286 = vmatprep.subr.bf16.mxu0 0
        %9287 = vmatpush1.bf16.msra.mxu0 0
        %9288 = vmatprep.subr.bf16.mxu0 0
        %9289 = vmatpush1.bf16.msra.mxu0 0
        %9290 = vmatprep.subr.bf16.mxu0 0
        %9291 = vmatpush1.bf16.msra.mxu0 0
        %9292 = vmatprep.subr.bf16.mxu0 0
        %9293 = vmatpush1.bf16.msra.mxu0 0
        %9294 = vmatprep.subr.bf16.mxu0 0
        %9295 = vmatpush1.bf16.msra.mxu0 0
        %9296 = vmatprep.subr.bf16.mxu0 0
        %9297 = vmatpush1.bf16.msra.mxu0 0
        %9298 = vmatprep.subr.bf16.mxu0 0
        %9299 = vmatpush1.bf16.msra.mxu0 0
        %9300 = vmatprep.subr.bf16.mxu0 0
        %9301 = vmatpush1.bf16.msra.mxu0 0
        %9302 = vmatprep.mubr.bf16.mxu0 0
        %9303 = vmatmul.mubr.bf16.gmra.mrb[0].mxu0 %v7919
        %v9304 = vpop.f32.mrb[0].mxu0
        %v9305 = vadd.f32 0.0, %v9304
        %v9306 = vpop.f32.mrb[0].mxu0
        %v9307 = vpop.f32.mrb[0].mxu0
        %v9308 = vadd.f32 0.0, %v9307
        %v9309 = vpop.f32.mrb[0].mxu0
        %9310 = vmatprep.mubr.bf16.mxu0 0
        %9311 = vmatmul.mubr.bf16.gmra.mrb[0].mxu0 %v7922
        %v9312 = vpop.f32.mrb[0].mxu0
        %v9313 = vadd.f32 0.0, %v9312
        %v9314 = vpop.f32.mrb[0].mxu0
        %v9315 = vpop.f32.mrb[0].mxu0
        %v9316 = vadd.f32 0.0, %v9315
        %v9317 = vpop.f32.mrb[0].mxu0
        %9318 = vmatprep.mubr.bf16.mxu0 0
        %9319 = vmatmul.mubr.bf16.gmra.mrb[0].mxu0 %v7925
        %v9320 = vpop.f32.mrb[0].mxu0
        %v9321 = vadd.f32 0.0, %v9320
        %v9322 = vpop.f32.mrb[0].mxu0
        %v9323 = vpop.f32.mrb[0].mxu0
        %v9324 = vadd.f32 0.0, %v9323
        %v9325 = vpop.f32.mrb[0].mxu0
        %9326 = vmatprep.mubr.bf16.mxu0 0
        %9327 = vmatmul.mubr.bf16.gmra.mrb[0].mxu0 %v7928
        %v9328 = vpop.f32.mrb[0].mxu0
        %v9329 = vadd.f32 0.0, %v9328
        %v9330 = vpop.f32.mrb[0].mxu0
        %v9331 = vpop.f32.mrb[0].mxu0
        %v9332 = vadd.f32 0.0, %v9331
        %v9333 = vpop.f32.mrb[0].mxu0
        %9334 = vmatprep.mubr.bf16.mxu0 0
        %9335 = vmatmul.mubr.bf16.gmra.mrb[0].mxu0 %v7931
        %v9336 = vpop.f32.mrb[0].mxu0
        %v9337 = vadd.f32 0.0, %v9336
        %v9338 = vpop.f32.mrb[0].mxu0
        %v9339 = vpop.f32.mrb[0].mxu0
        %v9340 = vadd.f32 0.0, %v9339
        %v9341 = vpop.f32.mrb[0].mxu0
        %9342 = vmatprep.mubr.bf16.mxu0 0
        %9343 = vmatmul.mubr.bf16.gmra.mrb[0].mxu0 %v7934
        %v9344 = vpop.f32.mrb[0].mxu0
        %v9345 = vadd.f32 0.0, %v9344
        %v9346 = vpop.f32.mrb[0].mxu0
        %v9347 = vpop.f32.mrb[0].mxu0
        %v9348 = vadd.f32 0.0, %v9347
        %v9349 = vpop.f32.mrb[0].mxu0
        %9350 = vmatprep.mubr.bf16.mxu0 0
        %9351 = vmatmul.mubr.bf16.gmra.mrb[0].mxu0 %v7937
        %v9352 = vpop.f32.mrb[0].mxu0
        %v9353 = vadd.f32 0.0, %v9352
        %v9354 = vpop.f32.mrb[0].mxu0
        %v9355 = vpop.f32.mrb[0].mxu0
        %v9356 = vadd.f32 0.0, %v9355
        %v9357 = vpop.f32.mrb[0].mxu0
        %9358 = vmatprep.mubr.bf16.mxu0 0
        %9359 = vmatmul.mubr.bf16.gmra.mrb[0].mxu0 %v7940
        %v9360 = vpop.f32.mrb[0].mxu0
        %v9361 = vadd.f32 0.0, %v9360
        %v9362 = vpop.f32.mrb[0].mxu0
        %v9363 = vpop.f32.mrb[0].mxu0
        %v9364 = vadd.f32 0.0, %v9363
        %v9365 = vpop.f32.mrb[0].mxu0
        %9366 = vmatprep.mubr.bf16.mxu0 0
        %9367 = vmatmul.mubr.bf16.gmra.mrb[0].mxu0 %v7943
        %v9368 = vpop.f32.mrb[0].mxu0
        %v9369 = vadd.f32 0.0, %v9368
        %v9370 = vpop.f32.mrb[0].mxu0
        %v9371 = vpop.f32.mrb[0].mxu0
        %v9372 = vadd.f32 0.0, %v9371
        %v9373 = vpop.f32.mrb[0].mxu0
        %9374 = vmatprep.mubr.bf16.mxu0 0
        %9375 = vmatmul.mubr.bf16.gmra.mrb[0].mxu0 %v7946
        %v9376 = vpop.f32.mrb[0].mxu0
        %v9377 = vadd.f32 0.0, %v9376
        %v9378 = vpop.f32.mrb[0].mxu0
        %v9379 = vpop.f32.mrb[0].mxu0
        %v9380 = vadd.f32 0.0, %v9379
        %v9381 = vpop.f32.mrb[0].mxu0
        %9382 = vmatprep.mubr.bf16.mxu0 0
        %9383 = vmatmul.mubr.bf16.gmra.mrb[0].mxu0 %v7949
        %v9384 = vpop.f32.mrb[0].mxu0
        %v9385 = vadd.f32 0.0, %v9384
        %v9386 = vpop.f32.mrb[0].mxu0
        %v9387 = vpop.f32.mrb[0].mxu0
        %v9388 = vadd.f32 0.0, %v9387
        %v9389 = vpop.f32.mrb[0].mxu0
        %9390 = vmatprep.mubr.bf16.mxu0 0
        %9391 = vmatmul.mubr.bf16.gmra.mrb[0].mxu0 %v7952
        %v9392 = vpop.f32.mrb[0].mxu0
        %v9393 = vadd.f32 0.0, %v9392
        %v9394 = vpop.f32.mrb[0].mxu0
        %v9395 = vpop.f32.mrb[0].mxu0
        %v9396 = vadd.f32 0.0, %v9395
        %v9397 = vpop.f32.mrb[0].mxu0
        %9398 = vmatprep.mubr.bf16.mxu0 0
        %9399 = vmatmul.mubr.bf16.gmra.mrb[0].mxu0 %v7955
        %v9400 = vpop.f32.mrb[0].mxu0
        %v9401 = vadd.f32 0.0, %v9400
        %v9402 = vpop.f32.mrb[0].mxu0
        %v9403 = vpop.f32.mrb[0].mxu0
        %v9404 = vadd.f32 0.0, %v9403
        %v9405 = vpop.f32.mrb[0].mxu0
        %9406 = vmatprep.mubr.bf16.mxu0 0
        %9407 = vmatmul.mubr.bf16.gmra.mrb[0].mxu0 %v7958
        %v9408 = vpop.f32.mrb[0].mxu0
        %v9409 = vadd.f32 0.0, %v9408
        %v9410 = vpop.f32.mrb[0].mxu0
        %v9411 = vpop.f32.mrb[0].mxu0
        %v9412 = vadd.f32 0.0, %v9411
        %v9413 = vpop.f32.mrb[0].mxu0
        %9414 = vmatprep.mubr.bf16.mxu0 0
        %9415 = vmatmul.mubr.bf16.gmra.mrb[0].mxu0 %v8613
        %v9416 = vpop.f32.mrb[0].mxu0
        %v9417 = vadd.f32 0.0, %v9416
        %v9418 = vpop.f32.mrb[0].mxu0
        %v9419 = vpop.f32.mrb[0].mxu0
        %v9420 = vadd.f32 0.0, %v9419
        %v9421 = vpop.f32.mrb[0].mxu0
        %9422 = vmatprep.mubr.bf16.mxu0 0
        %9423 = vmatmul.mubr.bf16.gmra.mrb[0].mxu0 %v9268
        %v9424 = vpop.f32.mrb[0].mxu0
        %v9425 = vadd.f32 0.0, %v9424
        %v9426 = vpop.f32.mrb[0].mxu0
        %v9427 = vpop.f32.mrb[0].mxu0
        %v9428 = vadd.f32 0.0, %v9427
        %v9429 = vpop.f32.mrb[0].mxu0
        %9430 = vdwg.mxu0
        %v9431 = vadd.f32 %v9213, %v9305
        %v9432 = vadd.f32 %v9214, %v9308
        %v9433 = vadd.f32 %v9215, %v9313
        %v9434 = vadd.f32 %v9216, %v9316
        %v9435 = vadd.f32 %v9217, %v9321
        %v9436 = vadd.f32 %v9218, %v9324
        %v9437 = vadd.f32 %v9219, %v9329
        %v9438 = vadd.f32 %v9220, %v9332
        %v9439 = vadd.f32 %v9221, %v9337
        %v9440 = vadd.f32 %v9222, %v9340
        %v9441 = vadd.f32 %v9223, %v9345
        %v9442 = vadd.f32 %v9224, %v9348
        %v9443 = vadd.f32 %v9225, %v9353
        %v9444 = vadd.f32 %v9226, %v9356
        %v9445 = vadd.f32 %v9227, %v9361
        %v9446 = vadd.f32 %v9228, %v9364
        %v9447 = vadd.f32 %v9229, %v9369
        %v9448 = vadd.f32 %v9230, %v9372
        %v9449 = vadd.f32 %v9231, %v9377
        %v9450 = vadd.f32 %v9232, %v9380
        %v9451 = vadd.f32 %v9233, %v9385
        %v9452 = vadd.f32 %v9234, %v9388
        %v9453 = vadd.f32 %v9235, %v9393
        %v9454 = vadd.f32 %v9236, %v9396
        %v9455 = vadd.f32 %v9237, %v9401
        %v9456 = vadd.f32 %v9238, %v9404
        %v9457 = vadd.f32 %v9239, %v9409
        %v9458 = vadd.f32 %v9240, %v9412
        %v9459 = vadd.f32 %v9241, %v9417
        %v9460 = vadd.f32 %v9242, %v9420
        %v9461 = vadd.f32 %v9243, %v9425
        %v9462 = vadd.f32 %v9244, %v9428
        %v9463 = vxor.u32 %v9431, 2147483648
        %v9464 = vxor.u32 %v9432, 2147483648
        %v9465 = vxor.u32 %v9433, 2147483648
        %v9466 = vxor.u32 %v9434, 2147483648
        %v9467 = vxor.u32 %v9435, 2147483648
        %v9468 = vxor.u32 %v9436, 2147483648
        %v9469 = vxor.u32 %v9437, 2147483648
        %v9470 = vxor.u32 %v9438, 2147483648
        %v9471 = vxor.u32 %v9439, 2147483648
        %v9472 = vxor.u32 %v9440, 2147483648
        %v9473 = vxor.u32 %v9441, 2147483648
        %v9474 = vxor.u32 %v9442, 2147483648
        %v9475 = vxor.u32 %v9443, 2147483648
        %v9476 = vxor.u32 %v9444, 2147483648
        %v9477 = vxor.u32 %v9445, 2147483648
        %v9478 = vxor.u32 %v9446, 2147483648
        %v9479 = vxor.u32 %v9447, 2147483648
        %v9480 = vxor.u32 %v9448, 2147483648
        %v9481 = vxor.u32 %v9449, 2147483648
        %v9482 = vxor.u32 %v9450, 2147483648
        %v9483 = vxor.u32 %v9451, 2147483648
        %v9484 = vxor.u32 %v9452, 2147483648
        %v9485 = vxor.u32 %v9453, 2147483648
        %v9486 = vxor.u32 %v9454, 2147483648
        %v9487 = vxor.u32 %v9455, 2147483648
        %v9488 = vxor.u32 %v9456, 2147483648
        %v9489 = vxor.u32 %v9457, 2147483648
        %v9490 = vxor.u32 %v9458, 2147483648
        %v9491 = vxor.u32 %v9459, 2147483648
        %v9492 = vxor.u32 %v9460, 2147483648
        %v9493 = vxor.u32 %v9461, 2147483648
        %v9494 = vxor.u32 %v9462, 2147483648
        %v9495 = vmul.f32 %v9463, 1.442695
        %v9496 = vpow.pop %v9495
        %v9497 = vmul.f32 %v9464, 1.442695
        %v9498 = vpow.pop %v9497
        %v9499 = vmul.f32 %v9465, 1.442695
        %v9500 = vpow.pop %v9499
        %v9501 = vmul.f32 %v9466, 1.442695
        %v9502 = vpow.pop %v9501
        %v9503 = vmul.f32 %v9467, 1.442695
        %v9504 = vpow.pop %v9503
        %v9505 = vmul.f32 %v9468, 1.442695
        %v9506 = vpow.pop %v9505
        %v9507 = vmul.f32 %v9469, 1.442695
        %v9508 = vpow.pop %v9507
        %v9509 = vmul.f32 %v9470, 1.442695
        %v9510 = vpow.pop %v9509
        %v9511 = vmul.f32 %v9471, 1.442695
        %v9512 = vpow.pop %v9511
        %v9513 = vmul.f32 %v9472, 1.442695
        %v9514 = vpow.pop %v9513
        %v9515 = vmul.f32 %v9473, 1.442695
        %v9516 = vpow.pop %v9515
        %v9517 = vmul.f32 %v9474, 1.442695
        %v9518 = vpow.pop %v9517
        %v9519 = vmul.f32 %v9475, 1.442695
        %v9520 = vpow.pop %v9519
        %v9521 = vmul.f32 %v9476, 1.442695
        %v9522 = vpow.pop %v9521
        %v9523 = vmul.f32 %v9477, 1.442695
        %v9524 = vpow.pop %v9523
        %v9525 = vmul.f32 %v9478, 1.442695
        %v9526 = vpow.pop %v9525
        %v9527 = vmul.f32 %v9479, 1.442695
        %v9528 = vpow.pop %v9527
        %v9529 = vmul.f32 %v9480, 1.442695
        %v9530 = vpow.pop %v9529
        %v9531 = vmul.f32 %v9481, 1.442695
        %v9532 = vpow.pop %v9531
        %v9533 = vmul.f32 %v9482, 1.442695
        %v9534 = vpow.pop %v9533
        %v9535 = vmul.f32 %v9483, 1.442695
        %v9536 = vpow.pop %v9535
        %v9537 = vmul.f32 %v9484, 1.442695
        %v9538 = vpow.pop %v9537
        %v9539 = vmul.f32 %v9485, 1.442695
        %v9540 = vpow.pop %v9539
        %v9541 = vmul.f32 %v9486, 1.442695
        %v9542 = vpow.pop %v9541
        %v9543 = vmul.f32 %v9487, 1.442695
        %v9544 = vpow.pop %v9543
        %v9545 = vmul.f32 %v9488, 1.442695
        %v9546 = vpow.pop %v9545
        %v9547 = vmul.f32 %v9489, 1.442695
        %v9548 = vpow.pop %v9547
        %v9549 = vmul.f32 %v9490, 1.442695
        %v9550 = vpow.pop %v9549
        %v9551 = vmul.f32 %v9491, 1.442695
        %v9552 = vpow.pop %v9551
        %v9553 = vmul.f32 %v9492, 1.442695
        %v9554 = vpow.pop %v9553
        %v9555 = vmul.f32 %v9493, 1.442695
        %v9556 = vpow.pop %v9555
        %v9557 = vmul.f32 %v9494, 1.442695
        %v9558 = vpow.pop %v9557
        %v9559 = vadd.f32 %v9496, 1.0
        %v9560 = vadd.f32 %v9498, 1.0
        %v9561 = vadd.f32 %v9500, 1.0
        %v9562 = vadd.f32 %v9502, 1.0
        %v9563 = vadd.f32 %v9504, 1.0
        %v9564 = vadd.f32 %v9506, 1.0
        %v9565 = vadd.f32 %v9508, 1.0
        %v9566 = vadd.f32 %v9510, 1.0
        %v9567 = vadd.f32 %v9512, 1.0
        %v9568 = vadd.f32 %v9514, 1.0
        %v9569 = vadd.f32 %v9516, 1.0
        %v9570 = vadd.f32 %v9518, 1.0
        %v9571 = vadd.f32 %v9520, 1.0
        %v9572 = vadd.f32 %v9522, 1.0
        %v9573 = vadd.f32 %v9524, 1.0
        %v9574 = vadd.f32 %v9526, 1.0
        %v9575 = vadd.f32 %v9528, 1.0
        %v9576 = vadd.f32 %v9530, 1.0
        %v9577 = vadd.f32 %v9532, 1.0
        %v9578 = vadd.f32 %v9534, 1.0
        %v9579 = vadd.f32 %v9536, 1.0
        %v9580 = vadd.f32 %v9538, 1.0
        %v9581 = vadd.f32 %v9540, 1.0
        %v9582 = vadd.f32 %v9542, 1.0
        %v9583 = vadd.f32 %v9544, 1.0
        %v9584 = vadd.f32 %v9546, 1.0
        %v9585 = vadd.f32 %v9548, 1.0
        %v9586 = vadd.f32 %v9550, 1.0
        %v9587 = vadd.f32 %v9552, 1.0
        %v9588 = vadd.f32 %v9554, 1.0
        %v9589 = vadd.f32 %v9556, 1.0
        %v9590 = vadd.f32 %v9558, 1.0
        %v9591 = vrcp.pop %v9559
        %v9592 = vmul.f32 1.0, %v9591
        %v9593 = vrcp.pop %v9560
        %v9594 = vmul.f32 1.0, %v9593
        %v9595 = vrcp.pop %v9561
        %v9596 = vmul.f32 1.0, %v9595
        %v9597 = vrcp.pop %v9562
        %v9598 = vmul.f32 1.0, %v9597
        %v9599 = vrcp.pop %v9563
        %v9600 = vmul.f32 1.0, %v9599
        %v9601 = vrcp.pop %v9564
        %v9602 = vmul.f32 1.0, %v9601
        %v9603 = vrcp.pop %v9565
        %v9604 = vmul.f32 1.0, %v9603
        %v9605 = vrcp.pop %v9566
        %v9606 = vmul.f32 1.0, %v9605
        %v9607 = vrcp.pop %v9567
        %v9608 = vmul.f32 1.0, %v9607
        %v9609 = vrcp.pop %v9568
        %v9610 = vmul.f32 1.0, %v9609
        %v9611 = vrcp.pop %v9569
        %v9612 = vmul.f32 1.0, %v9611
        %v9613 = vrcp.pop %v9570
        %v9614 = vmul.f32 1.0, %v9613
        %v9615 = vrcp.pop %v9571
        %v9616 = vmul.f32 1.0, %v9615
        %v9617 = vrcp.pop %v9572
        %v9618 = vmul.f32 1.0, %v9617
        %v9619 = vrcp.pop %v9573
        %v9620 = vmul.f32 1.0, %v9619
        %v9621 = vrcp.pop %v9574
        %v9622 = vmul.f32 1.0, %v9621
        %v9623 = vrcp.pop %v9575
        %v9624 = vmul.f32 1.0, %v9623
        %v9625 = vrcp.pop %v9576
        %v9626 = vmul.f32 1.0, %v9625
        %v9627 = vrcp.pop %v9577
        %v9628 = vmul.f32 1.0, %v9627
        %v9629 = vrcp.pop %v9578
        %v9630 = vmul.f32 1.0, %v9629
        %v9631 = vrcp.pop %v9579
        %v9632 = vmul.f32 1.0, %v9631
        %v9633 = vrcp.pop %v9580
        %v9634 = vmul.f32 1.0, %v9633
        %v9635 = vrcp.pop %v9581
        %v9636 = vmul.f32 1.0, %v9635
        %v9637 = vrcp.pop %v9582
        %v9638 = vmul.f32 1.0, %v9637
        %v9639 = vrcp.pop %v9583
        %v9640 = vmul.f32 1.0, %v9639
        %v9641 = vrcp.pop %v9584
        %v9642 = vmul.f32 1.0, %v9641
        %v9643 = vrcp.pop %v9585
        %v9644 = vmul.f32 1.0, %v9643
        %v9645 = vrcp.pop %v9586
        %v9646 = vmul.f32 1.0, %v9645
        %v9647 = vrcp.pop %v9587
        %v9648 = vmul.f32 1.0, %v9647
        %v9649 = vrcp.pop %v9588
        %v9650 = vmul.f32 1.0, %v9649
        %v9651 = vrcp.pop %v9589
        %v9652 = vmul.f32 1.0, %v9651
        %v9653 = vrcp.pop %v9590
        %v9654 = vmul.f32 1.0, %v9653
        %v9655 = vtanh.pop %v9431
        %v9656 = vtanh.pop %v9432
        %v9657 = vtanh.pop %v9433
        %v9658 = vtanh.pop %v9434
        %v9659 = vtanh.pop %v9435
        %v9660 = vtanh.pop %v9436
        %v9661 = vtanh.pop %v9437
        %v9662 = vtanh.pop %v9438
        %v9663 = vtanh.pop %v9439
        %v9664 = vtanh.pop %v9440
        %v9665 = vtanh.pop %v9441
        %v9666 = vtanh.pop %v9442
        %v9667 = vtanh.pop %v9443
        %v9668 = vtanh.pop %v9444
        %v9669 = vtanh.pop %v9445
        %v9670 = vtanh.pop %v9446
        %v9671 = vtanh.pop %v9447
        %v9672 = vtanh.pop %v9448
        %v9673 = vtanh.pop %v9449
        %v9674 = vtanh.pop %v9450
        %v9675 = vtanh.pop %v9451
        %v9676 = vtanh.pop %v9452
        %v9677 = vtanh.pop %v9453
        %v9678 = vtanh.pop %v9454
        %v9679 = vtanh.pop %v9455
        %v9680 = vtanh.pop %v9456
        %v9681 = vtanh.pop %v9457
        %v9682 = vtanh.pop %v9458
        %v9683 = vtanh.pop %v9459
        %v9684 = vtanh.pop %v9460
        %v9685 = vtanh.pop %v9461
        %v9686 = vtanh.pop %v9462
        %v9687 = vld [vmem:[#allocation5] sm:$0xff]
        %v9688 = vld [vmem:[#allocation5 + $0x8] sm:$0xff]
        %v9689 = vld [vmem:[#allocation5 + $0x10] sm:$0xff]
        %v9690 = vld [vmem:[#allocation5 + $0x18] sm:$0xff]
        %v9691 = vld [vmem:[#allocation5 + $0x20] sm:$0xff]
        %v9692 = vld [vmem:[#allocation5 + $0x28] sm:$0xff]
        %v9693 = vld [vmem:[#allocation5 + $0x30] sm:$0xff]
        %v9694 = vld [vmem:[#allocation5 + $0x38] sm:$0xff]
        %v9695 = vld [vmem:[#allocation5 + $0x40] sm:$0xff]
        %v9696 = vld [vmem:[#allocation5 + $0x48] sm:$0xff]
        %v9697 = vld [vmem:[#allocation5 + $0x50] sm:$0xff]
        %v9698 = vld [vmem:[#allocation5 + $0x58] sm:$0xff]
        %v9699 = vld [vmem:[#allocation5 + $0x60] sm:$0xff]
        %v9700 = vld [vmem:[#allocation5 + $0x68] sm:$0xff]
        %v9701 = vld [vmem:[#allocation5 + $0x70] sm:$0xff]
        %v9702 = vld [vmem:[#allocation5 + $0x78] sm:$0xff]
        %v9703 = vld [vmem:[#allocation5 + $0x80] sm:$0xff]
        %v9704 = vld [vmem:[#allocation5 + $0x88] sm:$0xff]
        %v9705 = vld [vmem:[#allocation5 + $0x90] sm:$0xff]
        %v9706 = vld [vmem:[#allocation5 + $0x98] sm:$0xff]
        %v9707 = vld [vmem:[#allocation5 + $0xa0] sm:$0xff]
        %v9708 = vld [vmem:[#allocation5 + $0xa8] sm:$0xff]
        %v9709 = vld [vmem:[#allocation5 + $0xb0] sm:$0xff]
        %v9710 = vld [vmem:[#allocation5 + $0xb8] sm:$0xff]
        %v9711 = vld [vmem:[#allocation5 + $0xc0] sm:$0xff]
        %v9712 = vld [vmem:[#allocation5 + $0xc8] sm:$0xff]
        %v9713 = vld [vmem:[#allocation5 + $0xd0] sm:$0xff]
        %v9714 = vld [vmem:[#allocation5 + $0xd8] sm:$0xff]
        %v9715 = vld [vmem:[#allocation5 + $0xe0] sm:$0xff]
        %v9716 = vld [vmem:[#allocation5 + $0xe8] sm:$0xff]
        %v9717 = vld [vmem:[#allocation5 + $0xf0] sm:$0xff]
        %v9718 = vld [vmem:[#allocation5 + $0xf8] sm:$0xff]
        %9751 = vrot.lane.b32.xlu0 %v9687, 32
        %v9752 = vpop.permute.xlu0 %9751
        %9753 = vrot.lane.b32.xlu0 %v9688, 32
        %v9754 = vpop.permute.xlu0 %9753
        %9755 = vrot.lane.b32.xlu0 %v9689, 32
        %v9756 = vpop.permute.xlu0 %9755
        %9757 = vrot.lane.b32.xlu0 %v9690, 32
        %v9758 = vpop.permute.xlu0 %9757
        %9759 = vrot.lane.b32.xlu0 %v9691, 32
        %v9760 = vpop.permute.xlu0 %9759
        %9761 = vrot.lane.b32.xlu0 %v9692, 32
        %v9762 = vpop.permute.xlu0 %9761
        %9763 = vrot.lane.b32.xlu0 %v9693, 32
        %v9764 = vpop.permute.xlu0 %9763
        %9765 = vrot.lane.b32.xlu0 %v9694, 32
        %v9766 = vpop.permute.xlu0 %9765
        %9767 = vrot.lane.b32.xlu0 %v9695, 32
        %v9768 = vpop.permute.xlu0 %9767
        %9769 = vrot.lane.b32.xlu0 %v9696, 32
        %v9770 = vpop.permute.xlu0 %9769
        %9771 = vrot.lane.b32.xlu0 %v9697, 32
        %v9772 = vpop.permute.xlu0 %9771
        %9773 = vrot.lane.b32.xlu0 %v9698, 32
        %v9774 = vpop.permute.xlu0 %9773
        %9775 = vrot.lane.b32.xlu0 %v9699, 32
        %v9776 = vpop.permute.xlu0 %9775
        %9777 = vrot.lane.b32.xlu0 %v9700, 32
        %v9778 = vpop.permute.xlu0 %9777
        %9779 = vrot.lane.b32.xlu0 %v9701, 32
        %v9780 = vpop.permute.xlu0 %9779
        %9781 = vrot.lane.b32.xlu0 %v9702, 32
        %v9782 = vpop.permute.xlu0 %9781
        %9783 = vrot.lane.b32.xlu0 %v9703, 32
        %v9784 = vpop.permute.xlu0 %9783
        %9785 = vrot.lane.b32.xlu0 %v9704, 32
        %v9786 = vpop.permute.xlu0 %9785
        %9787 = vrot.lane.b32.xlu0 %v9705, 32
        %v9788 = vpop.permute.xlu0 %9787
        %9789 = vrot.lane.b32.xlu0 %v9706, 32
        %v9790 = vpop.permute.xlu0 %9789
        %9791 = vrot.lane.b32.xlu0 %v9707, 32
        %v9792 = vpop.permute.xlu0 %9791
        %9793 = vrot.lane.b32.xlu0 %v9708, 32
        %v9794 = vpop.permute.xlu0 %9793
        %9795 = vrot.lane.b32.xlu0 %v9709, 32
        %v9796 = vpop.permute.xlu0 %9795
        %9797 = vrot.lane.b32.xlu0 %v9710, 32
        %v9798 = vpop.permute.xlu0 %9797
        %9799 = vrot.lane.b32.xlu0 %v9711, 32
        %v9800 = vpop.permute.xlu0 %9799
        %9801 = vrot.lane.b32.xlu0 %v9712, 32
        %v9802 = vpop.permute.xlu0 %9801
        %9803 = vrot.lane.b32.xlu0 %v9713, 32
        %v9804 = vpop.permute.xlu0 %9803
        %9805 = vrot.lane.b32.xlu0 %v9714, 32
        %v9806 = vpop.permute.xlu0 %9805
        %9807 = vrot.lane.b32.xlu0 %v9715, 32
        %v9808 = vpop.permute.xlu0 %9807
        %9809 = vrot.lane.b32.xlu0 %v9716, 32
        %v9810 = vpop.permute.xlu0 %9809
        %9811 = vrot.lane.b32.xlu0 %v9717, 32
        %v9812 = vpop.permute.xlu0 %9811
        %9813 = vrot.lane.b32.xlu0 %v9718, 32
        %v9814 = vpop.permute.xlu0 %9813
        %v9847 = vmul.f32 %v9592, %v9752
        %v9848 = vmul.f32 %v9594, %v9754
        %v9849 = vmul.f32 %v9596, %v9756
        %v9850 = vmul.f32 %v9598, %v9758
        %v9851 = vmul.f32 %v9600, %v9760
        %v9852 = vmul.f32 %v9602, %v9762
        %v9853 = vmul.f32 %v9604, %v9764
        %v9854 = vmul.f32 %v9606, %v9766
        %v9855 = vmul.f32 %v9608, %v9768
        %v9856 = vmul.f32 %v9610, %v9770
        %v9857 = vmul.f32 %v9612, %v9772
        %v9858 = vmul.f32 %v9614, %v9774
        %v9859 = vmul.f32 %v9616, %v9776
        %v9860 = vmul.f32 %v9618, %v9778
        %v9861 = vmul.f32 %v9620, %v9780
        %v9862 = vmul.f32 %v9622, %v9782
        %v9863 = vmul.f32 %v9624, %v9784
        %v9864 = vmul.f32 %v9626, %v9786
        %v9865 = vmul.f32 %v9628, %v9788
        %v9866 = vmul.f32 %v9630, %v9790
        %v9867 = vmul.f32 %v9632, %v9792
        %v9868 = vmul.f32 %v9634, %v9794
        %v9869 = vmul.f32 %v9636, %v9796
        %v9870 = vmul.f32 %v9638, %v9798
        %v9871 = vmul.f32 %v9640, %v9800
        %v9872 = vmul.f32 %v9642, %v9802
        %v9873 = vmul.f32 %v9644, %v9804
        %v9874 = vmul.f32 %v9646, %v9806
        %v9875 = vmul.f32 %v9648, %v9808
        %v9876 = vmul.f32 %v9650, %v9810
        %v9877 = vmul.f32 %v9652, %v9812
        %v9878 = vmul.f32 %v9654, %v9814
        %9911 = vrot.lane.b32.xlu0 %v9655, 32
        %v9912 = vpop.permute.xlu0 %9911
        %9913 = vrot.lane.b32.xlu0 %v9656, 32
        %v9914 = vpop.permute.xlu0 %9913
        %9915 = vrot.lane.b32.xlu0 %v9657, 32
        %v9916 = vpop.permute.xlu0 %9915
        %9917 = vrot.lane.b32.xlu0 %v9658, 32
        %v9918 = vpop.permute.xlu0 %9917
        %9919 = vrot.lane.b32.xlu0 %v9659, 32
        %v9920 = vpop.permute.xlu0 %9919
        %9921 = vrot.lane.b32.xlu0 %v9660, 32
        %v9922 = vpop.permute.xlu0 %9921
        %9923 = vrot.lane.b32.xlu0 %v9661, 32
        %v9924 = vpop.permute.xlu0 %9923
        %9925 = vrot.lane.b32.xlu0 %v9662, 32
        %v9926 = vpop.permute.xlu0 %9925
        %9927 = vrot.lane.b32.xlu0 %v9663, 32
        %v9928 = vpop.permute.xlu0 %9927
        %9929 = vrot.lane.b32.xlu0 %v9664, 32
        %v9930 = vpop.permute.xlu0 %9929
        %9931 = vrot.lane.b32.xlu0 %v9665, 32
        %v9932 = vpop.permute.xlu0 %9931
        %9933 = vrot.lane.b32.xlu0 %v9666, 32
        %v9934 = vpop.permute.xlu0 %9933
        %9935 = vrot.lane.b32.xlu0 %v9667, 32
        %v9936 = vpop.permute.xlu0 %9935
        %9937 = vrot.lane.b32.xlu0 %v9668, 32
        %v9938 = vpop.permute.xlu0 %9937
        %9939 = vrot.lane.b32.xlu0 %v9669, 32
        %v9940 = vpop.permute.xlu0 %9939
        %9941 = vrot.lane.b32.xlu0 %v9670, 32
        %v9942 = vpop.permute.xlu0 %9941
        %9943 = vrot.lane.b32.xlu0 %v9671, 32
        %v9944 = vpop.permute.xlu0 %9943
        %9945 = vrot.lane.b32.xlu0 %v9672, 32
        %v9946 = vpop.permute.xlu0 %9945
        %9947 = vrot.lane.b32.xlu0 %v9673, 32
        %v9948 = vpop.permute.xlu0 %9947
        %9949 = vrot.lane.b32.xlu0 %v9674, 32
        %v9950 = vpop.permute.xlu0 %9949
        %9951 = vrot.lane.b32.xlu0 %v9675, 32
        %v9952 = vpop.permute.xlu0 %9951
        %9953 = vrot.lane.b32.xlu0 %v9676, 32
        %v9954 = vpop.permute.xlu0 %9953
        %9955 = vrot.lane.b32.xlu0 %v9677, 32
        %v9956 = vpop.permute.xlu0 %9955
        %9957 = vrot.lane.b32.xlu0 %v9678, 32
        %v9958 = vpop.permute.xlu0 %9957
        %9959 = vrot.lane.b32.xlu0 %v9679, 32
        %v9960 = vpop.permute.xlu0 %9959
        %9961 = vrot.lane.b32.xlu0 %v9680, 32
        %v9962 = vpop.permute.xlu0 %9961
        %9963 = vrot.lane.b32.xlu0 %v9681, 32
        %v9964 = vpop.permute.xlu0 %9963
        %9965 = vrot.lane.b32.xlu0 %v9682, 32
        %v9966 = vpop.permute.xlu0 %9965
        %9967 = vrot.lane.b32.xlu0 %v9683, 32
        %v9968 = vpop.permute.xlu0 %9967
        %9969 = vrot.lane.b32.xlu0 %v9684, 32
        %v9970 = vpop.permute.xlu0 %9969
        %9971 = vrot.lane.b32.xlu0 %v9685, 32
        %v9972 = vpop.permute.xlu0 %9971
        %9973 = vrot.lane.b32.xlu0 %v9686, 32
        %v9974 = vpop.permute.xlu0 %9973
        %v10007 = vmul.f32 %v9592, %v9912
        %v10008 = vmul.f32 %v9594, %v9914
        %v10009 = vmul.f32 %v9596, %v9916
        %v10010 = vmul.f32 %v9598, %v9918
        %v10011 = vmul.f32 %v9600, %v9920
        %v10012 = vmul.f32 %v9602, %v9922
        %v10013 = vmul.f32 %v9604, %v9924
        %v10014 = vmul.f32 %v9606, %v9926
        %v10015 = vmul.f32 %v9608, %v9928
        %v10016 = vmul.f32 %v9610, %v9930
        %v10017 = vmul.f32 %v9612, %v9932
        %v10018 = vmul.f32 %v9614, %v9934
        %v10019 = vmul.f32 %v9616, %v9936
        %v10020 = vmul.f32 %v9618, %v9938
        %v10021 = vmul.f32 %v9620, %v9940
        %v10022 = vmul.f32 %v9622, %v9942
        %v10023 = vmul.f32 %v9624, %v9944
        %v10024 = vmul.f32 %v9626, %v9946
        %v10025 = vmul.f32 %v9628, %v9948
        %v10026 = vmul.f32 %v9630, %v9950
        %v10027 = vmul.f32 %v9632, %v9952
        %v10028 = vmul.f32 %v9634, %v9954
        %v10029 = vmul.f32 %v9636, %v9956
        %v10030 = vmul.f32 %v9638, %v9958
        %v10031 = vmul.f32 %v9640, %v9960
        %v10032 = vmul.f32 %v9642, %v9962
        %v10033 = vmul.f32 %v9644, %v9964
        %v10034 = vmul.f32 %v9646, %v9966
        %v10035 = vmul.f32 %v9648, %v9968
        %v10036 = vmul.f32 %v9650, %v9970
        %v10037 = vmul.f32 %v9652, %v9972
        %v10038 = vmul.f32 %v9654, %v9974
        %10071 = vrot.lane.b32.xlu0 %v10007, 32
        %v10072 = vpop.permute.xlu0 %10071
        %10073 = vrot.lane.b32.xlu0 %v10008, 32
        %v10074 = vpop.permute.xlu0 %10073
        %10075 = vrot.lane.b32.xlu0 %v10009, 32
        %v10076 = vpop.permute.xlu0 %10075
        %10077 = vrot.lane.b32.xlu0 %v10010, 32
        %v10078 = vpop.permute.xlu0 %10077
        %10079 = vrot.lane.b32.xlu0 %v10011, 32
        %v10080 = vpop.permute.xlu0 %10079
        %10081 = vrot.lane.b32.xlu0 %v10012, 32
        %v10082 = vpop.permute.xlu0 %10081
        %10083 = vrot.lane.b32.xlu0 %v10013, 32
        %v10084 = vpop.permute.xlu0 %10083
        %10085 = vrot.lane.b32.xlu0 %v10014, 32
        %v10086 = vpop.permute.xlu0 %10085
        %10087 = vrot.lane.b32.xlu0 %v10015, 32
        %v10088 = vpop.permute.xlu0 %10087
        %10089 = vrot.lane.b32.xlu0 %v10016, 32
        %v10090 = vpop.permute.xlu0 %10089
        %10091 = vrot.lane.b32.xlu0 %v10017, 32
        %v10092 = vpop.permute.xlu0 %10091
        %10093 = vrot.lane.b32.xlu0 %v10018, 32
        %v10094 = vpop.permute.xlu0 %10093
        %10095 = vrot.lane.b32.xlu0 %v10019, 32
        %v10096 = vpop.permute.xlu0 %10095
        %10097 = vrot.lane.b32.xlu0 %v10020, 32
        %v10098 = vpop.permute.xlu0 %10097
        %10099 = vrot.lane.b32.xlu0 %v10021, 32
        %v10100 = vpop.permute.xlu0 %10099
        %10101 = vrot.lane.b32.xlu0 %v10022, 32
        %v10102 = vpop.permute.xlu0 %10101
        %10103 = vrot.lane.b32.xlu0 %v10023, 32
        %v10104 = vpop.permute.xlu0 %10103
        %10105 = vrot.lane.b32.xlu0 %v10024, 32
        %v10106 = vpop.permute.xlu0 %10105
        %10107 = vrot.lane.b32.xlu0 %v10025, 32
        %v10108 = vpop.permute.xlu0 %10107
        %10109 = vrot.lane.b32.xlu0 %v10026, 32
        %v10110 = vpop.permute.xlu0 %10109
        %10111 = vrot.lane.b32.xlu0 %v10027, 32
        %v10112 = vpop.permute.xlu0 %10111
        %10113 = vrot.lane.b32.xlu0 %v10028, 32
        %v10114 = vpop.permute.xlu0 %10113
        %10115 = vrot.lane.b32.xlu0 %v10029, 32
        %v10116 = vpop.permute.xlu0 %10115
        %10117 = vrot.lane.b32.xlu0 %v10030, 32
        %v10118 = vpop.permute.xlu0 %10117
        %10119 = vrot.lane.b32.xlu0 %v10031, 32
        %v10120 = vpop.permute.xlu0 %10119
        %10121 = vrot.lane.b32.xlu0 %v10032, 32
        %v10122 = vpop.permute.xlu0 %10121
        %10123 = vrot.lane.b32.xlu0 %v10033, 32
        %v10124 = vpop.permute.xlu0 %10123
        %10125 = vrot.lane.b32.xlu0 %v10034, 32
        %v10126 = vpop.permute.xlu0 %10125
        %10127 = vrot.lane.b32.xlu0 %v10035, 32
        %v10128 = vpop.permute.xlu0 %10127
        %10129 = vrot.lane.b32.xlu0 %v10036, 32
        %v10130 = vpop.permute.xlu0 %10129
        %10131 = vrot.lane.b32.xlu0 %v10037, 32
        %v10132 = vpop.permute.xlu0 %10131
        %10133 = vrot.lane.b32.xlu0 %v10038, 32
        %v10134 = vpop.permute.xlu0 %10133
        %v10167 = vadd.f32 %v9847, %v10072
        %v10168 = vadd.f32 %v9848, %v10074
        %v10169 = vadd.f32 %v9849, %v10076
        %v10170 = vadd.f32 %v9850, %v10078
        %v10171 = vadd.f32 %v9851, %v10080
        %v10172 = vadd.f32 %v9852, %v10082
        %v10173 = vadd.f32 %v9853, %v10084
        %v10174 = vadd.f32 %v9854, %v10086
        %v10175 = vadd.f32 %v9855, %v10088
        %v10176 = vadd.f32 %v9856, %v10090
        %v10177 = vadd.f32 %v9857, %v10092
        %v10178 = vadd.f32 %v9858, %v10094
        %v10179 = vadd.f32 %v9859, %v10096
        %v10180 = vadd.f32 %v9860, %v10098
        %v10181 = vadd.f32 %v9861, %v10100
        %v10182 = vadd.f32 %v9862, %v10102
        %v10183 = vadd.f32 %v9863, %v10104
        %v10184 = vadd.f32 %v9864, %v10106
        %v10185 = vadd.f32 %v9865, %v10108
        %v10186 = vadd.f32 %v9866, %v10110
        %v10187 = vadd.f32 %v9867, %v10112
        %v10188 = vadd.f32 %v9868, %v10114
        %v10189 = vadd.f32 %v9869, %v10116
        %v10190 = vadd.f32 %v9870, %v10118
        %v10191 = vadd.f32 %v9871, %v10120
        %v10192 = vadd.f32 %v9872, %v10122
        %v10193 = vadd.f32 %v9873, %v10124
        %v10194 = vadd.f32 %v9874, %v10126
        %v10195 = vadd.f32 %v9875, %v10128
        %v10196 = vadd.f32 %v9876, %v10130
        %v10197 = vadd.f32 %v9877, %v10132
        %v10198 = vadd.f32 %v9878, %v10134
        %v10199 = vtanh.pop %v10167
        %v10200 = vtanh.pop %v10168
        %v10201 = vtanh.pop %v10169
        %v10202 = vtanh.pop %v10170
        %v10203 = vtanh.pop %v10171
        %v10204 = vtanh.pop %v10172
        %v10205 = vtanh.pop %v10173
        %v10206 = vtanh.pop %v10174
        %v10207 = vtanh.pop %v10175
        %v10208 = vtanh.pop %v10176
        %v10209 = vtanh.pop %v10177
        %v10210 = vtanh.pop %v10178
        %v10211 = vtanh.pop %v10179
        %v10212 = vtanh.pop %v10180
        %v10213 = vtanh.pop %v10181
        %v10214 = vtanh.pop %v10182
        %v10215 = vtanh.pop %v10183
        %v10216 = vtanh.pop %v10184
        %v10217 = vtanh.pop %v10185
        %v10218 = vtanh.pop %v10186
        %v10219 = vtanh.pop %v10187
        %v10220 = vtanh.pop %v10188
        %v10221 = vtanh.pop %v10189
        %v10222 = vtanh.pop %v10190
        %v10223 = vtanh.pop %v10191
        %v10224 = vtanh.pop %v10192
        %v10225 = vtanh.pop %v10193
        %v10226 = vtanh.pop %v10194
        %v10227 = vtanh.pop %v10195
        %v10228 = vtanh.pop %v10196
        %v10229 = vtanh.pop %v10197
        %v10230 = vtanh.pop %v10198
        %10263 = vrot.lane.b32.xlu0 %v10199, 32
        %v10264 = vpop.permute.xlu0 %10263
        %10265 = vrot.lane.b32.xlu0 %v10200, 32
        %v10266 = vpop.permute.xlu0 %10265
        %10267 = vrot.lane.b32.xlu0 %v10201, 32
        %v10268 = vpop.permute.xlu0 %10267
        %10269 = vrot.lane.b32.xlu0 %v10202, 32
        %v10270 = vpop.permute.xlu0 %10269
        %10271 = vrot.lane.b32.xlu0 %v10203, 32
        %v10272 = vpop.permute.xlu0 %10271
        %10273 = vrot.lane.b32.xlu0 %v10204, 32
        %v10274 = vpop.permute.xlu0 %10273
        %10275 = vrot.lane.b32.xlu0 %v10205, 32
        %v10276 = vpop.permute.xlu0 %10275
        %10277 = vrot.lane.b32.xlu0 %v10206, 32
        %v10278 = vpop.permute.xlu0 %10277
        %10279 = vrot.lane.b32.xlu0 %v10207, 32
        %v10280 = vpop.permute.xlu0 %10279
        %10281 = vrot.lane.b32.xlu0 %v10208, 32
        %v10282 = vpop.permute.xlu0 %10281
        %10283 = vrot.lane.b32.xlu0 %v10209, 32
        %v10284 = vpop.permute.xlu0 %10283
        %10285 = vrot.lane.b32.xlu0 %v10210, 32
        %v10286 = vpop.permute.xlu0 %10285
        %10287 = vrot.lane.b32.xlu0 %v10211, 32
        %v10288 = vpop.permute.xlu0 %10287
        %10289 = vrot.lane.b32.xlu0 %v10212, 32
        %v10290 = vpop.permute.xlu0 %10289
        %10291 = vrot.lane.b32.xlu0 %v10213, 32
        %v10292 = vpop.permute.xlu0 %10291
        %10293 = vrot.lane.b32.xlu0 %v10214, 32
        %v10294 = vpop.permute.xlu0 %10293
        %10295 = vrot.lane.b32.xlu0 %v10215, 32
        %v10296 = vpop.permute.xlu0 %10295
        %10297 = vrot.lane.b32.xlu0 %v10216, 32
        %v10298 = vpop.permute.xlu0 %10297
        %10299 = vrot.lane.b32.xlu0 %v10217, 32
        %v10300 = vpop.permute.xlu0 %10299
        %10301 = vrot.lane.b32.xlu0 %v10218, 32
        %v10302 = vpop.permute.xlu0 %10301
        %10303 = vrot.lane.b32.xlu0 %v10219, 32
        %v10304 = vpop.permute.xlu0 %10303
        %10305 = vrot.lane.b32.xlu0 %v10220, 32
        %v10306 = vpop.permute.xlu0 %10305
        %10307 = vrot.lane.b32.xlu0 %v10221, 32
        %v10308 = vpop.permute.xlu0 %10307
        %10309 = vrot.lane.b32.xlu0 %v10222, 32
        %v10310 = vpop.permute.xlu0 %10309
        %10311 = vrot.lane.b32.xlu0 %v10223, 32
        %v10312 = vpop.permute.xlu0 %10311
        %10313 = vrot.lane.b32.xlu0 %v10224, 32
        %v10314 = vpop.permute.xlu0 %10313
        %10315 = vrot.lane.b32.xlu0 %v10225, 32
        %v10316 = vpop.permute.xlu0 %10315
        %10317 = vrot.lane.b32.xlu0 %v10226, 32
        %v10318 = vpop.permute.xlu0 %10317
        %10319 = vrot.lane.b32.xlu0 %v10227, 32
        %v10320 = vpop.permute.xlu0 %10319
        %10321 = vrot.lane.b32.xlu0 %v10228, 32
        %v10322 = vpop.permute.xlu0 %10321
        %10323 = vrot.lane.b32.xlu0 %v10229, 32
        %v10324 = vpop.permute.xlu0 %10323
        %10325 = vrot.lane.b32.xlu0 %v10230, 32
        %v10326 = vpop.permute.xlu0 %10325
        %v10359 = vmul.f32 %v9592, %v10264
        %v10360 = vmul.f32 %v9594, %v10266
        %v10361 = vmul.f32 %v9596, %v10268
        %v10362 = vmul.f32 %v9598, %v10270
        %v10363 = vmul.f32 %v9600, %v10272
        %v10364 = vmul.f32 %v9602, %v10274
        %v10365 = vmul.f32 %v9604, %v10276
        %v10366 = vmul.f32 %v9606, %v10278
        %v10367 = vmul.f32 %v9608, %v10280
        %v10368 = vmul.f32 %v9610, %v10282
        %v10369 = vmul.f32 %v9612, %v10284
        %v10370 = vmul.f32 %v9614, %v10286
        %v10371 = vmul.f32 %v9616, %v10288
        %v10372 = vmul.f32 %v9618, %v10290
        %v10373 = vmul.f32 %v9620, %v10292
        %v10374 = vmul.f32 %v9622, %v10294
        %v10375 = vmul.f32 %v9624, %v10296
        %v10376 = vmul.f32 %v9626, %v10298
        %v10377 = vmul.f32 %v9628, %v10300
        %v10378 = vmul.f32 %v9630, %v10302
        %v10379 = vmul.f32 %v9632, %v10304
        %v10380 = vmul.f32 %v9634, %v10306
        %v10381 = vmul.f32 %v9636, %v10308
        %v10382 = vmul.f32 %v9638, %v10310
        %v10383 = vmul.f32 %v9640, %v10312
        %v10384 = vmul.f32 %v9642, %v10314
        %v10385 = vmul.f32 %v9644, %v10316
        %v10386 = vmul.f32 %v9646, %v10318
        %v10387 = vmul.f32 %v9648, %v10320
        %v10388 = vmul.f32 %v9650, %v10322
        %v10389 = vmul.f32 %v9652, %v10324
        %v10390 = vmul.f32 %v9654, %v10326
        %10423 = vrot.lane.b32.xlu0 %v10167, 96
        %v10424 = vpop.permute.xlu0 %10423
        %10425 = vrot.lane.b32.xlu0 %v10168, 96
        %v10426 = vpop.permute.xlu0 %10425
        %10427 = vrot.lane.b32.xlu0 %v10169, 96
        %v10428 = vpop.permute.xlu0 %10427
        %10429 = vrot.lane.b32.xlu0 %v10170, 96
        %v10430 = vpop.permute.xlu0 %10429
        %10431 = vrot.lane.b32.xlu0 %v10171, 96
        %v10432 = vpop.permute.xlu0 %10431
        %10433 = vrot.lane.b32.xlu0 %v10172, 96
        %v10434 = vpop.permute.xlu0 %10433
        %10435 = vrot.lane.b32.xlu0 %v10173, 96
        %v10436 = vpop.permute.xlu0 %10435
        %10437 = vrot.lane.b32.xlu0 %v10174, 96
        %v10438 = vpop.permute.xlu0 %10437
        %10439 = vrot.lane.b32.xlu0 %v10175, 96
        %v10440 = vpop.permute.xlu0 %10439
        %10441 = vrot.lane.b32.xlu0 %v10176, 96
        %v10442 = vpop.permute.xlu0 %10441
        %10443 = vrot.lane.b32.xlu0 %v10177, 96
        %v10444 = vpop.permute.xlu0 %10443
        %10445 = vrot.lane.b32.xlu0 %v10178, 96
        %v10446 = vpop.permute.xlu0 %10445
        %10447 = vrot.lane.b32.xlu0 %v10179, 96
        %v10448 = vpop.permute.xlu0 %10447
        %10449 = vrot.lane.b32.xlu0 %v10180, 96
        %v10450 = vpop.permute.xlu0 %10449
        %10451 = vrot.lane.b32.xlu0 %v10181, 96
        %v10452 = vpop.permute.xlu0 %10451
        %10453 = vrot.lane.b32.xlu0 %v10182, 96
        %v10454 = vpop.permute.xlu0 %10453
        %10455 = vrot.lane.b32.xlu0 %v10183, 96
        %v10456 = vpop.permute.xlu0 %10455
        %10457 = vrot.lane.b32.xlu0 %v10184, 96
        %v10458 = vpop.permute.xlu0 %10457
        %10459 = vrot.lane.b32.xlu0 %v10185, 96
        %v10460 = vpop.permute.xlu0 %10459
        %10461 = vrot.lane.b32.xlu0 %v10186, 96
        %v10462 = vpop.permute.xlu0 %10461
        %10463 = vrot.lane.b32.xlu0 %v10187, 96
        %v10464 = vpop.permute.xlu0 %10463
        %10465 = vrot.lane.b32.xlu0 %v10188, 96
        %v10466 = vpop.permute.xlu0 %10465
        %10467 = vrot.lane.b32.xlu0 %v10189, 96
        %v10468 = vpop.permute.xlu0 %10467
        %10469 = vrot.lane.b32.xlu0 %v10190, 96
        %v10470 = vpop.permute.xlu0 %10469
        %10471 = vrot.lane.b32.xlu0 %v10191, 96
        %v10472 = vpop.permute.xlu0 %10471
        %10473 = vrot.lane.b32.xlu0 %v10192, 96
        %v10474 = vpop.permute.xlu0 %10473
        %10475 = vrot.lane.b32.xlu0 %v10193, 96
        %v10476 = vpop.permute.xlu0 %10475
        %10477 = vrot.lane.b32.xlu0 %v10194, 96
        %v10478 = vpop.permute.xlu0 %10477
        %10479 = vrot.lane.b32.xlu0 %v10195, 96
        %v10480 = vpop.permute.xlu0 %10479
        %10481 = vrot.lane.b32.xlu0 %v10196, 96
        %v10482 = vpop.permute.xlu0 %10481
        %10483 = vrot.lane.b32.xlu0 %v10197, 96
        %v10484 = vpop.permute.xlu0 %10483
        %10485 = vrot.lane.b32.xlu0 %v10198, 96
        %v10486 = vpop.permute.xlu0 %10485
        %10519 = vst.msk [vmem:[#allocation5] sm:$0xff] %vm1023, %v10424
        %10520 = vst.msk [vmem:[#allocation5 + $0x8] sm:$0xff] %vm1023, %v10426
        %10521 = vst.msk [vmem:[#allocation5 + $0x10] sm:$0xff] %vm1023, %v10428
        %10522 = vst.msk [vmem:[#allocation5 + $0x18] sm:$0xff] %vm1023, %v10430
        %10523 = vst.msk [vmem:[#allocation5 + $0x20] sm:$0xff] %vm1023, %v10432
        %10524 = vst.msk [vmem:[#allocation5 + $0x28] sm:$0xff] %vm1023, %v10434
        %10525 = vst.msk [vmem:[#allocation5 + $0x30] sm:$0xff] %vm1023, %v10436
        %10526 = vst.msk [vmem:[#allocation5 + $0x38] sm:$0xff] %vm1023, %v10438
        %10527 = vst.msk [vmem:[#allocation5 + $0x40] sm:$0xff] %vm1023, %v10440
        %10528 = vst.msk [vmem:[#allocation5 + $0x48] sm:$0xff] %vm1023, %v10442
        %10529 = vst.msk [vmem:[#allocation5 + $0x50] sm:$0xff] %vm1023, %v10444
        %10530 = vst.msk [vmem:[#allocation5 + $0x58] sm:$0xff] %vm1023, %v10446
        %10531 = vst.msk [vmem:[#allocation5 + $0x60] sm:$0xff] %vm1023, %v10448
        %10532 = vst.msk [vmem:[#allocation5 + $0x68] sm:$0xff] %vm1023, %v10450
        %10533 = vst.msk [vmem:[#allocation5 + $0x70] sm:$0xff] %vm1023, %v10452
        %10534 = vst.msk [vmem:[#allocation5 + $0x78] sm:$0xff] %vm1023, %v10454
        %10535 = vst.msk [vmem:[#allocation5 + $0x80] sm:$0xff] %vm1023, %v10456
        %10536 = vst.msk [vmem:[#allocation5 + $0x88] sm:$0xff] %vm1023, %v10458
        %10537 = vst.msk [vmem:[#allocation5 + $0x90] sm:$0xff] %vm1023, %v10460
        %10538 = vst.msk [vmem:[#allocation5 + $0x98] sm:$0xff] %vm1023, %v10462
        %10539 = vst.msk [vmem:[#allocation5 + $0xa0] sm:$0xff] %vm1023, %v10464
        %10540 = vst.msk [vmem:[#allocation5 + $0xa8] sm:$0xff] %vm1023, %v10466
        %10541 = vst.msk [vmem:[#allocation5 + $0xb0] sm:$0xff] %vm1023, %v10468
        %10542 = vst.msk [vmem:[#allocation5 + $0xb8] sm:$0xff] %vm1023, %v10470
        %10543 = vst.msk [vmem:[#allocation5 + $0xc0] sm:$0xff] %vm1023, %v10472
        %10544 = vst.msk [vmem:[#allocation5 + $0xc8] sm:$0xff] %vm1023, %v10474
        %10545 = vst.msk [vmem:[#allocation5 + $0xd0] sm:$0xff] %vm1023, %v10476
        %10546 = vst.msk [vmem:[#allocation5 + $0xd8] sm:$0xff] %vm1023, %v10478
        %10547 = vst.msk [vmem:[#allocation5 + $0xe0] sm:$0xff] %vm1023, %v10480
        %10548 = vst.msk [vmem:[#allocation5 + $0xe8] sm:$0xff] %vm1023, %v10482
        %10549 = vst.msk [vmem:[#allocation5 + $0xf0] sm:$0xff] %vm1023, %v10484
        %10550 = vst.msk [vmem:[#allocation5 + $0xf8] sm:$0xff] %vm1023, %v10486
        %10583 = vrot.lane.b32.xlu0 %v10359, 64
        %v10584 = vpop.permute.xlu0 %10583
        %10585 = vrot.lane.b32.xlu0 %v10360, 64
        %v10586 = vpop.permute.xlu0 %10585
        %10587 = vrot.lane.b32.xlu0 %v10361, 64
        %v10588 = vpop.permute.xlu0 %10587
        %10589 = vrot.lane.b32.xlu0 %v10362, 64
        %v10590 = vpop.permute.xlu0 %10589
        %10591 = vrot.lane.b32.xlu0 %v10363, 64
        %v10592 = vpop.permute.xlu0 %10591
        %10593 = vrot.lane.b32.xlu0 %v10364, 64
        %v10594 = vpop.permute.xlu0 %10593
        %10595 = vrot.lane.b32.xlu0 %v10365, 64
        %v10596 = vpop.permute.xlu0 %10595
        %10597 = vrot.lane.b32.xlu0 %v10366, 64
        %v10598 = vpop.permute.xlu0 %10597
        %10599 = vrot.lane.b32.xlu0 %v10367, 64
        %v10600 = vpop.permute.xlu0 %10599
        %10601 = vrot.lane.b32.xlu0 %v10368, 64
        %v10602 = vpop.permute.xlu0 %10601
        %10603 = vrot.lane.b32.xlu0 %v10369, 64
        %v10604 = vpop.permute.xlu0 %10603
        %10605 = vrot.lane.b32.xlu0 %v10370, 64
        %v10606 = vpop.permute.xlu0 %10605
        %10607 = vrot.lane.b32.xlu0 %v10371, 64
        %v10608 = vpop.permute.xlu0 %10607
        %10609 = vrot.lane.b32.xlu0 %v10372, 64
        %v10610 = vpop.permute.xlu0 %10609
        %10611 = vrot.lane.b32.xlu0 %v10373, 64
        %v10612 = vpop.permute.xlu0 %10611
        %10613 = vrot.lane.b32.xlu0 %v10374, 64
        %v10614 = vpop.permute.xlu0 %10613
        %10615 = vrot.lane.b32.xlu0 %v10375, 64
        %v10616 = vpop.permute.xlu0 %10615
        %10617 = vrot.lane.b32.xlu0 %v10376, 64
        %v10618 = vpop.permute.xlu0 %10617
        %10619 = vrot.lane.b32.xlu0 %v10377, 64
        %v10620 = vpop.permute.xlu0 %10619
        %10621 = vrot.lane.b32.xlu0 %v10378, 64
        %v10622 = vpop.permute.xlu0 %10621
        %10623 = vrot.lane.b32.xlu0 %v10379, 64
        %v10624 = vpop.permute.xlu0 %10623
        %10625 = vrot.lane.b32.xlu0 %v10380, 64
        %v10626 = vpop.permute.xlu0 %10625
        %10627 = vrot.lane.b32.xlu0 %v10381, 64
        %v10628 = vpop.permute.xlu0 %10627
        %10629 = vrot.lane.b32.xlu0 %v10382, 64
        %v10630 = vpop.permute.xlu0 %10629
        %10631 = vrot.lane.b32.xlu0 %v10383, 64
        %v10632 = vpop.permute.xlu0 %10631
        %10633 = vrot.lane.b32.xlu0 %v10384, 64
        %v10634 = vpop.permute.xlu0 %10633
        %10635 = vrot.lane.b32.xlu0 %v10385, 64
        %v10636 = vpop.permute.xlu0 %10635
        %10637 = vrot.lane.b32.xlu0 %v10386, 64
        %v10638 = vpop.permute.xlu0 %10637
        %10639 = vrot.lane.b32.xlu0 %v10387, 64
        %v10640 = vpop.permute.xlu0 %10639
        %10641 = vrot.lane.b32.xlu0 %v10388, 64
        %v10642 = vpop.permute.xlu0 %10641
        %10643 = vrot.lane.b32.xlu0 %v10389, 64
        %v10644 = vpop.permute.xlu0 %10643
        %10645 = vrot.lane.b32.xlu0 %v10390, 64
        %v10646 = vpop.permute.xlu0 %10645
        %s10679 = scalar_lea.vmem [#allocation4], 24
        %10680 = vst.msk [vmem:[%s10679 + $0x1] sm:$0xff] %vm1023, %v10584
        %10681 = vst.msk [vmem:[%s10679 + $0x9] sm:$0xff] %vm1023, %v10586
        %10682 = vst.msk [vmem:[%s10679 + $0x19] sm:$0xff] %vm1023, %v10588
        %10683 = vst.msk [vmem:[%s10679 + $0x21] sm:$0xff] %vm1023, %v10590
        %10684 = vst.msk [vmem:[%s10679 + $0x31] sm:$0xff] %vm1023, %v10592
        %10685 = vst.msk [vmem:[%s10679 + $0x39] sm:$0xff] %vm1023, %v10594
        %10686 = vst.msk [vmem:[%s10679 + $0x49] sm:$0xff] %vm1023, %v10596
        %10687 = vst.msk [vmem:[%s10679 + $0x51] sm:$0xff] %vm1023, %v10598
        %10688 = vst.msk [vmem:[%s10679 + $0x61] sm:$0xff] %vm1023, %v10600
        %10689 = vst.msk [vmem:[%s10679 + $0x69] sm:$0xff] %vm1023, %v10602
        %10690 = vst.msk [vmem:[%s10679 + $0x79] sm:$0xff] %vm1023, %v10604
        %10691 = vst.msk [vmem:[%s10679 + $0x81] sm:$0xff] %vm1023, %v10606
        %10692 = vst.msk [vmem:[%s10679 + $0x91] sm:$0xff] %vm1023, %v10608
        %10693 = vst.msk [vmem:[%s10679 + $0x99] sm:$0xff] %vm1023, %v10610
        %10694 = vst.msk [vmem:[%s10679 + $0xa9] sm:$0xff] %vm1023, %v10612
        %10695 = vst.msk [vmem:[%s10679 + $0xb1] sm:$0xff] %vm1023, %v10614
        %10696 = vst.msk [vmem:[%s10679 + $0xc1] sm:$0xff] %vm1023, %v10616
        %10697 = vst.msk [vmem:[%s10679 + $0xc9] sm:$0xff] %vm1023, %v10618
        %10698 = vst.msk [vmem:[%s10679 + $0xd9] sm:$0xff] %vm1023, %v10620
        %10699 = vst.msk [vmem:[%s10679 + $0xe1] sm:$0xff] %vm1023, %v10622
        %10700 = vst.msk [vmem:[%s10679 + $0xf1] sm:$0xff] %vm1023, %v10624
        %10701 = vst.msk [vmem:[%s10679 + $0xf9] sm:$0xff] %vm1023, %v10626
        %10702 = vst.msk [vmem:[%s10679 + $0x109] sm:$0xff] %vm1023, %v10628
        %10703 = vst.msk [vmem:[%s10679 + $0x111] sm:$0xff] %vm1023, %v10630
        %10704 = vst.msk [vmem:[%s10679 + $0x121] sm:$0xff] %vm1023, %v10632
        %10705 = vst.msk [vmem:[%s10679 + $0x129] sm:$0xff] %vm1023, %v10634
        %10706 = vst.msk [vmem:[%s10679 + $0x139] sm:$0xff] %vm1023, %v10636
        %10707 = vst.msk [vmem:[%s10679 + $0x141] sm:$0xff] %vm1023, %v10638
        %10708 = vst.msk [vmem:[%s10679 + $0x151] sm:$0xff] %vm1023, %v10640
        %10709 = vst.msk [vmem:[%s10679 + $0x159] sm:$0xff] %vm1023, %v10642
        %10710 = vst.msk [vmem:[%s10679 + $0x169] sm:$0xff] %vm1023, %v10644
        %10711 = vst.msk [vmem:[%s10679 + $0x171] sm:$0xff] %vm1023, %v10646
        %10712 = vst.msk [vmem:[%s352] sm:$0xff] %vm1023, %v10584
        %10713 = vst.msk [vmem:[%s352 + $0x8] sm:$0xff] %vm1023, %v10586
        %10714 = vst.msk [vmem:[%s352 + $0x10] sm:$0xff] %vm1023, %v10588
        %10715 = vst.msk [vmem:[%s352 + $0x18] sm:$0xff] %vm1023, %v10590
        %10716 = vst.msk [vmem:[%s352 + $0x20] sm:$0xff] %vm1023, %v10592
        %10717 = vst.msk [vmem:[%s352 + $0x28] sm:$0xff] %vm1023, %v10594
        %10718 = vst.msk [vmem:[%s352 + $0x30] sm:$0xff] %vm1023, %v10596
        %10719 = vst.msk [vmem:[%s352 + $0x38] sm:$0xff] %vm1023, %v10598
        %10720 = vst.msk [vmem:[%s352 + $0x40] sm:$0xff] %vm1023, %v10600
        %10721 = vst.msk [vmem:[%s352 + $0x48] sm:$0xff] %vm1023, %v10602
        %10722 = vst.msk [vmem:[%s352 + $0x50] sm:$0xff] %vm1023, %v10604
        %10723 = vst.msk [vmem:[%s352 + $0x58] sm:$0xff] %vm1023, %v10606
        %10724 = vst.msk [vmem:[%s352 + $0x60] sm:$0xff] %vm1023, %v10608
        %10725 = vst.msk [vmem:[%s352 + $0x68] sm:$0xff] %vm1023, %v10610
        %10726 = vst.msk [vmem:[%s352 + $0x70] sm:$0xff] %vm1023, %v10612
        %10727 = vst.msk [vmem:[%s352 + $0x78] sm:$0xff] %vm1023, %v10614
        %10728 = vst.msk [vmem:[%s352 + $0x80] sm:$0xff] %vm1023, %v10616
        %10729 = vst.msk [vmem:[%s352 + $0x88] sm:$0xff] %vm1023, %v10618
        %10730 = vst.msk [vmem:[%s352 + $0x90] sm:$0xff] %vm1023, %v10620
        %10731 = vst.msk [vmem:[%s352 + $0x98] sm:$0xff] %vm1023, %v10622
        %10732 = vst.msk [vmem:[%s352 + $0xa0] sm:$0xff] %vm1023, %v10624
        %10733 = vst.msk [vmem:[%s352 + $0xa8] sm:$0xff] %vm1023, %v10626
        %10734 = vst.msk [vmem:[%s352 + $0xb0] sm:$0xff] %vm1023, %v10628
        %10735 = vst.msk [vmem:[%s352 + $0xb8] sm:$0xff] %vm1023, %v10630
        %10736 = vst.msk [vmem:[%s352 + $0xc0] sm:$0xff] %vm1023, %v10632
        %10737 = vst.msk [vmem:[%s352 + $0xc8] sm:$0xff] %vm1023, %v10634
        %10738 = vst.msk [vmem:[%s352 + $0xd0] sm:$0xff] %vm1023, %v10636
        %10739 = vst.msk [vmem:[%s352 + $0xd8] sm:$0xff] %vm1023, %v10638
        %10740 = vst.msk [vmem:[%s352 + $0xe0] sm:$0xff] %vm1023, %v10640
        %10741 = vst.msk [vmem:[%s352 + $0xe8] sm:$0xff] %vm1023, %v10642
        %10742 = vst.msk [vmem:[%s352 + $0xf0] sm:$0xff] %vm1023, %v10644
        %10743 = vst.msk [vmem:[%s352 + $0xf8] sm:$0xff] %vm1023, %v10646
        %p10744 = scmp.eq.s32.totalorder %s28, 7
        // Predicated region
        $region53: #{conv_lstm_forward.1} parent=47 // pred_check
          %p10745 = pneg %p10744
        $region54: #{conv_lstm_forward.1} parent=47 // pred_check_branch
          %10747 = sbr.rel (%p10745) target = $region56
        $region55: #{conv_lstm_forward.1} parent=47 // pred_region
          %10748 = vst.msk [vmem:[%s334] sm:$0xff] %vm1023, %v10424
          %10749 = vst.msk [vmem:[%s334 + $0x8] sm:$0xff] %vm1023, %v10426
          %10750 = vst.msk [vmem:[%s334 + $0x10] sm:$0xff] %vm1023, %v10428
          %10751 = vst.msk [vmem:[%s334 + $0x18] sm:$0xff] %vm1023, %v10430
          %10752 = vst.msk [vmem:[%s334 + $0x20] sm:$0xff] %vm1023, %v10432
          %10753 = vst.msk [vmem:[%s334 + $0x28] sm:$0xff] %vm1023, %v10434
          %10754 = vst.msk [vmem:[%s334 + $0x30] sm:$0xff] %vm1023, %v10436
          %10755 = vst.msk [vmem:[%s334 + $0x38] sm:$0xff] %vm1023, %v10438
          %10756 = vst.msk [vmem:[%s334 + $0x40] sm:$0xff] %vm1023, %v10440
          %10757 = vst.msk [vmem:[%s334 + $0x48] sm:$0xff] %vm1023, %v10442
          %10758 = vst.msk [vmem:[%s334 + $0x50] sm:$0xff] %vm1023, %v10444
          %10759 = vst.msk [vmem:[%s334 + $0x58] sm:$0xff] %vm1023, %v10446
          %10760 = vst.msk [vmem:[%s334 + $0x60] sm:$0xff] %vm1023, %v10448
          %10761 = vst.msk [vmem:[%s334 + $0x68] sm:$0xff] %vm1023, %v10450
          %10762 = vst.msk [vmem:[%s334 + $0x70] sm:$0xff] %vm1023, %v10452
          %10763 = vst.msk [vmem:[%s334 + $0x78] sm:$0xff] %vm1023, %v10454
          %10764 = vst.msk [vmem:[%s334 + $0x80] sm:$0xff] %vm1023, %v10456
          %10765 = vst.msk [vmem:[%s334 + $0x88] sm:$0xff] %vm1023, %v10458
          %10766 = vst.msk [vmem:[%s334 + $0x90] sm:$0xff] %vm1023, %v10460
          %10767 = vst.msk [vmem:[%s334 + $0x98] sm:$0xff] %vm1023, %v10462
          %10768 = vst.msk [vmem:[%s334 + $0xa0] sm:$0xff] %vm1023, %v10464
          %10769 = vst.msk [vmem:[%s334 + $0xa8] sm:$0xff] %vm1023, %v10466
          %10770 = vst.msk [vmem:[%s334 + $0xb0] sm:$0xff] %vm1023, %v10468
          %10771 = vst.msk [vmem:[%s334 + $0xb8] sm:$0xff] %vm1023, %v10470
          %10772 = vst.msk [vmem:[%s334 + $0xc0] sm:$0xff] %vm1023, %v10472
          %10773 = vst.msk [vmem:[%s334 + $0xc8] sm:$0xff] %vm1023, %v10474
          %10774 = vst.msk [vmem:[%s334 + $0xd0] sm:$0xff] %vm1023, %v10476
          %10775 = vst.msk [vmem:[%s334 + $0xd8] sm:$0xff] %vm1023, %v10478
          %10776 = vst.msk [vmem:[%s334 + $0xe0] sm:$0xff] %vm1023, %v10480
          %10777 = vst.msk [vmem:[%s334 + $0xe8] sm:$0xff] %vm1023, %v10482
          %10778 = vst.msk [vmem:[%s334 + $0xf0] sm:$0xff] %vm1023, %v10484
          %10779 = vst.msk [vmem:[%s334 + $0xf8] sm:$0xff] %vm1023, %v10486
        $region56: #{conv_lstm_forward.1} parent=47 // pred_fallthru
          _
        %p10780 = scmp.lt.s32.totalorder %s27, 1
        %s10781 = scalar_select %p10780, %s27, 1
        %p10782 = scmp.lt.s32.totalorder %s28, 7
        %s10783 = scalar_select %p10782, %s28, 7
        %s10784 = smul.addr %s10783, 32
        %s10785 = smul.addr %s10781, 256
        %s10786 = sadd.s32 %s10784, %s10785
        %s10787 = smul.addr %s10786, 8
        %s10788 = scalar_lea.vmem %s7, %s10787
        %s10789 = sand.u32 %s225, 1
        %s10790 = scalar_lea.sflag [#allocation7], %s10789
        %s10791 = sand.u32 %s225, 1
        %s10792 = smul.addr %s10791, 256
        %s10793 = scalar_lea.vmem [#allocation6], %s10792
        // Predicated region
        $region57: #{conv_lstm_forward.1} parent=47 // pred_check
          %p10794 = pneg %p209
        $region58: #{conv_lstm_forward.1} parent=47 // pred_check_branch
          %10796 = sbr.rel (%p10794) target = $region60
        $region59: #{conv_lstm_forward.1} parent=47 // pred_region
          _
        $region60: #{conv_lstm_forward.1} parent=47 // pred_fallthru
          _
        // Predicated region
        $region61: #{conv_lstm_forward.1} parent=47 // pred_check
          %p10797 = pneg %p235
        $region62: #{conv_lstm_forward.1} parent=47 // pred_check_branch
          %10799 = sbr.rel (%p10797) target = $region64
        $region63: #{conv_lstm_forward.1} parent=47 // pred_region
          %s10801 = ssub.s32 4096, 4096
          %10802 = vsyncadd %s10790, %s10801
          %s10803 = smul.addr %s27, 32
          %s10804 = smul.addr %s10803, 128
          %s10805 = scalar_lea.hbm %s8, %s10804
          %s10806 = sshll.u32 %s10793, 4
          %s10807 = int_to_ptr.vmem [resolvable:$true] %s10806
          %10812 = dma.vmem_to_hbm [thread:$0]  %s10807, 4096, %s10805, %s10790, 128, 128, 8
        $region64: #{conv_lstm_forward.1} parent=47 // pred_fallthru
          _
      $region48: #{conv_lstm_forward.1} parent=5 // pred_fallthru
        _
      %p10813 = scmp.le.s32.totalorder 2, %s18
      // Predicated region
      $region65: #{conv_lstm_forward.1} parent=5 // pred_check
        %p10814 = pneg %p10813
      $region66: #{conv_lstm_forward.1} parent=5 // pred_check_branch
        %10816 = sbr.rel (%p10814) target = $region68
      $region67: #{conv_lstm_forward.1} parent=5 // pred_region
        %s10817 = ssub.s32 %s18, 2
        // Predicated region
        $region69: #{conv_lstm_forward.1} parent=67 // pred_check
          %p10818 = pneg %p215
        $region70: #{conv_lstm_forward.1} parent=67 // pred_check_branch
          %10820 = sbr.rel (%p10818) target = $region72
        $region71: #{conv_lstm_forward.1} parent=67 // pred_region
          %p10821 = scmp.lt.s32.totalorder %s29, 1
          %s10822 = scalar_select %p10821, %s29, 1
          %p10823 = scmp.lt.s32.totalorder %s30, 7
          %s10824 = scalar_select %p10823, %s30, 7
          %s10825 = smul.addr %s10824, 32
          %s10826 = smul.addr %s10822, 256
          %s10827 = sadd.s32 %s10825, %s10826
          %s10828 = smul.addr %s10827, 8
          %s10829 = scalar_lea.vmem %s7, %s10828
        $region72: #{conv_lstm_forward.1} parent=67 // pred_fallthru
          _
        // Predicated region
        $region73: #{conv_lstm_forward.1} parent=67 // pred_check
          %p10830 = pneg %p241
        $region74: #{conv_lstm_forward.1} parent=67 // pred_check_branch
          %10832 = sbr.rel (%p10830) target = $region76
        $region75: #{conv_lstm_forward.1} parent=67 // pred_region
          %s10833 = sand.u32 %s226, 1
          %s10834 = scalar_lea.sflag [#allocation7], %s10833
          %s10835 = sand.u32 %s226, 1
          %s10836 = smul.addr %s10835, 256
          %s10837 = scalar_lea.vmem [#allocation6], %s10836
          %10838 = dma.done %s10834, 4096
        $region76: #{conv_lstm_forward.1} parent=67 // pred_fallthru
          _
      $region68: #{conv_lstm_forward.1} parent=5 // pred_fallthru
        _
    $region6: #{conv_lstm_forward.1} parent=1 // loop_footer
      %s22 = sadd.s32 1, %s18
    $region7: #{conv_lstm_forward.1} parent=1 // loop_footer_branch
      %17 = sbr.rel target = $region3
    $region8: #{conv_lstm_forward.1} parent=1 // loop_exit
      _
    %10839 = vsyncpa [#allocation7], 1
    %s10840 = scalar_lea.sflag [#allocation7], 1
    %10841 = vsyncpa %s10840, 1

</llo_original>
